<compile_context>
chip_gen: v7x
topology: tpu7x:2x2x1
jax: 0.10.0
libtpu: 0.0.40
codegen_flags: <defaults>
</compile_context>

<pallas_src>
import math
import jax
import jax.numpy as jnp
from jax import lax
from jax.experimental import pallas as pl
from jax.experimental.pallas import tpu as pltpu

# ----------------------------------------------------------------------------
# hyperparameters (small, consistent with the module)
# ----------------------------------------------------------------------------
N_VOCAB, N_TONE, N_LANGUAGE = 40, 8, 4
OUT_CHANNELS = 16            # proj exists in __init__ but is unused in forward
HIDDEN, FILTER = 64, 128     # hidden_channels, filter_channels
N_HEADS, N_LAYERS = 2, 2     # encoder has N_LAYERS layers, encoder2 has 1
N_TOTAL_LAYERS = N_LAYERS + 1
KERNEL_SIZE = 3
P_DROPOUT = 0.1              # inference: dropout == identity (not applied)
WINDOW = 4                   # attentions.Encoder default window_size
D_HEAD = HIDDEN // N_HEADS
NW = 2 * WINDOW + 1
LN_EPS = 1e-5

B, T = 2, 16


# ----------------------------------------------------------------------------
# kernel
# ----------------------------------------------------------------------------
def _layer_norm(z, gamma, beta):
    mean = jnp.mean(z, axis=-1, keepdims=True)
    var = jnp.mean(jnp.square(z - mean), axis=-1, keepdims=True)
    return (z - mean) * lax.rsqrt(var + LN_EPS) * gamma + beta


def _encoder_stack_kernel(x_ref, m_ref, amask_ref, band_ref, edge_ref,
                          wqkv_ref, bqkv_ref, wo_ref, bo_ref,
                          relk_ref, relv_ref, g1_ref, be1_ref,
                          w1_ref, b1_ref, w2_ref, b2_ref, g2_ref, be2_ref,
                          o_ref):
    """Full 3-layer encoder stack on the folded batch.

    x_ref:    (B*T, C)      activations (time*batch on sublanes, channels on lanes)
    m_ref:    (B*T, 1)      sequence mask (column form)
    amask_ref:(B*T, B*T)    block-diagonal attention mask (mask_i * mask_j, same batch)
    band_ref: (NW, B*T, B*T) band[n,i,j] = 1 iff j-i == n-WINDOW and same batch
    edge_ref: (2, B*T, 1)   [prev_edge, next_edge] masks zeroing segment boundaries
    weight refs are stacked along a leading layer axis (L=3); matmul weights bf16.
    """
    f32, bf16 = jnp.float32, jnp.bfloat16

    x = x_ref[...]                      # (BT, C) f32
    m = m_ref[...]                      # (BT, 1)
    prev_edge = edge_ref[0]             # (BT, 1): 0 at the first row of each segment
    next_edge = edge_ref[1]             # (BT, 1): 0 at the last row of each segment

    inv_sqrt_d = f32(1.0 / math.sqrt(D_HEAD))
    neg = f32(-1e4)

    def shifted(z):
        # z[t-1] and z[t+1] with zero padding at segment boundaries (k=3 "same" conv).
        zrow = jnp.zeros((1, z.shape[1]), f32)
        zp = jnp.concatenate([zrow, z, zrow], axis=0)      # (BT+2, C)
        return zp[:-2] * prev_edge, zp[2:] * next_edge     # prev, next

    # Encoder entry mask (TextEncoder passes x*x_mask; Encoder re-masks — idempotent).
    x = x * m

    for l in range(N_TOTAL_LAYERS):                        # python-unrolled (3 layers)
        # -------- multi-head self-attention with relative positions ---------
        qkv = (jnp.dot(x.astype(bf16), wqkv_ref[l],
                       preferred_element_type=f32) + bqkv_ref[l])     # (BT, 3C)
        q_all = (qkv[:, :HIDDEN] * inv_sqrt_d).astype(bf16)            # scaled q, all heads
        # relative-key logits for every head in one push (block-diag rel weight)
        rel_logits = jnp.dot(q_all, relk_ref[l],
                             preferred_element_type=f32)               # (BT, H*NW)
        relv_l = relv_ref[l]                                           # (NW, Dh)
        keep = amask_ref[...] > 0.0

        head_outs = []
        for hh in range(N_HEADS):
            q_h = q_all[:, hh * D_HEAD:(hh + 1) * D_HEAD]
            k_h = qkv[:, HIDDEN + hh * D_HEAD:
                      HIDDEN + (hh + 1) * D_HEAD].astype(bf16)
            v_h = qkv[:, 2 * HIDDEN + hh * D_HEAD:
                      2 * HIDDEN + (hh + 1) * D_HEAD].astype(bf16)

            # content scores  s[i,j] = q_i . k_j
            s = lax.dot_general(q_h, k_h, (((1,), (1,)), ((), ())),
                                preferred_element_type=f32)            # (BT,BT)
            # rel-key bias scatter via band one-hots (VPU slot)
            for n in range(NW):
                c0 = hh * NW + n
                s = s + rel_logits[:, c0:c0 + 1] * band_ref[n]

            # masked_fill(mask==0, -1e4) + softmax (exact divide)
            s = jnp.where(keep, s, neg)
            s = s - jnp.max(s, axis=-1, keepdims=True)
            e = jnp.exp(s)
            p = e / jnp.sum(e, axis=-1, keepdims=True)                 # f32

            o_h = jnp.dot(p.astype(bf16), v_h,
                          preferred_element_type=f32)                  # (BT, Dh)
            # rel-value contribution via the same band masks
            for n in range(NW):
                w_n = jnp.sum(p * band_ref[n], axis=-1, keepdims=True)  # (BT,1)
                o_h = o_h + w_n * relv_l[n:n + 1, :]
            head_outs.append(o_h)

        o_cat = jnp.concatenate(head_outs, axis=-1)                    # (BT, C)
        y = (jnp.dot(o_cat.astype(bf16), wo_ref[l],
                     preferred_element_type=f32) + bo_ref[l])
        x = _layer_norm(x + y, g1_ref[l], be1_ref[l])

        # -------- FFN: conv1d(k=3) -> relu -> conv1d(k=3), masked ------------
        xm = x * m
        xp, xn = shifted(xm)
        xcat = jnp.concatenate([xp, xm, xn], axis=-1).astype(bf16)     # (BT, 3C)
        h1 = jnp.dot(xcat, w1_ref[l], preferred_element_type=f32) + b1_ref[l]
        h1 = jnp.maximum(h1, 0.0)

        hm = h1 * m
        hp, hn = shifted(hm)
        hcat = jnp.concatenate([hp, hm, hn], axis=-1).astype(bf16)     # (BT, 3F)
        y = (jnp.dot(hcat, w2_ref[l], preferred_element_type=f32)
             + b2_ref[l]) * m
        x = _layer_norm(x + y, g2_ref[l], be2_ref[l])

        # end-of-Encoder masking: after encoder (l==1) and after encoder2 (l==2)
        if l in (N_LAYERS - 1, N_TOTAL_LAYERS - 1):
            x = x * m

    o_ref[...] = x


# ----------------------------------------------------------------------------
# pallas_call wrapper
# ----------------------------------------------------------------------------
def text_encoder_forward(params, x_tokens, x_lengths, g, tone, language):
    del g  # g / self.cond are never used in TextEncoder.forward

    f32, bf16 = jnp.float32, jnp.bfloat16
    Bb, Tt = x_tokens.shape
    BT = Bb * Tt
    scale = math.sqrt(HIDDEN)

    # embedding lookups (glue) — each embedding scaled by sqrt(hidden_channels)
    h = (jnp.take(params['emb'], x_tokens, axis=0)
         + jnp.take(params['emb_tone'], tone, axis=0)
         + jnp.take(params['emb_language'], language, axis=0)) * scale   # (B,T,C)
    x_flat = h.reshape(BT, HIDDEN).astype(f32)

    mask = (jnp.arange(Tt)[None, :] < x_lengths[:, None]).astype(f32)    # (B,T)
    m_flat = mask.reshape(BT, 1)

    # block-diagonal structure so the folded batch elements never interact
    same_batch = jnp.kron(jnp.eye(Bb, dtype=f32), jnp.ones((Tt, Tt), f32))  # (BT,BT)
    amask = (m_flat * m_flat.reshape(1, BT)) * same_batch

    idx = jnp.arange(BT)
    rel = idx[None, :] - idx[:, None]                                     # j - i
    band = (jnp.stack([(rel == (n - WINDOW)).astype(f32) for n in range(NW)], axis=0)
            * same_batch[None])                                           # (NW,BT,BT)

    t_in_seq = idx % Tt
    prev_edge = (t_in_seq != 0).astype(f32)[:, None]
    next_edge = (t_in_seq != Tt - 1).astype(f32)[:, None]
    edges = jnp.stack([prev_edge, next_edge], axis=0)                     # (2,BT,1)

    L = N_TOTAL_LAYERS
    # block-diagonal relative-key weight: q(all heads) @ relk_blk -> per-head logits
    relk_t = jnp.transpose(params['rel_k'], (0, 2, 1))                    # (L, Dh, NW)
    relk_blk = jnp.zeros((L, HIDDEN, N_HEADS * NW), f32)
    for hh in range(N_HEADS):
        relk_blk = relk_blk.at[:, hh * D_HEAD:(hh + 1) * D_HEAD,
                               hh * NW:(hh + 1) * NW].set(relk_t)

    # FFN conv taps stacked along the contraction axis (tap-major rows)
    w1_cat = params['w1'].reshape(L, KERNEL_SIZE * HIDDEN, FILTER)
    w2_cat = params['w2'].reshape(L, KERNEL_SIZE * FILTER, HIDDEN)

    weights = (params['wqkv'].astype(bf16), params['bqkv'],
               params['wo'].astype(bf16), params['bo'],
               relk_blk.astype(bf16), params['rel_v'],
               params['ln1_g'], params['ln1_b'],
               w1_cat.astype(bf16), params['b1'],
               w2_cat.astype(bf16), params['b2'],
               params['ln2_g'], params['ln2_b'])

    inputs = (x_flat, m_flat, amask, band, edges) + weights
    vmem_spec = pl.BlockSpec(memory_space=pltpu.MemorySpace.VMEM)

    # Single grid-less invocation: everything (~1 MiB) is VMEM resident.
    # TODO(synk): on v7x, benchmark the grid=(B,) dimension_semantics=("parallel",)
    # variant (one batch element per TensorCore) against this fused-batch version.
    out = pl.pallas_call(
        _encoder_stack_kernel,
        out_shape=jax.ShapeDtypeStruct((BT, HIDDEN), f32),
        in_specs=[vmem_spec] * len(inputs),
        out_specs=vmem_spec,
    )(*inputs)

    x_out = out.reshape(Bb, Tt, HIDDEN).transpose(0, 2, 1)                # (B,C,T)
    return x_out, mask[:, None, :]


# ----------------------------------------------------------------------------
# parameters
# ----------------------------------------------------------------------------
def init_params(key):
    keys = iter(jax.random.split(key, 64))

    def nrm(shape, std):
        return jax.random.normal(next(keys), shape, jnp.float32) * std

    emb_std = HIDDEN ** -0.5
    rel_std = D_HEAD ** -0.5
    L = N_TOTAL_LAYERS

    return {
        'emb': nrm((N_VOCAB, HIDDEN), emb_std),
        'emb_tone': nrm((N_TONE, HIDDEN), emb_std),
        'emb_language': nrm((N_LANGUAGE, HIDDEN), emb_std),
        # attention 1x1 convs packed as x[T,C] @ W -> [Q(heads) | K(heads) | V(heads)]
        # (W[:, 0:64] = conv_q.weight[:,:,0].T, etc.; heads are lane-contiguous)
        'wqkv': nrm((L, HIDDEN, 3 * HIDDEN), 0.05),
        'bqkv': nrm((L, 1, 3 * HIDDEN), 0.01),
        # output 1x1 conv: rows ordered like the head-major concat of head outputs
        'wo': nrm((L, HIDDEN, HIDDEN), 0.05),
        'bo': nrm((L, 1, HIDDEN), 0.01),
        # relative-position embeddings, shared across heads (heads_share=True)
        'rel_k': nrm((L, NW, D_HEAD), rel_std),
        'rel_v': nrm((L, NW, D_HEAD), rel_std),
        'ln1_g': jnp.ones((L, 1, HIDDEN), jnp.float32),
        'ln1_b': jnp.zeros((L, 1, HIDDEN), jnp.float32),
        # FFN convs stored tap-major [l, k, C_in, C_out]; tap 0 multiplies x[t-1]
        # (PyTorch Conv1d weight [C_out, C_in, k] transposed (2, 1, 0))
        'w1': nrm((L, KERNEL_SIZE, HIDDEN, FILTER), 0.05),
        'b1': nrm((L, 1, FILTER), 0.01),
        'w2': nrm((L, KERNEL_SIZE, FILTER, HIDDEN), 0.05),
        'b2': nrm((L, 1, HIDDEN), 0.01),
        'ln2_g': jnp.ones((L, 1, HIDDEN), jnp.float32),
        'ln2_b': jnp.zeros((L, 1, HIDDEN), jnp.float32),
        # declared in __init__ but unused in forward (self.cond, self.proj):
        'cond_w': nrm((HIDDEN, 256), 0.05),
        'cond_b': jnp.zeros((1, HIDDEN), jnp.float32),
        'proj_w': nrm((OUT_CHANNELS * 2, HIDDEN), 0.05),
        'proj_b': jnp.zeros((1, OUT_CHANNELS * 2), jnp.float32),
    }


# ----------------------------------------------------------------------------
if __name__ == "__main__":
    key = jax.random.PRNGKey(0)
    pkey, dkey = jax.random.split(key)
    params = init_params(pkey)

    k1, k2, k3, k4 = jax.random.split(dkey, 4)
    tokens = jax.random.randint(k1, (B, T), 0, N_VOCAB, dtype=jnp.int32)
    tone = jax.random.randint(k2, (B, T), 0, N_TONE, dtype=jnp.int32)
    language = jax.random.randint(k3, (B, T), 0, N_LANGUAGE, dtype=jnp.int32)
    g = jax.random.normal(k4, (B, 256, 1), jnp.float32)      # unused in forward
    x_lengths = jnp.array([T, 11], dtype=jnp.int32)

    fwd = jax.jit(text_encoder_forward)
    x_out, x_mask = fwd(params, tokens, x_lengths, g, tone, language)
    jax.block_until_ready((x_out, x_mask))

    assert x_out.shape == (B, HIDDEN, T)
    assert x_mask.shape == (B, 1, T)
    assert bool(jnp.all(jnp.isfinite(x_out)))
    print("KERNEL_OK")
</pallas_src>

<mosaic_0001>
module attributes {stable_mosaic.version = 11 : i64} {
  func.func @_encoder_stack_kernel(%arg0: memref<32x64xf32, #tpu.memory_space<vmem>>, %arg1: memref<32x1xf32, #tpu.memory_space<vmem>>, %arg2: memref<32x32xf32, #tpu.memory_space<vmem>>, %arg3: memref<9x32x32xf32, #tpu.memory_space<vmem>>, %arg4: memref<2x32x1xf32, #tpu.memory_space<vmem>>, %arg5: memref<3x64x192xbf16, #tpu.memory_space<vmem>>, %arg6: memref<3x1x192xf32, #tpu.memory_space<vmem>>, %arg7: memref<3x64x64xbf16, #tpu.memory_space<vmem>>, %arg8: memref<3x1x64xf32, #tpu.memory_space<vmem>>, %arg9: memref<3x64x18xbf16, #tpu.memory_space<vmem>>, %arg10: memref<3x9x32xf32, #tpu.memory_space<vmem>>, %arg11: memref<3x1x64xf32, #tpu.memory_space<vmem>>, %arg12: memref<3x1x64xf32, #tpu.memory_space<vmem>>, %arg13: memref<3x192x128xbf16, #tpu.memory_space<vmem>>, %arg14: memref<3x1x128xf32, #tpu.memory_space<vmem>>, %arg15: memref<3x384x64xbf16, #tpu.memory_space<vmem>>, %arg16: memref<3x1x64xf32, #tpu.memory_space<vmem>>, %arg17: memref<3x1x64xf32, #tpu.memory_space<vmem>>, %arg18: memref<3x1x64xf32, #tpu.memory_space<vmem>>, %arg19: memref<32x64xf32, #tpu.memory_space<vmem>>) attributes {dimension_semantics = [], scalar_prefetch = 0 : i64, scratch_operands = 0 : i64, tpu.core_type = #tpu.core_type<tc>} {
    %c0 = arith.constant 0 : index
    %c0_0 = arith.constant 0 : index
    %0 = vector.load %arg0[%c0, %c0_0] : memref<32x64xf32, #tpu.memory_space<vmem>>, vector<32x64xf32>
    %c0_1 = arith.constant 0 : index
    %c0_2 = arith.constant 0 : index
    %1 = vector.load %arg1[%c0_1, %c0_2] : memref<32x1xf32, #tpu.memory_space<vmem>>, vector<32x1xf32>
    %c0_3 = arith.constant 0 : index
    %c0_4 = arith.constant 0 : index
    %c0_5 = arith.constant 0 : index
    %2 = vector.load %arg4[%c0_3, %c0_4, %c0_5] : memref<2x32x1xf32, #tpu.memory_space<vmem>>, vector<1x32x1xf32>
    %3 = vector.shape_cast %2 : vector<1x32x1xf32> to vector<32x1xf32>
    %c1 = arith.constant 1 : index
    %c0_6 = arith.constant 0 : index
    %c0_7 = arith.constant 0 : index
    %4 = vector.load %arg4[%c1, %c0_6, %c0_7] : memref<2x32x1xf32, #tpu.memory_space<vmem>>, vector<1x32x1xf32>
    %5 = vector.shape_cast %4 : vector<1x32x1xf32> to vector<32x1xf32>
    %6 = vector.broadcast %1 : vector<32x1xf32> to vector<32x64xf32>
    %7 = arith.mulf %0, %6 : vector<32x64xf32>
    %8 = arith.truncf %7 : vector<32x64xf32> to vector<32x64xbf16>
    %c0_8 = arith.constant 0 : index
    %c0_9 = arith.constant 0 : index
    %c0_10 = arith.constant 0 : index
    %9 = vector.load %arg5[%c0_8, %c0_9, %c0_10] : memref<3x64x192xbf16, #tpu.memory_space<vmem>>, vector<1x64x192xbf16>
    %10 = vector.shape_cast %9 : vector<1x64x192xbf16> to vector<64x192xbf16>
    %cst = arith.constant dense<0.000000e+00> : vector<32x192xf32>
    %11 = tpu.matmul %8, %10, %cst {dimension_numbers = #tpu.dot_dimension_numbers<[1], [0], [0], [1], [0, 0, 1, 1], [], []>} : vector<32x64xbf16>, vector<64x192xbf16>, vector<32x192xf32> -> vector<32x192xf32>
    %c0_11 = arith.constant 0 : index
    %c0_12 = arith.constant 0 : index
    %c0_13 = arith.constant 0 : index
    %12 = vector.load %arg6[%c0_11, %c0_12, %c0_13] : memref<3x1x192xf32, #tpu.memory_space<vmem>>, vector<1x1x192xf32>
    %13 = vector.shape_cast %12 : vector<1x1x192xf32> to vector<1x192xf32>
    %14 = vector.broadcast %13 : vector<1x192xf32> to vector<32x192xf32>
    %15 = arith.addf %11, %14 : vector<32x192xf32>
    %16 = vector.extract_strided_slice %15 {offsets = [0, 0], sizes = [32, 64], strides = [1, 1]} : vector<32x192xf32> to vector<32x64xf32>
    %cst_14 = arith.constant 0.176776692 : f32
    %17 = vector.broadcast %cst_14 : f32 to vector<32x64xf32>
    %18 = arith.mulf %16, %17 : vector<32x64xf32>
    %19 = arith.truncf %18 : vector<32x64xf32> to vector<32x64xbf16>
    %c0_15 = arith.constant 0 : index
    %c0_16 = arith.constant 0 : index
    %c0_17 = arith.constant 0 : index
    %20 = vector.load %arg9[%c0_15, %c0_16, %c0_17] : memref<3x64x18xbf16, #tpu.memory_space<vmem>>, vector<1x64x18xbf16>
    %21 = vector.shape_cast %20 : vector<1x64x18xbf16> to vector<64x18xbf16>
    %cst_18 = arith.constant dense<0.000000e+00> : vector<32x18xf32>
    %22 = tpu.matmul %19, %21, %cst_18 {dimension_numbers = #tpu.dot_dimension_numbers<[1], [0], [0], [1], [0, 0, 1, 1], [], []>} : vector<32x64xbf16>, vector<64x18xbf16>, vector<32x18xf32> -> vector<32x18xf32>
    %c0_19 = arith.constant 0 : index
    %c0_20 = arith.constant 0 : index
    %c0_21 = arith.constant 0 : index
    %23 = vector.load %arg10[%c0_19, %c0_20, %c0_21] : memref<3x9x32xf32, #tpu.memory_space<vmem>>, vector<1x9x32xf32>
    %24 = vector.shape_cast %23 : vector<1x9x32xf32> to vector<9x32xf32>
    %c0_22 = arith.constant 0 : index
    %c0_23 = arith.constant 0 : index
    %25 = vector.load %arg2[%c0_22, %c0_23] : memref<32x32xf32, #tpu.memory_space<vmem>>, vector<32x32xf32>
    %cst_24 = arith.constant 0.000000e+00 : f32
    %26 = vector.broadcast %cst_24 : f32 to vector<32x32xf32>
    %27 = arith.cmpf ogt, %25, %26 : vector<32x32xf32>
    %28 = vector.extract_strided_slice %19 {offsets = [0, 0], sizes = [32, 32], strides = [1, 1]} : vector<32x64xbf16> to vector<32x32xbf16>
    %29 = vector.extract_strided_slice %15 {offsets = [0, 64], sizes = [32, 32], strides = [1, 1]} : vector<32x192xf32> to vector<32x32xf32>
    %30 = arith.truncf %29 : vector<32x32xf32> to vector<32x32xbf16>
    %31 = vector.extract_strided_slice %15 {offsets = [0, 128], sizes = [32, 32], strides = [1, 1]} : vector<32x192xf32> to vector<32x32xf32>
    %32 = arith.truncf %31 : vector<32x32xf32> to vector<32x32xbf16>
    %cst_25 = arith.constant dense<0.000000e+00> : vector<32x32xf32>
    %33 = tpu.matmul %28, %30, %cst_25 {dimension_numbers = #tpu.dot_dimension_numbers<[1], [1], [0], [0], [0, 0, 1, 0], [], []>} : vector<32x32xbf16>, vector<32x32xbf16>, vector<32x32xf32> -> vector<32x32xf32>
    %34 = vector.extract_strided_slice %22 {offsets = [0, 0], sizes = [32, 1], strides = [1, 1]} : vector<32x18xf32> to vector<32x1xf32>
    %c0_26 = arith.constant 0 : index
    %c0_27 = arith.constant 0 : index
    %c0_28 = arith.constant 0 : index
    %35 = vector.load %arg3[%c0_26, %c0_27, %c0_28] : memref<9x32x32xf32, #tpu.memory_space<vmem>>, vector<1x32x32xf32>
    %36 = vector.shape_cast %35 : vector<1x32x32xf32> to vector<32x32xf32>
    %37 = vector.broadcast %34 : vector<32x1xf32> to vector<32x32xf32>
    %38 = arith.mulf %37, %36 : vector<32x32xf32>
    %39 = arith.addf %33, %38 : vector<32x32xf32>
    %40 = vector.extract_strided_slice %22 {offsets = [0, 1], sizes = [32, 1], strides = [1, 1]} : vector<32x18xf32> to vector<32x1xf32>
    %c1_29 = arith.constant 1 : index
    %c0_30 = arith.constant 0 : index
    %c0_31 = arith.constant 0 : index
    %41 = vector.load %arg3[%c1_29, %c0_30, %c0_31] : memref<9x32x32xf32, #tpu.memory_space<vmem>>, vector<1x32x32xf32>
    %42 = vector.shape_cast %41 : vector<1x32x32xf32> to vector<32x32xf32>
    %43 = vector.broadcast %40 : vector<32x1xf32> to vector<32x32xf32>
    %44 = arith.mulf %43, %42 : vector<32x32xf32>
    %45 = arith.addf %39, %44 : vector<32x32xf32>
    %46 = vector.extract_strided_slice %22 {offsets = [0, 2], sizes = [32, 1], strides = [1, 1]} : vector<32x18xf32> to vector<32x1xf32>
    %c2 = arith.constant 2 : index
    %c0_32 = arith.constant 0 : index
    %c0_33 = arith.constant 0 : index
    %47 = vector.load %arg3[%c2, %c0_32, %c0_33] : memref<9x32x32xf32, #tpu.memory_space<vmem>>, vector<1x32x32xf32>
    %48 = vector.shape_cast %47 : vector<1x32x32xf32> to vector<32x32xf32>
    %49 = vector.broadcast %46 : vector<32x1xf32> to vector<32x32xf32>
    %50 = arith.mulf %49, %48 : vector<32x32xf32>
    %51 = arith.addf %45, %50 : vector<32x32xf32>
    %52 = vector.extract_strided_slice %22 {offsets = [0, 3], sizes = [32, 1], strides = [1, 1]} : vector<32x18xf32> to vector<32x1xf32>
    %c3 = arith.constant 3 : index
    %c0_34 = arith.constant 0 : index
    %c0_35 = arith.constant 0 : index
    %53 = vector.load %arg3[%c3, %c0_34, %c0_35] : memref<9x32x32xf32, #tpu.memory_space<vmem>>, vector<1x32x32xf32>
    %54 = vector.shape_cast %53 : vector<1x32x32xf32> to vector<32x32xf32>
    %55 = vector.broadcast %52 : vector<32x1xf32> to vector<32x32xf32>
    %56 = arith.mulf %55, %54 : vector<32x32xf32>
    %57 = arith.addf %51, %56 : vector<32x32xf32>
    %58 = vector.extract_strided_slice %22 {offsets = [0, 4], sizes = [32, 1], strides = [1, 1]} : vector<32x18xf32> to vector<32x1xf32>
    %c4 = arith.constant 4 : index
    %c0_36 = arith.constant 0 : index
    %c0_37 = arith.constant 0 : index
    %59 = vector.load %arg3[%c4, %c0_36, %c0_37] : memref<9x32x32xf32, #tpu.memory_space<vmem>>, vector<1x32x32xf32>
    %60 = vector.shape_cast %59 : vector<1x32x32xf32> to vector<32x32xf32>
    %61 = vector.broadcast %58 : vector<32x1xf32> to vector<32x32xf32>
    %62 = arith.mulf %61, %60 : vector<32x32xf32>
    %63 = arith.addf %57, %62 : vector<32x32xf32>
    %64 = vector.extract_strided_slice %22 {offsets = [0, 5], sizes = [32, 1], strides = [1, 1]} : vector<32x18xf32> to vector<32x1xf32>
    %c5 = arith.constant 5 : index
    %c0_38 = arith.constant 0 : index
    %c0_39 = arith.constant 0 : index
    %65 = vector.load %arg3[%c5, %c0_38, %c0_39] : memref<9x32x32xf32, #tpu.memory_space<vmem>>, vector<1x32x32xf32>
    %66 = vector.shape_cast %65 : vector<1x32x32xf32> to vector<32x32xf32>
    %67 = vector.broadcast %64 : vector<32x1xf32> to vector<32x32xf32>
    %68 = arith.mulf %67, %66 : vector<32x32xf32>
    %69 = arith.addf %63, %68 : vector<32x32xf32>
    %70 = vector.extract_strided_slice %22 {offsets = [0, 6], sizes = [32, 1], strides = [1, 1]} : vector<32x18xf32> to vector<32x1xf32>
    %c6 = arith.constant 6 : index
    %c0_40 = arith.constant 0 : index
    %c0_41 = arith.constant 0 : index
    %71 = vector.load %arg3[%c6, %c0_40, %c0_41] : memref<9x32x32xf32, #tpu.memory_space<vmem>>, vector<1x32x32xf32>
    %72 = vector.shape_cast %71 : vector<1x32x32xf32> to vector<32x32xf32>
    %73 = vector.broadcast %70 : vector<32x1xf32> to vector<32x32xf32>
    %74 = arith.mulf %73, %72 : vector<32x32xf32>
    %75 = arith.addf %69, %74 : vector<32x32xf32>
    %76 = vector.extract_strided_slice %22 {offsets = [0, 7], sizes = [32, 1], strides = [1, 1]} : vector<32x18xf32> to vector<32x1xf32>
    %c7 = arith.constant 7 : index
    %c0_42 = arith.constant 0 : index
    %c0_43 = arith.constant 0 : index
    %77 = vector.load %arg3[%c7, %c0_42, %c0_43] : memref<9x32x32xf32, #tpu.memory_space<vmem>>, vector<1x32x32xf32>
    %78 = vector.shape_cast %77 : vector<1x32x32xf32> to vector<32x32xf32>
    %79 = vector.broadcast %76 : vector<32x1xf32> to vector<32x32xf32>
    %80 = arith.mulf %79, %78 : vector<32x32xf32>
    %81 = arith.addf %75, %80 : vector<32x32xf32>
    %82 = vector.extract_strided_slice %22 {offsets = [0, 8], sizes = [32, 1], strides = [1, 1]} : vector<32x18xf32> to vector<32x1xf32>
    %c8 = arith.constant 8 : index
    %c0_44 = arith.constant 0 : index
    %c0_45 = arith.constant 0 : index
    %83 = vector.load %arg3[%c8, %c0_44, %c0_45] : memref<9x32x32xf32, #tpu.memory_space<vmem>>, vector<1x32x32xf32>
    %84 = vector.shape_cast %83 : vector<1x32x32xf32> to vector<32x32xf32>
    %85 = vector.broadcast %82 : vector<32x1xf32> to vector<32x32xf32>
    %86 = arith.mulf %85, %84 : vector<32x32xf32>
    %87 = arith.addf %81, %86 : vector<32x32xf32>
    %cst_46 = arith.constant -1.000000e+04 : f32
    %88 = vector.broadcast %cst_46 : f32 to vector<32x32xf32>
    %89 = arith.select %27, %87, %88 : vector<32x32xi1>, vector<32x32xf32>
    %cst_47 = arith.constant dense<0xFF800000> : vector<32xf32>
    %90 = vector.multi_reduction <maximumf>, %89, %cst_47 [1] : vector<32x32xf32> to vector<32xf32>
    %91 = vector.shape_cast %90 : vector<32xf32> to vector<32x1xf32>
    %92 = vector.broadcast %91 : vector<32x1xf32> to vector<32x32xf32>
    %93 = arith.subf %89, %92 : vector<32x32xf32>
    %94 = math.exp %93 : vector<32x32xf32>
    %cst_48 = arith.constant dense<0.000000e+00> : vector<32xf32>
    %95 = vector.multi_reduction <add>, %94, %cst_48 [1] : vector<32x32xf32> to vector<32xf32>
    %96 = vector.shape_cast %95 : vector<32xf32> to vector<32x1xf32>
    %97 = vector.broadcast %96 : vector<32x1xf32> to vector<32x32xf32>
    %98 = arith.divf %94, %97 : vector<32x32xf32>
    %99 = arith.truncf %98 : vector<32x32xf32> to vector<32x32xbf16>
    %cst_49 = arith.constant dense<0.000000e+00> : vector<32x32xf32>
    %100 = tpu.matmul %99, %32, %cst_49 {dimension_numbers = #tpu.dot_dimension_numbers<[1], [0], [0], [1], [0, 0, 1, 1], [], []>} : vector<32x32xbf16>, vector<32x32xbf16>, vector<32x32xf32> -> vector<32x32xf32>
    %c0_50 = arith.constant 0 : index
    %c0_51 = arith.constant 0 : index
    %c0_52 = arith.constant 0 : index
    %101 = vector.load %arg3[%c0_50, %c0_51, %c0_52] : memref<9x32x32xf32, #tpu.memory_space<vmem>>, vector<1x32x32xf32>
    %102 = vector.shape_cast %101 : vector<1x32x32xf32> to vector<32x32xf32>
    %103 = arith.mulf %98, %102 : vector<32x32xf32>
    %cst_53 = arith.constant dense<0.000000e+00> : vector<32xf32>
    %104 = vector.multi_reduction <add>, %103, %cst_53 [1] : vector<32x32xf32> to vector<32xf32>
    %105 = vector.shape_cast %104 : vector<32xf32> to vector<32x1xf32>
    %106 = vector.extract_strided_slice %24 {offsets = [0, 0], sizes = [1, 32], strides = [1, 1]} : vector<9x32xf32> to vector<1x32xf32>
    %107 = vector.broadcast %105 : vector<32x1xf32> to vector<32x32xf32>
    %108 = vector.broadcast %106 : vector<1x32xf32> to vector<32x32xf32>
    %109 = arith.mulf %107, %108 : vector<32x32xf32>
    %110 = arith.addf %100, %109 : vector<32x32xf32>
    %c1_54 = arith.constant 1 : index
    %c0_55 = arith.constant 0 : index
    %c0_56 = arith.constant 0 : index
    %111 = vector.load %arg3[%c1_54, %c0_55, %c0_56] : memref<9x32x32xf32, #tpu.memory_space<vmem>>, vector<1x32x32xf32>
    %112 = vector.shape_cast %111 : vector<1x32x32xf32> to vector<32x32xf32>
    %113 = arith.mulf %98, %112 : vector<32x32xf32>
    %cst_57 = arith.constant dense<0.000000e+00> : vector<32xf32>
    %114 = vector.multi_reduction <add>, %113, %cst_57 [1] : vector<32x32xf32> to vector<32xf32>
    %115 = vector.shape_cast %114 : vector<32xf32> to vector<32x1xf32>
    %116 = vector.extract_strided_slice %24 {offsets = [1, 0], sizes = [1, 32], strides = [1, 1]} : vector<9x32xf32> to vector<1x32xf32>
    %117 = vector.broadcast %115 : vector<32x1xf32> to vector<32x32xf32>
    %118 = vector.broadcast %116 : vector<1x32xf32> to vector<32x32xf32>
    %119 = arith.mulf %117, %118 : vector<32x32xf32>
    %120 = arith.addf %110, %119 : vector<32x32xf32>
    %c2_58 = arith.constant 2 : index
    %c0_59 = arith.constant 0 : index
    %c0_60 = arith.constant 0 : index
    %121 = vector.load %arg3[%c2_58, %c0_59, %c0_60] : memref<9x32x32xf32, #tpu.memory_space<vmem>>, vector<1x32x32xf32>
    %122 = vector.shape_cast %121 : vector<1x32x32xf32> to vector<32x32xf32>
    %123 = arith.mulf %98, %122 : vector<32x32xf32>
    %cst_61 = arith.constant dense<0.000000e+00> : vector<32xf32>
    %124 = vector.multi_reduction <add>, %123, %cst_61 [1] : vector<32x32xf32> to vector<32xf32>
    %125 = vector.shape_cast %124 : vector<32xf32> to vector<32x1xf32>
    %126 = vector.extract_strided_slice %24 {offsets = [2, 0], sizes = [1, 32], strides = [1, 1]} : vector<9x32xf32> to vector<1x32xf32>
    %127 = vector.broadcast %125 : vector<32x1xf32> to vector<32x32xf32>
    %128 = vector.broadcast %126 : vector<1x32xf32> to vector<32x32xf32>
    %129 = arith.mulf %127, %128 : vector<32x32xf32>
    %130 = arith.addf %120, %129 : vector<32x32xf32>
    %c3_62 = arith.constant 3 : index
    %c0_63 = arith.constant 0 : index
    %c0_64 = arith.constant 0 : index
    %131 = vector.load %arg3[%c3_62, %c0_63, %c0_64] : memref<9x32x32xf32, #tpu.memory_space<vmem>>, vector<1x32x32xf32>
    %132 = vector.shape_cast %131 : vector<1x32x32xf32> to vector<32x32xf32>
    %133 = arith.mulf %98, %132 : vector<32x32xf32>
    %cst_65 = arith.constant dense<0.000000e+00> : vector<32xf32>
    %134 = vector.multi_reduction <add>, %133, %cst_65 [1] : vector<32x32xf32> to vector<32xf32>
    %135 = vector.shape_cast %134 : vector<32xf32> to vector<32x1xf32>
    %136 = vector.extract_strided_slice %24 {offsets = [3, 0], sizes = [1, 32], strides = [1, 1]} : vector<9x32xf32> to vector<1x32xf32>
    %137 = vector.broadcast %135 : vector<32x1xf32> to vector<32x32xf32>
    %138 = vector.broadcast %136 : vector<1x32xf32> to vector<32x32xf32>
    %139 = arith.mulf %137, %138 : vector<32x32xf32>
    %140 = arith.addf %130, %139 : vector<32x32xf32>
    %c4_66 = arith.constant 4 : index
    %c0_67 = arith.constant 0 : index
    %c0_68 = arith.constant 0 : index
    %141 = vector.load %arg3[%c4_66, %c0_67, %c0_68] : memref<9x32x32xf32, #tpu.memory_space<vmem>>, vector<1x32x32xf32>
    %142 = vector.shape_cast %141 : vector<1x32x32xf32> to vector<32x32xf32>
    %143 = arith.mulf %98, %142 : vector<32x32xf32>
    %cst_69 = arith.constant dense<0.000000e+00> : vector<32xf32>
    %144 = vector.multi_reduction <add>, %143, %cst_69 [1] : vector<32x32xf32> to vector<32xf32>
    %145 = vector.shape_cast %144 : vector<32xf32> to vector<32x1xf32>
    %146 = vector.extract_strided_slice %24 {offsets = [4, 0], sizes = [1, 32], strides = [1, 1]} : vector<9x32xf32> to vector<1x32xf32>
    %147 = vector.broadcast %145 : vector<32x1xf32> to vector<32x32xf32>
    %148 = vector.broadcast %146 : vector<1x32xf32> to vector<32x32xf32>
    %149 = arith.mulf %147, %148 : vector<32x32xf32>
    %150 = arith.addf %140, %149 : vector<32x32xf32>
    %c5_70 = arith.constant 5 : index
    %c0_71 = arith.constant 0 : index
    %c0_72 = arith.constant 0 : index
    %151 = vector.load %arg3[%c5_70, %c0_71, %c0_72] : memref<9x32x32xf32, #tpu.memory_space<vmem>>, vector<1x32x32xf32>
    %152 = vector.shape_cast %151 : vector<1x32x32xf32> to vector<32x32xf32>
    %153 = arith.mulf %98, %152 : vector<32x32xf32>
    %cst_73 = arith.constant dense<0.000000e+00> : vector<32xf32>
    %154 = vector.multi_reduction <add>, %153, %cst_73 [1] : vector<32x32xf32> to vector<32xf32>
    %155 = vector.shape_cast %154 : vector<32xf32> to vector<32x1xf32>
    %156 = vector.extract_strided_slice %24 {offsets = [5, 0], sizes = [1, 32], strides = [1, 1]} : vector<9x32xf32> to vector<1x32xf32>
    %157 = vector.broadcast %155 : vector<32x1xf32> to vector<32x32xf32>
    %158 = vector.broadcast %156 : vector<1x32xf32> to vector<32x32xf32>
    %159 = arith.mulf %157, %158 : vector<32x32xf32>
    %160 = arith.addf %150, %159 : vector<32x32xf32>
    %c6_74 = arith.constant 6 : index
    %c0_75 = arith.constant 0 : index
    %c0_76 = arith.constant 0 : index
    %161 = vector.load %arg3[%c6_74, %c0_75, %c0_76] : memref<9x32x32xf32, #tpu.memory_space<vmem>>, vector<1x32x32xf32>
    %162 = vector.shape_cast %161 : vector<1x32x32xf32> to vector<32x32xf32>
    %163 = arith.mulf %98, %162 : vector<32x32xf32>
    %cst_77 = arith.constant dense<0.000000e+00> : vector<32xf32>
    %164 = vector.multi_reduction <add>, %163, %cst_77 [1] : vector<32x32xf32> to vector<32xf32>
    %165 = vector.shape_cast %164 : vector<32xf32> to vector<32x1xf32>
    %166 = vector.extract_strided_slice %24 {offsets = [6, 0], sizes = [1, 32], strides = [1, 1]} : vector<9x32xf32> to vector<1x32xf32>
    %167 = vector.broadcast %165 : vector<32x1xf32> to vector<32x32xf32>
    %168 = vector.broadcast %166 : vector<1x32xf32> to vector<32x32xf32>
    %169 = arith.mulf %167, %168 : vector<32x32xf32>
    %170 = arith.addf %160, %169 : vector<32x32xf32>
    %c7_78 = arith.constant 7 : index
    %c0_79 = arith.constant 0 : index
    %c0_80 = arith.constant 0 : index
    %171 = vector.load %arg3[%c7_78, %c0_79, %c0_80] : memref<9x32x32xf32, #tpu.memory_space<vmem>>, vector<1x32x32xf32>
    %172 = vector.shape_cast %171 : vector<1x32x32xf32> to vector<32x32xf32>
    %173 = arith.mulf %98, %172 : vector<32x32xf32>
    %cst_81 = arith.constant dense<0.000000e+00> : vector<32xf32>
    %174 = vector.multi_reduction <add>, %173, %cst_81 [1] : vector<32x32xf32> to vector<32xf32>
    %175 = vector.shape_cast %174 : vector<32xf32> to vector<32x1xf32>
    %176 = vector.extract_strided_slice %24 {offsets = [7, 0], sizes = [1, 32], strides = [1, 1]} : vector<9x32xf32> to vector<1x32xf32>
    %177 = vector.broadcast %175 : vector<32x1xf32> to vector<32x32xf32>
    %178 = vector.broadcast %176 : vector<1x32xf32> to vector<32x32xf32>
    %179 = arith.mulf %177, %178 : vector<32x32xf32>
    %180 = arith.addf %170, %179 : vector<32x32xf32>
    %c8_82 = arith.constant 8 : index
    %c0_83 = arith.constant 0 : index
    %c0_84 = arith.constant 0 : index
    %181 = vector.load %arg3[%c8_82, %c0_83, %c0_84] : memref<9x32x32xf32, #tpu.memory_space<vmem>>, vector<1x32x32xf32>
    %182 = vector.shape_cast %181 : vector<1x32x32xf32> to vector<32x32xf32>
    %183 = arith.mulf %98, %182 : vector<32x32xf32>
    %cst_85 = arith.constant dense<0.000000e+00> : vector<32xf32>
    %184 = vector.multi_reduction <add>, %183, %cst_85 [1] : vector<32x32xf32> to vector<32xf32>
    %185 = vector.shape_cast %184 : vector<32xf32> to vector<32x1xf32>
    %186 = vector.extract_strided_slice %24 {offsets = [8, 0], sizes = [1, 32], strides = [1, 1]} : vector<9x32xf32> to vector<1x32xf32>
    %187 = vector.broadcast %185 : vector<32x1xf32> to vector<32x32xf32>
    %188 = vector.broadcast %186 : vector<1x32xf32> to vector<32x32xf32>
    %189 = arith.mulf %187, %188 : vector<32x32xf32>
    %190 = arith.addf %180, %189 : vector<32x32xf32>
    %191 = vector.extract_strided_slice %19 {offsets = [0, 32], sizes = [32, 32], strides = [1, 1]} : vector<32x64xbf16> to vector<32x32xbf16>
    %192 = vector.extract_strided_slice %15 {offsets = [0, 96], sizes = [32, 32], strides = [1, 1]} : vector<32x192xf32> to vector<32x32xf32>
    %193 = arith.truncf %192 : vector<32x32xf32> to vector<32x32xbf16>
    %194 = vector.extract_strided_slice %15 {offsets = [0, 160], sizes = [32, 32], strides = [1, 1]} : vector<32x192xf32> to vector<32x32xf32>
    %195 = arith.truncf %194 : vector<32x32xf32> to vector<32x32xbf16>
    %cst_86 = arith.constant dense<0.000000e+00> : vector<32x32xf32>
    %196 = tpu.matmul %191, %193, %cst_86 {dimension_numbers = #tpu.dot_dimension_numbers<[1], [1], [0], [0], [0, 0, 1, 0], [], []>} : vector<32x32xbf16>, vector<32x32xbf16>, vector<32x32xf32> -> vector<32x32xf32>
    %197 = vector.extract_strided_slice %22 {offsets = [0, 9], sizes = [32, 1], strides = [1, 1]} : vector<32x18xf32> to vector<32x1xf32>
    %c0_87 = arith.constant 0 : index
    %c0_88 = arith.constant 0 : index
    %c0_89 = arith.constant 0 : index
    %198 = vector.load %arg3[%c0_87, %c0_88, %c0_89] : memref<9x32x32xf32, #tpu.memory_space<vmem>>, vector<1x32x32xf32>
    %199 = vector.shape_cast %198 : vector<1x32x32xf32> to vector<32x32xf32>
    %200 = vector.broadcast %197 : vector<32x1xf32> to vector<32x32xf32>
    %201 = arith.mulf %200, %199 : vector<32x32xf32>
    %202 = arith.addf %196, %201 : vector<32x32xf32>
    %203 = vector.extract_strided_slice %22 {offsets = [0, 10], sizes = [32, 1], strides = [1, 1]} : vector<32x18xf32> to vector<32x1xf32>
    %c1_90 = arith.constant 1 : index
    %c0_91 = arith.constant 0 : index
    %c0_92 = arith.constant 0 : index
    %204 = vector.load %arg3[%c1_90, %c0_91, %c0_92] : memref<9x32x32xf32, #tpu.memory_space<vmem>>, vector<1x32x32xf32>
    %205 = vector.shape_cast %204 : vector<1x32x32xf32> to vector<32x32xf32>
    %206 = vector.broadcast %203 : vector<32x1xf32> to vector<32x32xf32>
    %207 = arith.mulf %206, %205 : vector<32x32xf32>
    %208 = arith.addf %202, %207 : vector<32x32xf32>
    %209 = vector.extract_strided_slice %22 {offsets = [0, 11], sizes = [32, 1], strides = [1, 1]} : vector<32x18xf32> to vector<32x1xf32>
    %c2_93 = arith.constant 2 : index
    %c0_94 = arith.constant 0 : index
    %c0_95 = arith.constant 0 : index
    %210 = vector.load %arg3[%c2_93, %c0_94, %c0_95] : memref<9x32x32xf32, #tpu.memory_space<vmem>>, vector<1x32x32xf32>
    %211 = vector.shape_cast %210 : vector<1x32x32xf32> to vector<32x32xf32>
    %212 = vector.broadcast %209 : vector<32x1xf32> to vector<32x32xf32>
    %213 = arith.mulf %212, %211 : vector<32x32xf32>
    %214 = arith.addf %208, %213 : vector<32x32xf32>
    %215 = vector.extract_strided_slice %22 {offsets = [0, 12], sizes = [32, 1], strides = [1, 1]} : vector<32x18xf32> to vector<32x1xf32>
    %c3_96 = arith.constant 3 : index
    %c0_97 = arith.constant 0 : index
    %c0_98 = arith.constant 0 : index
    %216 = vector.load %arg3[%c3_96, %c0_97, %c0_98] : memref<9x32x32xf32, #tpu.memory_space<vmem>>, vector<1x32x32xf32>
    %217 = vector.shape_cast %216 : vector<1x32x32xf32> to vector<32x32xf32>
    %218 = vector.broadcast %215 : vector<32x1xf32> to vector<32x32xf32>
    %219 = arith.mulf %218, %217 : vector<32x32xf32>
    %220 = arith.addf %214, %219 : vector<32x32xf32>
    %221 = vector.extract_strided_slice %22 {offsets = [0, 13], sizes = [32, 1], strides = [1, 1]} : vector<32x18xf32> to vector<32x1xf32>
    %c4_99 = arith.constant 4 : index
    %c0_100 = arith.constant 0 : index
    %c0_101 = arith.constant 0 : index
    %222 = vector.load %arg3[%c4_99, %c0_100, %c0_101] : memref<9x32x32xf32, #tpu.memory_space<vmem>>, vector<1x32x32xf32>
    %223 = vector.shape_cast %222 : vector<1x32x32xf32> to vector<32x32xf32>
    %224 = vector.broadcast %221 : vector<32x1xf32> to vector<32x32xf32>
    %225 = arith.mulf %224, %223 : vector<32x32xf32>
    %226 = arith.addf %220, %225 : vector<32x32xf32>
    %227 = vector.extract_strided_slice %22 {offsets = [0, 14], sizes = [32, 1], strides = [1, 1]} : vector<32x18xf32> to vector<32x1xf32>
    %c5_102 = arith.constant 5 : index
    %c0_103 = arith.constant 0 : index
    %c0_104 = arith.constant 0 : index
    %228 = vector.load %arg3[%c5_102, %c0_103, %c0_104] : memref<9x32x32xf32, #tpu.memory_space<vmem>>, vector<1x32x32xf32>
    %229 = vector.shape_cast %228 : vector<1x32x32xf32> to vector<32x32xf32>
    %230 = vector.broadcast %227 : vector<32x1xf32> to vector<32x32xf32>
    %231 = arith.mulf %230, %229 : vector<32x32xf32>
    %232 = arith.addf %226, %231 : vector<32x32xf32>
    %233 = vector.extract_strided_slice %22 {offsets = [0, 15], sizes = [32, 1], strides = [1, 1]} : vector<32x18xf32> to vector<32x1xf32>
    %c6_105 = arith.constant 6 : index
    %c0_106 = arith.constant 0 : index
    %c0_107 = arith.constant 0 : index
    %234 = vector.load %arg3[%c6_105, %c0_106, %c0_107] : memref<9x32x32xf32, #tpu.memory_space<vmem>>, vector<1x32x32xf32>
    %235 = vector.shape_cast %234 : vector<1x32x32xf32> to vector<32x32xf32>
    %236 = vector.broadcast %233 : vector<32x1xf32> to vector<32x32xf32>
    %237 = arith.mulf %236, %235 : vector<32x32xf32>
    %238 = arith.addf %232, %237 : vector<32x32xf32>
    %239 = vector.extract_strided_slice %22 {offsets = [0, 16], sizes = [32, 1], strides = [1, 1]} : vector<32x18xf32> to vector<32x1xf32>
    %c7_108 = arith.constant 7 : index
    %c0_109 = arith.constant 0 : index
    %c0_110 = arith.constant 0 : index
    %240 = vector.load %arg3[%c7_108, %c0_109, %c0_110] : memref<9x32x32xf32, #tpu.memory_space<vmem>>, vector<1x32x32xf32>
    %241 = vector.shape_cast %240 : vector<1x32x32xf32> to vector<32x32xf32>
    %242 = vector.broadcast %239 : vector<32x1xf32> to vector<32x32xf32>
    %243 = arith.mulf %242, %241 : vector<32x32xf32>
    %244 = arith.addf %238, %243 : vector<32x32xf32>
    %245 = vector.extract_strided_slice %22 {offsets = [0, 17], sizes = [32, 1], strides = [1, 1]} : vector<32x18xf32> to vector<32x1xf32>
    %c8_111 = arith.constant 8 : index
    %c0_112 = arith.constant 0 : index
    %c0_113 = arith.constant 0 : index
    %246 = vector.load %arg3[%c8_111, %c0_112, %c0_113] : memref<9x32x32xf32, #tpu.memory_space<vmem>>, vector<1x32x32xf32>
    %247 = vector.shape_cast %246 : vector<1x32x32xf32> to vector<32x32xf32>
    %248 = vector.broadcast %245 : vector<32x1xf32> to vector<32x32xf32>
    %249 = arith.mulf %248, %247 : vector<32x32xf32>
    %250 = arith.addf %244, %249 : vector<32x32xf32>
    %cst_114 = arith.constant -1.000000e+04 : f32
    %251 = vector.broadcast %cst_114 : f32 to vector<32x32xf32>
    %252 = arith.select %27, %250, %251 : vector<32x32xi1>, vector<32x32xf32>
    %cst_115 = arith.constant dense<0xFF800000> : vector<32xf32>
    %253 = vector.multi_reduction <maximumf>, %252, %cst_115 [1] : vector<32x32xf32> to vector<32xf32>
    %254 = vector.shape_cast %253 : vector<32xf32> to vector<32x1xf32>
    %255 = vector.broadcast %254 : vector<32x1xf32> to vector<32x32xf32>
    %256 = arith.subf %252, %255 : vector<32x32xf32>
    %257 = math.exp %256 : vector<32x32xf32>
    %cst_116 = arith.constant dense<0.000000e+00> : vector<32xf32>
    %258 = vector.multi_reduction <add>, %257, %cst_116 [1] : vector<32x32xf32> to vector<32xf32>
    %259 = vector.shape_cast %258 : vector<32xf32> to vector<32x1xf32>
    %260 = vector.broadcast %259 : vector<32x1xf32> to vector<32x32xf32>
    %261 = arith.divf %257, %260 : vector<32x32xf32>
    %262 = arith.truncf %261 : vector<32x32xf32> to vector<32x32xbf16>
    %cst_117 = arith.constant dense<0.000000e+00> : vector<32x32xf32>
    %263 = tpu.matmul %262, %195, %cst_117 {dimension_numbers = #tpu.dot_dimension_numbers<[1], [0], [0], [1], [0, 0, 1, 1], [], []>} : vector<32x32xbf16>, vector<32x32xbf16>, vector<32x32xf32> -> vector<32x32xf32>
    %c0_118 = arith.constant 0 : index
    %c0_119 = arith.constant 0 : index
    %c0_120 = arith.constant 0 : index
    %264 = vector.load %arg3[%c0_118, %c0_119, %c0_120] : memref<9x32x32xf32, #tpu.memory_space<vmem>>, vector<1x32x32xf32>
    %265 = vector.shape_cast %264 : vector<1x32x32xf32> to vector<32x32xf32>
    %266 = arith.mulf %261, %265 : vector<32x32xf32>
    %cst_121 = arith.constant dense<0.000000e+00> : vector<32xf32>
    %267 = vector.multi_reduction <add>, %266, %cst_121 [1] : vector<32x32xf32> to vector<32xf32>
    %268 = vector.shape_cast %267 : vector<32xf32> to vector<32x1xf32>
    %269 = vector.extract_strided_slice %24 {offsets = [0, 0], sizes = [1, 32], strides = [1, 1]} : vector<9x32xf32> to vector<1x32xf32>
    %270 = vector.broadcast %268 : vector<32x1xf32> to vector<32x32xf32>
    %271 = vector.broadcast %269 : vector<1x32xf32> to vector<32x32xf32>
    %272 = arith.mulf %270, %271 : vector<32x32xf32>
    %273 = arith.addf %263, %272 : vector<32x32xf32>
    %c1_122 = arith.constant 1 : index
    %c0_123 = arith.constant 0 : index
    %c0_124 = arith.constant 0 : index
    %274 = vector.load %arg3[%c1_122, %c0_123, %c0_124] : memref<9x32x32xf32, #tpu.memory_space<vmem>>, vector<1x32x32xf32>
    %275 = vector.shape_cast %274 : vector<1x32x32xf32> to vector<32x32xf32>
    %276 = arith.mulf %261, %275 : vector<32x32xf32>
    %cst_125 = arith.constant dense<0.000000e+00> : vector<32xf32>
    %277 = vector.multi_reduction <add>, %276, %cst_125 [1] : vector<32x32xf32> to vector<32xf32>
    %278 = vector.shape_cast %277 : vector<32xf32> to vector<32x1xf32>
    %279 = vector.extract_strided_slice %24 {offsets = [1, 0], sizes = [1, 32], strides = [1, 1]} : vector<9x32xf32> to vector<1x32xf32>
    %280 = vector.broadcast %278 : vector<32x1xf32> to vector<32x32xf32>
    %281 = vector.broadcast %279 : vector<1x32xf32> to vector<32x32xf32>
    %282 = arith.mulf %280, %281 : vector<32x32xf32>
    %283 = arith.addf %273, %282 : vector<32x32xf32>
    %c2_126 = arith.constant 2 : index
    %c0_127 = arith.constant 0 : index
    %c0_128 = arith.constant 0 : index
    %284 = vector.load %arg3[%c2_126, %c0_127, %c0_128] : memref<9x32x32xf32, #tpu.memory_space<vmem>>, vector<1x32x32xf32>
    %285 = vector.shape_cast %284 : vector<1x32x32xf32> to vector<32x32xf32>
    %286 = arith.mulf %261, %285 : vector<32x32xf32>
    %cst_129 = arith.constant dense<0.000000e+00> : vector<32xf32>
    %287 = vector.multi_reduction <add>, %286, %cst_129 [1] : vector<32x32xf32> to vector<32xf32>
    %288 = vector.shape_cast %287 : vector<32xf32> to vector<32x1xf32>
    %289 = vector.extract_strided_slice %24 {offsets = [2, 0], sizes = [1, 32], strides = [1, 1]} : vector<9x32xf32> to vector<1x32xf32>
    %290 = vector.broadcast %288 : vector<32x1xf32> to vector<32x32xf32>
    %291 = vector.broadcast %289 : vector<1x32xf32> to vector<32x32xf32>
    %292 = arith.mulf %290, %291 : vector<32x32xf32>
    %293 = arith.addf %283, %292 : vector<32x32xf32>
    %c3_130 = arith.constant 3 : index
    %c0_131 = arith.constant 0 : index
    %c0_132 = arith.constant 0 : index
    %294 = vector.load %arg3[%c3_130, %c0_131, %c0_132] : memref<9x32x32xf32, #tpu.memory_space<vmem>>, vector<1x32x32xf32>
    %295 = vector.shape_cast %294 : vector<1x32x32xf32> to vector<32x32xf32>
    %296 = arith.mulf %261, %295 : vector<32x32xf32>
    %cst_133 = arith.constant dense<0.000000e+00> : vector<32xf32>
    %297 = vector.multi_reduction <add>, %296, %cst_133 [1] : vector<32x32xf32> to vector<32xf32>
    %298 = vector.shape_cast %297 : vector<32xf32> to vector<32x1xf32>
    %299 = vector.extract_strided_slice %24 {offsets = [3, 0], sizes = [1, 32], strides = [1, 1]} : vector<9x32xf32> to vector<1x32xf32>
    %300 = vector.broadcast %298 : vector<32x1xf32> to vector<32x32xf32>
    %301 = vector.broadcast %299 : vector<1x32xf32> to vector<32x32xf32>
    %302 = arith.mulf %300, %301 : vector<32x32xf32>
    %303 = arith.addf %293, %302 : vector<32x32xf32>
    %c4_134 = arith.constant 4 : index
    %c0_135 = arith.constant 0 : index
    %c0_136 = arith.constant 0 : index
    %304 = vector.load %arg3[%c4_134, %c0_135, %c0_136] : memref<9x32x32xf32, #tpu.memory_space<vmem>>, vector<1x32x32xf32>
    %305 = vector.shape_cast %304 : vector<1x32x32xf32> to vector<32x32xf32>
    %306 = arith.mulf %261, %305 : vector<32x32xf32>
    %cst_137 = arith.constant dense<0.000000e+00> : vector<32xf32>
    %307 = vector.multi_reduction <add>, %306, %cst_137 [1] : vector<32x32xf32> to vector<32xf32>
    %308 = vector.shape_cast %307 : vector<32xf32> to vector<32x1xf32>
    %309 = vector.extract_strided_slice %24 {offsets = [4, 0], sizes = [1, 32], strides = [1, 1]} : vector<9x32xf32> to vector<1x32xf32>
    %310 = vector.broadcast %308 : vector<32x1xf32> to vector<32x32xf32>
    %311 = vector.broadcast %309 : vector<1x32xf32> to vector<32x32xf32>
    %312 = arith.mulf %310, %311 : vector<32x32xf32>
    %313 = arith.addf %303, %312 : vector<32x32xf32>
    %c5_138 = arith.constant 5 : index
    %c0_139 = arith.constant 0 : index
    %c0_140 = arith.constant 0 : index
    %314 = vector.load %arg3[%c5_138, %c0_139, %c0_140] : memref<9x32x32xf32, #tpu.memory_space<vmem>>, vector<1x32x32xf32>
    %315 = vector.shape_cast %314 : vector<1x32x32xf32> to vector<32x32xf32>
    %316 = arith.mulf %261, %315 : vector<32x32xf32>
    %cst_141 = arith.constant dense<0.000000e+00> : vector<32xf32>
    %317 = vector.multi_reduction <add>, %316, %cst_141 [1] : vector<32x32xf32> to vector<32xf32>
    %318 = vector.shape_cast %317 : vector<32xf32> to vector<32x1xf32>
    %319 = vector.extract_strided_slice %24 {offsets = [5, 0], sizes = [1, 32], strides = [1, 1]} : vector<9x32xf32> to vector<1x32xf32>
    %320 = vector.broadcast %318 : vector<32x1xf32> to vector<32x32xf32>
    %321 = vector.broadcast %319 : vector<1x32xf32> to vector<32x32xf32>
    %322 = arith.mulf %320, %321 : vector<32x32xf32>
    %323 = arith.addf %313, %322 : vector<32x32xf32>
    %c6_142 = arith.constant 6 : index
    %c0_143 = arith.constant 0 : index
    %c0_144 = arith.constant 0 : index
    %324 = vector.load %arg3[%c6_142, %c0_143, %c0_144] : memref<9x32x32xf32, #tpu.memory_space<vmem>>, vector<1x32x32xf32>
    %325 = vector.shape_cast %324 : vector<1x32x32xf32> to vector<32x32xf32>
    %326 = arith.mulf %261, %325 : vector<32x32xf32>
    %cst_145 = arith.constant dense<0.000000e+00> : vector<32xf32>
    %327 = vector.multi_reduction <add>, %326, %cst_145 [1] : vector<32x32xf32> to vector<32xf32>
    %328 = vector.shape_cast %327 : vector<32xf32> to vector<32x1xf32>
    %329 = vector.extract_strided_slice %24 {offsets = [6, 0], sizes = [1, 32], strides = [1, 1]} : vector<9x32xf32> to vector<1x32xf32>
    %330 = vector.broadcast %328 : vector<32x1xf32> to vector<32x32xf32>
    %331 = vector.broadcast %329 : vector<1x32xf32> to vector<32x32xf32>
    %332 = arith.mulf %330, %331 : vector<32x32xf32>
    %333 = arith.addf %323, %332 : vector<32x32xf32>
    %c7_146 = arith.constant 7 : index
    %c0_147 = arith.constant 0 : index
    %c0_148 = arith.constant 0 : index
    %334 = vector.load %arg3[%c7_146, %c0_147, %c0_148] : memref<9x32x32xf32, #tpu.memory_space<vmem>>, vector<1x32x32xf32>
    %335 = vector.shape_cast %334 : vector<1x32x32xf32> to vector<32x32xf32>
    %336 = arith.mulf %261, %335 : vector<32x32xf32>
    %cst_149 = arith.constant dense<0.000000e+00> : vector<32xf32>
    %337 = vector.multi_reduction <add>, %336, %cst_149 [1] : vector<32x32xf32> to vector<32xf32>
    %338 = vector.shape_cast %337 : vector<32xf32> to vector<32x1xf32>
    %339 = vector.extract_strided_slice %24 {offsets = [7, 0], sizes = [1, 32], strides = [1, 1]} : vector<9x32xf32> to vector<1x32xf32>
    %340 = vector.broadcast %338 : vector<32x1xf32> to vector<32x32xf32>
    %341 = vector.broadcast %339 : vector<1x32xf32> to vector<32x32xf32>
    %342 = arith.mulf %340, %341 : vector<32x32xf32>
    %343 = arith.addf %333, %342 : vector<32x32xf32>
    %c8_150 = arith.constant 8 : index
    %c0_151 = arith.constant 0 : index
    %c0_152 = arith.constant 0 : index
    %344 = vector.load %arg3[%c8_150, %c0_151, %c0_152] : memref<9x32x32xf32, #tpu.memory_space<vmem>>, vector<1x32x32xf32>
    %345 = vector.shape_cast %344 : vector<1x32x32xf32> to vector<32x32xf32>
    %346 = arith.mulf %261, %345 : vector<32x32xf32>
    %cst_153 = arith.constant dense<0.000000e+00> : vector<32xf32>
    %347 = vector.multi_reduction <add>, %346, %cst_153 [1] : vector<32x32xf32> to vector<32xf32>
    %348 = vector.shape_cast %347 : vector<32xf32> to vector<32x1xf32>
    %349 = vector.extract_strided_slice %24 {offsets = [8, 0], sizes = [1, 32], strides = [1, 1]} : vector<9x32xf32> to vector<1x32xf32>
    %350 = vector.broadcast %348 : vector<32x1xf32> to vector<32x32xf32>
    %351 = vector.broadcast %349 : vector<1x32xf32> to vector<32x32xf32>
    %352 = arith.mulf %350, %351 : vector<32x32xf32>
    %353 = arith.addf %343, %352 : vector<32x32xf32>
    %354 = tpu.concatenate %190, %353 in 1 : vector<32x32xf32>, vector<32x32xf32> -> vector<32x64xf32>
    %355 = arith.truncf %354 : vector<32x64xf32> to vector<32x64xbf16>
    %c0_154 = arith.constant 0 : index
    %c0_155 = arith.constant 0 : index
    %c0_156 = arith.constant 0 : index
    %356 = vector.load %arg7[%c0_154, %c0_155, %c0_156] : memref<3x64x64xbf16, #tpu.memory_space<vmem>>, vector<1x64x64xbf16>
    %357 = vector.shape_cast %356 : vector<1x64x64xbf16> to vector<64x64xbf16>
    %cst_157 = arith.constant dense<0.000000e+00> : vector<32x64xf32>
    %358 = tpu.matmul %355, %357, %cst_157 {dimension_numbers = #tpu.dot_dimension_numbers<[1], [0], [0], [1], [0, 0, 1, 1], [], []>} : vector<32x64xbf16>, vector<64x64xbf16>, vector<32x64xf32> -> vector<32x64xf32>
    %c0_158 = arith.constant 0 : index
    %c0_159 = arith.constant 0 : index
    %c0_160 = arith.constant 0 : index
    %359 = vector.load %arg8[%c0_158, %c0_159, %c0_160] : memref<3x1x64xf32, #tpu.memory_space<vmem>>, vector<1x1x64xf32>
    %360 = vector.shape_cast %359 : vector<1x1x64xf32> to vector<1x64xf32>
    %361 = vector.broadcast %360 : vector<1x64xf32> to vector<32x64xf32>
    %362 = arith.addf %358, %361 : vector<32x64xf32>
    %363 = arith.addf %7, %362 : vector<32x64xf32>
    %c0_161 = arith.constant 0 : index
    %c0_162 = arith.constant 0 : index
    %c0_163 = arith.constant 0 : index
    %364 = vector.load %arg11[%c0_161, %c0_162, %c0_163] : memref<3x1x64xf32, #tpu.memory_space<vmem>>, vector<1x1x64xf32>
    %365 = vector.shape_cast %364 : vector<1x1x64xf32> to vector<1x64xf32>
    %c0_164 = arith.constant 0 : index
    %c0_165 = arith.constant 0 : index
    %c0_166 = arith.constant 0 : index
    %366 = vector.load %arg12[%c0_164, %c0_165, %c0_166] : memref<3x1x64xf32, #tpu.memory_space<vmem>>, vector<1x1x64xf32>
    %367 = vector.shape_cast %366 : vector<1x1x64xf32> to vector<1x64xf32>
    %cst_167 = arith.constant dense<0.000000e+00> : vector<32xf32>
    %368 = vector.multi_reduction <add>, %363, %cst_167 [1] : vector<32x64xf32> to vector<32xf32>
    %369 = vector.shape_cast %368 : vector<32xf32> to vector<32x1xf32>
    %cst_168 = arith.constant 6.400000e+01 : f32
    %370 = vector.broadcast %cst_168 : f32 to vector<32x1xf32>
    %371 = arith.divf %369, %370 : vector<32x1xf32>
    %372 = vector.broadcast %371 : vector<32x1xf32> to vector<32x64xf32>
    %373 = arith.subf %363, %372 : vector<32x64xf32>
    %374 = arith.mulf %373, %373 : vector<32x64xf32>
    %cst_169 = arith.constant dense<0.000000e+00> : vector<32xf32>
    %375 = vector.multi_reduction <add>, %374, %cst_169 [1] : vector<32x64xf32> to vector<32xf32>
    %376 = vector.shape_cast %375 : vector<32xf32> to vector<32x1xf32>
    %cst_170 = arith.constant 6.400000e+01 : f32
    %377 = vector.broadcast %cst_170 : f32 to vector<32x1xf32>
    %378 = arith.divf %376, %377 : vector<32x1xf32>
    %379 = vector.broadcast %371 : vector<32x1xf32> to vector<32x64xf32>
    %380 = arith.subf %363, %379 : vector<32x64xf32>
    %cst_171 = arith.constant 9.99999974E-6 : f32
    %381 = vector.broadcast %cst_171 : f32 to vector<32x1xf32>
    %382 = arith.addf %378, %381 : vector<32x1xf32>
    %383 = math.rsqrt %382 : vector<32x1xf32>
    %384 = vector.broadcast %383 : vector<32x1xf32> to vector<32x64xf32>
    %385 = arith.mulf %380, %384 : vector<32x64xf32>
    %386 = vector.broadcast %365 : vector<1x64xf32> to vector<32x64xf32>
    %387 = arith.mulf %385, %386 : vector<32x64xf32>
    %388 = vector.broadcast %367 : vector<1x64xf32> to vector<32x64xf32>
    %389 = arith.addf %387, %388 : vector<32x64xf32>
    %390 = vector.broadcast %1 : vector<32x1xf32> to vector<32x64xf32>
    %391 = arith.mulf %389, %390 : vector<32x64xf32>
    %cst_172 = arith.constant 0.000000e+00 : f32
    %392 = vector.broadcast %cst_172 : f32 to vector<1x64xf32>
    %393 = tpu.concatenate %392, %391, %392 in 0 : vector<1x64xf32>, vector<32x64xf32>, vector<1x64xf32> -> vector<34x64xf32>
    %394 = vector.extract_strided_slice %393 {offsets = [0, 0], sizes = [32, 64], strides = [1, 1]} : vector<34x64xf32> to vector<32x64xf32>
    %395 = vector.broadcast %3 : vector<32x1xf32> to vector<32x64xf32>
    %396 = arith.mulf %394, %395 : vector<32x64xf32>
    %397 = vector.extract_strided_slice %393 {offsets = [2, 0], sizes = [32, 64], strides = [1, 1]} : vector<34x64xf32> to vector<32x64xf32>
    %398 = vector.broadcast %5 : vector<32x1xf32> to vector<32x64xf32>
    %399 = arith.mulf %397, %398 : vector<32x64xf32>
    %400 = tpu.concatenate %396, %391, %399 in 1 : vector<32x64xf32>, vector<32x64xf32>, vector<32x64xf32> -> vector<32x192xf32>
    %401 = arith.truncf %400 : vector<32x192xf32> to vector<32x192xbf16>
    %c0_173 = arith.constant 0 : index
    %c0_174 = arith.constant 0 : index
    %c0_175 = arith.constant 0 : index
    %402 = vector.load %arg13[%c0_173, %c0_174, %c0_175] : memref<3x192x128xbf16, #tpu.memory_space<vmem>>, vector<1x192x128xbf16>
    %403 = vector.shape_cast %402 : vector<1x192x128xbf16> to vector<192x128xbf16>
    %cst_176 = arith.constant dense<0.000000e+00> : vector<32x128xf32>
    %404 = tpu.matmul %401, %403, %cst_176 {dimension_numbers = #tpu.dot_dimension_numbers<[1], [0], [0], [1], [0, 0, 1, 1], [], []>} : vector<32x192xbf16>, vector<192x128xbf16>, vector<32x128xf32> -> vector<32x128xf32>
    %c0_177 = arith.constant 0 : index
    %c0_178 = arith.constant 0 : index
    %c0_179 = arith.constant 0 : index
    %405 = vector.load %arg14[%c0_177, %c0_178, %c0_179] : memref<3x1x128xf32, #tpu.memory_space<vmem>>, vector<1x1x128xf32>
    %406 = vector.shape_cast %405 : vector<1x1x128xf32> to vector<1x128xf32>
    %407 = vector.broadcast %406 : vector<1x128xf32> to vector<32x128xf32>
    %408 = arith.addf %404, %407 : vector<32x128xf32>
    %cst_180 = arith.constant 0.000000e+00 : f32
    %409 = vector.broadcast %cst_180 : f32 to vector<32x128xf32>
    %410 = arith.maximumf %408, %409 : vector<32x128xf32>
    %411 = vector.broadcast %1 : vector<32x1xf32> to vector<32x128xf32>
    %412 = arith.mulf %410, %411 : vector<32x128xf32>
    %cst_181 = arith.constant 0.000000e+00 : f32
    %413 = vector.broadcast %cst_181 : f32 to vector<1x128xf32>
    %414 = tpu.concatenate %413, %412, %413 in 0 : vector<1x128xf32>, vector<32x128xf32>, vector<1x128xf32> -> vector<34x128xf32>
    %415 = vector.extract_strided_slice %414 {offsets = [0, 0], sizes = [32, 128], strides = [1, 1]} : vector<34x128xf32> to vector<32x128xf32>
    %416 = vector.broadcast %3 : vector<32x1xf32> to vector<32x128xf32>
    %417 = arith.mulf %415, %416 : vector<32x128xf32>
    %418 = vector.extract_strided_slice %414 {offsets = [2, 0], sizes = [32, 128], strides = [1, 1]} : vector<34x128xf32> to vector<32x128xf32>
    %419 = vector.broadcast %5 : vector<32x1xf32> to vector<32x128xf32>
    %420 = arith.mulf %418, %419 : vector<32x128xf32>
    %421 = tpu.concatenate %417, %412, %420 in 1 : vector<32x128xf32>, vector<32x128xf32>, vector<32x128xf32> -> vector<32x384xf32>
    %422 = arith.truncf %421 : vector<32x384xf32> to vector<32x384xbf16>
    %c0_182 = arith.constant 0 : index
    %c0_183 = arith.constant 0 : index
    %c0_184 = arith.constant 0 : index
    %423 = vector.load %arg15[%c0_182, %c0_183, %c0_184] : memref<3x384x64xbf16, #tpu.memory_space<vmem>>, vector<1x384x64xbf16>
    %424 = vector.shape_cast %423 : vector<1x384x64xbf16> to vector<384x64xbf16>
    %cst_185 = arith.constant dense<0.000000e+00> : vector<32x64xf32>
    %425 = tpu.matmul %422, %424, %cst_185 {dimension_numbers = #tpu.dot_dimension_numbers<[1], [0], [0], [1], [0, 0, 1, 1], [], []>} : vector<32x384xbf16>, vector<384x64xbf16>, vector<32x64xf32> -> vector<32x64xf32>
    %c0_186 = arith.constant 0 : index
    %c0_187 = arith.constant 0 : index
    %c0_188 = arith.constant 0 : index
    %426 = vector.load %arg16[%c0_186, %c0_187, %c0_188] : memref<3x1x64xf32, #tpu.memory_space<vmem>>, vector<1x1x64xf32>
    %427 = vector.shape_cast %426 : vector<1x1x64xf32> to vector<1x64xf32>
    %428 = vector.broadcast %427 : vector<1x64xf32> to vector<32x64xf32>
    %429 = arith.addf %425, %428 : vector<32x64xf32>
    %430 = vector.broadcast %1 : vector<32x1xf32> to vector<32x64xf32>
    %431 = arith.mulf %429, %430 : vector<32x64xf32>
    %432 = arith.addf %389, %431 : vector<32x64xf32>
    %c0_189 = arith.constant 0 : index
    %c0_190 = arith.constant 0 : index
    %c0_191 = arith.constant 0 : index
    %433 = vector.load %arg17[%c0_189, %c0_190, %c0_191] : memref<3x1x64xf32, #tpu.memory_space<vmem>>, vector<1x1x64xf32>
    %434 = vector.shape_cast %433 : vector<1x1x64xf32> to vector<1x64xf32>
    %c0_192 = arith.constant 0 : index
    %c0_193 = arith.constant 0 : index
    %c0_194 = arith.constant 0 : index
    %435 = vector.load %arg18[%c0_192, %c0_193, %c0_194] : memref<3x1x64xf32, #tpu.memory_space<vmem>>, vector<1x1x64xf32>
    %436 = vector.shape_cast %435 : vector<1x1x64xf32> to vector<1x64xf32>
    %cst_195 = arith.constant dense<0.000000e+00> : vector<32xf32>
    %437 = vector.multi_reduction <add>, %432, %cst_195 [1] : vector<32x64xf32> to vector<32xf32>
    %438 = vector.shape_cast %437 : vector<32xf32> to vector<32x1xf32>
    %cst_196 = arith.constant 6.400000e+01 : f32
    %439 = vector.broadcast %cst_196 : f32 to vector<32x1xf32>
    %440 = arith.divf %438, %439 : vector<32x1xf32>
    %441 = vector.broadcast %440 : vector<32x1xf32> to vector<32x64xf32>
    %442 = arith.subf %432, %441 : vector<32x64xf32>
    %443 = arith.mulf %442, %442 : vector<32x64xf32>
    %cst_197 = arith.constant dense<0.000000e+00> : vector<32xf32>
    %444 = vector.multi_reduction <add>, %443, %cst_197 [1] : vector<32x64xf32> to vector<32xf32>
    %445 = vector.shape_cast %444 : vector<32xf32> to vector<32x1xf32>
    %cst_198 = arith.constant 6.400000e+01 : f32
    %446 = vector.broadcast %cst_198 : f32 to vector<32x1xf32>
    %447 = arith.divf %445, %446 : vector<32x1xf32>
    %448 = vector.broadcast %440 : vector<32x1xf32> to vector<32x64xf32>
    %449 = arith.subf %432, %448 : vector<32x64xf32>
    %cst_199 = arith.constant 9.99999974E-6 : f32
    %450 = vector.broadcast %cst_199 : f32 to vector<32x1xf32>
    %451 = arith.addf %447, %450 : vector<32x1xf32>
    %452 = math.rsqrt %451 : vector<32x1xf32>
    %453 = vector.broadcast %452 : vector<32x1xf32> to vector<32x64xf32>
    %454 = arith.mulf %449, %453 : vector<32x64xf32>
    %455 = vector.broadcast %434 : vector<1x64xf32> to vector<32x64xf32>
    %456 = arith.mulf %454, %455 : vector<32x64xf32>
    %457 = vector.broadcast %436 : vector<1x64xf32> to vector<32x64xf32>
    %458 = arith.addf %456, %457 : vector<32x64xf32>
    %459 = arith.truncf %458 : vector<32x64xf32> to vector<32x64xbf16>
    %c1_200 = arith.constant 1 : index
    %c0_201 = arith.constant 0 : index
    %c0_202 = arith.constant 0 : index
    %460 = vector.load %arg5[%c1_200, %c0_201, %c0_202] : memref<3x64x192xbf16, #tpu.memory_space<vmem>>, vector<1x64x192xbf16>
    %461 = vector.shape_cast %460 : vector<1x64x192xbf16> to vector<64x192xbf16>
    %cst_203 = arith.constant dense<0.000000e+00> : vector<32x192xf32>
    %462 = tpu.matmul %459, %461, %cst_203 {dimension_numbers = #tpu.dot_dimension_numbers<[1], [0], [0], [1], [0, 0, 1, 1], [], []>} : vector<32x64xbf16>, vector<64x192xbf16>, vector<32x192xf32> -> vector<32x192xf32>
    %c1_204 = arith.constant 1 : index
    %c0_205 = arith.constant 0 : index
    %c0_206 = arith.constant 0 : index
    %463 = vector.load %arg6[%c1_204, %c0_205, %c0_206] : memref<3x1x192xf32, #tpu.memory_space<vmem>>, vector<1x1x192xf32>
    %464 = vector.shape_cast %463 : vector<1x1x192xf32> to vector<1x192xf32>
    %465 = vector.broadcast %464 : vector<1x192xf32> to vector<32x192xf32>
    %466 = arith.addf %462, %465 : vector<32x192xf32>
    %467 = vector.extract_strided_slice %466 {offsets = [0, 0], sizes = [32, 64], strides = [1, 1]} : vector<32x192xf32> to vector<32x64xf32>
    %cst_207 = arith.constant 0.176776692 : f32
    %468 = vector.broadcast %cst_207 : f32 to vector<32x64xf32>
    %469 = arith.mulf %467, %468 : vector<32x64xf32>
    %470 = arith.truncf %469 : vector<32x64xf32> to vector<32x64xbf16>
    %c1_208 = arith.constant 1 : index
    %c0_209 = arith.constant 0 : index
    %c0_210 = arith.constant 0 : index
    %471 = vector.load %arg9[%c1_208, %c0_209, %c0_210] : memref<3x64x18xbf16, #tpu.memory_space<vmem>>, vector<1x64x18xbf16>
    %472 = vector.shape_cast %471 : vector<1x64x18xbf16> to vector<64x18xbf16>
    %cst_211 = arith.constant dense<0.000000e+00> : vector<32x18xf32>
    %473 = tpu.matmul %470, %472, %cst_211 {dimension_numbers = #tpu.dot_dimension_numbers<[1], [0], [0], [1], [0, 0, 1, 1], [], []>} : vector<32x64xbf16>, vector<64x18xbf16>, vector<32x18xf32> -> vector<32x18xf32>
    %c1_212 = arith.constant 1 : index
    %c0_213 = arith.constant 0 : index
    %c0_214 = arith.constant 0 : index
    %474 = vector.load %arg10[%c1_212, %c0_213, %c0_214] : memref<3x9x32xf32, #tpu.memory_space<vmem>>, vector<1x9x32xf32>
    %475 = vector.shape_cast %474 : vector<1x9x32xf32> to vector<9x32xf32>
    %c0_215 = arith.constant 0 : index
    %c0_216 = arith.constant 0 : index
    %476 = vector.load %arg2[%c0_215, %c0_216] : memref<32x32xf32, #tpu.memory_space<vmem>>, vector<32x32xf32>
    %cst_217 = arith.constant 0.000000e+00 : f32
    %477 = vector.broadcast %cst_217 : f32 to vector<32x32xf32>
    %478 = arith.cmpf ogt, %476, %477 : vector<32x32xf32>
    %479 = vector.extract_strided_slice %470 {offsets = [0, 0], sizes = [32, 32], strides = [1, 1]} : vector<32x64xbf16> to vector<32x32xbf16>
    %480 = vector.extract_strided_slice %466 {offsets = [0, 64], sizes = [32, 32], strides = [1, 1]} : vector<32x192xf32> to vector<32x32xf32>
    %481 = arith.truncf %480 : vector<32x32xf32> to vector<32x32xbf16>
    %482 = vector.extract_strided_slice %466 {offsets = [0, 128], sizes = [32, 32], strides = [1, 1]} : vector<32x192xf32> to vector<32x32xf32>
    %483 = arith.truncf %482 : vector<32x32xf32> to vector<32x32xbf16>
    %cst_218 = arith.constant dense<0.000000e+00> : vector<32x32xf32>
    %484 = tpu.matmul %479, %481, %cst_218 {dimension_numbers = #tpu.dot_dimension_numbers<[1], [1], [0], [0], [0, 0, 1, 0], [], []>} : vector<32x32xbf16>, vector<32x32xbf16>, vector<32x32xf32> -> vector<32x32xf32>
    %485 = vector.extract_strided_slice %473 {offsets = [0, 0], sizes = [32, 1], strides = [1, 1]} : vector<32x18xf32> to vector<32x1xf32>
    %c0_219 = arith.constant 0 : index
    %c0_220 = arith.constant 0 : index
    %c0_221 = arith.constant 0 : index
    %486 = vector.load %arg3[%c0_219, %c0_220, %c0_221] : memref<9x32x32xf32, #tpu.memory_space<vmem>>, vector<1x32x32xf32>
    %487 = vector.shape_cast %486 : vector<1x32x32xf32> to vector<32x32xf32>
    %488 = vector.broadcast %485 : vector<32x1xf32> to vector<32x32xf32>
    %489 = arith.mulf %488, %487 : vector<32x32xf32>
    %490 = arith.addf %484, %489 : vector<32x32xf32>
    %491 = vector.extract_strided_slice %473 {offsets = [0, 1], sizes = [32, 1], strides = [1, 1]} : vector<32x18xf32> to vector<32x1xf32>
    %c1_222 = arith.constant 1 : index
    %c0_223 = arith.constant 0 : index
    %c0_224 = arith.constant 0 : index
    %492 = vector.load %arg3[%c1_222, %c0_223, %c0_224] : memref<9x32x32xf32, #tpu.memory_space<vmem>>, vector<1x32x32xf32>
    %493 = vector.shape_cast %492 : vector<1x32x32xf32> to vector<32x32xf32>
    %494 = vector.broadcast %491 : vector<32x1xf32> to vector<32x32xf32>
    %495 = arith.mulf %494, %493 : vector<32x32xf32>
    %496 = arith.addf %490, %495 : vector<32x32xf32>
    %497 = vector.extract_strided_slice %473 {offsets = [0, 2], sizes = [32, 1], strides = [1, 1]} : vector<32x18xf32> to vector<32x1xf32>
    %c2_225 = arith.constant 2 : index
    %c0_226 = arith.constant 0 : index
    %c0_227 = arith.constant 0 : index
    %498 = vector.load %arg3[%c2_225, %c0_226, %c0_227] : memref<9x32x32xf32, #tpu.memory_space<vmem>>, vector<1x32x32xf32>
    %499 = vector.shape_cast %498 : vector<1x32x32xf32> to vector<32x32xf32>
    %500 = vector.broadcast %497 : vector<32x1xf32> to vector<32x32xf32>
    %501 = arith.mulf %500, %499 : vector<32x32xf32>
    %502 = arith.addf %496, %501 : vector<32x32xf32>
    %503 = vector.extract_strided_slice %473 {offsets = [0, 3], sizes = [32, 1], strides = [1, 1]} : vector<32x18xf32> to vector<32x1xf32>
    %c3_228 = arith.constant 3 : index
    %c0_229 = arith.constant 0 : index
    %c0_230 = arith.constant 0 : index
    %504 = vector.load %arg3[%c3_228, %c0_229, %c0_230] : memref<9x32x32xf32, #tpu.memory_space<vmem>>, vector<1x32x32xf32>
    %505 = vector.shape_cast %504 : vector<1x32x32xf32> to vector<32x32xf32>
    %506 = vector.broadcast %503 : vector<32x1xf32> to vector<32x32xf32>
    %507 = arith.mulf %506, %505 : vector<32x32xf32>
    %508 = arith.addf %502, %507 : vector<32x32xf32>
    %509 = vector.extract_strided_slice %473 {offsets = [0, 4], sizes = [32, 1], strides = [1, 1]} : vector<32x18xf32> to vector<32x1xf32>
    %c4_231 = arith.constant 4 : index
    %c0_232 = arith.constant 0 : index
    %c0_233 = arith.constant 0 : index
    %510 = vector.load %arg3[%c4_231, %c0_232, %c0_233] : memref<9x32x32xf32, #tpu.memory_space<vmem>>, vector<1x32x32xf32>
    %511 = vector.shape_cast %510 : vector<1x32x32xf32> to vector<32x32xf32>
    %512 = vector.broadcast %509 : vector<32x1xf32> to vector<32x32xf32>
    %513 = arith.mulf %512, %511 : vector<32x32xf32>
    %514 = arith.addf %508, %513 : vector<32x32xf32>
    %515 = vector.extract_strided_slice %473 {offsets = [0, 5], sizes = [32, 1], strides = [1, 1]} : vector<32x18xf32> to vector<32x1xf32>
    %c5_234 = arith.constant 5 : index
    %c0_235 = arith.constant 0 : index
    %c0_236 = arith.constant 0 : index
    %516 = vector.load %arg3[%c5_234, %c0_235, %c0_236] : memref<9x32x32xf32, #tpu.memory_space<vmem>>, vector<1x32x32xf32>
    %517 = vector.shape_cast %516 : vector<1x32x32xf32> to vector<32x32xf32>
    %518 = vector.broadcast %515 : vector<32x1xf32> to vector<32x32xf32>
    %519 = arith.mulf %518, %517 : vector<32x32xf32>
    %520 = arith.addf %514, %519 : vector<32x32xf32>
    %521 = vector.extract_strided_slice %473 {offsets = [0, 6], sizes = [32, 1], strides = [1, 1]} : vector<32x18xf32> to vector<32x1xf32>
    %c6_237 = arith.constant 6 : index
    %c0_238 = arith.constant 0 : index
    %c0_239 = arith.constant 0 : index
    %522 = vector.load %arg3[%c6_237, %c0_238, %c0_239] : memref<9x32x32xf32, #tpu.memory_space<vmem>>, vector<1x32x32xf32>
    %523 = vector.shape_cast %522 : vector<1x32x32xf32> to vector<32x32xf32>
    %524 = vector.broadcast %521 : vector<32x1xf32> to vector<32x32xf32>
    %525 = arith.mulf %524, %523 : vector<32x32xf32>
    %526 = arith.addf %520, %525 : vector<32x32xf32>
    %527 = vector.extract_strided_slice %473 {offsets = [0, 7], sizes = [32, 1], strides = [1, 1]} : vector<32x18xf32> to vector<32x1xf32>
    %c7_240 = arith.constant 7 : index
    %c0_241 = arith.constant 0 : index
    %c0_242 = arith.constant 0 : index
    %528 = vector.load %arg3[%c7_240, %c0_241, %c0_242] : memref<9x32x32xf32, #tpu.memory_space<vmem>>, vector<1x32x32xf32>
    %529 = vector.shape_cast %528 : vector<1x32x32xf32> to vector<32x32xf32>
    %530 = vector.broadcast %527 : vector<32x1xf32> to vector<32x32xf32>
    %531 = arith.mulf %530, %529 : vector<32x32xf32>
    %532 = arith.addf %526, %531 : vector<32x32xf32>
    %533 = vector.extract_strided_slice %473 {offsets = [0, 8], sizes = [32, 1], strides = [1, 1]} : vector<32x18xf32> to vector<32x1xf32>
    %c8_243 = arith.constant 8 : index
    %c0_244 = arith.constant 0 : index
    %c0_245 = arith.constant 0 : index
    %534 = vector.load %arg3[%c8_243, %c0_244, %c0_245] : memref<9x32x32xf32, #tpu.memory_space<vmem>>, vector<1x32x32xf32>
    %535 = vector.shape_cast %534 : vector<1x32x32xf32> to vector<32x32xf32>
    %536 = vector.broadcast %533 : vector<32x1xf32> to vector<32x32xf32>
    %537 = arith.mulf %536, %535 : vector<32x32xf32>
    %538 = arith.addf %532, %537 : vector<32x32xf32>
    %cst_246 = arith.constant -1.000000e+04 : f32
    %539 = vector.broadcast %cst_246 : f32 to vector<32x32xf32>
    %540 = arith.select %478, %538, %539 : vector<32x32xi1>, vector<32x32xf32>
    %cst_247 = arith.constant dense<0xFF800000> : vector<32xf32>
    %541 = vector.multi_reduction <maximumf>, %540, %cst_247 [1] : vector<32x32xf32> to vector<32xf32>
    %542 = vector.shape_cast %541 : vector<32xf32> to vector<32x1xf32>
    %543 = vector.broadcast %542 : vector<32x1xf32> to vector<32x32xf32>
    %544 = arith.subf %540, %543 : vector<32x32xf32>
    %545 = math.exp %544 : vector<32x32xf32>
    %cst_248 = arith.constant dense<0.000000e+00> : vector<32xf32>
    %546 = vector.multi_reduction <add>, %545, %cst_248 [1] : vector<32x32xf32> to vector<32xf32>
    %547 = vector.shape_cast %546 : vector<32xf32> to vector<32x1xf32>
    %548 = vector.broadcast %547 : vector<32x1xf32> to vector<32x32xf32>
    %549 = arith.divf %545, %548 : vector<32x32xf32>
    %550 = arith.truncf %549 : vector<32x32xf32> to vector<32x32xbf16>
    %cst_249 = arith.constant dense<0.000000e+00> : vector<32x32xf32>
    %551 = tpu.matmul %550, %483, %cst_249 {dimension_numbers = #tpu.dot_dimension_numbers<[1], [0], [0], [1], [0, 0, 1, 1], [], []>} : vector<32x32xbf16>, vector<32x32xbf16>, vector<32x32xf32> -> vector<32x32xf32>
    %c0_250 = arith.constant 0 : index
    %c0_251 = arith.constant 0 : index
    %c0_252 = arith.constant 0 : index
    %552 = vector.load %arg3[%c0_250, %c0_251, %c0_252] : memref<9x32x32xf32, #tpu.memory_space<vmem>>, vector<1x32x32xf32>
    %553 = vector.shape_cast %552 : vector<1x32x32xf32> to vector<32x32xf32>
    %554 = arith.mulf %549, %553 : vector<32x32xf32>
    %cst_253 = arith.constant dense<0.000000e+00> : vector<32xf32>
    %555 = vector.multi_reduction <add>, %554, %cst_253 [1] : vector<32x32xf32> to vector<32xf32>
    %556 = vector.shape_cast %555 : vector<32xf32> to vector<32x1xf32>
    %557 = vector.extract_strided_slice %475 {offsets = [0, 0], sizes = [1, 32], strides = [1, 1]} : vector<9x32xf32> to vector<1x32xf32>
    %558 = vector.broadcast %556 : vector<32x1xf32> to vector<32x32xf32>
    %559 = vector.broadcast %557 : vector<1x32xf32> to vector<32x32xf32>
    %560 = arith.mulf %558, %559 : vector<32x32xf32>
    %561 = arith.addf %551, %560 : vector<32x32xf32>
    %c1_254 = arith.constant 1 : index
    %c0_255 = arith.constant 0 : index
    %c0_256 = arith.constant 0 : index
    %562 = vector.load %arg3[%c1_254, %c0_255, %c0_256] : memref<9x32x32xf32, #tpu.memory_space<vmem>>, vector<1x32x32xf32>
    %563 = vector.shape_cast %562 : vector<1x32x32xf32> to vector<32x32xf32>
    %564 = arith.mulf %549, %563 : vector<32x32xf32>
    %cst_257 = arith.constant dense<0.000000e+00> : vector<32xf32>
    %565 = vector.multi_reduction <add>, %564, %cst_257 [1] : vector<32x32xf32> to vector<32xf32>
    %566 = vector.shape_cast %565 : vector<32xf32> to vector<32x1xf32>
    %567 = vector.extract_strided_slice %475 {offsets = [1, 0], sizes = [1, 32], strides = [1, 1]} : vector<9x32xf32> to vector<1x32xf32>
    %568 = vector.broadcast %566 : vector<32x1xf32> to vector<32x32xf32>
    %569 = vector.broadcast %567 : vector<1x32xf32> to vector<32x32xf32>
    %570 = arith.mulf %568, %569 : vector<32x32xf32>
    %571 = arith.addf %561, %570 : vector<32x32xf32>
    %c2_258 = arith.constant 2 : index
    %c0_259 = arith.constant 0 : index
    %c0_260 = arith.constant 0 : index
    %572 = vector.load %arg3[%c2_258, %c0_259, %c0_260] : memref<9x32x32xf32, #tpu.memory_space<vmem>>, vector<1x32x32xf32>
    %573 = vector.shape_cast %572 : vector<1x32x32xf32> to vector<32x32xf32>
    %574 = arith.mulf %549, %573 : vector<32x32xf32>
    %cst_261 = arith.constant dense<0.000000e+00> : vector<32xf32>
    %575 = vector.multi_reduction <add>, %574, %cst_261 [1] : vector<32x32xf32> to vector<32xf32>
    %576 = vector.shape_cast %575 : vector<32xf32> to vector<32x1xf32>
    %577 = vector.extract_strided_slice %475 {offsets = [2, 0], sizes = [1, 32], strides = [1, 1]} : vector<9x32xf32> to vector<1x32xf32>
    %578 = vector.broadcast %576 : vector<32x1xf32> to vector<32x32xf32>
    %579 = vector.broadcast %577 : vector<1x32xf32> to vector<32x32xf32>
    %580 = arith.mulf %578, %579 : vector<32x32xf32>
    %581 = arith.addf %571, %580 : vector<32x32xf32>
    %c3_262 = arith.constant 3 : index
    %c0_263 = arith.constant 0 : index
    %c0_264 = arith.constant 0 : index
    %582 = vector.load %arg3[%c3_262, %c0_263, %c0_264] : memref<9x32x32xf32, #tpu.memory_space<vmem>>, vector<1x32x32xf32>
    %583 = vector.shape_cast %582 : vector<1x32x32xf32> to vector<32x32xf32>
    %584 = arith.mulf %549, %583 : vector<32x32xf32>
    %cst_265 = arith.constant dense<0.000000e+00> : vector<32xf32>
    %585 = vector.multi_reduction <add>, %584, %cst_265 [1] : vector<32x32xf32> to vector<32xf32>
    %586 = vector.shape_cast %585 : vector<32xf32> to vector<32x1xf32>
    %587 = vector.extract_strided_slice %475 {offsets = [3, 0], sizes = [1, 32], strides = [1, 1]} : vector<9x32xf32> to vector<1x32xf32>
    %588 = vector.broadcast %586 : vector<32x1xf32> to vector<32x32xf32>
    %589 = vector.broadcast %587 : vector<1x32xf32> to vector<32x32xf32>
    %590 = arith.mulf %588, %589 : vector<32x32xf32>
    %591 = arith.addf %581, %590 : vector<32x32xf32>
    %c4_266 = arith.constant 4 : index
    %c0_267 = arith.constant 0 : index
    %c0_268 = arith.constant 0 : index
    %592 = vector.load %arg3[%c4_266, %c0_267, %c0_268] : memref<9x32x32xf32, #tpu.memory_space<vmem>>, vector<1x32x32xf32>
    %593 = vector.shape_cast %592 : vector<1x32x32xf32> to vector<32x32xf32>
    %594 = arith.mulf %549, %593 : vector<32x32xf32>
    %cst_269 = arith.constant dense<0.000000e+00> : vector<32xf32>
    %595 = vector.multi_reduction <add>, %594, %cst_269 [1] : vector<32x32xf32> to vector<32xf32>
    %596 = vector.shape_cast %595 : vector<32xf32> to vector<32x1xf32>
    %597 = vector.extract_strided_slice %475 {offsets = [4, 0], sizes = [1, 32], strides = [1, 1]} : vector<9x32xf32> to vector<1x32xf32>
    %598 = vector.broadcast %596 : vector<32x1xf32> to vector<32x32xf32>
    %599 = vector.broadcast %597 : vector<1x32xf32> to vector<32x32xf32>
    %600 = arith.mulf %598, %599 : vector<32x32xf32>
    %601 = arith.addf %591, %600 : vector<32x32xf32>
    %c5_270 = arith.constant 5 : index
    %c0_271 = arith.constant 0 : index
    %c0_272 = arith.constant 0 : index
    %602 = vector.load %arg3[%c5_270, %c0_271, %c0_272] : memref<9x32x32xf32, #tpu.memory_space<vmem>>, vector<1x32x32xf32>
    %603 = vector.shape_cast %602 : vector<1x32x32xf32> to vector<32x32xf32>
    %604 = arith.mulf %549, %603 : vector<32x32xf32>
    %cst_273 = arith.constant dense<0.000000e+00> : vector<32xf32>
    %605 = vector.multi_reduction <add>, %604, %cst_273 [1] : vector<32x32xf32> to vector<32xf32>
    %606 = vector.shape_cast %605 : vector<32xf32> to vector<32x1xf32>
    %607 = vector.extract_strided_slice %475 {offsets = [5, 0], sizes = [1, 32], strides = [1, 1]} : vector<9x32xf32> to vector<1x32xf32>
    %608 = vector.broadcast %606 : vector<32x1xf32> to vector<32x32xf32>
    %609 = vector.broadcast %607 : vector<1x32xf32> to vector<32x32xf32>
    %610 = arith.mulf %608, %609 : vector<32x32xf32>
    %611 = arith.addf %601, %610 : vector<32x32xf32>
    %c6_274 = arith.constant 6 : index
    %c0_275 = arith.constant 0 : index
    %c0_276 = arith.constant 0 : index
    %612 = vector.load %arg3[%c6_274, %c0_275, %c0_276] : memref<9x32x32xf32, #tpu.memory_space<vmem>>, vector<1x32x32xf32>
    %613 = vector.shape_cast %612 : vector<1x32x32xf32> to vector<32x32xf32>
    %614 = arith.mulf %549, %613 : vector<32x32xf32>
    %cst_277 = arith.constant dense<0.000000e+00> : vector<32xf32>
    %615 = vector.multi_reduction <add>, %614, %cst_277 [1] : vector<32x32xf32> to vector<32xf32>
    %616 = vector.shape_cast %615 : vector<32xf32> to vector<32x1xf32>
    %617 = vector.extract_strided_slice %475 {offsets = [6, 0], sizes = [1, 32], strides = [1, 1]} : vector<9x32xf32> to vector<1x32xf32>
    %618 = vector.broadcast %616 : vector<32x1xf32> to vector<32x32xf32>
    %619 = vector.broadcast %617 : vector<1x32xf32> to vector<32x32xf32>
    %620 = arith.mulf %618, %619 : vector<32x32xf32>
    %621 = arith.addf %611, %620 : vector<32x32xf32>
    %c7_278 = arith.constant 7 : index
    %c0_279 = arith.constant 0 : index
    %c0_280 = arith.constant 0 : index
    %622 = vector.load %arg3[%c7_278, %c0_279, %c0_280] : memref<9x32x32xf32, #tpu.memory_space<vmem>>, vector<1x32x32xf32>
    %623 = vector.shape_cast %622 : vector<1x32x32xf32> to vector<32x32xf32>
    %624 = arith.mulf %549, %623 : vector<32x32xf32>
    %cst_281 = arith.constant dense<0.000000e+00> : vector<32xf32>
    %625 = vector.multi_reduction <add>, %624, %cst_281 [1] : vector<32x32xf32> to vector<32xf32>
    %626 = vector.shape_cast %625 : vector<32xf32> to vector<32x1xf32>
    %627 = vector.extract_strided_slice %475 {offsets = [7, 0], sizes = [1, 32], strides = [1, 1]} : vector<9x32xf32> to vector<1x32xf32>
    %628 = vector.broadcast %626 : vector<32x1xf32> to vector<32x32xf32>
    %629 = vector.broadcast %627 : vector<1x32xf32> to vector<32x32xf32>
    %630 = arith.mulf %628, %629 : vector<32x32xf32>
    %631 = arith.addf %621, %630 : vector<32x32xf32>
    %c8_282 = arith.constant 8 : index
    %c0_283 = arith.constant 0 : index
    %c0_284 = arith.constant 0 : index
    %632 = vector.load %arg3[%c8_282, %c0_283, %c0_284] : memref<9x32x32xf32, #tpu.memory_space<vmem>>, vector<1x32x32xf32>
    %633 = vector.shape_cast %632 : vector<1x32x32xf32> to vector<32x32xf32>
    %634 = arith.mulf %549, %633 : vector<32x32xf32>
    %cst_285 = arith.constant dense<0.000000e+00> : vector<32xf32>
    %635 = vector.multi_reduction <add>, %634, %cst_285 [1] : vector<32x32xf32> to vector<32xf32>
    %636 = vector.shape_cast %635 : vector<32xf32> to vector<32x1xf32>
    %637 = vector.extract_strided_slice %475 {offsets = [8, 0], sizes = [1, 32], strides = [1, 1]} : vector<9x32xf32> to vector<1x32xf32>
    %638 = vector.broadcast %636 : vector<32x1xf32> to vector<32x32xf32>
    %639 = vector.broadcast %637 : vector<1x32xf32> to vector<32x32xf32>
    %640 = arith.mulf %638, %639 : vector<32x32xf32>
    %641 = arith.addf %631, %640 : vector<32x32xf32>
    %642 = vector.extract_strided_slice %470 {offsets = [0, 32], sizes = [32, 32], strides = [1, 1]} : vector<32x64xbf16> to vector<32x32xbf16>
    %643 = vector.extract_strided_slice %466 {offsets = [0, 96], sizes = [32, 32], strides = [1, 1]} : vector<32x192xf32> to vector<32x32xf32>
    %644 = arith.truncf %643 : vector<32x32xf32> to vector<32x32xbf16>
    %645 = vector.extract_strided_slice %466 {offsets = [0, 160], sizes = [32, 32], strides = [1, 1]} : vector<32x192xf32> to vector<32x32xf32>
    %646 = arith.truncf %645 : vector<32x32xf32> to vector<32x32xbf16>
    %cst_286 = arith.constant dense<0.000000e+00> : vector<32x32xf32>
    %647 = tpu.matmul %642, %644, %cst_286 {dimension_numbers = #tpu.dot_dimension_numbers<[1], [1], [0], [0], [0, 0, 1, 0], [], []>} : vector<32x32xbf16>, vector<32x32xbf16>, vector<32x32xf32> -> vector<32x32xf32>
    %648 = vector.extract_strided_slice %473 {offsets = [0, 9], sizes = [32, 1], strides = [1, 1]} : vector<32x18xf32> to vector<32x1xf32>
    %c0_287 = arith.constant 0 : index
    %c0_288 = arith.constant 0 : index
    %c0_289 = arith.constant 0 : index
    %649 = vector.load %arg3[%c0_287, %c0_288, %c0_289] : memref<9x32x32xf32, #tpu.memory_space<vmem>>, vector<1x32x32xf32>
    %650 = vector.shape_cast %649 : vector<1x32x32xf32> to vector<32x32xf32>
    %651 = vector.broadcast %648 : vector<32x1xf32> to vector<32x32xf32>
    %652 = arith.mulf %651, %650 : vector<32x32xf32>
    %653 = arith.addf %647, %652 : vector<32x32xf32>
    %654 = vector.extract_strided_slice %473 {offsets = [0, 10], sizes = [32, 1], strides = [1, 1]} : vector<32x18xf32> to vector<32x1xf32>
    %c1_290 = arith.constant 1 : index
    %c0_291 = arith.constant 0 : index
    %c0_292 = arith.constant 0 : index
    %655 = vector.load %arg3[%c1_290, %c0_291, %c0_292] : memref<9x32x32xf32, #tpu.memory_space<vmem>>, vector<1x32x32xf32>
    %656 = vector.shape_cast %655 : vector<1x32x32xf32> to vector<32x32xf32>
    %657 = vector.broadcast %654 : vector<32x1xf32> to vector<32x32xf32>
    %658 = arith.mulf %657, %656 : vector<32x32xf32>
    %659 = arith.addf %653, %658 : vector<32x32xf32>
    %660 = vector.extract_strided_slice %473 {offsets = [0, 11], sizes = [32, 1], strides = [1, 1]} : vector<32x18xf32> to vector<32x1xf32>
    %c2_293 = arith.constant 2 : index
    %c0_294 = arith.constant 0 : index
    %c0_295 = arith.constant 0 : index
    %661 = vector.load %arg3[%c2_293, %c0_294, %c0_295] : memref<9x32x32xf32, #tpu.memory_space<vmem>>, vector<1x32x32xf32>
    %662 = vector.shape_cast %661 : vector<1x32x32xf32> to vector<32x32xf32>
    %663 = vector.broadcast %660 : vector<32x1xf32> to vector<32x32xf32>
    %664 = arith.mulf %663, %662 : vector<32x32xf32>
    %665 = arith.addf %659, %664 : vector<32x32xf32>
    %666 = vector.extract_strided_slice %473 {offsets = [0, 12], sizes = [32, 1], strides = [1, 1]} : vector<32x18xf32> to vector<32x1xf32>
    %c3_296 = arith.constant 3 : index
    %c0_297 = arith.constant 0 : index
    %c0_298 = arith.constant 0 : index
    %667 = vector.load %arg3[%c3_296, %c0_297, %c0_298] : memref<9x32x32xf32, #tpu.memory_space<vmem>>, vector<1x32x32xf32>
    %668 = vector.shape_cast %667 : vector<1x32x32xf32> to vector<32x32xf32>
    %669 = vector.broadcast %666 : vector<32x1xf32> to vector<32x32xf32>
    %670 = arith.mulf %669, %668 : vector<32x32xf32>
    %671 = arith.addf %665, %670 : vector<32x32xf32>
    %672 = vector.extract_strided_slice %473 {offsets = [0, 13], sizes = [32, 1], strides = [1, 1]} : vector<32x18xf32> to vector<32x1xf32>
    %c4_299 = arith.constant 4 : index
    %c0_300 = arith.constant 0 : index
    %c0_301 = arith.constant 0 : index
    %673 = vector.load %arg3[%c4_299, %c0_300, %c0_301] : memref<9x32x32xf32, #tpu.memory_space<vmem>>, vector<1x32x32xf32>
    %674 = vector.shape_cast %673 : vector<1x32x32xf32> to vector<32x32xf32>
    %675 = vector.broadcast %672 : vector<32x1xf32> to vector<32x32xf32>
    %676 = arith.mulf %675, %674 : vector<32x32xf32>
    %677 = arith.addf %671, %676 : vector<32x32xf32>
    %678 = vector.extract_strided_slice %473 {offsets = [0, 14], sizes = [32, 1], strides = [1, 1]} : vector<32x18xf32> to vector<32x1xf32>
    %c5_302 = arith.constant 5 : index
    %c0_303 = arith.constant 0 : index
    %c0_304 = arith.constant 0 : index
    %679 = vector.load %arg3[%c5_302, %c0_303, %c0_304] : memref<9x32x32xf32, #tpu.memory_space<vmem>>, vector<1x32x32xf32>
    %680 = vector.shape_cast %679 : vector<1x32x32xf32> to vector<32x32xf32>
    %681 = vector.broadcast %678 : vector<32x1xf32> to vector<32x32xf32>
    %682 = arith.mulf %681, %680 : vector<32x32xf32>
    %683 = arith.addf %677, %682 : vector<32x32xf32>
    %684 = vector.extract_strided_slice %473 {offsets = [0, 15], sizes = [32, 1], strides = [1, 1]} : vector<32x18xf32> to vector<32x1xf32>
    %c6_305 = arith.constant 6 : index
    %c0_306 = arith.constant 0 : index
    %c0_307 = arith.constant 0 : index
    %685 = vector.load %arg3[%c6_305, %c0_306, %c0_307] : memref<9x32x32xf32, #tpu.memory_space<vmem>>, vector<1x32x32xf32>
    %686 = vector.shape_cast %685 : vector<1x32x32xf32> to vector<32x32xf32>
    %687 = vector.broadcast %684 : vector<32x1xf32> to vector<32x32xf32>
    %688 = arith.mulf %687, %686 : vector<32x32xf32>
    %689 = arith.addf %683, %688 : vector<32x32xf32>
    %690 = vector.extract_strided_slice %473 {offsets = [0, 16], sizes = [32, 1], strides = [1, 1]} : vector<32x18xf32> to vector<32x1xf32>
    %c7_308 = arith.constant 7 : index
    %c0_309 = arith.constant 0 : index
    %c0_310 = arith.constant 0 : index
    %691 = vector.load %arg3[%c7_308, %c0_309, %c0_310] : memref<9x32x32xf32, #tpu.memory_space<vmem>>, vector<1x32x32xf32>
    %692 = vector.shape_cast %691 : vector<1x32x32xf32> to vector<32x32xf32>
    %693 = vector.broadcast %690 : vector<32x1xf32> to vector<32x32xf32>
    %694 = arith.mulf %693, %692 : vector<32x32xf32>
    %695 = arith.addf %689, %694 : vector<32x32xf32>
    %696 = vector.extract_strided_slice %473 {offsets = [0, 17], sizes = [32, 1], strides = [1, 1]} : vector<32x18xf32> to vector<32x1xf32>
    %c8_311 = arith.constant 8 : index
    %c0_312 = arith.constant 0 : index
    %c0_313 = arith.constant 0 : index
    %697 = vector.load %arg3[%c8_311, %c0_312, %c0_313] : memref<9x32x32xf32, #tpu.memory_space<vmem>>, vector<1x32x32xf32>
    %698 = vector.shape_cast %697 : vector<1x32x32xf32> to vector<32x32xf32>
    %699 = vector.broadcast %696 : vector<32x1xf32> to vector<32x32xf32>
    %700 = arith.mulf %699, %698 : vector<32x32xf32>
    %701 = arith.addf %695, %700 : vector<32x32xf32>
    %cst_314 = arith.constant -1.000000e+04 : f32
    %702 = vector.broadcast %cst_314 : f32 to vector<32x32xf32>
    %703 = arith.select %478, %701, %702 : vector<32x32xi1>, vector<32x32xf32>
    %cst_315 = arith.constant dense<0xFF800000> : vector<32xf32>
    %704 = vector.multi_reduction <maximumf>, %703, %cst_315 [1] : vector<32x32xf32> to vector<32xf32>
    %705 = vector.shape_cast %704 : vector<32xf32> to vector<32x1xf32>
    %706 = vector.broadcast %705 : vector<32x1xf32> to vector<32x32xf32>
    %707 = arith.subf %703, %706 : vector<32x32xf32>
    %708 = math.exp %707 : vector<32x32xf32>
    %cst_316 = arith.constant dense<0.000000e+00> : vector<32xf32>
    %709 = vector.multi_reduction <add>, %708, %cst_316 [1] : vector<32x32xf32> to vector<32xf32>
    %710 = vector.shape_cast %709 : vector<32xf32> to vector<32x1xf32>
    %711 = vector.broadcast %710 : vector<32x1xf32> to vector<32x32xf32>
    %712 = arith.divf %708, %711 : vector<32x32xf32>
    %713 = arith.truncf %712 : vector<32x32xf32> to vector<32x32xbf16>
    %cst_317 = arith.constant dense<0.000000e+00> : vector<32x32xf32>
    %714 = tpu.matmul %713, %646, %cst_317 {dimension_numbers = #tpu.dot_dimension_numbers<[1], [0], [0], [1], [0, 0, 1, 1], [], []>} : vector<32x32xbf16>, vector<32x32xbf16>, vector<32x32xf32> -> vector<32x32xf32>
    %c0_318 = arith.constant 0 : index
    %c0_319 = arith.constant 0 : index
    %c0_320 = arith.constant 0 : index
    %715 = vector.load %arg3[%c0_318, %c0_319, %c0_320] : memref<9x32x32xf32, #tpu.memory_space<vmem>>, vector<1x32x32xf32>
    %716 = vector.shape_cast %715 : vector<1x32x32xf32> to vector<32x32xf32>
    %717 = arith.mulf %712, %716 : vector<32x32xf32>
    %cst_321 = arith.constant dense<0.000000e+00> : vector<32xf32>
    %718 = vector.multi_reduction <add>, %717, %cst_321 [1] : vector<32x32xf32> to vector<32xf32>
    %719 = vector.shape_cast %718 : vector<32xf32> to vector<32x1xf32>
    %720 = vector.extract_strided_slice %475 {offsets = [0, 0], sizes = [1, 32], strides = [1, 1]} : vector<9x32xf32> to vector<1x32xf32>
    %721 = vector.broadcast %719 : vector<32x1xf32> to vector<32x32xf32>
    %722 = vector.broadcast %720 : vector<1x32xf32> to vector<32x32xf32>
    %723 = arith.mulf %721, %722 : vector<32x32xf32>
    %724 = arith.addf %714, %723 : vector<32x32xf32>
    %c1_322 = arith.constant 1 : index
    %c0_323 = arith.constant 0 : index
    %c0_324 = arith.constant 0 : index
    %725 = vector.load %arg3[%c1_322, %c0_323, %c0_324] : memref<9x32x32xf32, #tpu.memory_space<vmem>>, vector<1x32x32xf32>
    %726 = vector.shape_cast %725 : vector<1x32x32xf32> to vector<32x32xf32>
    %727 = arith.mulf %712, %726 : vector<32x32xf32>
    %cst_325 = arith.constant dense<0.000000e+00> : vector<32xf32>
    %728 = vector.multi_reduction <add>, %727, %cst_325 [1] : vector<32x32xf32> to vector<32xf32>
    %729 = vector.shape_cast %728 : vector<32xf32> to vector<32x1xf32>
    %730 = vector.extract_strided_slice %475 {offsets = [1, 0], sizes = [1, 32], strides = [1, 1]} : vector<9x32xf32> to vector<1x32xf32>
    %731 = vector.broadcast %729 : vector<32x1xf32> to vector<32x32xf32>
    %732 = vector.broadcast %730 : vector<1x32xf32> to vector<32x32xf32>
    %733 = arith.mulf %731, %732 : vector<32x32xf32>
    %734 = arith.addf %724, %733 : vector<32x32xf32>
    %c2_326 = arith.constant 2 : index
    %c0_327 = arith.constant 0 : index
    %c0_328 = arith.constant 0 : index
    %735 = vector.load %arg3[%c2_326, %c0_327, %c0_328] : memref<9x32x32xf32, #tpu.memory_space<vmem>>, vector<1x32x32xf32>
    %736 = vector.shape_cast %735 : vector<1x32x32xf32> to vector<32x32xf32>
    %737 = arith.mulf %712, %736 : vector<32x32xf32>
    %cst_329 = arith.constant dense<0.000000e+00> : vector<32xf32>
    %738 = vector.multi_reduction <add>, %737, %cst_329 [1] : vector<32x32xf32> to vector<32xf32>
    %739 = vector.shape_cast %738 : vector<32xf32> to vector<32x1xf32>
    %740 = vector.extract_strided_slice %475 {offsets = [2, 0], sizes = [1, 32], strides = [1, 1]} : vector<9x32xf32> to vector<1x32xf32>
    %741 = vector.broadcast %739 : vector<32x1xf32> to vector<32x32xf32>
    %742 = vector.broadcast %740 : vector<1x32xf32> to vector<32x32xf32>
    %743 = arith.mulf %741, %742 : vector<32x32xf32>
    %744 = arith.addf %734, %743 : vector<32x32xf32>
    %c3_330 = arith.constant 3 : index
    %c0_331 = arith.constant 0 : index
    %c0_332 = arith.constant 0 : index
    %745 = vector.load %arg3[%c3_330, %c0_331, %c0_332] : memref<9x32x32xf32, #tpu.memory_space<vmem>>, vector<1x32x32xf32>
    %746 = vector.shape_cast %745 : vector<1x32x32xf32> to vector<32x32xf32>
    %747 = arith.mulf %712, %746 : vector<32x32xf32>
    %cst_333 = arith.constant dense<0.000000e+00> : vector<32xf32>
    %748 = vector.multi_reduction <add>, %747, %cst_333 [1] : vector<32x32xf32> to vector<32xf32>
    %749 = vector.shape_cast %748 : vector<32xf32> to vector<32x1xf32>
    %750 = vector.extract_strided_slice %475 {offsets = [3, 0], sizes = [1, 32], strides = [1, 1]} : vector<9x32xf32> to vector<1x32xf32>
    %751 = vector.broadcast %749 : vector<32x1xf32> to vector<32x32xf32>
    %752 = vector.broadcast %750 : vector<1x32xf32> to vector<32x32xf32>
    %753 = arith.mulf %751, %752 : vector<32x32xf32>
    %754 = arith.addf %744, %753 : vector<32x32xf32>
    %c4_334 = arith.constant 4 : index
    %c0_335 = arith.constant 0 : index
    %c0_336 = arith.constant 0 : index
    %755 = vector.load %arg3[%c4_334, %c0_335, %c0_336] : memref<9x32x32xf32, #tpu.memory_space<vmem>>, vector<1x32x32xf32>
    %756 = vector.shape_cast %755 : vector<1x32x32xf32> to vector<32x32xf32>
    %757 = arith.mulf %712, %756 : vector<32x32xf32>
    %cst_337 = arith.constant dense<0.000000e+00> : vector<32xf32>
    %758 = vector.multi_reduction <add>, %757, %cst_337 [1] : vector<32x32xf32> to vector<32xf32>
    %759 = vector.shape_cast %758 : vector<32xf32> to vector<32x1xf32>
    %760 = vector.extract_strided_slice %475 {offsets = [4, 0], sizes = [1, 32], strides = [1, 1]} : vector<9x32xf32> to vector<1x32xf32>
    %761 = vector.broadcast %759 : vector<32x1xf32> to vector<32x32xf32>
    %762 = vector.broadcast %760 : vector<1x32xf32> to vector<32x32xf32>
    %763 = arith.mulf %761, %762 : vector<32x32xf32>
    %764 = arith.addf %754, %763 : vector<32x32xf32>
    %c5_338 = arith.constant 5 : index
    %c0_339 = arith.constant 0 : index
    %c0_340 = arith.constant 0 : index
    %765 = vector.load %arg3[%c5_338, %c0_339, %c0_340] : memref<9x32x32xf32, #tpu.memory_space<vmem>>, vector<1x32x32xf32>
    %766 = vector.shape_cast %765 : vector<1x32x32xf32> to vector<32x32xf32>
    %767 = arith.mulf %712, %766 : vector<32x32xf32>
    %cst_341 = arith.constant dense<0.000000e+00> : vector<32xf32>
    %768 = vector.multi_reduction <add>, %767, %cst_341 [1] : vector<32x32xf32> to vector<32xf32>
    %769 = vector.shape_cast %768 : vector<32xf32> to vector<32x1xf32>
    %770 = vector.extract_strided_slice %475 {offsets = [5, 0], sizes = [1, 32], strides = [1, 1]} : vector<9x32xf32> to vector<1x32xf32>
    %771 = vector.broadcast %769 : vector<32x1xf32> to vector<32x32xf32>
    %772 = vector.broadcast %770 : vector<1x32xf32> to vector<32x32xf32>
    %773 = arith.mulf %771, %772 : vector<32x32xf32>
    %774 = arith.addf %764, %773 : vector<32x32xf32>
    %c6_342 = arith.constant 6 : index
    %c0_343 = arith.constant 0 : index
    %c0_344 = arith.constant 0 : index
    %775 = vector.load %arg3[%c6_342, %c0_343, %c0_344] : memref<9x32x32xf32, #tpu.memory_space<vmem>>, vector<1x32x32xf32>
    %776 = vector.shape_cast %775 : vector<1x32x32xf32> to vector<32x32xf32>
    %777 = arith.mulf %712, %776 : vector<32x32xf32>
    %cst_345 = arith.constant dense<0.000000e+00> : vector<32xf32>
    %778 = vector.multi_reduction <add>, %777, %cst_345 [1] : vector<32x32xf32> to vector<32xf32>
    %779 = vector.shape_cast %778 : vector<32xf32> to vector<32x1xf32>
    %780 = vector.extract_strided_slice %475 {offsets = [6, 0], sizes = [1, 32], strides = [1, 1]} : vector<9x32xf32> to vector<1x32xf32>
    %781 = vector.broadcast %779 : vector<32x1xf32> to vector<32x32xf32>
    %782 = vector.broadcast %780 : vector<1x32xf32> to vector<32x32xf32>
    %783 = arith.mulf %781, %782 : vector<32x32xf32>
    %784 = arith.addf %774, %783 : vector<32x32xf32>
    %c7_346 = arith.constant 7 : index
    %c0_347 = arith.constant 0 : index
    %c0_348 = arith.constant 0 : index
    %785 = vector.load %arg3[%c7_346, %c0_347, %c0_348] : memref<9x32x32xf32, #tpu.memory_space<vmem>>, vector<1x32x32xf32>
    %786 = vector.shape_cast %785 : vector<1x32x32xf32> to vector<32x32xf32>
    %787 = arith.mulf %712, %786 : vector<32x32xf32>
    %cst_349 = arith.constant dense<0.000000e+00> : vector<32xf32>
    %788 = vector.multi_reduction <add>, %787, %cst_349 [1] : vector<32x32xf32> to vector<32xf32>
    %789 = vector.shape_cast %788 : vector<32xf32> to vector<32x1xf32>
    %790 = vector.extract_strided_slice %475 {offsets = [7, 0], sizes = [1, 32], strides = [1, 1]} : vector<9x32xf32> to vector<1x32xf32>
    %791 = vector.broadcast %789 : vector<32x1xf32> to vector<32x32xf32>
    %792 = vector.broadcast %790 : vector<1x32xf32> to vector<32x32xf32>
    %793 = arith.mulf %791, %792 : vector<32x32xf32>
    %794 = arith.addf %784, %793 : vector<32x32xf32>
    %c8_350 = arith.constant 8 : index
    %c0_351 = arith.constant 0 : index
    %c0_352 = arith.constant 0 : index
    %795 = vector.load %arg3[%c8_350, %c0_351, %c0_352] : memref<9x32x32xf32, #tpu.memory_space<vmem>>, vector<1x32x32xf32>
    %796 = vector.shape_cast %795 : vector<1x32x32xf32> to vector<32x32xf32>
    %797 = arith.mulf %712, %796 : vector<32x32xf32>
    %cst_353 = arith.constant dense<0.000000e+00> : vector<32xf32>
    %798 = vector.multi_reduction <add>, %797, %cst_353 [1] : vector<32x32xf32> to vector<32xf32>
    %799 = vector.shape_cast %798 : vector<32xf32> to vector<32x1xf32>
    %800 = vector.extract_strided_slice %475 {offsets = [8, 0], sizes = [1, 32], strides = [1, 1]} : vector<9x32xf32> to vector<1x32xf32>
    %801 = vector.broadcast %799 : vector<32x1xf32> to vector<32x32xf32>
    %802 = vector.broadcast %800 : vector<1x32xf32> to vector<32x32xf32>
    %803 = arith.mulf %801, %802 : vector<32x32xf32>
    %804 = arith.addf %794, %803 : vector<32x32xf32>
    %805 = tpu.concatenate %641, %804 in 1 : vector<32x32xf32>, vector<32x32xf32> -> vector<32x64xf32>
    %806 = arith.truncf %805 : vector<32x64xf32> to vector<32x64xbf16>
    %c1_354 = arith.constant 1 : index
    %c0_355 = arith.constant 0 : index
    %c0_356 = arith.constant 0 : index
    %807 = vector.load %arg7[%c1_354, %c0_355, %c0_356] : memref<3x64x64xbf16, #tpu.memory_space<vmem>>, vector<1x64x64xbf16>
    %808 = vector.shape_cast %807 : vector<1x64x64xbf16> to vector<64x64xbf16>
    %cst_357 = arith.constant dense<0.000000e+00> : vector<32x64xf32>
    %809 = tpu.matmul %806, %808, %cst_357 {dimension_numbers = #tpu.dot_dimension_numbers<[1], [0], [0], [1], [0, 0, 1, 1], [], []>} : vector<32x64xbf16>, vector<64x64xbf16>, vector<32x64xf32> -> vector<32x64xf32>
    %c1_358 = arith.constant 1 : index
    %c0_359 = arith.constant 0 : index
    %c0_360 = arith.constant 0 : index
    %810 = vector.load %arg8[%c1_358, %c0_359, %c0_360] : memref<3x1x64xf32, #tpu.memory_space<vmem>>, vector<1x1x64xf32>
    %811 = vector.shape_cast %810 : vector<1x1x64xf32> to vector<1x64xf32>
    %812 = vector.broadcast %811 : vector<1x64xf32> to vector<32x64xf32>
    %813 = arith.addf %809, %812 : vector<32x64xf32>
    %814 = arith.addf %458, %813 : vector<32x64xf32>
    %c1_361 = arith.constant 1 : index
    %c0_362 = arith.constant 0 : index
    %c0_363 = arith.constant 0 : index
    %815 = vector.load %arg11[%c1_361, %c0_362, %c0_363] : memref<3x1x64xf32, #tpu.memory_space<vmem>>, vector<1x1x64xf32>
    %816 = vector.shape_cast %815 : vector<1x1x64xf32> to vector<1x64xf32>
    %c1_364 = arith.constant 1 : index
    %c0_365 = arith.constant 0 : index
    %c0_366 = arith.constant 0 : index
    %817 = vector.load %arg12[%c1_364, %c0_365, %c0_366] : memref<3x1x64xf32, #tpu.memory_space<vmem>>, vector<1x1x64xf32>
    %818 = vector.shape_cast %817 : vector<1x1x64xf32> to vector<1x64xf32>
    %cst_367 = arith.constant dense<0.000000e+00> : vector<32xf32>
    %819 = vector.multi_reduction <add>, %814, %cst_367 [1] : vector<32x64xf32> to vector<32xf32>
    %820 = vector.shape_cast %819 : vector<32xf32> to vector<32x1xf32>
    %cst_368 = arith.constant 6.400000e+01 : f32
    %821 = vector.broadcast %cst_368 : f32 to vector<32x1xf32>
    %822 = arith.divf %820, %821 : vector<32x1xf32>
    %823 = vector.broadcast %822 : vector<32x1xf32> to vector<32x64xf32>
    %824 = arith.subf %814, %823 : vector<32x64xf32>
    %825 = arith.mulf %824, %824 : vector<32x64xf32>
    %cst_369 = arith.constant dense<0.000000e+00> : vector<32xf32>
    %826 = vector.multi_reduction <add>, %825, %cst_369 [1] : vector<32x64xf32> to vector<32xf32>
    %827 = vector.shape_cast %826 : vector<32xf32> to vector<32x1xf32>
    %cst_370 = arith.constant 6.400000e+01 : f32
    %828 = vector.broadcast %cst_370 : f32 to vector<32x1xf32>
    %829 = arith.divf %827, %828 : vector<32x1xf32>
    %830 = vector.broadcast %822 : vector<32x1xf32> to vector<32x64xf32>
    %831 = arith.subf %814, %830 : vector<32x64xf32>
    %cst_371 = arith.constant 9.99999974E-6 : f32
    %832 = vector.broadcast %cst_371 : f32 to vector<32x1xf32>
    %833 = arith.addf %829, %832 : vector<32x1xf32>
    %834 = math.rsqrt %833 : vector<32x1xf32>
    %835 = vector.broadcast %834 : vector<32x1xf32> to vector<32x64xf32>
    %836 = arith.mulf %831, %835 : vector<32x64xf32>
    %837 = vector.broadcast %816 : vector<1x64xf32> to vector<32x64xf32>
    %838 = arith.mulf %836, %837 : vector<32x64xf32>
    %839 = vector.broadcast %818 : vector<1x64xf32> to vector<32x64xf32>
    %840 = arith.addf %838, %839 : vector<32x64xf32>
    %841 = vector.broadcast %1 : vector<32x1xf32> to vector<32x64xf32>
    %842 = arith.mulf %840, %841 : vector<32x64xf32>
    %cst_372 = arith.constant 0.000000e+00 : f32
    %843 = vector.broadcast %cst_372 : f32 to vector<1x64xf32>
    %844 = tpu.concatenate %843, %842, %843 in 0 : vector<1x64xf32>, vector<32x64xf32>, vector<1x64xf32> -> vector<34x64xf32>
    %845 = vector.extract_strided_slice %844 {offsets = [0, 0], sizes = [32, 64], strides = [1, 1]} : vector<34x64xf32> to vector<32x64xf32>
    %846 = vector.broadcast %3 : vector<32x1xf32> to vector<32x64xf32>
    %847 = arith.mulf %845, %846 : vector<32x64xf32>
    %848 = vector.extract_strided_slice %844 {offsets = [2, 0], sizes = [32, 64], strides = [1, 1]} : vector<34x64xf32> to vector<32x64xf32>
    %849 = vector.broadcast %5 : vector<32x1xf32> to vector<32x64xf32>
    %850 = arith.mulf %848, %849 : vector<32x64xf32>
    %851 = tpu.concatenate %847, %842, %850 in 1 : vector<32x64xf32>, vector<32x64xf32>, vector<32x64xf32> -> vector<32x192xf32>
    %852 = arith.truncf %851 : vector<32x192xf32> to vector<32x192xbf16>
    %c1_373 = arith.constant 1 : index
    %c0_374 = arith.constant 0 : index
    %c0_375 = arith.constant 0 : index
    %853 = vector.load %arg13[%c1_373, %c0_374, %c0_375] : memref<3x192x128xbf16, #tpu.memory_space<vmem>>, vector<1x192x128xbf16>
    %854 = vector.shape_cast %853 : vector<1x192x128xbf16> to vector<192x128xbf16>
    %cst_376 = arith.constant dense<0.000000e+00> : vector<32x128xf32>
    %855 = tpu.matmul %852, %854, %cst_376 {dimension_numbers = #tpu.dot_dimension_numbers<[1], [0], [0], [1], [0, 0, 1, 1], [], []>} : vector<32x192xbf16>, vector<192x128xbf16>, vector<32x128xf32> -> vector<32x128xf32>
    %c1_377 = arith.constant 1 : index
    %c0_378 = arith.constant 0 : index
    %c0_379 = arith.constant 0 : index
    %856 = vector.load %arg14[%c1_377, %c0_378, %c0_379] : memref<3x1x128xf32, #tpu.memory_space<vmem>>, vector<1x1x128xf32>
    %857 = vector.shape_cast %856 : vector<1x1x128xf32> to vector<1x128xf32>
    %858 = vector.broadcast %857 : vector<1x128xf32> to vector<32x128xf32>
    %859 = arith.addf %855, %858 : vector<32x128xf32>
    %cst_380 = arith.constant 0.000000e+00 : f32
    %860 = vector.broadcast %cst_380 : f32 to vector<32x128xf32>
    %861 = arith.maximumf %859, %860 : vector<32x128xf32>
    %862 = vector.broadcast %1 : vector<32x1xf32> to vector<32x128xf32>
    %863 = arith.mulf %861, %862 : vector<32x128xf32>
    %cst_381 = arith.constant 0.000000e+00 : f32
    %864 = vector.broadcast %cst_381 : f32 to vector<1x128xf32>
    %865 = tpu.concatenate %864, %863, %864 in 0 : vector<1x128xf32>, vector<32x128xf32>, vector<1x128xf32> -> vector<34x128xf32>
    %866 = vector.extract_strided_slice %865 {offsets = [0, 0], sizes = [32, 128], strides = [1, 1]} : vector<34x128xf32> to vector<32x128xf32>
    %867 = vector.broadcast %3 : vector<32x1xf32> to vector<32x128xf32>
    %868 = arith.mulf %866, %867 : vector<32x128xf32>
    %869 = vector.extract_strided_slice %865 {offsets = [2, 0], sizes = [32, 128], strides = [1, 1]} : vector<34x128xf32> to vector<32x128xf32>
    %870 = vector.broadcast %5 : vector<32x1xf32> to vector<32x128xf32>
    %871 = arith.mulf %869, %870 : vector<32x128xf32>
    %872 = tpu.concatenate %868, %863, %871 in 1 : vector<32x128xf32>, vector<32x128xf32>, vector<32x128xf32> -> vector<32x384xf32>
    %873 = arith.truncf %872 : vector<32x384xf32> to vector<32x384xbf16>
    %c1_382 = arith.constant 1 : index
    %c0_383 = arith.constant 0 : index
    %c0_384 = arith.constant 0 : index
    %874 = vector.load %arg15[%c1_382, %c0_383, %c0_384] : memref<3x384x64xbf16, #tpu.memory_space<vmem>>, vector<1x384x64xbf16>
    %875 = vector.shape_cast %874 : vector<1x384x64xbf16> to vector<384x64xbf16>
    %cst_385 = arith.constant dense<0.000000e+00> : vector<32x64xf32>
    %876 = tpu.matmul %873, %875, %cst_385 {dimension_numbers = #tpu.dot_dimension_numbers<[1], [0], [0], [1], [0, 0, 1, 1], [], []>} : vector<32x384xbf16>, vector<384x64xbf16>, vector<32x64xf32> -> vector<32x64xf32>
    %c1_386 = arith.constant 1 : index
    %c0_387 = arith.constant 0 : index
    %c0_388 = arith.constant 0 : index
    %877 = vector.load %arg16[%c1_386, %c0_387, %c0_388] : memref<3x1x64xf32, #tpu.memory_space<vmem>>, vector<1x1x64xf32>
    %878 = vector.shape_cast %877 : vector<1x1x64xf32> to vector<1x64xf32>
    %879 = vector.broadcast %878 : vector<1x64xf32> to vector<32x64xf32>
    %880 = arith.addf %876, %879 : vector<32x64xf32>
    %881 = vector.broadcast %1 : vector<32x1xf32> to vector<32x64xf32>
    %882 = arith.mulf %880, %881 : vector<32x64xf32>
    %883 = arith.addf %840, %882 : vector<32x64xf32>
    %c1_389 = arith.constant 1 : index
    %c0_390 = arith.constant 0 : index
    %c0_391 = arith.constant 0 : index
    %884 = vector.load %arg17[%c1_389, %c0_390, %c0_391] : memref<3x1x64xf32, #tpu.memory_space<vmem>>, vector<1x1x64xf32>
    %885 = vector.shape_cast %884 : vector<1x1x64xf32> to vector<1x64xf32>
    %c1_392 = arith.constant 1 : index
    %c0_393 = arith.constant 0 : index
    %c0_394 = arith.constant 0 : index
    %886 = vector.load %arg18[%c1_392, %c0_393, %c0_394] : memref<3x1x64xf32, #tpu.memory_space<vmem>>, vector<1x1x64xf32>
    %887 = vector.shape_cast %886 : vector<1x1x64xf32> to vector<1x64xf32>
    %cst_395 = arith.constant dense<0.000000e+00> : vector<32xf32>
    %888 = vector.multi_reduction <add>, %883, %cst_395 [1] : vector<32x64xf32> to vector<32xf32>
    %889 = vector.shape_cast %888 : vector<32xf32> to vector<32x1xf32>
    %cst_396 = arith.constant 6.400000e+01 : f32
    %890 = vector.broadcast %cst_396 : f32 to vector<32x1xf32>
    %891 = arith.divf %889, %890 : vector<32x1xf32>
    %892 = vector.broadcast %891 : vector<32x1xf32> to vector<32x64xf32>
    %893 = arith.subf %883, %892 : vector<32x64xf32>
    %894 = arith.mulf %893, %893 : vector<32x64xf32>
    %cst_397 = arith.constant dense<0.000000e+00> : vector<32xf32>
    %895 = vector.multi_reduction <add>, %894, %cst_397 [1] : vector<32x64xf32> to vector<32xf32>
    %896 = vector.shape_cast %895 : vector<32xf32> to vector<32x1xf32>
    %cst_398 = arith.constant 6.400000e+01 : f32
    %897 = vector.broadcast %cst_398 : f32 to vector<32x1xf32>
    %898 = arith.divf %896, %897 : vector<32x1xf32>
    %899 = vector.broadcast %891 : vector<32x1xf32> to vector<32x64xf32>
    %900 = arith.subf %883, %899 : vector<32x64xf32>
    %cst_399 = arith.constant 9.99999974E-6 : f32
    %901 = vector.broadcast %cst_399 : f32 to vector<32x1xf32>
    %902 = arith.addf %898, %901 : vector<32x1xf32>
    %903 = math.rsqrt %902 : vector<32x1xf32>
    %904 = vector.broadcast %903 : vector<32x1xf32> to vector<32x64xf32>
    %905 = arith.mulf %900, %904 : vector<32x64xf32>
    %906 = vector.broadcast %885 : vector<1x64xf32> to vector<32x64xf32>
    %907 = arith.mulf %905, %906 : vector<32x64xf32>
    %908 = vector.broadcast %887 : vector<1x64xf32> to vector<32x64xf32>
    %909 = arith.addf %907, %908 : vector<32x64xf32>
    %910 = vector.broadcast %1 : vector<32x1xf32> to vector<32x64xf32>
    %911 = arith.mulf %909, %910 : vector<32x64xf32>
    %912 = arith.truncf %911 : vector<32x64xf32> to vector<32x64xbf16>
    %c2_400 = arith.constant 2 : index
    %c0_401 = arith.constant 0 : index
    %c0_402 = arith.constant 0 : index
    %913 = vector.load %arg5[%c2_400, %c0_401, %c0_402] : memref<3x64x192xbf16, #tpu.memory_space<vmem>>, vector<1x64x192xbf16>
    %914 = vector.shape_cast %913 : vector<1x64x192xbf16> to vector<64x192xbf16>
    %cst_403 = arith.constant dense<0.000000e+00> : vector<32x192xf32>
    %915 = tpu.matmul %912, %914, %cst_403 {dimension_numbers = #tpu.dot_dimension_numbers<[1], [0], [0], [1], [0, 0, 1, 1], [], []>} : vector<32x64xbf16>, vector<64x192xbf16>, vector<32x192xf32> -> vector<32x192xf32>
    %c2_404 = arith.constant 2 : index
    %c0_405 = arith.constant 0 : index
    %c0_406 = arith.constant 0 : index
    %916 = vector.load %arg6[%c2_404, %c0_405, %c0_406] : memref<3x1x192xf32, #tpu.memory_space<vmem>>, vector<1x1x192xf32>
    %917 = vector.shape_cast %916 : vector<1x1x192xf32> to vector<1x192xf32>
    %918 = vector.broadcast %917 : vector<1x192xf32> to vector<32x192xf32>
    %919 = arith.addf %915, %918 : vector<32x192xf32>
    %920 = vector.extract_strided_slice %919 {offsets = [0, 0], sizes = [32, 64], strides = [1, 1]} : vector<32x192xf32> to vector<32x64xf32>
    %cst_407 = arith.constant 0.176776692 : f32
    %921 = vector.broadcast %cst_407 : f32 to vector<32x64xf32>
    %922 = arith.mulf %920, %921 : vector<32x64xf32>
    %923 = arith.truncf %922 : vector<32x64xf32> to vector<32x64xbf16>
    %c2_408 = arith.constant 2 : index
    %c0_409 = arith.constant 0 : index
    %c0_410 = arith.constant 0 : index
    %924 = vector.load %arg9[%c2_408, %c0_409, %c0_410] : memref<3x64x18xbf16, #tpu.memory_space<vmem>>, vector<1x64x18xbf16>
    %925 = vector.shape_cast %924 : vector<1x64x18xbf16> to vector<64x18xbf16>
    %cst_411 = arith.constant dense<0.000000e+00> : vector<32x18xf32>
    %926 = tpu.matmul %923, %925, %cst_411 {dimension_numbers = #tpu.dot_dimension_numbers<[1], [0], [0], [1], [0, 0, 1, 1], [], []>} : vector<32x64xbf16>, vector<64x18xbf16>, vector<32x18xf32> -> vector<32x18xf32>
    %c2_412 = arith.constant 2 : index
    %c0_413 = arith.constant 0 : index
    %c0_414 = arith.constant 0 : index
    %927 = vector.load %arg10[%c2_412, %c0_413, %c0_414] : memref<3x9x32xf32, #tpu.memory_space<vmem>>, vector<1x9x32xf32>
    %928 = vector.shape_cast %927 : vector<1x9x32xf32> to vector<9x32xf32>
    %c0_415 = arith.constant 0 : index
    %c0_416 = arith.constant 0 : index
    %929 = vector.load %arg2[%c0_415, %c0_416] : memref<32x32xf32, #tpu.memory_space<vmem>>, vector<32x32xf32>
    %cst_417 = arith.constant 0.000000e+00 : f32
    %930 = vector.broadcast %cst_417 : f32 to vector<32x32xf32>
    %931 = arith.cmpf ogt, %929, %930 : vector<32x32xf32>
    %932 = vector.extract_strided_slice %923 {offsets = [0, 0], sizes = [32, 32], strides = [1, 1]} : vector<32x64xbf16> to vector<32x32xbf16>
    %933 = vector.extract_strided_slice %919 {offsets = [0, 64], sizes = [32, 32], strides = [1, 1]} : vector<32x192xf32> to vector<32x32xf32>
    %934 = arith.truncf %933 : vector<32x32xf32> to vector<32x32xbf16>
    %935 = vector.extract_strided_slice %919 {offsets = [0, 128], sizes = [32, 32], strides = [1, 1]} : vector<32x192xf32> to vector<32x32xf32>
    %936 = arith.truncf %935 : vector<32x32xf32> to vector<32x32xbf16>
    %cst_418 = arith.constant dense<0.000000e+00> : vector<32x32xf32>
    %937 = tpu.matmul %932, %934, %cst_418 {dimension_numbers = #tpu.dot_dimension_numbers<[1], [1], [0], [0], [0, 0, 1, 0], [], []>} : vector<32x32xbf16>, vector<32x32xbf16>, vector<32x32xf32> -> vector<32x32xf32>
    %938 = vector.extract_strided_slice %926 {offsets = [0, 0], sizes = [32, 1], strides = [1, 1]} : vector<32x18xf32> to vector<32x1xf32>
    %c0_419 = arith.constant 0 : index
    %c0_420 = arith.constant 0 : index
    %c0_421 = arith.constant 0 : index
    %939 = vector.load %arg3[%c0_419, %c0_420, %c0_421] : memref<9x32x32xf32, #tpu.memory_space<vmem>>, vector<1x32x32xf32>
    %940 = vector.shape_cast %939 : vector<1x32x32xf32> to vector<32x32xf32>
    %941 = vector.broadcast %938 : vector<32x1xf32> to vector<32x32xf32>
    %942 = arith.mulf %941, %940 : vector<32x32xf32>
    %943 = arith.addf %937, %942 : vector<32x32xf32>
    %944 = vector.extract_strided_slice %926 {offsets = [0, 1], sizes = [32, 1], strides = [1, 1]} : vector<32x18xf32> to vector<32x1xf32>
    %c1_422 = arith.constant 1 : index
    %c0_423 = arith.constant 0 : index
    %c0_424 = arith.constant 0 : index
    %945 = vector.load %arg3[%c1_422, %c0_423, %c0_424] : memref<9x32x32xf32, #tpu.memory_space<vmem>>, vector<1x32x32xf32>
    %946 = vector.shape_cast %945 : vector<1x32x32xf32> to vector<32x32xf32>
    %947 = vector.broadcast %944 : vector<32x1xf32> to vector<32x32xf32>
    %948 = arith.mulf %947, %946 : vector<32x32xf32>
    %949 = arith.addf %943, %948 : vector<32x32xf32>
    %950 = vector.extract_strided_slice %926 {offsets = [0, 2], sizes = [32, 1], strides = [1, 1]} : vector<32x18xf32> to vector<32x1xf32>
    %c2_425 = arith.constant 2 : index
    %c0_426 = arith.constant 0 : index
    %c0_427 = arith.constant 0 : index
    %951 = vector.load %arg3[%c2_425, %c0_426, %c0_427] : memref<9x32x32xf32, #tpu.memory_space<vmem>>, vector<1x32x32xf32>
    %952 = vector.shape_cast %951 : vector<1x32x32xf32> to vector<32x32xf32>
    %953 = vector.broadcast %950 : vector<32x1xf32> to vector<32x32xf32>
    %954 = arith.mulf %953, %952 : vector<32x32xf32>
    %955 = arith.addf %949, %954 : vector<32x32xf32>
    %956 = vector.extract_strided_slice %926 {offsets = [0, 3], sizes = [32, 1], strides = [1, 1]} : vector<32x18xf32> to vector<32x1xf32>
    %c3_428 = arith.constant 3 : index
    %c0_429 = arith.constant 0 : index
    %c0_430 = arith.constant 0 : index
    %957 = vector.load %arg3[%c3_428, %c0_429, %c0_430] : memref<9x32x32xf32, #tpu.memory_space<vmem>>, vector<1x32x32xf32>
    %958 = vector.shape_cast %957 : vector<1x32x32xf32> to vector<32x32xf32>
    %959 = vector.broadcast %956 : vector<32x1xf32> to vector<32x32xf32>
    %960 = arith.mulf %959, %958 : vector<32x32xf32>
    %961 = arith.addf %955, %960 : vector<32x32xf32>
    %962 = vector.extract_strided_slice %926 {offsets = [0, 4], sizes = [32, 1], strides = [1, 1]} : vector<32x18xf32> to vector<32x1xf32>
    %c4_431 = arith.constant 4 : index
    %c0_432 = arith.constant 0 : index
    %c0_433 = arith.constant 0 : index
    %963 = vector.load %arg3[%c4_431, %c0_432, %c0_433] : memref<9x32x32xf32, #tpu.memory_space<vmem>>, vector<1x32x32xf32>
    %964 = vector.shape_cast %963 : vector<1x32x32xf32> to vector<32x32xf32>
    %965 = vector.broadcast %962 : vector<32x1xf32> to vector<32x32xf32>
    %966 = arith.mulf %965, %964 : vector<32x32xf32>
    %967 = arith.addf %961, %966 : vector<32x32xf32>
    %968 = vector.extract_strided_slice %926 {offsets = [0, 5], sizes = [32, 1], strides = [1, 1]} : vector<32x18xf32> to vector<32x1xf32>
    %c5_434 = arith.constant 5 : index
    %c0_435 = arith.constant 0 : index
    %c0_436 = arith.constant 0 : index
    %969 = vector.load %arg3[%c5_434, %c0_435, %c0_436] : memref<9x32x32xf32, #tpu.memory_space<vmem>>, vector<1x32x32xf32>
    %970 = vector.shape_cast %969 : vector<1x32x32xf32> to vector<32x32xf32>
    %971 = vector.broadcast %968 : vector<32x1xf32> to vector<32x32xf32>
    %972 = arith.mulf %971, %970 : vector<32x32xf32>
    %973 = arith.addf %967, %972 : vector<32x32xf32>
    %974 = vector.extract_strided_slice %926 {offsets = [0, 6], sizes = [32, 1], strides = [1, 1]} : vector<32x18xf32> to vector<32x1xf32>
    %c6_437 = arith.constant 6 : index
    %c0_438 = arith.constant 0 : index
    %c0_439 = arith.constant 0 : index
    %975 = vector.load %arg3[%c6_437, %c0_438, %c0_439] : memref<9x32x32xf32, #tpu.memory_space<vmem>>, vector<1x32x32xf32>
    %976 = vector.shape_cast %975 : vector<1x32x32xf32> to vector<32x32xf32>
    %977 = vector.broadcast %974 : vector<32x1xf32> to vector<32x32xf32>
    %978 = arith.mulf %977, %976 : vector<32x32xf32>
    %979 = arith.addf %973, %978 : vector<32x32xf32>
    %980 = vector.extract_strided_slice %926 {offsets = [0, 7], sizes = [32, 1], strides = [1, 1]} : vector<32x18xf32> to vector<32x1xf32>
    %c7_440 = arith.constant 7 : index
    %c0_441 = arith.constant 0 : index
    %c0_442 = arith.constant 0 : index
    %981 = vector.load %arg3[%c7_440, %c0_441, %c0_442] : memref<9x32x32xf32, #tpu.memory_space<vmem>>, vector<1x32x32xf32>
    %982 = vector.shape_cast %981 : vector<1x32x32xf32> to vector<32x32xf32>
    %983 = vector.broadcast %980 : vector<32x1xf32> to vector<32x32xf32>
    %984 = arith.mulf %983, %982 : vector<32x32xf32>
    %985 = arith.addf %979, %984 : vector<32x32xf32>
    %986 = vector.extract_strided_slice %926 {offsets = [0, 8], sizes = [32, 1], strides = [1, 1]} : vector<32x18xf32> to vector<32x1xf32>
    %c8_443 = arith.constant 8 : index
    %c0_444 = arith.constant 0 : index
    %c0_445 = arith.constant 0 : index
    %987 = vector.load %arg3[%c8_443, %c0_444, %c0_445] : memref<9x32x32xf32, #tpu.memory_space<vmem>>, vector<1x32x32xf32>
    %988 = vector.shape_cast %987 : vector<1x32x32xf32> to vector<32x32xf32>
    %989 = vector.broadcast %986 : vector<32x1xf32> to vector<32x32xf32>
    %990 = arith.mulf %989, %988 : vector<32x32xf32>
    %991 = arith.addf %985, %990 : vector<32x32xf32>
    %cst_446 = arith.constant -1.000000e+04 : f32
    %992 = vector.broadcast %cst_446 : f32 to vector<32x32xf32>
    %993 = arith.select %931, %991, %992 : vector<32x32xi1>, vector<32x32xf32>
    %cst_447 = arith.constant dense<0xFF800000> : vector<32xf32>
    %994 = vector.multi_reduction <maximumf>, %993, %cst_447 [1] : vector<32x32xf32> to vector<32xf32>
    %995 = vector.shape_cast %994 : vector<32xf32> to vector<32x1xf32>
    %996 = vector.broadcast %995 : vector<32x1xf32> to vector<32x32xf32>
    %997 = arith.subf %993, %996 : vector<32x32xf32>
    %998 = math.exp %997 : vector<32x32xf32>
    %cst_448 = arith.constant dense<0.000000e+00> : vector<32xf32>
    %999 = vector.multi_reduction <add>, %998, %cst_448 [1] : vector<32x32xf32> to vector<32xf32>
    %1000 = vector.shape_cast %999 : vector<32xf32> to vector<32x1xf32>
    %1001 = vector.broadcast %1000 : vector<32x1xf32> to vector<32x32xf32>
    %1002 = arith.divf %998, %1001 : vector<32x32xf32>
    %1003 = arith.truncf %1002 : vector<32x32xf32> to vector<32x32xbf16>
    %cst_449 = arith.constant dense<0.000000e+00> : vector<32x32xf32>
    %1004 = tpu.matmul %1003, %936, %cst_449 {dimension_numbers = #tpu.dot_dimension_numbers<[1], [0], [0], [1], [0, 0, 1, 1], [], []>} : vector<32x32xbf16>, vector<32x32xbf16>, vector<32x32xf32> -> vector<32x32xf32>
    %c0_450 = arith.constant 0 : index
    %c0_451 = arith.constant 0 : index
    %c0_452 = arith.constant 0 : index
    %1005 = vector.load %arg3[%c0_450, %c0_451, %c0_452] : memref<9x32x32xf32, #tpu.memory_space<vmem>>, vector<1x32x32xf32>
    %1006 = vector.shape_cast %1005 : vector<1x32x32xf32> to vector<32x32xf32>
    %1007 = arith.mulf %1002, %1006 : vector<32x32xf32>
    %cst_453 = arith.constant dense<0.000000e+00> : vector<32xf32>
    %1008 = vector.multi_reduction <add>, %1007, %cst_453 [1] : vector<32x32xf32> to vector<32xf32>
    %1009 = vector.shape_cast %1008 : vector<32xf32> to vector<32x1xf32>
    %1010 = vector.extract_strided_slice %928 {offsets = [0, 0], sizes = [1, 32], strides = [1, 1]} : vector<9x32xf32> to vector<1x32xf32>
    %1011 = vector.broadcast %1009 : vector<32x1xf32> to vector<32x32xf32>
    %1012 = vector.broadcast %1010 : vector<1x32xf32> to vector<32x32xf32>
    %1013 = arith.mulf %1011, %1012 : vector<32x32xf32>
    %1014 = arith.addf %1004, %1013 : vector<32x32xf32>
    %c1_454 = arith.constant 1 : index
    %c0_455 = arith.constant 0 : index
    %c0_456 = arith.constant 0 : index
    %1015 = vector.load %arg3[%c1_454, %c0_455, %c0_456] : memref<9x32x32xf32, #tpu.memory_space<vmem>>, vector<1x32x32xf32>
    %1016 = vector.shape_cast %1015 : vector<1x32x32xf32> to vector<32x32xf32>
    %1017 = arith.mulf %1002, %1016 : vector<32x32xf32>
    %cst_457 = arith.constant dense<0.000000e+00> : vector<32xf32>
    %1018 = vector.multi_reduction <add>, %1017, %cst_457 [1] : vector<32x32xf32> to vector<32xf32>
    %1019 = vector.shape_cast %1018 : vector<32xf32> to vector<32x1xf32>
    %1020 = vector.extract_strided_slice %928 {offsets = [1, 0], sizes = [1, 32], strides = [1, 1]} : vector<9x32xf32> to vector<1x32xf32>
    %1021 = vector.broadcast %1019 : vector<32x1xf32> to vector<32x32xf32>
    %1022 = vector.broadcast %1020 : vector<1x32xf32> to vector<32x32xf32>
    %1023 = arith.mulf %1021, %1022 : vector<32x32xf32>
    %1024 = arith.addf %1014, %1023 : vector<32x32xf32>
    %c2_458 = arith.constant 2 : index
    %c0_459 = arith.constant 0 : index
    %c0_460 = arith.constant 0 : index
    %1025 = vector.load %arg3[%c2_458, %c0_459, %c0_460] : memref<9x32x32xf32, #tpu.memory_space<vmem>>, vector<1x32x32xf32>
    %1026 = vector.shape_cast %1025 : vector<1x32x32xf32> to vector<32x32xf32>
    %1027 = arith.mulf %1002, %1026 : vector<32x32xf32>
    %cst_461 = arith.constant dense<0.000000e+00> : vector<32xf32>
    %1028 = vector.multi_reduction <add>, %1027, %cst_461 [1] : vector<32x32xf32> to vector<32xf32>
    %1029 = vector.shape_cast %1028 : vector<32xf32> to vector<32x1xf32>
    %1030 = vector.extract_strided_slice %928 {offsets = [2, 0], sizes = [1, 32], strides = [1, 1]} : vector<9x32xf32> to vector<1x32xf32>
    %1031 = vector.broadcast %1029 : vector<32x1xf32> to vector<32x32xf32>
    %1032 = vector.broadcast %1030 : vector<1x32xf32> to vector<32x32xf32>
    %1033 = arith.mulf %1031, %1032 : vector<32x32xf32>
    %1034 = arith.addf %1024, %1033 : vector<32x32xf32>
    %c3_462 = arith.constant 3 : index
    %c0_463 = arith.constant 0 : index
    %c0_464 = arith.constant 0 : index
    %1035 = vector.load %arg3[%c3_462, %c0_463, %c0_464] : memref<9x32x32xf32, #tpu.memory_space<vmem>>, vector<1x32x32xf32>
    %1036 = vector.shape_cast %1035 : vector<1x32x32xf32> to vector<32x32xf32>
    %1037 = arith.mulf %1002, %1036 : vector<32x32xf32>
    %cst_465 = arith.constant dense<0.000000e+00> : vector<32xf32>
    %1038 = vector.multi_reduction <add>, %1037, %cst_465 [1] : vector<32x32xf32> to vector<32xf32>
    %1039 = vector.shape_cast %1038 : vector<32xf32> to vector<32x1xf32>
    %1040 = vector.extract_strided_slice %928 {offsets = [3, 0], sizes = [1, 32], strides = [1, 1]} : vector<9x32xf32> to vector<1x32xf32>
    %1041 = vector.broadcast %1039 : vector<32x1xf32> to vector<32x32xf32>
    %1042 = vector.broadcast %1040 : vector<1x32xf32> to vector<32x32xf32>
    %1043 = arith.mulf %1041, %1042 : vector<32x32xf32>
    %1044 = arith.addf %1034, %1043 : vector<32x32xf32>
    %c4_466 = arith.constant 4 : index
    %c0_467 = arith.constant 0 : index
    %c0_468 = arith.constant 0 : index
    %1045 = vector.load %arg3[%c4_466, %c0_467, %c0_468] : memref<9x32x32xf32, #tpu.memory_space<vmem>>, vector<1x32x32xf32>
    %1046 = vector.shape_cast %1045 : vector<1x32x32xf32> to vector<32x32xf32>
    %1047 = arith.mulf %1002, %1046 : vector<32x32xf32>
    %cst_469 = arith.constant dense<0.000000e+00> : vector<32xf32>
    %1048 = vector.multi_reduction <add>, %1047, %cst_469 [1] : vector<32x32xf32> to vector<32xf32>
    %1049 = vector.shape_cast %1048 : vector<32xf32> to vector<32x1xf32>
    %1050 = vector.extract_strided_slice %928 {offsets = [4, 0], sizes = [1, 32], strides = [1, 1]} : vector<9x32xf32> to vector<1x32xf32>
    %1051 = vector.broadcast %1049 : vector<32x1xf32> to vector<32x32xf32>
    %1052 = vector.broadcast %1050 : vector<1x32xf32> to vector<32x32xf32>
    %1053 = arith.mulf %1051, %1052 : vector<32x32xf32>
    %1054 = arith.addf %1044, %1053 : vector<32x32xf32>
    %c5_470 = arith.constant 5 : index
    %c0_471 = arith.constant 0 : index
    %c0_472 = arith.constant 0 : index
    %1055 = vector.load %arg3[%c5_470, %c0_471, %c0_472] : memref<9x32x32xf32, #tpu.memory_space<vmem>>, vector<1x32x32xf32>
    %1056 = vector.shape_cast %1055 : vector<1x32x32xf32> to vector<32x32xf32>
    %1057 = arith.mulf %1002, %1056 : vector<32x32xf32>
    %cst_473 = arith.constant dense<0.000000e+00> : vector<32xf32>
    %1058 = vector.multi_reduction <add>, %1057, %cst_473 [1] : vector<32x32xf32> to vector<32xf32>
    %1059 = vector.shape_cast %1058 : vector<32xf32> to vector<32x1xf32>
    %1060 = vector.extract_strided_slice %928 {offsets = [5, 0], sizes = [1, 32], strides = [1, 1]} : vector<9x32xf32> to vector<1x32xf32>
    %1061 = vector.broadcast %1059 : vector<32x1xf32> to vector<32x32xf32>
    %1062 = vector.broadcast %1060 : vector<1x32xf32> to vector<32x32xf32>
    %1063 = arith.mulf %1061, %1062 : vector<32x32xf32>
    %1064 = arith.addf %1054, %1063 : vector<32x32xf32>
    %c6_474 = arith.constant 6 : index
    %c0_475 = arith.constant 0 : index
    %c0_476 = arith.constant 0 : index
    %1065 = vector.load %arg3[%c6_474, %c0_475, %c0_476] : memref<9x32x32xf32, #tpu.memory_space<vmem>>, vector<1x32x32xf32>
    %1066 = vector.shape_cast %1065 : vector<1x32x32xf32> to vector<32x32xf32>
    %1067 = arith.mulf %1002, %1066 : vector<32x32xf32>
    %cst_477 = arith.constant dense<0.000000e+00> : vector<32xf32>
    %1068 = vector.multi_reduction <add>, %1067, %cst_477 [1] : vector<32x32xf32> to vector<32xf32>
    %1069 = vector.shape_cast %1068 : vector<32xf32> to vector<32x1xf32>
    %1070 = vector.extract_strided_slice %928 {offsets = [6, 0], sizes = [1, 32], strides = [1, 1]} : vector<9x32xf32> to vector<1x32xf32>
    %1071 = vector.broadcast %1069 : vector<32x1xf32> to vector<32x32xf32>
    %1072 = vector.broadcast %1070 : vector<1x32xf32> to vector<32x32xf32>
    %1073 = arith.mulf %1071, %1072 : vector<32x32xf32>
    %1074 = arith.addf %1064, %1073 : vector<32x32xf32>
    %c7_478 = arith.constant 7 : index
    %c0_479 = arith.constant 0 : index
    %c0_480 = arith.constant 0 : index
    %1075 = vector.load %arg3[%c7_478, %c0_479, %c0_480] : memref<9x32x32xf32, #tpu.memory_space<vmem>>, vector<1x32x32xf32>
    %1076 = vector.shape_cast %1075 : vector<1x32x32xf32> to vector<32x32xf32>
    %1077 = arith.mulf %1002, %1076 : vector<32x32xf32>
    %cst_481 = arith.constant dense<0.000000e+00> : vector<32xf32>
    %1078 = vector.multi_reduction <add>, %1077, %cst_481 [1] : vector<32x32xf32> to vector<32xf32>
    %1079 = vector.shape_cast %1078 : vector<32xf32> to vector<32x1xf32>
    %1080 = vector.extract_strided_slice %928 {offsets = [7, 0], sizes = [1, 32], strides = [1, 1]} : vector<9x32xf32> to vector<1x32xf32>
    %1081 = vector.broadcast %1079 : vector<32x1xf32> to vector<32x32xf32>
    %1082 = vector.broadcast %1080 : vector<1x32xf32> to vector<32x32xf32>
    %1083 = arith.mulf %1081, %1082 : vector<32x32xf32>
    %1084 = arith.addf %1074, %1083 : vector<32x32xf32>
    %c8_482 = arith.constant 8 : index
    %c0_483 = arith.constant 0 : index
    %c0_484 = arith.constant 0 : index
    %1085 = vector.load %arg3[%c8_482, %c0_483, %c0_484] : memref<9x32x32xf32, #tpu.memory_space<vmem>>, vector<1x32x32xf32>
    %1086 = vector.shape_cast %1085 : vector<1x32x32xf32> to vector<32x32xf32>
    %1087 = arith.mulf %1002, %1086 : vector<32x32xf32>
    %cst_485 = arith.constant dense<0.000000e+00> : vector<32xf32>
    %1088 = vector.multi_reduction <add>, %1087, %cst_485 [1] : vector<32x32xf32> to vector<32xf32>
    %1089 = vector.shape_cast %1088 : vector<32xf32> to vector<32x1xf32>
    %1090 = vector.extract_strided_slice %928 {offsets = [8, 0], sizes = [1, 32], strides = [1, 1]} : vector<9x32xf32> to vector<1x32xf32>
    %1091 = vector.broadcast %1089 : vector<32x1xf32> to vector<32x32xf32>
    %1092 = vector.broadcast %1090 : vector<1x32xf32> to vector<32x32xf32>
    %1093 = arith.mulf %1091, %1092 : vector<32x32xf32>
    %1094 = arith.addf %1084, %1093 : vector<32x32xf32>
    %1095 = vector.extract_strided_slice %923 {offsets = [0, 32], sizes = [32, 32], strides = [1, 1]} : vector<32x64xbf16> to vector<32x32xbf16>
    %1096 = vector.extract_strided_slice %919 {offsets = [0, 96], sizes = [32, 32], strides = [1, 1]} : vector<32x192xf32> to vector<32x32xf32>
    %1097 = arith.truncf %1096 : vector<32x32xf32> to vector<32x32xbf16>
    %1098 = vector.extract_strided_slice %919 {offsets = [0, 160], sizes = [32, 32], strides = [1, 1]} : vector<32x192xf32> to vector<32x32xf32>
    %1099 = arith.truncf %1098 : vector<32x32xf32> to vector<32x32xbf16>
    %cst_486 = arith.constant dense<0.000000e+00> : vector<32x32xf32>
    %1100 = tpu.matmul %1095, %1097, %cst_486 {dimension_numbers = #tpu.dot_dimension_numbers<[1], [1], [0], [0], [0, 0, 1, 0], [], []>} : vector<32x32xbf16>, vector<32x32xbf16>, vector<32x32xf32> -> vector<32x32xf32>
    %1101 = vector.extract_strided_slice %926 {offsets = [0, 9], sizes = [32, 1], strides = [1, 1]} : vector<32x18xf32> to vector<32x1xf32>
    %c0_487 = arith.constant 0 : index
    %c0_488 = arith.constant 0 : index
    %c0_489 = arith.constant 0 : index
    %1102 = vector.load %arg3[%c0_487, %c0_488, %c0_489] : memref<9x32x32xf32, #tpu.memory_space<vmem>>, vector<1x32x32xf32>
    %1103 = vector.shape_cast %1102 : vector<1x32x32xf32> to vector<32x32xf32>
    %1104 = vector.broadcast %1101 : vector<32x1xf32> to vector<32x32xf32>
    %1105 = arith.mulf %1104, %1103 : vector<32x32xf32>
    %1106 = arith.addf %1100, %1105 : vector<32x32xf32>
    %1107 = vector.extract_strided_slice %926 {offsets = [0, 10], sizes = [32, 1], strides = [1, 1]} : vector<32x18xf32> to vector<32x1xf32>
    %c1_490 = arith.constant 1 : index
    %c0_491 = arith.constant 0 : index
    %c0_492 = arith.constant 0 : index
    %1108 = vector.load %arg3[%c1_490, %c0_491, %c0_492] : memref<9x32x32xf32, #tpu.memory_space<vmem>>, vector<1x32x32xf32>
    %1109 = vector.shape_cast %1108 : vector<1x32x32xf32> to vector<32x32xf32>
    %1110 = vector.broadcast %1107 : vector<32x1xf32> to vector<32x32xf32>
    %1111 = arith.mulf %1110, %1109 : vector<32x32xf32>
    %1112 = arith.addf %1106, %1111 : vector<32x32xf32>
    %1113 = vector.extract_strided_slice %926 {offsets = [0, 11], sizes = [32, 1], strides = [1, 1]} : vector<32x18xf32> to vector<32x1xf32>
    %c2_493 = arith.constant 2 : index
    %c0_494 = arith.constant 0 : index
    %c0_495 = arith.constant 0 : index
    %1114 = vector.load %arg3[%c2_493, %c0_494, %c0_495] : memref<9x32x32xf32, #tpu.memory_space<vmem>>, vector<1x32x32xf32>
    %1115 = vector.shape_cast %1114 : vector<1x32x32xf32> to vector<32x32xf32>
    %1116 = vector.broadcast %1113 : vector<32x1xf32> to vector<32x32xf32>
    %1117 = arith.mulf %1116, %1115 : vector<32x32xf32>
    %1118 = arith.addf %1112, %1117 : vector<32x32xf32>
    %1119 = vector.extract_strided_slice %926 {offsets = [0, 12], sizes = [32, 1], strides = [1, 1]} : vector<32x18xf32> to vector<32x1xf32>
    %c3_496 = arith.constant 3 : index
    %c0_497 = arith.constant 0 : index
    %c0_498 = arith.constant 0 : index
    %1120 = vector.load %arg3[%c3_496, %c0_497, %c0_498] : memref<9x32x32xf32, #tpu.memory_space<vmem>>, vector<1x32x32xf32>
    %1121 = vector.shape_cast %1120 : vector<1x32x32xf32> to vector<32x32xf32>
    %1122 = vector.broadcast %1119 : vector<32x1xf32> to vector<32x32xf32>
    %1123 = arith.mulf %1122, %1121 : vector<32x32xf32>
    %1124 = arith.addf %1118, %1123 : vector<32x32xf32>
    %1125 = vector.extract_strided_slice %926 {offsets = [0, 13], sizes = [32, 1], strides = [1, 1]} : vector<32x18xf32> to vector<32x1xf32>
    %c4_499 = arith.constant 4 : index
    %c0_500 = arith.constant 0 : index
    %c0_501 = arith.constant 0 : index
    %1126 = vector.load %arg3[%c4_499, %c0_500, %c0_501] : memref<9x32x32xf32, #tpu.memory_space<vmem>>, vector<1x32x32xf32>
    %1127 = vector.shape_cast %1126 : vector<1x32x32xf32> to vector<32x32xf32>
    %1128 = vector.broadcast %1125 : vector<32x1xf32> to vector<32x32xf32>
    %1129 = arith.mulf %1128, %1127 : vector<32x32xf32>
    %1130 = arith.addf %1124, %1129 : vector<32x32xf32>
    %1131 = vector.extract_strided_slice %926 {offsets = [0, 14], sizes = [32, 1], strides = [1, 1]} : vector<32x18xf32> to vector<32x1xf32>
    %c5_502 = arith.constant 5 : index
    %c0_503 = arith.constant 0 : index
    %c0_504 = arith.constant 0 : index
    %1132 = vector.load %arg3[%c5_502, %c0_503, %c0_504] : memref<9x32x32xf32, #tpu.memory_space<vmem>>, vector<1x32x32xf32>
    %1133 = vector.shape_cast %1132 : vector<1x32x32xf32> to vector<32x32xf32>
    %1134 = vector.broadcast %1131 : vector<32x1xf32> to vector<32x32xf32>
    %1135 = arith.mulf %1134, %1133 : vector<32x32xf32>
    %1136 = arith.addf %1130, %1135 : vector<32x32xf32>
    %1137 = vector.extract_strided_slice %926 {offsets = [0, 15], sizes = [32, 1], strides = [1, 1]} : vector<32x18xf32> to vector<32x1xf32>
    %c6_505 = arith.constant 6 : index
    %c0_506 = arith.constant 0 : index
    %c0_507 = arith.constant 0 : index
    %1138 = vector.load %arg3[%c6_505, %c0_506, %c0_507] : memref<9x32x32xf32, #tpu.memory_space<vmem>>, vector<1x32x32xf32>
    %1139 = vector.shape_cast %1138 : vector<1x32x32xf32> to vector<32x32xf32>
    %1140 = vector.broadcast %1137 : vector<32x1xf32> to vector<32x32xf32>
    %1141 = arith.mulf %1140, %1139 : vector<32x32xf32>
    %1142 = arith.addf %1136, %1141 : vector<32x32xf32>
    %1143 = vector.extract_strided_slice %926 {offsets = [0, 16], sizes = [32, 1], strides = [1, 1]} : vector<32x18xf32> to vector<32x1xf32>
    %c7_508 = arith.constant 7 : index
    %c0_509 = arith.constant 0 : index
    %c0_510 = arith.constant 0 : index
    %1144 = vector.load %arg3[%c7_508, %c0_509, %c0_510] : memref<9x32x32xf32, #tpu.memory_space<vmem>>, vector<1x32x32xf32>
    %1145 = vector.shape_cast %1144 : vector<1x32x32xf32> to vector<32x32xf32>
    %1146 = vector.broadcast %1143 : vector<32x1xf32> to vector<32x32xf32>
    %1147 = arith.mulf %1146, %1145 : vector<32x32xf32>
    %1148 = arith.addf %1142, %1147 : vector<32x32xf32>
    %1149 = vector.extract_strided_slice %926 {offsets = [0, 17], sizes = [32, 1], strides = [1, 1]} : vector<32x18xf32> to vector<32x1xf32>
    %c8_511 = arith.constant 8 : index
    %c0_512 = arith.constant 0 : index
    %c0_513 = arith.constant 0 : index
    %1150 = vector.load %arg3[%c8_511, %c0_512, %c0_513] : memref<9x32x32xf32, #tpu.memory_space<vmem>>, vector<1x32x32xf32>
    %1151 = vector.shape_cast %1150 : vector<1x32x32xf32> to vector<32x32xf32>
    %1152 = vector.broadcast %1149 : vector<32x1xf32> to vector<32x32xf32>
    %1153 = arith.mulf %1152, %1151 : vector<32x32xf32>
    %1154 = arith.addf %1148, %1153 : vector<32x32xf32>
    %cst_514 = arith.constant -1.000000e+04 : f32
    %1155 = vector.broadcast %cst_514 : f32 to vector<32x32xf32>
    %1156 = arith.select %931, %1154, %1155 : vector<32x32xi1>, vector<32x32xf32>
    %cst_515 = arith.constant dense<0xFF800000> : vector<32xf32>
    %1157 = vector.multi_reduction <maximumf>, %1156, %cst_515 [1] : vector<32x32xf32> to vector<32xf32>
    %1158 = vector.shape_cast %1157 : vector<32xf32> to vector<32x1xf32>
    %1159 = vector.broadcast %1158 : vector<32x1xf32> to vector<32x32xf32>
    %1160 = arith.subf %1156, %1159 : vector<32x32xf32>
    %1161 = math.exp %1160 : vector<32x32xf32>
    %cst_516 = arith.constant dense<0.000000e+00> : vector<32xf32>
    %1162 = vector.multi_reduction <add>, %1161, %cst_516 [1] : vector<32x32xf32> to vector<32xf32>
    %1163 = vector.shape_cast %1162 : vector<32xf32> to vector<32x1xf32>
    %1164 = vector.broadcast %1163 : vector<32x1xf32> to vector<32x32xf32>
    %1165 = arith.divf %1161, %1164 : vector<32x32xf32>
    %1166 = arith.truncf %1165 : vector<32x32xf32> to vector<32x32xbf16>
    %cst_517 = arith.constant dense<0.000000e+00> : vector<32x32xf32>
    %1167 = tpu.matmul %1166, %1099, %cst_517 {dimension_numbers = #tpu.dot_dimension_numbers<[1], [0], [0], [1], [0, 0, 1, 1], [], []>} : vector<32x32xbf16>, vector<32x32xbf16>, vector<32x32xf32> -> vector<32x32xf32>
    %c0_518 = arith.constant 0 : index
    %c0_519 = arith.constant 0 : index
    %c0_520 = arith.constant 0 : index
    %1168 = vector.load %arg3[%c0_518, %c0_519, %c0_520] : memref<9x32x32xf32, #tpu.memory_space<vmem>>, vector<1x32x32xf32>
    %1169 = vector.shape_cast %1168 : vector<1x32x32xf32> to vector<32x32xf32>
    %1170 = arith.mulf %1165, %1169 : vector<32x32xf32>
    %cst_521 = arith.constant dense<0.000000e+00> : vector<32xf32>
    %1171 = vector.multi_reduction <add>, %1170, %cst_521 [1] : vector<32x32xf32> to vector<32xf32>
    %1172 = vector.shape_cast %1171 : vector<32xf32> to vector<32x1xf32>
    %1173 = vector.extract_strided_slice %928 {offsets = [0, 0], sizes = [1, 32], strides = [1, 1]} : vector<9x32xf32> to vector<1x32xf32>
    %1174 = vector.broadcast %1172 : vector<32x1xf32> to vector<32x32xf32>
    %1175 = vector.broadcast %1173 : vector<1x32xf32> to vector<32x32xf32>
    %1176 = arith.mulf %1174, %1175 : vector<32x32xf32>
    %1177 = arith.addf %1167, %1176 : vector<32x32xf32>
    %c1_522 = arith.constant 1 : index
    %c0_523 = arith.constant 0 : index
    %c0_524 = arith.constant 0 : index
    %1178 = vector.load %arg3[%c1_522, %c0_523, %c0_524] : memref<9x32x32xf32, #tpu.memory_space<vmem>>, vector<1x32x32xf32>
    %1179 = vector.shape_cast %1178 : vector<1x32x32xf32> to vector<32x32xf32>
    %1180 = arith.mulf %1165, %1179 : vector<32x32xf32>
    %cst_525 = arith.constant dense<0.000000e+00> : vector<32xf32>
    %1181 = vector.multi_reduction <add>, %1180, %cst_525 [1] : vector<32x32xf32> to vector<32xf32>
    %1182 = vector.shape_cast %1181 : vector<32xf32> to vector<32x1xf32>
    %1183 = vector.extract_strided_slice %928 {offsets = [1, 0], sizes = [1, 32], strides = [1, 1]} : vector<9x32xf32> to vector<1x32xf32>
    %1184 = vector.broadcast %1182 : vector<32x1xf32> to vector<32x32xf32>
    %1185 = vector.broadcast %1183 : vector<1x32xf32> to vector<32x32xf32>
    %1186 = arith.mulf %1184, %1185 : vector<32x32xf32>
    %1187 = arith.addf %1177, %1186 : vector<32x32xf32>
    %c2_526 = arith.constant 2 : index
    %c0_527 = arith.constant 0 : index
    %c0_528 = arith.constant 0 : index
    %1188 = vector.load %arg3[%c2_526, %c0_527, %c0_528] : memref<9x32x32xf32, #tpu.memory_space<vmem>>, vector<1x32x32xf32>
    %1189 = vector.shape_cast %1188 : vector<1x32x32xf32> to vector<32x32xf32>
    %1190 = arith.mulf %1165, %1189 : vector<32x32xf32>
    %cst_529 = arith.constant dense<0.000000e+00> : vector<32xf32>
    %1191 = vector.multi_reduction <add>, %1190, %cst_529 [1] : vector<32x32xf32> to vector<32xf32>
    %1192 = vector.shape_cast %1191 : vector<32xf32> to vector<32x1xf32>
    %1193 = vector.extract_strided_slice %928 {offsets = [2, 0], sizes = [1, 32], strides = [1, 1]} : vector<9x32xf32> to vector<1x32xf32>
    %1194 = vector.broadcast %1192 : vector<32x1xf32> to vector<32x32xf32>
    %1195 = vector.broadcast %1193 : vector<1x32xf32> to vector<32x32xf32>
    %1196 = arith.mulf %1194, %1195 : vector<32x32xf32>
    %1197 = arith.addf %1187, %1196 : vector<32x32xf32>
    %c3_530 = arith.constant 3 : index
    %c0_531 = arith.constant 0 : index
    %c0_532 = arith.constant 0 : index
    %1198 = vector.load %arg3[%c3_530, %c0_531, %c0_532] : memref<9x32x32xf32, #tpu.memory_space<vmem>>, vector<1x32x32xf32>
    %1199 = vector.shape_cast %1198 : vector<1x32x32xf32> to vector<32x32xf32>
    %1200 = arith.mulf %1165, %1199 : vector<32x32xf32>
    %cst_533 = arith.constant dense<0.000000e+00> : vector<32xf32>
    %1201 = vector.multi_reduction <add>, %1200, %cst_533 [1] : vector<32x32xf32> to vector<32xf32>
    %1202 = vector.shape_cast %1201 : vector<32xf32> to vector<32x1xf32>
    %1203 = vector.extract_strided_slice %928 {offsets = [3, 0], sizes = [1, 32], strides = [1, 1]} : vector<9x32xf32> to vector<1x32xf32>
    %1204 = vector.broadcast %1202 : vector<32x1xf32> to vector<32x32xf32>
    %1205 = vector.broadcast %1203 : vector<1x32xf32> to vector<32x32xf32>
    %1206 = arith.mulf %1204, %1205 : vector<32x32xf32>
    %1207 = arith.addf %1197, %1206 : vector<32x32xf32>
    %c4_534 = arith.constant 4 : index
    %c0_535 = arith.constant 0 : index
    %c0_536 = arith.constant 0 : index
    %1208 = vector.load %arg3[%c4_534, %c0_535, %c0_536] : memref<9x32x32xf32, #tpu.memory_space<vmem>>, vector<1x32x32xf32>
    %1209 = vector.shape_cast %1208 : vector<1x32x32xf32> to vector<32x32xf32>
    %1210 = arith.mulf %1165, %1209 : vector<32x32xf32>
    %cst_537 = arith.constant dense<0.000000e+00> : vector<32xf32>
    %1211 = vector.multi_reduction <add>, %1210, %cst_537 [1] : vector<32x32xf32> to vector<32xf32>
    %1212 = vector.shape_cast %1211 : vector<32xf32> to vector<32x1xf32>
    %1213 = vector.extract_strided_slice %928 {offsets = [4, 0], sizes = [1, 32], strides = [1, 1]} : vector<9x32xf32> to vector<1x32xf32>
    %1214 = vector.broadcast %1212 : vector<32x1xf32> to vector<32x32xf32>
    %1215 = vector.broadcast %1213 : vector<1x32xf32> to vector<32x32xf32>
    %1216 = arith.mulf %1214, %1215 : vector<32x32xf32>
    %1217 = arith.addf %1207, %1216 : vector<32x32xf32>
    %c5_538 = arith.constant 5 : index
    %c0_539 = arith.constant 0 : index
    %c0_540 = arith.constant 0 : index
    %1218 = vector.load %arg3[%c5_538, %c0_539, %c0_540] : memref<9x32x32xf32, #tpu.memory_space<vmem>>, vector<1x32x32xf32>
    %1219 = vector.shape_cast %1218 : vector<1x32x32xf32> to vector<32x32xf32>
    %1220 = arith.mulf %1165, %1219 : vector<32x32xf32>
    %cst_541 = arith.constant dense<0.000000e+00> : vector<32xf32>
    %1221 = vector.multi_reduction <add>, %1220, %cst_541 [1] : vector<32x32xf32> to vector<32xf32>
    %1222 = vector.shape_cast %1221 : vector<32xf32> to vector<32x1xf32>
    %1223 = vector.extract_strided_slice %928 {offsets = [5, 0], sizes = [1, 32], strides = [1, 1]} : vector<9x32xf32> to vector<1x32xf32>
    %1224 = vector.broadcast %1222 : vector<32x1xf32> to vector<32x32xf32>
    %1225 = vector.broadcast %1223 : vector<1x32xf32> to vector<32x32xf32>
    %1226 = arith.mulf %1224, %1225 : vector<32x32xf32>
    %1227 = arith.addf %1217, %1226 : vector<32x32xf32>
    %c6_542 = arith.constant 6 : index
    %c0_543 = arith.constant 0 : index
    %c0_544 = arith.constant 0 : index
    %1228 = vector.load %arg3[%c6_542, %c0_543, %c0_544] : memref<9x32x32xf32, #tpu.memory_space<vmem>>, vector<1x32x32xf32>
    %1229 = vector.shape_cast %1228 : vector<1x32x32xf32> to vector<32x32xf32>
    %1230 = arith.mulf %1165, %1229 : vector<32x32xf32>
    %cst_545 = arith.constant dense<0.000000e+00> : vector<32xf32>
    %1231 = vector.multi_reduction <add>, %1230, %cst_545 [1] : vector<32x32xf32> to vector<32xf32>
    %1232 = vector.shape_cast %1231 : vector<32xf32> to vector<32x1xf32>
    %1233 = vector.extract_strided_slice %928 {offsets = [6, 0], sizes = [1, 32], strides = [1, 1]} : vector<9x32xf32> to vector<1x32xf32>
    %1234 = vector.broadcast %1232 : vector<32x1xf32> to vector<32x32xf32>
    %1235 = vector.broadcast %1233 : vector<1x32xf32> to vector<32x32xf32>
    %1236 = arith.mulf %1234, %1235 : vector<32x32xf32>
    %1237 = arith.addf %1227, %1236 : vector<32x32xf32>
    %c7_546 = arith.constant 7 : index
    %c0_547 = arith.constant 0 : index
    %c0_548 = arith.constant 0 : index
    %1238 = vector.load %arg3[%c7_546, %c0_547, %c0_548] : memref<9x32x32xf32, #tpu.memory_space<vmem>>, vector<1x32x32xf32>
    %1239 = vector.shape_cast %1238 : vector<1x32x32xf32> to vector<32x32xf32>
    %1240 = arith.mulf %1165, %1239 : vector<32x32xf32>
    %cst_549 = arith.constant dense<0.000000e+00> : vector<32xf32>
    %1241 = vector.multi_reduction <add>, %1240, %cst_549 [1] : vector<32x32xf32> to vector<32xf32>
    %1242 = vector.shape_cast %1241 : vector<32xf32> to vector<32x1xf32>
    %1243 = vector.extract_strided_slice %928 {offsets = [7, 0], sizes = [1, 32], strides = [1, 1]} : vector<9x32xf32> to vector<1x32xf32>
    %1244 = vector.broadcast %1242 : vector<32x1xf32> to vector<32x32xf32>
    %1245 = vector.broadcast %1243 : vector<1x32xf32> to vector<32x32xf32>
    %1246 = arith.mulf %1244, %1245 : vector<32x32xf32>
    %1247 = arith.addf %1237, %1246 : vector<32x32xf32>
    %c8_550 = arith.constant 8 : index
    %c0_551 = arith.constant 0 : index
    %c0_552 = arith.constant 0 : index
    %1248 = vector.load %arg3[%c8_550, %c0_551, %c0_552] : memref<9x32x32xf32, #tpu.memory_space<vmem>>, vector<1x32x32xf32>
    %1249 = vector.shape_cast %1248 : vector<1x32x32xf32> to vector<32x32xf32>
    %1250 = arith.mulf %1165, %1249 : vector<32x32xf32>
    %cst_553 = arith.constant dense<0.000000e+00> : vector<32xf32>
    %1251 = vector.multi_reduction <add>, %1250, %cst_553 [1] : vector<32x32xf32> to vector<32xf32>
    %1252 = vector.shape_cast %1251 : vector<32xf32> to vector<32x1xf32>
    %1253 = vector.extract_strided_slice %928 {offsets = [8, 0], sizes = [1, 32], strides = [1, 1]} : vector<9x32xf32> to vector<1x32xf32>
    %1254 = vector.broadcast %1252 : vector<32x1xf32> to vector<32x32xf32>
    %1255 = vector.broadcast %1253 : vector<1x32xf32> to vector<32x32xf32>
    %1256 = arith.mulf %1254, %1255 : vector<32x32xf32>
    %1257 = arith.addf %1247, %1256 : vector<32x32xf32>
    %1258 = tpu.concatenate %1094, %1257 in 1 : vector<32x32xf32>, vector<32x32xf32> -> vector<32x64xf32>
    %1259 = arith.truncf %1258 : vector<32x64xf32> to vector<32x64xbf16>
    %c2_554 = arith.constant 2 : index
    %c0_555 = arith.constant 0 : index
    %c0_556 = arith.constant 0 : index
    %1260 = vector.load %arg7[%c2_554, %c0_555, %c0_556] : memref<3x64x64xbf16, #tpu.memory_space<vmem>>, vector<1x64x64xbf16>
    %1261 = vector.shape_cast %1260 : vector<1x64x64xbf16> to vector<64x64xbf16>
    %cst_557 = arith.constant dense<0.000000e+00> : vector<32x64xf32>
    %1262 = tpu.matmul %1259, %1261, %cst_557 {dimension_numbers = #tpu.dot_dimension_numbers<[1], [0], [0], [1], [0, 0, 1, 1], [], []>} : vector<32x64xbf16>, vector<64x64xbf16>, vector<32x64xf32> -> vector<32x64xf32>
    %c2_558 = arith.constant 2 : index
    %c0_559 = arith.constant 0 : index
    %c0_560 = arith.constant 0 : index
    %1263 = vector.load %arg8[%c2_558, %c0_559, %c0_560] : memref<3x1x64xf32, #tpu.memory_space<vmem>>, vector<1x1x64xf32>
    %1264 = vector.shape_cast %1263 : vector<1x1x64xf32> to vector<1x64xf32>
    %1265 = vector.broadcast %1264 : vector<1x64xf32> to vector<32x64xf32>
    %1266 = arith.addf %1262, %1265 : vector<32x64xf32>
    %1267 = arith.addf %911, %1266 : vector<32x64xf32>
    %c2_561 = arith.constant 2 : index
    %c0_562 = arith.constant 0 : index
    %c0_563 = arith.constant 0 : index
    %1268 = vector.load %arg11[%c2_561, %c0_562, %c0_563] : memref<3x1x64xf32, #tpu.memory_space<vmem>>, vector<1x1x64xf32>
    %1269 = vector.shape_cast %1268 : vector<1x1x64xf32> to vector<1x64xf32>
    %c2_564 = arith.constant 2 : index
    %c0_565 = arith.constant 0 : index
    %c0_566 = arith.constant 0 : index
    %1270 = vector.load %arg12[%c2_564, %c0_565, %c0_566] : memref<3x1x64xf32, #tpu.memory_space<vmem>>, vector<1x1x64xf32>
    %1271 = vector.shape_cast %1270 : vector<1x1x64xf32> to vector<1x64xf32>
    %cst_567 = arith.constant dense<0.000000e+00> : vector<32xf32>
    %1272 = vector.multi_reduction <add>, %1267, %cst_567 [1] : vector<32x64xf32> to vector<32xf32>
    %1273 = vector.shape_cast %1272 : vector<32xf32> to vector<32x1xf32>
    %cst_568 = arith.constant 6.400000e+01 : f32
    %1274 = vector.broadcast %cst_568 : f32 to vector<32x1xf32>
    %1275 = arith.divf %1273, %1274 : vector<32x1xf32>
    %1276 = vector.broadcast %1275 : vector<32x1xf32> to vector<32x64xf32>
    %1277 = arith.subf %1267, %1276 : vector<32x64xf32>
    %1278 = arith.mulf %1277, %1277 : vector<32x64xf32>
    %cst_569 = arith.constant dense<0.000000e+00> : vector<32xf32>
    %1279 = vector.multi_reduction <add>, %1278, %cst_569 [1] : vector<32x64xf32> to vector<32xf32>
    %1280 = vector.shape_cast %1279 : vector<32xf32> to vector<32x1xf32>
    %cst_570 = arith.constant 6.400000e+01 : f32
    %1281 = vector.broadcast %cst_570 : f32 to vector<32x1xf32>
    %1282 = arith.divf %1280, %1281 : vector<32x1xf32>
    %1283 = vector.broadcast %1275 : vector<32x1xf32> to vector<32x64xf32>
    %1284 = arith.subf %1267, %1283 : vector<32x64xf32>
    %cst_571 = arith.constant 9.99999974E-6 : f32
    %1285 = vector.broadcast %cst_571 : f32 to vector<32x1xf32>
    %1286 = arith.addf %1282, %1285 : vector<32x1xf32>
    %1287 = math.rsqrt %1286 : vector<32x1xf32>
    %1288 = vector.broadcast %1287 : vector<32x1xf32> to vector<32x64xf32>
    %1289 = arith.mulf %1284, %1288 : vector<32x64xf32>
    %1290 = vector.broadcast %1269 : vector<1x64xf32> to vector<32x64xf32>
    %1291 = arith.mulf %1289, %1290 : vector<32x64xf32>
    %1292 = vector.broadcast %1271 : vector<1x64xf32> to vector<32x64xf32>
    %1293 = arith.addf %1291, %1292 : vector<32x64xf32>
    %1294 = vector.broadcast %1 : vector<32x1xf32> to vector<32x64xf32>
    %1295 = arith.mulf %1293, %1294 : vector<32x64xf32>
    %cst_572 = arith.constant 0.000000e+00 : f32
    %1296 = vector.broadcast %cst_572 : f32 to vector<1x64xf32>
    %1297 = tpu.concatenate %1296, %1295, %1296 in 0 : vector<1x64xf32>, vector<32x64xf32>, vector<1x64xf32> -> vector<34x64xf32>
    %1298 = vector.extract_strided_slice %1297 {offsets = [0, 0], sizes = [32, 64], strides = [1, 1]} : vector<34x64xf32> to vector<32x64xf32>
    %1299 = vector.broadcast %3 : vector<32x1xf32> to vector<32x64xf32>
    %1300 = arith.mulf %1298, %1299 : vector<32x64xf32>
    %1301 = vector.extract_strided_slice %1297 {offsets = [2, 0], sizes = [32, 64], strides = [1, 1]} : vector<34x64xf32> to vector<32x64xf32>
    %1302 = vector.broadcast %5 : vector<32x1xf32> to vector<32x64xf32>
    %1303 = arith.mulf %1301, %1302 : vector<32x64xf32>
    %1304 = tpu.concatenate %1300, %1295, %1303 in 1 : vector<32x64xf32>, vector<32x64xf32>, vector<32x64xf32> -> vector<32x192xf32>
    %1305 = arith.truncf %1304 : vector<32x192xf32> to vector<32x192xbf16>
    %c2_573 = arith.constant 2 : index
    %c0_574 = arith.constant 0 : index
    %c0_575 = arith.constant 0 : index
    %1306 = vector.load %arg13[%c2_573, %c0_574, %c0_575] : memref<3x192x128xbf16, #tpu.memory_space<vmem>>, vector<1x192x128xbf16>
    %1307 = vector.shape_cast %1306 : vector<1x192x128xbf16> to vector<192x128xbf16>
    %cst_576 = arith.constant dense<0.000000e+00> : vector<32x128xf32>
    %1308 = tpu.matmul %1305, %1307, %cst_576 {dimension_numbers = #tpu.dot_dimension_numbers<[1], [0], [0], [1], [0, 0, 1, 1], [], []>} : vector<32x192xbf16>, vector<192x128xbf16>, vector<32x128xf32> -> vector<32x128xf32>
    %c2_577 = arith.constant 2 : index
    %c0_578 = arith.constant 0 : index
    %c0_579 = arith.constant 0 : index
    %1309 = vector.load %arg14[%c2_577, %c0_578, %c0_579] : memref<3x1x128xf32, #tpu.memory_space<vmem>>, vector<1x1x128xf32>
    %1310 = vector.shape_cast %1309 : vector<1x1x128xf32> to vector<1x128xf32>
    %1311 = vector.broadcast %1310 : vector<1x128xf32> to vector<32x128xf32>
    %1312 = arith.addf %1308, %1311 : vector<32x128xf32>
    %cst_580 = arith.constant 0.000000e+00 : f32
    %1313 = vector.broadcast %cst_580 : f32 to vector<32x128xf32>
    %1314 = arith.maximumf %1312, %1313 : vector<32x128xf32>
    %1315 = vector.broadcast %1 : vector<32x1xf32> to vector<32x128xf32>
    %1316 = arith.mulf %1314, %1315 : vector<32x128xf32>
    %cst_581 = arith.constant 0.000000e+00 : f32
    %1317 = vector.broadcast %cst_581 : f32 to vector<1x128xf32>
    %1318 = tpu.concatenate %1317, %1316, %1317 in 0 : vector<1x128xf32>, vector<32x128xf32>, vector<1x128xf32> -> vector<34x128xf32>
    %1319 = vector.extract_strided_slice %1318 {offsets = [0, 0], sizes = [32, 128], strides = [1, 1]} : vector<34x128xf32> to vector<32x128xf32>
    %1320 = vector.broadcast %3 : vector<32x1xf32> to vector<32x128xf32>
    %1321 = arith.mulf %1319, %1320 : vector<32x128xf32>
    %1322 = vector.extract_strided_slice %1318 {offsets = [2, 0], sizes = [32, 128], strides = [1, 1]} : vector<34x128xf32> to vector<32x128xf32>
    %1323 = vector.broadcast %5 : vector<32x1xf32> to vector<32x128xf32>
    %1324 = arith.mulf %1322, %1323 : vector<32x128xf32>
    %1325 = tpu.concatenate %1321, %1316, %1324 in 1 : vector<32x128xf32>, vector<32x128xf32>, vector<32x128xf32> -> vector<32x384xf32>
    %1326 = arith.truncf %1325 : vector<32x384xf32> to vector<32x384xbf16>
    %c2_582 = arith.constant 2 : index
    %c0_583 = arith.constant 0 : index
    %c0_584 = arith.constant 0 : index
    %1327 = vector.load %arg15[%c2_582, %c0_583, %c0_584] : memref<3x384x64xbf16, #tpu.memory_space<vmem>>, vector<1x384x64xbf16>
    %1328 = vector.shape_cast %1327 : vector<1x384x64xbf16> to vector<384x64xbf16>
    %cst_585 = arith.constant dense<0.000000e+00> : vector<32x64xf32>
    %1329 = tpu.matmul %1326, %1328, %cst_585 {dimension_numbers = #tpu.dot_dimension_numbers<[1], [0], [0], [1], [0, 0, 1, 1], [], []>} : vector<32x384xbf16>, vector<384x64xbf16>, vector<32x64xf32> -> vector<32x64xf32>
    %c2_586 = arith.constant 2 : index
    %c0_587 = arith.constant 0 : index
    %c0_588 = arith.constant 0 : index
    %1330 = vector.load %arg16[%c2_586, %c0_587, %c0_588] : memref<3x1x64xf32, #tpu.memory_space<vmem>>, vector<1x1x64xf32>
    %1331 = vector.shape_cast %1330 : vector<1x1x64xf32> to vector<1x64xf32>
    %1332 = vector.broadcast %1331 : vector<1x64xf32> to vector<32x64xf32>
    %1333 = arith.addf %1329, %1332 : vector<32x64xf32>
    %1334 = vector.broadcast %1 : vector<32x1xf32> to vector<32x64xf32>
    %1335 = arith.mulf %1333, %1334 : vector<32x64xf32>
    %1336 = arith.addf %1293, %1335 : vector<32x64xf32>
    %c2_589 = arith.constant 2 : index
    %c0_590 = arith.constant 0 : index
    %c0_591 = arith.constant 0 : index
    %1337 = vector.load %arg17[%c2_589, %c0_590, %c0_591] : memref<3x1x64xf32, #tpu.memory_space<vmem>>, vector<1x1x64xf32>
    %1338 = vector.shape_cast %1337 : vector<1x1x64xf32> to vector<1x64xf32>
    %c2_592 = arith.constant 2 : index
    %c0_593 = arith.constant 0 : index
    %c0_594 = arith.constant 0 : index
    %1339 = vector.load %arg18[%c2_592, %c0_593, %c0_594] : memref<3x1x64xf32, #tpu.memory_space<vmem>>, vector<1x1x64xf32>
    %1340 = vector.shape_cast %1339 : vector<1x1x64xf32> to vector<1x64xf32>
    %cst_595 = arith.constant dense<0.000000e+00> : vector<32xf32>
    %1341 = vector.multi_reduction <add>, %1336, %cst_595 [1] : vector<32x64xf32> to vector<32xf32>
    %1342 = vector.shape_cast %1341 : vector<32xf32> to vector<32x1xf32>
    %cst_596 = arith.constant 6.400000e+01 : f32
    %1343 = vector.broadcast %cst_596 : f32 to vector<32x1xf32>
    %1344 = arith.divf %1342, %1343 : vector<32x1xf32>
    %1345 = vector.broadcast %1344 : vector<32x1xf32> to vector<32x64xf32>
    %1346 = arith.subf %1336, %1345 : vector<32x64xf32>
    %1347 = arith.mulf %1346, %1346 : vector<32x64xf32>
    %cst_597 = arith.constant dense<0.000000e+00> : vector<32xf32>
    %1348 = vector.multi_reduction <add>, %1347, %cst_597 [1] : vector<32x64xf32> to vector<32xf32>
    %1349 = vector.shape_cast %1348 : vector<32xf32> to vector<32x1xf32>
    %cst_598 = arith.constant 6.400000e+01 : f32
    %1350 = vector.broadcast %cst_598 : f32 to vector<32x1xf32>
    %1351 = arith.divf %1349, %1350 : vector<32x1xf32>
    %1352 = vector.broadcast %1344 : vector<32x1xf32> to vector<32x64xf32>
    %1353 = arith.subf %1336, %1352 : vector<32x64xf32>
    %cst_599 = arith.constant 9.99999974E-6 : f32
    %1354 = vector.broadcast %cst_599 : f32 to vector<32x1xf32>
    %1355 = arith.addf %1351, %1354 : vector<32x1xf32>
    %1356 = math.rsqrt %1355 : vector<32x1xf32>
    %1357 = vector.broadcast %1356 : vector<32x1xf32> to vector<32x64xf32>
    %1358 = arith.mulf %1353, %1357 : vector<32x64xf32>
    %1359 = vector.broadcast %1338 : vector<1x64xf32> to vector<32x64xf32>
    %1360 = arith.mulf %1358, %1359 : vector<32x64xf32>
    %1361 = vector.broadcast %1340 : vector<1x64xf32> to vector<32x64xf32>
    %1362 = arith.addf %1360, %1361 : vector<32x64xf32>
    %1363 = vector.broadcast %1 : vector<32x1xf32> to vector<32x64xf32>
    %1364 = arith.mulf %1362, %1363 : vector<32x64xf32>
    %c0_600 = arith.constant 0 : index
    %c0_601 = arith.constant 0 : index
    %1365 = vector.load %arg19[%c0_600, %c0_601] : memref<32x64xf32, #tpu.memory_space<vmem>>, vector<32x64xf32>
    tpu.vector_store %arg19[%c0_600, %c0_601], %1364 {strides = array<i32>} : memref<32x64xf32, #tpu.memory_space<vmem>>, vector<32x64xf32>,
    return
  }
}

</mosaic_0001>

<llo_original>
// kernel: text_encoder_forward.1
$region0: #{text_encoder_forward.1}
  #allocation0 [shape = 'u32[]', space=smem, size = 0x4, offset = 0x4, fixed_abs, tag = 'smem constant byte address 0x4 - core index']
  #allocation1 [shape = 'u32[144,128]{1,0:T(1,128)}', space=vmem, size = 0x12000, scoped, tag = 'internal scratch']
  %s0 = inlined_call_operand.vmem [shape: f32[32,64], index: 0, kind: input, shape index: {}]
  %s1 = inlined_call_operand.vmem [shape: f32[32,1], index: 1, kind: input, shape index: {}]
  %s2 = inlined_call_operand.vmem [shape: f32[32,32], index: 2, kind: input, shape index: {}]
  %s3 = inlined_call_operand.vmem [shape: f32[9,32,32], index: 3, kind: input, shape index: {}]
  %s4 = inlined_call_operand.vmem [shape: f32[2,32,1], index: 4, kind: input, shape index: {}]
  %s5 = inlined_call_operand.vmem [shape: bf16[3,64,192], index: 5, kind: input, shape index: {}]
  %s6 = inlined_call_operand.vmem [shape: f32[3,1,192], index: 6, kind: input, shape index: {}]
  %s7 = inlined_call_operand.vmem [shape: bf16[3,64,64], index: 7, kind: input, shape index: {}]
  %s8 = inlined_call_operand.vmem [shape: f32[3,1,64], index: 8, kind: input, shape index: {}]
  %s9 = inlined_call_operand.vmem [shape: bf16[3,64,18], index: 9, kind: input, shape index: {}]
  %s10 = inlined_call_operand.vmem [shape: f32[3,9,32], index: 10, kind: input, shape index: {}]
  %s11 = inlined_call_operand.vmem [shape: f32[3,1,64], index: 11, kind: input, shape index: {}]
  %s12 = inlined_call_operand.vmem [shape: f32[3,1,64], index: 12, kind: input, shape index: {}]
  %s13 = inlined_call_operand.vmem [shape: bf16[3,192,128], index: 13, kind: input, shape index: {}]
  %s14 = inlined_call_operand.vmem [shape: f32[3,1,128], index: 14, kind: input, shape index: {}]
  %s15 = inlined_call_operand.vmem [shape: bf16[3,384,64], index: 15, kind: input, shape index: {}]
  %s16 = inlined_call_operand.vmem [shape: f32[3,1,64], index: 16, kind: input, shape index: {}]
  %s17 = inlined_call_operand.vmem [shape: f32[3,1,64], index: 17, kind: input, shape index: {}]
  %s18 = inlined_call_operand.vmem [shape: f32[3,1,64], index: 18, kind: input, shape index: {}]
  %s19 = inlined_call_operand.hbm [shape: f32[32,64], index: 19, kind: output, shape index: {}]
  %s20 = sld [smem:[#allocation0]]
  $region86: #{text_encoder_forward.1} parent=0
    _
  %s22 = ssub.s32 1, %s20
  %s23 = scalar_select 0, %s22, %s20
  $region1: #{text_encoder_forward.1} parent=0
    #allocation2 [shape = 'u8[16384]{0}', space=vmem, size = 0x4000, scoped, tag = 'output window, operand 0, single buffered']
    #allocation3 [shape = 's32[1]{0}', space=sflag, size = 0x4, scoped, tag = 'scoped memory for text_encoder_forward.1']
    %24 = vsyncpa [#allocation3], 0
    // Predicated region
    $region2: #{text_encoder_forward.1} parent=1 // pred_check
      _
    $region3: #{text_encoder_forward.1} parent=1 // pred_check_branch
      %26 = sbr.rel (0) target = $region5
    $region4: #{text_encoder_forward.1} parent=1 // pred_region
      _
    $region5: #{text_encoder_forward.1} parent=1 // pred_fallthru
      _
    // Predicated region
    $region6: #{text_encoder_forward.1} parent=1 // pred_check
      _
    $region7: #{text_encoder_forward.1} parent=1 // pred_check_branch
      %28 = sbr.rel (0) target = $region9
    $region8: #{text_encoder_forward.1} parent=1 // pred_region
      _
    $region9: #{text_encoder_forward.1} parent=1 // pred_fallthru
      _
    // Predicated region
    $region10: #{text_encoder_forward.1} parent=1 // pred_check
      _
    $region11: #{text_encoder_forward.1} parent=1 // pred_check_branch
      %30 = sbr.rel (0) target = $region13
    $region12: #{text_encoder_forward.1} parent=1 // pred_region
      _
    $region13: #{text_encoder_forward.1} parent=1 // pred_fallthru
      _
    // Predicated region
    $region14: #{text_encoder_forward.1} parent=1 // pred_check
      _
    $region15: #{text_encoder_forward.1} parent=1 // pred_check_branch
      %32 = sbr.rel (0) target = $region17
    $region16: #{text_encoder_forward.1} parent=1 // pred_region
      _
    $region17: #{text_encoder_forward.1} parent=1 // pred_fallthru
      _
    // Predicated region
    $region18: #{text_encoder_forward.1} parent=1 // pred_check
      _
    $region19: #{text_encoder_forward.1} parent=1 // pred_check_branch
      %34 = sbr.rel (0) target = $region21
    $region20: #{text_encoder_forward.1} parent=1 // pred_region
      _
    $region21: #{text_encoder_forward.1} parent=1 // pred_fallthru
      _
    // Predicated region
    $region22: #{text_encoder_forward.1} parent=1 // pred_check
      _
    $region23: #{text_encoder_forward.1} parent=1 // pred_check_branch
      %36 = sbr.rel (0) target = $region25
    $region24: #{text_encoder_forward.1} parent=1 // pred_region
      _
    $region25: #{text_encoder_forward.1} parent=1 // pred_fallthru
      _
    // Predicated region
    $region26: #{text_encoder_forward.1} parent=1 // pred_check
      _
    $region27: #{text_encoder_forward.1} parent=1 // pred_check_branch
      %38 = sbr.rel (0) target = $region29
    $region28: #{text_encoder_forward.1} parent=1 // pred_region
      _
    $region29: #{text_encoder_forward.1} parent=1 // pred_fallthru
      _
    // Predicated region
    $region30: #{text_encoder_forward.1} parent=1 // pred_check
      _
    $region31: #{text_encoder_forward.1} parent=1 // pred_check_branch
      %40 = sbr.rel (0) target = $region33
    $region32: #{text_encoder_forward.1} parent=1 // pred_region
      _
    $region33: #{text_encoder_forward.1} parent=1 // pred_fallthru
      _
    // Predicated region
    $region34: #{text_encoder_forward.1} parent=1 // pred_check
      _
    $region35: #{text_encoder_forward.1} parent=1 // pred_check_branch
      %42 = sbr.rel (0) target = $region37
    $region36: #{text_encoder_forward.1} parent=1 // pred_region
      _
    $region37: #{text_encoder_forward.1} parent=1 // pred_fallthru
      _
    // Predicated region
    $region38: #{text_encoder_forward.1} parent=1 // pred_check
      _
    $region39: #{text_encoder_forward.1} parent=1 // pred_check_branch
      %44 = sbr.rel (0) target = $region41
    $region40: #{text_encoder_forward.1} parent=1 // pred_region
      _
    $region41: #{text_encoder_forward.1} parent=1 // pred_fallthru
      _
    // Predicated region
    $region42: #{text_encoder_forward.1} parent=1 // pred_check
      _
    $region43: #{text_encoder_forward.1} parent=1 // pred_check_branch
      %46 = sbr.rel (0) target = $region45
    $region44: #{text_encoder_forward.1} parent=1 // pred_region
      _
    $region45: #{text_encoder_forward.1} parent=1 // pred_fallthru
      _
    // Predicated region
    $region46: #{text_encoder_forward.1} parent=1 // pred_check
      _
    $region47: #{text_encoder_forward.1} parent=1 // pred_check_branch
      %48 = sbr.rel (0) target = $region49
    $region48: #{text_encoder_forward.1} parent=1 // pred_region
      _
    $region49: #{text_encoder_forward.1} parent=1 // pred_fallthru
      _
    // Predicated region
    $region50: #{text_encoder_forward.1} parent=1 // pred_check
      _
    $region51: #{text_encoder_forward.1} parent=1 // pred_check_branch
      %50 = sbr.rel (0) target = $region53
    $region52: #{text_encoder_forward.1} parent=1 // pred_region
      _
    $region53: #{text_encoder_forward.1} parent=1 // pred_fallthru
      _
    // Predicated region
    $region54: #{text_encoder_forward.1} parent=1 // pred_check
      _
    $region55: #{text_encoder_forward.1} parent=1 // pred_check_branch
      %52 = sbr.rel (0) target = $region57
    $region56: #{text_encoder_forward.1} parent=1 // pred_region
      _
    $region57: #{text_encoder_forward.1} parent=1 // pred_fallthru
      _
    // Predicated region
    $region58: #{text_encoder_forward.1} parent=1 // pred_check
      _
    $region59: #{text_encoder_forward.1} parent=1 // pred_check_branch
      %54 = sbr.rel (0) target = $region61
    $region60: #{text_encoder_forward.1} parent=1 // pred_region
      _
    $region61: #{text_encoder_forward.1} parent=1 // pred_fallthru
      _
    // Predicated region
    $region62: #{text_encoder_forward.1} parent=1 // pred_check
      _
    $region63: #{text_encoder_forward.1} parent=1 // pred_check_branch
      %56 = sbr.rel (0) target = $region65
    $region64: #{text_encoder_forward.1} parent=1 // pred_region
      _
    $region65: #{text_encoder_forward.1} parent=1 // pred_fallthru
      _
    // Predicated region
    $region66: #{text_encoder_forward.1} parent=1 // pred_check
      _
    $region67: #{text_encoder_forward.1} parent=1 // pred_check_branch
      %58 = sbr.rel (0) target = $region69
    $region68: #{text_encoder_forward.1} parent=1 // pred_region
      _
    $region69: #{text_encoder_forward.1} parent=1 // pred_fallthru
      _
    // Predicated region
    $region70: #{text_encoder_forward.1} parent=1 // pred_check
      _
    $region71: #{text_encoder_forward.1} parent=1 // pred_check_branch
      %60 = sbr.rel (0) target = $region73
    $region72: #{text_encoder_forward.1} parent=1 // pred_region
      _
    $region73: #{text_encoder_forward.1} parent=1 // pred_fallthru
      _
    // Predicated region
    $region74: #{text_encoder_forward.1} parent=1 // pred_check
      _
    $region75: #{text_encoder_forward.1} parent=1 // pred_check_branch
      %62 = sbr.rel (0) target = $region77
    $region76: #{text_encoder_forward.1} parent=1 // pred_region
      _
    $region77: #{text_encoder_forward.1} parent=1 // pred_fallthru
      _
    %v64 = vld [vmem:[%s0] sm:$0xff]
    %v65 = vld [vmem:[%s0 + $0x8] sm:$0xff]
    %v66 = vld [vmem:[%s0 + $0x10] sm:$0xff]
    %v67 = vld [vmem:[%s0 + $0x18] sm:$0xff]
    %v68 = vld [vmem:[%s1] sm:$0xff]
    %v69 = vld [vmem:[%s1 + $0x8] sm:$0xff]
    %v70 = vld [vmem:[%s1 + $0x10] sm:$0xff]
    %v71 = vld [vmem:[%s1 + $0x18] sm:$0xff]
    %v72 = vld [vmem:[%s4] sm:$0xff]
    %v73 = vld [vmem:[%s4 + $0x8] sm:$0xff]
    %v74 = vld [vmem:[%s4 + $0x10] sm:$0xff]
    %v75 = vld [vmem:[%s4 + $0x18] sm:$0xff]
    %s76 = scalar_lea.vmem %s4, 32
    %v77 = vld [vmem:[%s76] sm:$0xff]
    %v78 = vld [vmem:[%s76 + $0x8] sm:$0xff]
    %v79 = vld [vmem:[%s76 + $0x10] sm:$0xff]
    %v80 = vld [vmem:[%s76 + $0x18] sm:$0xff]
    %82 = vset.pattern.permute.xlu0 0
    %83 = vperm.xlu0 %82, %v68
    %v84 = vpop.permute.xlu0 %83
    %87 = vset.pattern.permute.xlu0 0
    %88 = vperm.xlu0 %87, %v69
    %v89 = vpop.permute.xlu0 %88
    %92 = vset.pattern.permute.xlu0 0
    %93 = vperm.xlu0 %92, %v70
    %v94 = vpop.permute.xlu0 %93
    %97 = vset.pattern.permute.xlu0 0
    %98 = vperm.xlu0 %97, %v71
    %v99 = vpop.permute.xlu0 %98
    %v101 = vmul.f32 %v64, %v84
    %v102 = vmul.f32 %v65, %v89
    %v103 = vmul.f32 %v66, %v94
    %v104 = vmul.f32 %v67, %v99
    %v105 = vpack.c.bf16 %v102, %v101
    %v106 = vpack.c.bf16 %v104, %v103
    %v107 = vld [vmem:[%s5] sm:$0xff]
    %v108 = vld [vmem:[%s5 + $0x8] sm:$0xff]
    %v109 = vld [vmem:[%s5 + $0x10] sm:$0xff]
    %v110 = vld [vmem:[%s5 + $0x18] sm:$0xff]
    %v111 = vld [vmem:[%s5 + $0x20] sm:$0xff]
    %v112 = vld [vmem:[%s5 + $0x28] sm:$0xff]
    %v113 = vld [vmem:[%s5 + $0x30] sm:$0xff]
    %v114 = vld [vmem:[%s5 + $0x38] sm:$0xff]
    %v115 = vld [vmem:[%s6] sm:$0x3]
    %v117 = vlaneseq
    %v118 = vshrl.u32 %v117, 7
    %v119 = vsub.s32 0, %v118
    %v120 = vrot.slane %v115, %v119
    %v121 = vlaneseq
    %v122 = vshrl.u32 %v121, 7
    %v123 = vsub.s32 1, %v122
    %v124 = vrot.slane %v115, %v123
    %v135 = vunpack.c.l.b16 %v107
    %v136 = vunpack.c.h.b16 %v107
    %v137 = vunpack.c.l.b16 %v108
    %v138 = vunpack.c.h.b16 %v108
    %v139 = vunpack.c.l.b16 %v109
    %v140 = vunpack.c.h.b16 %v109
    %v141 = vunpack.c.l.b16 %v110
    %v142 = vunpack.c.h.b16 %v110
    %v143 = vunpack.c.l.b16 %v111
    %v144 = vunpack.c.h.b16 %v111
    %v145 = vunpack.c.l.b16 %v112
    %v146 = vunpack.c.h.b16 %v112
    %v147 = vunpack.c.l.b16 %v113
    %v148 = vunpack.c.h.b16 %v113
    %v149 = vunpack.c.l.b16 %v114
    %v150 = vunpack.c.h.b16 %v114
    %v151 = vpack.c.b16 %v137, %v135
    %v152 = vpack.c.b16 %v138, %v136
    %v153 = vpack.c.b16 %v141, %v139
    %v154 = vpack.c.b16 %v142, %v140
    %v155 = vpack.c.b16 %v145, %v143
    %v156 = vpack.c.b16 %v146, %v144
    %v157 = vpack.c.b16 %v149, %v147
    %v158 = vpack.c.b16 %v150, %v148
    %vm167 = vcmask 523264
    %v169 = vsel %vm167, %v105, 0
    %v172 = vsel %vm167, %v106, 0
    %174 = vmatprep.subr.bf16.mxu0 %v152
    %175 = vmatpush1.bf16.msra.mxu0 %v151
    %176 = vmatprep.subr.bf16.mxu0 %v154
    %177 = vmatpush1.bf16.msra.mxu0 %v153
    %178 = vmatprep.subr.bf16.mxu0 %v156
    %179 = vmatpush1.bf16.msra.mxu0 %v155
    %180 = vmatprep.subr.bf16.mxu0 %v158
    %181 = vmatpush1.bf16.msra.mxu0 %v157
    %182 = vmatprep.subr.bf16.mxu0 0
    %183 = vmatpush1.bf16.msra.mxu0 0
    %184 = vmatprep.subr.bf16.mxu0 0
    %185 = vmatpush1.bf16.msra.mxu0 0
    %186 = vmatprep.subr.bf16.mxu0 0
    %187 = vmatpush1.bf16.msra.mxu0 0
    %188 = vmatprep.subr.bf16.mxu0 0
    %189 = vmatpush1.bf16.msra.mxu0 0
    %190 = vmatprep.subr.bf16.mxu0 0
    %191 = vmatpush1.bf16.msra.mxu0 0
    %192 = vmatprep.subr.bf16.mxu0 0
    %193 = vmatpush1.bf16.msra.mxu0 0
    %194 = vmatprep.subr.bf16.mxu0 0
    %195 = vmatpush1.bf16.msra.mxu0 0
    %196 = vmatprep.subr.bf16.mxu0 0
    %197 = vmatpush1.bf16.msra.mxu0 0
    %198 = vmatprep.subr.bf16.mxu0 0
    %199 = vmatpush1.bf16.msra.mxu0 0
    %200 = vmatprep.subr.bf16.mxu0 0
    %201 = vmatpush1.bf16.msra.mxu0 0
    %202 = vmatprep.subr.bf16.mxu0 0
    %203 = vmatpush1.bf16.msra.mxu0 0
    %204 = vmatprep.subr.bf16.mxu0 0
    %205 = vmatpush1.bf16.msra.mxu0 0
    %206 = vmatprep.mubr.bf16.mxu0 0
    %207 = vmatmul.mubr.bf16.gmra.mrb[0].mxu0 %v169
    %v208 = vpop.f32.mrb[0].mxu0
    %v209 = vadd.f32 %v120, %v208
    %v210 = vpop.f32.mrb[0].mxu0
    %v211 = vadd.f32 %v124, %v210
    %v212 = vpop.f32.mrb[0].mxu0
    %v213 = vadd.f32 %v120, %v212
    %v214 = vpop.f32.mrb[0].mxu0
    %v215 = vadd.f32 %v124, %v214
    %216 = vmatprep.mubr.bf16.mxu0 0
    %217 = vmatmul.mubr.bf16.gmra.mrb[0].mxu0 %v172
    %v218 = vpop.f32.mrb[0].mxu0
    %v219 = vadd.f32 %v120, %v218
    %v220 = vpop.f32.mrb[0].mxu0
    %v221 = vadd.f32 %v124, %v220
    %v222 = vpop.f32.mrb[0].mxu0
    %v223 = vadd.f32 %v120, %v222
    %v224 = vpop.f32.mrb[0].mxu0
    %v225 = vadd.f32 %v124, %v224
    %226 = vdwg.mxu0
    %v227 = vmul.f32 %v209, 0.17677669
    %v228 = vmul.f32 %v213, 0.17677669
    %v229 = vmul.f32 %v219, 0.17677669
    %v230 = vmul.f32 %v223, 0.17677669
    %v231 = vpack.c.bf16 %v228, %v227
    %v232 = vpack.c.bf16 %v230, %v229
    %v233 = vld [vmem:[%s9] sm:$0xf]
    %v234 = vld [vmem:[%s9 + $0x4] sm:$0xf]
    %v235 = vld [vmem:[%s9 + $0x8] sm:$0xf]
    %v236 = vld [vmem:[%s9 + $0xc] sm:$0xf]
    %v237 = vld [vmem:[%s9 + $0x10] sm:$0xf]
    %v238 = vld [vmem:[%s9 + $0x14] sm:$0xf]
    %v239 = vld [vmem:[%s9 + $0x18] sm:$0xf]
    %v240 = vld [vmem:[%s9 + $0x1c] sm:$0xf]
    %v249 = vunpack.c.l.b16 %v233
    %v250 = vunpack.c.l.b16 %v234
    %v251 = vunpack.c.l.b16 %v235
    %v252 = vunpack.c.l.b16 %v236
    %v253 = vunpack.c.l.b16 %v237
    %v254 = vunpack.c.l.b16 %v238
    %v255 = vunpack.c.l.b16 %v239
    %v256 = vunpack.c.l.b16 %v240
    %v257 = vpack.c.b16 %v250, %v249
    %v258 = vpack.c.b16 %v252, %v251
    %v259 = vpack.c.b16 %v254, %v253
    %v260 = vpack.c.b16 %v256, %v255
    %v266 = vsel %vm167, %v231, 0
    %v269 = vsel %vm167, %v232, 0
    %271 = vmatprep.subr.bf16.mxu0 0
    %272 = vmatpush1.bf16.msra.mxu0 %v257
    %273 = vmatprep.subr.bf16.mxu0 0
    %274 = vmatpush1.bf16.msra.mxu0 %v258
    %275 = vmatprep.subr.bf16.mxu0 0
    %276 = vmatpush1.bf16.msra.mxu0 %v259
    %277 = vmatprep.subr.bf16.mxu0 0
    %278 = vmatpush1.bf16.msra.mxu0 %v260
    %279 = vmatprep.subr.bf16.mxu0 0
    %280 = vmatpush1.bf16.msra.mxu0 0
    %281 = vmatprep.subr.bf16.mxu0 0
    %282 = vmatpush1.bf16.msra.mxu0 0
    %283 = vmatprep.subr.bf16.mxu0 0
    %284 = vmatpush1.bf16.msra.mxu0 0
    %285 = vmatprep.subr.bf16.mxu0 0
    %286 = vmatpush1.bf16.msra.mxu0 0
    %287 = vmatprep.subr.bf16.mxu0 0
    %288 = vmatpush1.bf16.msra.mxu0 0
    %289 = vmatprep.subr.bf16.mxu0 0
    %290 = vmatpush1.bf16.msra.mxu0 0
    %291 = vmatprep.subr.bf16.mxu0 0
    %292 = vmatpush1.bf16.msra.mxu0 0
    %293 = vmatprep.subr.bf16.mxu0 0
    %294 = vmatpush1.bf16.msra.mxu0 0
    %295 = vmatprep.subr.bf16.mxu0 0
    %296 = vmatpush1.bf16.msra.mxu0 0
    %297 = vmatprep.subr.bf16.mxu0 0
    %298 = vmatpush1.bf16.msra.mxu0 0
    %299 = vmatprep.subr.bf16.mxu0 0
    %300 = vmatpush1.bf16.msra.mxu0 0
    %301 = vmatprep.subr.bf16.mxu0 0
    %302 = vmatpush1.bf16.msra.mxu0 0
    %303 = vmatprep.mubr.bf16.mxu0 0
    %304 = vmatmul.mubr.bf16.gmra.mrb[0].mxu0 %v266
    %v305 = vpop.f32.mrb[0].mxu0
    %v306 = vadd.f32 0.0, %v305
    %v307 = vpop.f32.mrb[0].mxu0
    %v308 = vpop.f32.mrb[0].mxu0
    %v309 = vadd.f32 0.0, %v308
    %v310 = vpop.f32.mrb[0].mxu0
    %311 = vmatprep.mubr.bf16.mxu0 0
    %312 = vmatmul.mubr.bf16.gmra.mrb[0].mxu0 %v269
    %v313 = vpop.f32.mrb[0].mxu0
    %v314 = vadd.f32 0.0, %v313
    %v315 = vpop.f32.mrb[0].mxu0
    %v316 = vpop.f32.mrb[0].mxu0
    %v317 = vadd.f32 0.0, %v316
    %v318 = vpop.f32.mrb[0].mxu0
    %319 = vdwg.mxu0
    %v320 = vld [vmem:[%s10] sm:$0xff]
    %v321 = vld [vmem:[%s10 + $0x8] sm:$0x1]
    %v322 = vld [vmem:[%s2] sm:$0xff]
    %v323 = vld [vmem:[%s2 + $0x8] sm:$0xff]
    %v324 = vld [vmem:[%s2 + $0x10] sm:$0xff]
    %v325 = vld [vmem:[%s2 + $0x18] sm:$0xff]
    %vm326 = vcmp.gt.f32.partialorder %v322, 0.0
    %vm327 = vcmp.gt.f32.partialorder %v323, 0.0
    %vm328 = vcmp.gt.f32.partialorder %v324, 0.0
    %vm329 = vcmp.gt.f32.partialorder %v325, 0.0
    %v330 = vpack.c.bf16 %v213, %v209
    %v331 = vpack.c.bf16 %v223, %v219
    %v332 = vpack.c.bf16 %v215, %v211
    %v333 = vpack.c.bf16 %v225, %v221
    %v334 = vld [vmem:[%s3] sm:$0xff]
    %v335 = vld [vmem:[%s3 + $0x8] sm:$0xff]
    %v336 = vld [vmem:[%s3 + $0x10] sm:$0xff]
    %v337 = vld [vmem:[%s3 + $0x18] sm:$0xff]
    %339 = vset.pattern.permute.xlu0 0
    %340 = vperm.xlu0 %339, %v306
    %v341 = vpop.permute.xlu0 %340
    %344 = vset.pattern.permute.xlu0 0
    %345 = vperm.xlu0 %344, %v309
    %v346 = vpop.permute.xlu0 %345
    %349 = vset.pattern.permute.xlu0 0
    %350 = vperm.xlu0 %349, %v314
    %v351 = vpop.permute.xlu0 %350
    %354 = vset.pattern.permute.xlu0 0
    %355 = vperm.xlu0 %354, %v317
    %v356 = vpop.permute.xlu0 %355
    %v358 = vmul.f32 %v341, %v334
    %v359 = vmul.f32 %v346, %v335
    %v360 = vmul.f32 %v351, %v336
    %v361 = vmul.f32 %v356, %v337
    %364 = vrot.lane.b32.xlu0 %v330, 64
    %v365 = vpop.permute.xlu0 %364
    %366 = vrot.lane.b32.xlu0 %v331, 64
    %v367 = vpop.permute.xlu0 %366
    %vm368 = vcmask 261120
    %v369 = vsel %vm368, %v231, 0
    %v371 = vsel %vm368, %v232, 0
    %v374 = vsel %vm368, %v365, 0
    %v377 = vsel %vm368, %v367, 0
    %379 = vmatprep.subr.bf16.mxu0 0
    %380 = vmatpush1.bf16.xpose.msra.mxu0 %v374
    %381 = vmatprep.subr.bf16.mxu0 0
    %382 = vmatpush1.bf16.xpose.msra.mxu0 %v377
    %383 = vmatprep.subr.bf16.mxu0 0
    %384 = vmatpush1.bf16.xpose.msra.mxu0 0
    %385 = vmatprep.subr.bf16.mxu0 0
    %386 = vmatpush1.bf16.xpose.msra.mxu0 0
    %387 = vmatprep.subr.bf16.mxu0 0
    %388 = vmatpush1.bf16.xpose.msra.mxu0 0
    %389 = vmatprep.subr.bf16.mxu0 0
    %390 = vmatpush1.bf16.xpose.msra.mxu0 0
    %391 = vmatprep.subr.bf16.mxu0 0
    %392 = vmatpush1.bf16.xpose.msra.mxu0 0
    %393 = vmatprep.subr.bf16.mxu0 0
    %394 = vmatpush1.bf16.xpose.msra.mxu0 0
    %395 = vmatprep.subr.bf16.mxu0 0
    %396 = vmatpush1.bf16.xpose.msra.mxu0 0
    %397 = vmatprep.subr.bf16.mxu0 0
    %398 = vmatpush1.bf16.xpose.msra.mxu0 0
    %399 = vmatprep.subr.bf16.mxu0 0
    %400 = vmatpush1.bf16.xpose.msra.mxu0 0
    %401 = vmatprep.subr.bf16.mxu0 0
    %402 = vmatpush1.bf16.xpose.msra.mxu0 0
    %403 = vmatprep.subr.bf16.mxu0 0
    %404 = vmatpush1.bf16.xpose.msra.mxu0 0
    %405 = vmatprep.subr.bf16.mxu0 0
    %406 = vmatpush1.bf16.xpose.msra.mxu0 0
    %407 = vmatprep.subr.bf16.mxu0 0
    %408 = vmatpush1.bf16.xpose.msra.mxu0 0
    %409 = vmatprep.subr.bf16.mxu0 0
    %410 = vmatpush1.bf16.xpose.msra.mxu0 0
    %411 = vmatprep.mubr.bf16.mxu0 0
    %412 = vmatmul.mubr.bf16.gmra.mrb[0].mxu0 %v369
    %v413 = vpop.f32.mrb[0].mxu0
    %v414 = vadd.f32 %v358, %v413
    %v415 = vpop.f32.mrb[0].mxu0
    %v416 = vpop.f32.mrb[0].mxu0
    %v417 = vadd.f32 %v359, %v416
    %v418 = vpop.f32.mrb[0].mxu0
    %419 = vmatprep.mubr.bf16.mxu0 0
    %420 = vmatmul.mubr.bf16.gmra.mrb[0].mxu0 %v371
    %v421 = vpop.f32.mrb[0].mxu0
    %v422 = vadd.f32 %v360, %v421
    %v423 = vpop.f32.mrb[0].mxu0
    %v424 = vpop.f32.mrb[0].mxu0
    %v425 = vadd.f32 %v361, %v424
    %v426 = vpop.f32.mrb[0].mxu0
    %427 = vdwg.mxu0
    %s428 = scalar_lea.vmem %s3, 32
    %v429 = vld [vmem:[%s428] sm:$0xff]
    %v430 = vld [vmem:[%s428 + $0x8] sm:$0xff]
    %v431 = vld [vmem:[%s428 + $0x10] sm:$0xff]
    %v432 = vld [vmem:[%s428 + $0x18] sm:$0xff]
    %433 = vset.pattern.permute.xlu0 1
    %434 = vperm.xlu0 %433, %v306
    %v435 = vpop.permute.xlu0 %434
    %437 = vset.pattern.permute.xlu0 1
    %438 = vperm.xlu0 %437, %v309
    %v439 = vpop.permute.xlu0 %438
    %441 = vset.pattern.permute.xlu0 1
    %442 = vperm.xlu0 %441, %v314
    %v443 = vpop.permute.xlu0 %442
    %445 = vset.pattern.permute.xlu0 1
    %446 = vperm.xlu0 %445, %v317
    %v447 = vpop.permute.xlu0 %446
    %v449 = vmul.f32 %v435, %v429
    %v450 = vmul.f32 %v439, %v430
    %v451 = vmul.f32 %v443, %v431
    %v452 = vmul.f32 %v447, %v432
    %v453 = vadd.f32 %v414, %v449
    %v454 = vadd.f32 %v417, %v450
    %v455 = vadd.f32 %v422, %v451
    %v456 = vadd.f32 %v425, %v452
    %s457 = scalar_lea.vmem %s3, 64
    %v458 = vld [vmem:[%s457] sm:$0xff]
    %v459 = vld [vmem:[%s457 + $0x8] sm:$0xff]
    %v460 = vld [vmem:[%s457 + $0x10] sm:$0xff]
    %v461 = vld [vmem:[%s457 + $0x18] sm:$0xff]
    %462 = vset.pattern.permute.xlu0 2
    %463 = vperm.xlu0 %462, %v306
    %v464 = vpop.permute.xlu0 %463
    %466 = vset.pattern.permute.xlu0 2
    %467 = vperm.xlu0 %466, %v309
    %v468 = vpop.permute.xlu0 %467
    %470 = vset.pattern.permute.xlu0 2
    %471 = vperm.xlu0 %470, %v314
    %v472 = vpop.permute.xlu0 %471
    %474 = vset.pattern.permute.xlu0 2
    %475 = vperm.xlu0 %474, %v317
    %v476 = vpop.permute.xlu0 %475
    %v478 = vmul.f32 %v464, %v458
    %v479 = vmul.f32 %v468, %v459
    %v480 = vmul.f32 %v472, %v460
    %v481 = vmul.f32 %v476, %v461
    %v482 = vadd.f32 %v453, %v478
    %v483 = vadd.f32 %v454, %v479
    %v484 = vadd.f32 %v455, %v480
    %v485 = vadd.f32 %v456, %v481
    %s486 = scalar_lea.vmem %s3, 96
    %v487 = vld [vmem:[%s486] sm:$0xff]
    %v488 = vld [vmem:[%s486 + $0x8] sm:$0xff]
    %v489 = vld [vmem:[%s486 + $0x10] sm:$0xff]
    %v490 = vld [vmem:[%s486 + $0x18] sm:$0xff]
    %491 = vset.pattern.permute.xlu0 3
    %492 = vperm.xlu0 %491, %v306
    %v493 = vpop.permute.xlu0 %492
    %495 = vset.pattern.permute.xlu0 3
    %496 = vperm.xlu0 %495, %v309
    %v497 = vpop.permute.xlu0 %496
    %499 = vset.pattern.permute.xlu0 3
    %500 = vperm.xlu0 %499, %v314
    %v501 = vpop.permute.xlu0 %500
    %503 = vset.pattern.permute.xlu0 3
    %504 = vperm.xlu0 %503, %v317
    %v505 = vpop.permute.xlu0 %504
    %v507 = vmul.f32 %v493, %v487
    %v508 = vmul.f32 %v497, %v488
    %v509 = vmul.f32 %v501, %v489
    %v510 = vmul.f32 %v505, %v490
    %v511 = vadd.f32 %v482, %v507
    %v512 = vadd.f32 %v483, %v508
    %v513 = vadd.f32 %v484, %v509
    %v514 = vadd.f32 %v485, %v510
    %s515 = scalar_lea.vmem %s3, 128
    %v516 = vld [vmem:[%s515] sm:$0xff]
    %v517 = vld [vmem:[%s515 + $0x8] sm:$0xff]
    %v518 = vld [vmem:[%s515 + $0x10] sm:$0xff]
    %v519 = vld [vmem:[%s515 + $0x18] sm:$0xff]
    %520 = vset.pattern.permute.xlu0 4
    %521 = vperm.xlu0 %520, %v306
    %v522 = vpop.permute.xlu0 %521
    %524 = vset.pattern.permute.xlu0 4
    %525 = vperm.xlu0 %524, %v309
    %v526 = vpop.permute.xlu0 %525
    %528 = vset.pattern.permute.xlu0 4
    %529 = vperm.xlu0 %528, %v314
    %v530 = vpop.permute.xlu0 %529
    %532 = vset.pattern.permute.xlu0 4
    %533 = vperm.xlu0 %532, %v317
    %v534 = vpop.permute.xlu0 %533
    %v536 = vmul.f32 %v522, %v516
    %v537 = vmul.f32 %v526, %v517
    %v538 = vmul.f32 %v530, %v518
    %v539 = vmul.f32 %v534, %v519
    %v540 = vadd.f32 %v511, %v536
    %v541 = vadd.f32 %v512, %v537
    %v542 = vadd.f32 %v513, %v538
    %v543 = vadd.f32 %v514, %v539
    %s544 = scalar_lea.vmem %s3, 160
    %v545 = vld [vmem:[%s544] sm:$0xff]
    %v546 = vld [vmem:[%s544 + $0x8] sm:$0xff]
    %v547 = vld [vmem:[%s544 + $0x10] sm:$0xff]
    %v548 = vld [vmem:[%s544 + $0x18] sm:$0xff]
    %549 = vset.pattern.permute.xlu0 5
    %550 = vperm.xlu0 %549, %v306
    %v551 = vpop.permute.xlu0 %550
    %553 = vset.pattern.permute.xlu0 5
    %554 = vperm.xlu0 %553, %v309
    %v555 = vpop.permute.xlu0 %554
    %557 = vset.pattern.permute.xlu0 5
    %558 = vperm.xlu0 %557, %v314
    %v559 = vpop.permute.xlu0 %558
    %561 = vset.pattern.permute.xlu0 5
    %562 = vperm.xlu0 %561, %v317
    %v563 = vpop.permute.xlu0 %562
    %v565 = vmul.f32 %v551, %v545
    %v566 = vmul.f32 %v555, %v546
    %v567 = vmul.f32 %v559, %v547
    %v568 = vmul.f32 %v563, %v548
    %v569 = vadd.f32 %v540, %v565
    %v570 = vadd.f32 %v541, %v566
    %v571 = vadd.f32 %v542, %v567
    %v572 = vadd.f32 %v543, %v568
    %s573 = scalar_lea.vmem %s3, 192
    %v574 = vld [vmem:[%s573] sm:$0xff]
    %v575 = vld [vmem:[%s573 + $0x8] sm:$0xff]
    %v576 = vld [vmem:[%s573 + $0x10] sm:$0xff]
    %v577 = vld [vmem:[%s573 + $0x18] sm:$0xff]
    %578 = vset.pattern.permute.xlu0 6
    %579 = vperm.xlu0 %578, %v306
    %v580 = vpop.permute.xlu0 %579
    %582 = vset.pattern.permute.xlu0 6
    %583 = vperm.xlu0 %582, %v309
    %v584 = vpop.permute.xlu0 %583
    %586 = vset.pattern.permute.xlu0 6
    %587 = vperm.xlu0 %586, %v314
    %v588 = vpop.permute.xlu0 %587
    %590 = vset.pattern.permute.xlu0 6
    %591 = vperm.xlu0 %590, %v317
    %v592 = vpop.permute.xlu0 %591
    %v594 = vmul.f32 %v580, %v574
    %v595 = vmul.f32 %v584, %v575
    %v596 = vmul.f32 %v588, %v576
    %v597 = vmul.f32 %v592, %v577
    %v598 = vadd.f32 %v569, %v594
    %v599 = vadd.f32 %v570, %v595
    %v600 = vadd.f32 %v571, %v596
    %v601 = vadd.f32 %v572, %v597
    %s602 = scalar_lea.vmem %s3, 224
    %v603 = vld [vmem:[%s602] sm:$0xff]
    %v604 = vld [vmem:[%s602 + $0x8] sm:$0xff]
    %v605 = vld [vmem:[%s602 + $0x10] sm:$0xff]
    %v606 = vld [vmem:[%s602 + $0x18] sm:$0xff]
    %607 = vset.pattern.permute.xlu0 7
    %608 = vperm.xlu0 %607, %v306
    %v609 = vpop.permute.xlu0 %608
    %611 = vset.pattern.permute.xlu0 7
    %612 = vperm.xlu0 %611, %v309
    %v613 = vpop.permute.xlu0 %612
    %615 = vset.pattern.permute.xlu0 7
    %616 = vperm.xlu0 %615, %v314
    %v617 = vpop.permute.xlu0 %616
    %619 = vset.pattern.permute.xlu0 7
    %620 = vperm.xlu0 %619, %v317
    %v621 = vpop.permute.xlu0 %620
    %v623 = vmul.f32 %v609, %v603
    %v624 = vmul.f32 %v613, %v604
    %v625 = vmul.f32 %v617, %v605
    %v626 = vmul.f32 %v621, %v606
    %v627 = vadd.f32 %v598, %v623
    %v628 = vadd.f32 %v599, %v624
    %v629 = vadd.f32 %v600, %v625
    %v630 = vadd.f32 %v601, %v626
    %s631 = scalar_lea.vmem %s3, 256
    %v632 = vld [vmem:[%s631] sm:$0xff]
    %v633 = vld [vmem:[%s631 + $0x8] sm:$0xff]
    %v634 = vld [vmem:[%s631 + $0x10] sm:$0xff]
    %v635 = vld [vmem:[%s631 + $0x18] sm:$0xff]
    %636 = vset.pattern.permute.xlu0 8
    %637 = vperm.xlu0 %636, %v306
    %v638 = vpop.permute.xlu0 %637
    %640 = vset.pattern.permute.xlu0 8
    %641 = vperm.xlu0 %640, %v309
    %v642 = vpop.permute.xlu0 %641
    %644 = vset.pattern.permute.xlu0 8
    %645 = vperm.xlu0 %644, %v314
    %v646 = vpop.permute.xlu0 %645
    %648 = vset.pattern.permute.xlu0 8
    %649 = vperm.xlu0 %648, %v317
    %v650 = vpop.permute.xlu0 %649
    %v652 = vmul.f32 %v638, %v632
    %v653 = vmul.f32 %v642, %v633
    %v654 = vmul.f32 %v646, %v634
    %v655 = vmul.f32 %v650, %v635
    %v656 = vadd.f32 %v627, %v652
    %v657 = vadd.f32 %v628, %v653
    %v658 = vadd.f32 %v629, %v654
    %v659 = vadd.f32 %v630, %v655
    %v660 = vsel %vm326, %v656, -10000.0
    %v661 = vsel %vm327, %v657, -10000.0
    %v662 = vsel %vm328, %v658, -10000.0
    %v663 = vsel %vm329, %v659, -10000.0
    %v664 = vsel %vm368, %v660, -inf
    %665 = vmax.xlane.f32.xlu0 %v664
    %v666 = vpop.xlane.xlu0 %665
    %v667 = vsel %vm368, %v661, -inf
    %668 = vmax.xlane.f32.xlu0 %v667
    %v669 = vpop.xlane.xlu0 %668
    %v670 = vsel %vm368, %v662, -inf
    %671 = vmax.xlane.f32.xlu0 %v670
    %v672 = vpop.xlane.xlu0 %671
    %v673 = vsel %vm368, %v663, -inf
    %674 = vmax.xlane.f32.xlu0 %v673
    %v675 = vpop.xlane.xlu0 %674
    %v676 = vsub.f32 %v660, %v666
    %v677 = vsub.f32 %v661, %v669
    %v678 = vsub.f32 %v662, %v672
    %v679 = vsub.f32 %v663, %v675
    %v680 = vmul.f32 %v676, 1.442695
    %v681 = vpow.pop %v680
    %v682 = vmul.f32 %v677, 1.442695
    %v683 = vpow.pop %v682
    %v684 = vmul.f32 %v678, 1.442695
    %v685 = vpow.pop %v684
    %v686 = vmul.f32 %v679, 1.442695
    %v687 = vpow.pop %v686
    %v688 = vsel %vm368, %v681, 0.0
    %689 = vadd.xlane.f32.xlu0 %v688
    %v690 = vpop.xlane.xlu0 %689
    %v691 = vsel %vm368, %v683, 0.0
    %692 = vadd.xlane.f32.xlu0 %v691
    %v693 = vpop.xlane.xlu0 %692
    %v694 = vsel %vm368, %v685, 0.0
    %695 = vadd.xlane.f32.xlu0 %v694
    %v696 = vpop.xlane.xlu0 %695
    %v697 = vsel %vm368, %v687, 0.0
    %698 = vadd.xlane.f32.xlu0 %v697
    %v699 = vpop.xlane.xlu0 %698
    %v700 = vrcp.pop %v690
    %v701 = vmul.f32 %v681, %v700
    %v702 = vrcp.pop %v693
    %v703 = vmul.f32 %v683, %v702
    %v704 = vrcp.pop %v696
    %v705 = vmul.f32 %v685, %v704
    %v706 = vrcp.pop %v699
    %v707 = vmul.f32 %v687, %v706
    %v708 = vpack.c.bf16 %v703, %v701
    %v709 = vpack.c.bf16 %v707, %v705
    %v710 = vmul.f32 %v701, %v334
    %v711 = vmul.f32 %v703, %v335
    %v712 = vmul.f32 %v705, %v336
    %v713 = vmul.f32 %v707, %v337
    %v714 = vsel %vm368, %v710, 0.0
    %715 = vadd.xlane.f32.xlu0 %v714
    %v716 = vpop.xlane.xlu0 %715
    %v717 = vsel %vm368, %v711, 0.0
    %718 = vadd.xlane.f32.xlu0 %v717
    %v719 = vpop.xlane.xlu0 %718
    %v720 = vsel %vm368, %v712, 0.0
    %721 = vadd.xlane.f32.xlu0 %v720
    %v722 = vpop.xlane.xlu0 %721
    %v723 = vsel %vm368, %v713, 0.0
    %724 = vadd.xlane.f32.xlu0 %v723
    %v725 = vpop.xlane.xlu0 %724
    %v726 = vlaneseq
    %v727 = vshrl.u32 %v726, 7
    %v728 = vsub.s32 0, %v727
    %v729 = vrot.slane %v320, %v728
    %v730 = vmul.f32 %v716, %v729
    %v731 = vmul.f32 %v719, %v729
    %v732 = vmul.f32 %v722, %v729
    %v733 = vmul.f32 %v725, %v729
    %v735 = vsel %vm368, %v708, 0
    %v738 = vsel %vm368, %v709, 0
    %740 = vmatprep.subr.bf16.mxu0 0
    %741 = vmatpush1.bf16.msra.mxu0 %v332
    %742 = vmatprep.subr.bf16.mxu0 0
    %743 = vmatpush1.bf16.msra.mxu0 %v333
    %744 = vmatprep.subr.bf16.mxu0 0
    %745 = vmatpush1.bf16.msra.mxu0 0
    %746 = vmatprep.subr.bf16.mxu0 0
    %747 = vmatpush1.bf16.msra.mxu0 0
    %748 = vmatprep.subr.bf16.mxu0 0
    %749 = vmatpush1.bf16.msra.mxu0 0
    %750 = vmatprep.subr.bf16.mxu0 0
    %751 = vmatpush1.bf16.msra.mxu0 0
    %752 = vmatprep.subr.bf16.mxu0 0
    %753 = vmatpush1.bf16.msra.mxu0 0
    %754 = vmatprep.subr.bf16.mxu0 0
    %755 = vmatpush1.bf16.msra.mxu0 0
    %756 = vmatprep.subr.bf16.mxu0 0
    %757 = vmatpush1.bf16.msra.mxu0 0
    %758 = vmatprep.subr.bf16.mxu0 0
    %759 = vmatpush1.bf16.msra.mxu0 0
    %760 = vmatprep.subr.bf16.mxu0 0
    %761 = vmatpush1.bf16.msra.mxu0 0
    %762 = vmatprep.subr.bf16.mxu0 0
    %763 = vmatpush1.bf16.msra.mxu0 0
    %764 = vmatprep.subr.bf16.mxu0 0
    %765 = vmatpush1.bf16.msra.mxu0 0
    %766 = vmatprep.subr.bf16.mxu0 0
    %767 = vmatpush1.bf16.msra.mxu0 0
    %768 = vmatprep.subr.bf16.mxu0 0
    %769 = vmatpush1.bf16.msra.mxu0 0
    %770 = vmatprep.subr.bf16.mxu0 0
    %771 = vmatpush1.bf16.msra.mxu0 0
    %772 = vmatprep.mubr.bf16.mxu0 0
    %773 = vmatmul.mubr.bf16.gmra.mrb[0].mxu0 %v735
    %v774 = vpop.f32.mrb[0].mxu0
    %v775 = vadd.f32 %v730, %v774
    %v776 = vpop.f32.mrb[0].mxu0
    %v777 = vpop.f32.mrb[0].mxu0
    %v778 = vadd.f32 %v731, %v777
    %v779 = vpop.f32.mrb[0].mxu0
    %780 = vmatprep.mubr.bf16.mxu0 0
    %781 = vmatmul.mubr.bf16.gmra.mrb[0].mxu0 %v738
    %v782 = vpop.f32.mrb[0].mxu0
    %v783 = vadd.f32 %v732, %v782
    %v784 = vpop.f32.mrb[0].mxu0
    %v785 = vpop.f32.mrb[0].mxu0
    %v786 = vadd.f32 %v733, %v785
    %v787 = vpop.f32.mrb[0].mxu0
    %788 = vdwg.mxu0
    %v789 = vmul.f32 %v701, %v429
    %v790 = vmul.f32 %v703, %v430
    %v791 = vmul.f32 %v705, %v431
    %v792 = vmul.f32 %v707, %v432
    %v793 = vsel %vm368, %v789, 0.0
    %794 = vadd.xlane.f32.xlu0 %v793
    %v795 = vpop.xlane.xlu0 %794
    %v796 = vsel %vm368, %v790, 0.0
    %797 = vadd.xlane.f32.xlu0 %v796
    %v798 = vpop.xlane.xlu0 %797
    %v799 = vsel %vm368, %v791, 0.0
    %800 = vadd.xlane.f32.xlu0 %v799
    %v801 = vpop.xlane.xlu0 %800
    %v802 = vsel %vm368, %v792, 0.0
    %803 = vadd.xlane.f32.xlu0 %v802
    %v804 = vpop.xlane.xlu0 %803
    %v805 = vlaneseq
    %v806 = vshrl.u32 %v805, 7
    %v807 = vsub.s32 1, %v806
    %v808 = vrot.slane %v320, %v807
    %v809 = vmul.f32 %v795, %v808
    %v810 = vmul.f32 %v798, %v808
    %v811 = vmul.f32 %v801, %v808
    %v812 = vmul.f32 %v804, %v808
    %v813 = vadd.f32 %v775, %v809
    %v814 = vadd.f32 %v778, %v810
    %v815 = vadd.f32 %v783, %v811
    %v816 = vadd.f32 %v786, %v812
    %v817 = vmul.f32 %v701, %v458
    %v818 = vmul.f32 %v703, %v459
    %v819 = vmul.f32 %v705, %v460
    %v820 = vmul.f32 %v707, %v461
    %v821 = vsel %vm368, %v817, 0.0
    %822 = vadd.xlane.f32.xlu0 %v821
    %v823 = vpop.xlane.xlu0 %822
    %v824 = vsel %vm368, %v818, 0.0
    %825 = vadd.xlane.f32.xlu0 %v824
    %v826 = vpop.xlane.xlu0 %825
    %v827 = vsel %vm368, %v819, 0.0
    %828 = vadd.xlane.f32.xlu0 %v827
    %v829 = vpop.xlane.xlu0 %828
    %v830 = vsel %vm368, %v820, 0.0
    %831 = vadd.xlane.f32.xlu0 %v830
    %v832 = vpop.xlane.xlu0 %831
    %v833 = vlaneseq
    %v834 = vshrl.u32 %v833, 7
    %v835 = vsub.s32 2, %v834
    %v836 = vrot.slane %v320, %v835
    %v837 = vmul.f32 %v823, %v836
    %v838 = vmul.f32 %v826, %v836
    %v839 = vmul.f32 %v829, %v836
    %v840 = vmul.f32 %v832, %v836
    %v841 = vadd.f32 %v813, %v837
    %v842 = vadd.f32 %v814, %v838
    %v843 = vadd.f32 %v815, %v839
    %v844 = vadd.f32 %v816, %v840
    %v845 = vmul.f32 %v701, %v487
    %v846 = vmul.f32 %v703, %v488
    %v847 = vmul.f32 %v705, %v489
    %v848 = vmul.f32 %v707, %v490
    %v849 = vsel %vm368, %v845, 0.0
    %850 = vadd.xlane.f32.xlu0 %v849
    %v851 = vpop.xlane.xlu0 %850
    %v852 = vsel %vm368, %v846, 0.0
    %853 = vadd.xlane.f32.xlu0 %v852
    %v854 = vpop.xlane.xlu0 %853
    %v855 = vsel %vm368, %v847, 0.0
    %856 = vadd.xlane.f32.xlu0 %v855
    %v857 = vpop.xlane.xlu0 %856
    %v858 = vsel %vm368, %v848, 0.0
    %859 = vadd.xlane.f32.xlu0 %v858
    %v860 = vpop.xlane.xlu0 %859
    %v861 = vlaneseq
    %v862 = vshrl.u32 %v861, 7
    %v863 = vsub.s32 3, %v862
    %v864 = vrot.slane %v320, %v863
    %v865 = vmul.f32 %v851, %v864
    %v866 = vmul.f32 %v854, %v864
    %v867 = vmul.f32 %v857, %v864
    %v868 = vmul.f32 %v860, %v864
    %v869 = vadd.f32 %v841, %v865
    %v870 = vadd.f32 %v842, %v866
    %v871 = vadd.f32 %v843, %v867
    %v872 = vadd.f32 %v844, %v868
    %v873 = vmul.f32 %v701, %v516
    %v874 = vmul.f32 %v703, %v517
    %v875 = vmul.f32 %v705, %v518
    %v876 = vmul.f32 %v707, %v519
    %v877 = vsel %vm368, %v873, 0.0
    %878 = vadd.xlane.f32.xlu0 %v877
    %v879 = vpop.xlane.xlu0 %878
    %v880 = vsel %vm368, %v874, 0.0
    %881 = vadd.xlane.f32.xlu0 %v880
    %v882 = vpop.xlane.xlu0 %881
    %v883 = vsel %vm368, %v875, 0.0
    %884 = vadd.xlane.f32.xlu0 %v883
    %v885 = vpop.xlane.xlu0 %884
    %v886 = vsel %vm368, %v876, 0.0
    %887 = vadd.xlane.f32.xlu0 %v886
    %v888 = vpop.xlane.xlu0 %887
    %v889 = vlaneseq
    %v890 = vshrl.u32 %v889, 7
    %v891 = vsub.s32 4, %v890
    %v892 = vrot.slane %v320, %v891
    %v893 = vmul.f32 %v879, %v892
    %v894 = vmul.f32 %v882, %v892
    %v895 = vmul.f32 %v885, %v892
    %v896 = vmul.f32 %v888, %v892
    %v897 = vadd.f32 %v869, %v893
    %v898 = vadd.f32 %v870, %v894
    %v899 = vadd.f32 %v871, %v895
    %v900 = vadd.f32 %v872, %v896
    %v901 = vmul.f32 %v701, %v545
    %v902 = vmul.f32 %v703, %v546
    %v903 = vmul.f32 %v705, %v547
    %v904 = vmul.f32 %v707, %v548
    %v905 = vsel %vm368, %v901, 0.0
    %906 = vadd.xlane.f32.xlu0 %v905
    %v907 = vpop.xlane.xlu0 %906
    %v908 = vsel %vm368, %v902, 0.0
    %909 = vadd.xlane.f32.xlu0 %v908
    %v910 = vpop.xlane.xlu0 %909
    %v911 = vsel %vm368, %v903, 0.0
    %912 = vadd.xlane.f32.xlu0 %v911
    %v913 = vpop.xlane.xlu0 %912
    %v914 = vsel %vm368, %v904, 0.0
    %915 = vadd.xlane.f32.xlu0 %v914
    %v916 = vpop.xlane.xlu0 %915
    %v917 = vlaneseq
    %v918 = vshrl.u32 %v917, 7
    %v919 = vsub.s32 5, %v918
    %v920 = vrot.slane %v320, %v919
    %v921 = vmul.f32 %v907, %v920
    %v922 = vmul.f32 %v910, %v920
    %v923 = vmul.f32 %v913, %v920
    %v924 = vmul.f32 %v916, %v920
    %v925 = vadd.f32 %v897, %v921
    %v926 = vadd.f32 %v898, %v922
    %v927 = vadd.f32 %v899, %v923
    %v928 = vadd.f32 %v900, %v924
    %v929 = vmul.f32 %v701, %v574
    %v930 = vmul.f32 %v703, %v575
    %v931 = vmul.f32 %v705, %v576
    %v932 = vmul.f32 %v707, %v577
    %v933 = vsel %vm368, %v929, 0.0
    %934 = vadd.xlane.f32.xlu0 %v933
    %v935 = vpop.xlane.xlu0 %934
    %v936 = vsel %vm368, %v930, 0.0
    %937 = vadd.xlane.f32.xlu0 %v936
    %v938 = vpop.xlane.xlu0 %937
    %v939 = vsel %vm368, %v931, 0.0
    %940 = vadd.xlane.f32.xlu0 %v939
    %v941 = vpop.xlane.xlu0 %940
    %v942 = vsel %vm368, %v932, 0.0
    %943 = vadd.xlane.f32.xlu0 %v942
    %v944 = vpop.xlane.xlu0 %943
    %v945 = vlaneseq
    %v946 = vshrl.u32 %v945, 7
    %v947 = vsub.s32 6, %v946
    %v948 = vrot.slane %v320, %v947
    %v949 = vmul.f32 %v935, %v948
    %v950 = vmul.f32 %v938, %v948
    %v951 = vmul.f32 %v941, %v948
    %v952 = vmul.f32 %v944, %v948
    %v953 = vadd.f32 %v925, %v949
    %v954 = vadd.f32 %v926, %v950
    %v955 = vadd.f32 %v927, %v951
    %v956 = vadd.f32 %v928, %v952
    %v957 = vmul.f32 %v701, %v603
    %v958 = vmul.f32 %v703, %v604
    %v959 = vmul.f32 %v705, %v605
    %v960 = vmul.f32 %v707, %v606
    %v961 = vsel %vm368, %v957, 0.0
    %962 = vadd.xlane.f32.xlu0 %v961
    %v963 = vpop.xlane.xlu0 %962
    %v964 = vsel %vm368, %v958, 0.0
    %965 = vadd.xlane.f32.xlu0 %v964
    %v966 = vpop.xlane.xlu0 %965
    %v967 = vsel %vm368, %v959, 0.0
    %968 = vadd.xlane.f32.xlu0 %v967
    %v969 = vpop.xlane.xlu0 %968
    %v970 = vsel %vm368, %v960, 0.0
    %971 = vadd.xlane.f32.xlu0 %v970
    %v972 = vpop.xlane.xlu0 %971
    %v973 = vlaneseq
    %v974 = vshrl.u32 %v973, 7
    %v975 = vsub.s32 7, %v974
    %v976 = vrot.slane %v320, %v975
    %v977 = vmul.f32 %v963, %v976
    %v978 = vmul.f32 %v966, %v976
    %v979 = vmul.f32 %v969, %v976
    %v980 = vmul.f32 %v972, %v976
    %v981 = vadd.f32 %v953, %v977
    %v982 = vadd.f32 %v954, %v978
    %v983 = vadd.f32 %v955, %v979
    %v984 = vadd.f32 %v956, %v980
    %v985 = vmul.f32 %v701, %v632
    %v986 = vmul.f32 %v703, %v633
    %v987 = vmul.f32 %v705, %v634
    %v988 = vmul.f32 %v707, %v635
    %v989 = vsel %vm368, %v985, 0.0
    %990 = vadd.xlane.f32.xlu0 %v989
    %v991 = vpop.xlane.xlu0 %990
    %v992 = vsel %vm368, %v986, 0.0
    %993 = vadd.xlane.f32.xlu0 %v992
    %v994 = vpop.xlane.xlu0 %993
    %v995 = vsel %vm368, %v987, 0.0
    %996 = vadd.xlane.f32.xlu0 %v995
    %v997 = vpop.xlane.xlu0 %996
    %v998 = vsel %vm368, %v988, 0.0
    %999 = vadd.xlane.f32.xlu0 %v998
    %v1000 = vpop.xlane.xlu0 %999
    %v1001 = vlaneseq
    %v1002 = vshrl.u32 %v1001, 7
    %v1003 = vsub.s32 0, %v1002
    %v1004 = vrot.slane %v321, %v1003
    %v1005 = vmul.f32 %v991, %v1004
    %v1006 = vmul.f32 %v994, %v1004
    %v1007 = vmul.f32 %v997, %v1004
    %v1008 = vmul.f32 %v1000, %v1004
    %v1009 = vadd.f32 %v981, %v1005
    %v1010 = vadd.f32 %v982, %v1006
    %v1011 = vadd.f32 %v983, %v1007
    %v1012 = vadd.f32 %v984, %v1008
    %1013 = vset.pattern.permute.xlu0 9
    %1014 = vperm.xlu0 %1013, %v306
    %v1015 = vpop.permute.xlu0 %1014
    %1017 = vset.pattern.permute.xlu0 9
    %1018 = vperm.xlu0 %1017, %v309
    %v1019 = vpop.permute.xlu0 %1018
    %1021 = vset.pattern.permute.xlu0 9
    %1022 = vperm.xlu0 %1021, %v314
    %v1023 = vpop.permute.xlu0 %1022
    %1025 = vset.pattern.permute.xlu0 9
    %1026 = vperm.xlu0 %1025, %v317
    %v1027 = vpop.permute.xlu0 %1026
    %v1029 = vmul.f32 %v1015, %v334
    %v1030 = vmul.f32 %v1019, %v335
    %v1031 = vmul.f32 %v1023, %v336
    %v1032 = vmul.f32 %v1027, %v337
    %1035 = vrot.lane.b32.xlu0 %v231, 96
    %v1036 = vpop.permute.xlu0 %1035
    %1037 = vrot.lane.b32.xlu0 %v232, 96
    %v1038 = vpop.permute.xlu0 %1037
    %1039 = vrot.lane.b32.xlu0 %v330, 32
    %v1040 = vpop.permute.xlu0 %1039
    %1041 = vrot.lane.b32.xlu0 %v331, 32
    %v1042 = vpop.permute.xlu0 %1041
    %v1044 = vsel %vm368, %v1036, 0
    %v1047 = vsel %vm368, %v1038, 0
    %v1050 = vsel %vm368, %v1040, 0
    %v1053 = vsel %vm368, %v1042, 0
    %1055 = vmatprep.subr.bf16.mxu0 0
    %1056 = vmatpush1.bf16.xpose.msra.mxu0 %v1050
    %1057 = vmatprep.subr.bf16.mxu0 0
    %1058 = vmatpush1.bf16.xpose.msra.mxu0 %v1053
    %1059 = vmatprep.subr.bf16.mxu0 0
    %1060 = vmatpush1.bf16.xpose.msra.mxu0 0
    %1061 = vmatprep.subr.bf16.mxu0 0
    %1062 = vmatpush1.bf16.xpose.msra.mxu0 0
    %1063 = vmatprep.subr.bf16.mxu0 0
    %1064 = vmatpush1.bf16.xpose.msra.mxu0 0
    %1065 = vmatprep.subr.bf16.mxu0 0
    %1066 = vmatpush1.bf16.xpose.msra.mxu0 0
    %1067 = vmatprep.subr.bf16.mxu0 0
    %1068 = vmatpush1.bf16.xpose.msra.mxu0 0
    %1069 = vmatprep.subr.bf16.mxu0 0
    %1070 = vmatpush1.bf16.xpose.msra.mxu0 0
    %1071 = vmatprep.subr.bf16.mxu0 0
    %1072 = vmatpush1.bf16.xpose.msra.mxu0 0
    %1073 = vmatprep.subr.bf16.mxu0 0
    %1074 = vmatpush1.bf16.xpose.msra.mxu0 0
    %1075 = vmatprep.subr.bf16.mxu0 0
    %1076 = vmatpush1.bf16.xpose.msra.mxu0 0
    %1077 = vmatprep.subr.bf16.mxu0 0
    %1078 = vmatpush1.bf16.xpose.msra.mxu0 0
    %1079 = vmatprep.subr.bf16.mxu0 0
    %1080 = vmatpush1.bf16.xpose.msra.mxu0 0
    %1081 = vmatprep.subr.bf16.mxu0 0
    %1082 = vmatpush1.bf16.xpose.msra.mxu0 0
    %1083 = vmatprep.subr.bf16.mxu0 0
    %1084 = vmatpush1.bf16.xpose.msra.mxu0 0
    %1085 = vmatprep.subr.bf16.mxu0 0
    %1086 = vmatpush1.bf16.xpose.msra.mxu0 0
    %1087 = vmatprep.mubr.bf16.mxu0 0
    %1088 = vmatmul.mubr.bf16.gmra.mrb[0].mxu0 %v1044
    %v1089 = vpop.f32.mrb[0].mxu0
    %v1090 = vadd.f32 %v1029, %v1089
    %v1091 = vpop.f32.mrb[0].mxu0
    %v1092 = vpop.f32.mrb[0].mxu0
    %v1093 = vadd.f32 %v1030, %v1092
    %v1094 = vpop.f32.mrb[0].mxu0
    %1095 = vmatprep.mubr.bf16.mxu0 0
    %1096 = vmatmul.mubr.bf16.gmra.mrb[0].mxu0 %v1047
    %v1097 = vpop.f32.mrb[0].mxu0
    %v1098 = vadd.f32 %v1031, %v1097
    %v1099 = vpop.f32.mrb[0].mxu0
    %v1100 = vpop.f32.mrb[0].mxu0
    %v1101 = vadd.f32 %v1032, %v1100
    %v1102 = vpop.f32.mrb[0].mxu0
    %1103 = vdwg.mxu0
    %1104 = vset.pattern.permute.xlu0 10
    %1105 = vperm.xlu0 %1104, %v306
    %v1106 = vpop.permute.xlu0 %1105
    %1108 = vset.pattern.permute.xlu0 10
    %1109 = vperm.xlu0 %1108, %v309
    %v1110 = vpop.permute.xlu0 %1109
    %1112 = vset.pattern.permute.xlu0 10
    %1113 = vperm.xlu0 %1112, %v314
    %v1114 = vpop.permute.xlu0 %1113
    %1116 = vset.pattern.permute.xlu0 10
    %1117 = vperm.xlu0 %1116, %v317
    %v1118 = vpop.permute.xlu0 %1117
    %v1120 = vmul.f32 %v1106, %v429
    %v1121 = vmul.f32 %v1110, %v430
    %v1122 = vmul.f32 %v1114, %v431
    %v1123 = vmul.f32 %v1118, %v432
    %v1124 = vadd.f32 %v1090, %v1120
    %v1125 = vadd.f32 %v1093, %v1121
    %v1126 = vadd.f32 %v1098, %v1122
    %v1127 = vadd.f32 %v1101, %v1123
    %1128 = vset.pattern.permute.xlu0 11
    %1129 = vperm.xlu0 %1128, %v306
    %v1130 = vpop.permute.xlu0 %1129
    %1132 = vset.pattern.permute.xlu0 11
    %1133 = vperm.xlu0 %1132, %v309
    %v1134 = vpop.permute.xlu0 %1133
    %1136 = vset.pattern.permute.xlu0 11
    %1137 = vperm.xlu0 %1136, %v314
    %v1138 = vpop.permute.xlu0 %1137
    %1140 = vset.pattern.permute.xlu0 11
    %1141 = vperm.xlu0 %1140, %v317
    %v1142 = vpop.permute.xlu0 %1141
    %v1144 = vmul.f32 %v1130, %v458
    %v1145 = vmul.f32 %v1134, %v459
    %v1146 = vmul.f32 %v1138, %v460
    %v1147 = vmul.f32 %v1142, %v461
    %v1148 = vadd.f32 %v1124, %v1144
    %v1149 = vadd.f32 %v1125, %v1145
    %v1150 = vadd.f32 %v1126, %v1146
    %v1151 = vadd.f32 %v1127, %v1147
    %1152 = vset.pattern.permute.xlu0 12
    %1153 = vperm.xlu0 %1152, %v306
    %v1154 = vpop.permute.xlu0 %1153
    %1156 = vset.pattern.permute.xlu0 12
    %1157 = vperm.xlu0 %1156, %v309
    %v1158 = vpop.permute.xlu0 %1157
    %1160 = vset.pattern.permute.xlu0 12
    %1161 = vperm.xlu0 %1160, %v314
    %v1162 = vpop.permute.xlu0 %1161
    %1164 = vset.pattern.permute.xlu0 12
    %1165 = vperm.xlu0 %1164, %v317
    %v1166 = vpop.permute.xlu0 %1165
    %v1168 = vmul.f32 %v1154, %v487
    %v1169 = vmul.f32 %v1158, %v488
    %v1170 = vmul.f32 %v1162, %v489
    %v1171 = vmul.f32 %v1166, %v490
    %v1172 = vadd.f32 %v1148, %v1168
    %v1173 = vadd.f32 %v1149, %v1169
    %v1174 = vadd.f32 %v1150, %v1170
    %v1175 = vadd.f32 %v1151, %v1171
    %1176 = vset.pattern.permute.xlu0 13
    %1177 = vperm.xlu0 %1176, %v306
    %v1178 = vpop.permute.xlu0 %1177
    %1180 = vset.pattern.permute.xlu0 13
    %1181 = vperm.xlu0 %1180, %v309
    %v1182 = vpop.permute.xlu0 %1181
    %1184 = vset.pattern.permute.xlu0 13
    %1185 = vperm.xlu0 %1184, %v314
    %v1186 = vpop.permute.xlu0 %1185
    %1188 = vset.pattern.permute.xlu0 13
    %1189 = vperm.xlu0 %1188, %v317
    %v1190 = vpop.permute.xlu0 %1189
    %v1192 = vmul.f32 %v1178, %v516
    %v1193 = vmul.f32 %v1182, %v517
    %v1194 = vmul.f32 %v1186, %v518
    %v1195 = vmul.f32 %v1190, %v519
    %v1196 = vadd.f32 %v1172, %v1192
    %v1197 = vadd.f32 %v1173, %v1193
    %v1198 = vadd.f32 %v1174, %v1194
    %v1199 = vadd.f32 %v1175, %v1195
    %1200 = vset.pattern.permute.xlu0 14
    %1201 = vperm.xlu0 %1200, %v306
    %v1202 = vpop.permute.xlu0 %1201
    %1204 = vset.pattern.permute.xlu0 14
    %1205 = vperm.xlu0 %1204, %v309
    %v1206 = vpop.permute.xlu0 %1205
    %1208 = vset.pattern.permute.xlu0 14
    %1209 = vperm.xlu0 %1208, %v314
    %v1210 = vpop.permute.xlu0 %1209
    %1212 = vset.pattern.permute.xlu0 14
    %1213 = vperm.xlu0 %1212, %v317
    %v1214 = vpop.permute.xlu0 %1213
    %v1216 = vmul.f32 %v1202, %v545
    %v1217 = vmul.f32 %v1206, %v546
    %v1218 = vmul.f32 %v1210, %v547
    %v1219 = vmul.f32 %v1214, %v548
    %v1220 = vadd.f32 %v1196, %v1216
    %v1221 = vadd.f32 %v1197, %v1217
    %v1222 = vadd.f32 %v1198, %v1218
    %v1223 = vadd.f32 %v1199, %v1219
    %1224 = vset.pattern.permute.xlu0 15
    %1225 = vperm.xlu0 %1224, %v306
    %v1226 = vpop.permute.xlu0 %1225
    %1228 = vset.pattern.permute.xlu0 15
    %1229 = vperm.xlu0 %1228, %v309
    %v1230 = vpop.permute.xlu0 %1229
    %1232 = vset.pattern.permute.xlu0 15
    %1233 = vperm.xlu0 %1232, %v314
    %v1234 = vpop.permute.xlu0 %1233
    %1236 = vset.pattern.permute.xlu0 15
    %1237 = vperm.xlu0 %1236, %v317
    %v1238 = vpop.permute.xlu0 %1237
    %v1240 = vmul.f32 %v1226, %v574
    %v1241 = vmul.f32 %v1230, %v575
    %v1242 = vmul.f32 %v1234, %v576
    %v1243 = vmul.f32 %v1238, %v577
    %v1244 = vadd.f32 %v1220, %v1240
    %v1245 = vadd.f32 %v1221, %v1241
    %v1246 = vadd.f32 %v1222, %v1242
    %v1247 = vadd.f32 %v1223, %v1243
    %1248 = vset.pattern.permute.xlu0 16
    %1249 = vperm.xlu0 %1248, %v306
    %v1250 = vpop.permute.xlu0 %1249
    %1252 = vset.pattern.permute.xlu0 16
    %1253 = vperm.xlu0 %1252, %v309
    %v1254 = vpop.permute.xlu0 %1253
    %1256 = vset.pattern.permute.xlu0 16
    %1257 = vperm.xlu0 %1256, %v314
    %v1258 = vpop.permute.xlu0 %1257
    %1260 = vset.pattern.permute.xlu0 16
    %1261 = vperm.xlu0 %1260, %v317
    %v1262 = vpop.permute.xlu0 %1261
    %v1264 = vmul.f32 %v1250, %v603
    %v1265 = vmul.f32 %v1254, %v604
    %v1266 = vmul.f32 %v1258, %v605
    %v1267 = vmul.f32 %v1262, %v606
    %v1268 = vadd.f32 %v1244, %v1264
    %v1269 = vadd.f32 %v1245, %v1265
    %v1270 = vadd.f32 %v1246, %v1266
    %v1271 = vadd.f32 %v1247, %v1267
    %1272 = vset.pattern.permute.xlu0 17
    %1273 = vperm.xlu0 %1272, %v306
    %v1274 = vpop.permute.xlu0 %1273
    %1276 = vset.pattern.permute.xlu0 17
    %1277 = vperm.xlu0 %1276, %v309
    %v1278 = vpop.permute.xlu0 %1277
    %1280 = vset.pattern.permute.xlu0 17
    %1281 = vperm.xlu0 %1280, %v314
    %v1282 = vpop.permute.xlu0 %1281
    %1284 = vset.pattern.permute.xlu0 17
    %1285 = vperm.xlu0 %1284, %v317
    %v1286 = vpop.permute.xlu0 %1285
    %v1288 = vmul.f32 %v1274, %v632
    %v1289 = vmul.f32 %v1278, %v633
    %v1290 = vmul.f32 %v1282, %v634
    %v1291 = vmul.f32 %v1286, %v635
    %v1292 = vadd.f32 %v1268, %v1288
    %v1293 = vadd.f32 %v1269, %v1289
    %v1294 = vadd.f32 %v1270, %v1290
    %v1295 = vadd.f32 %v1271, %v1291
    %v1296 = vsel %vm326, %v1292, -10000.0
    %v1297 = vsel %vm327, %v1293, -10000.0
    %v1298 = vsel %vm328, %v1294, -10000.0
    %v1299 = vsel %vm329, %v1295, -10000.0
    %v1300 = vsel %vm368, %v1296, -inf
    %1301 = vmax.xlane.f32.xlu0 %v1300
    %v1302 = vpop.xlane.xlu0 %1301
    %v1303 = vsel %vm368, %v1297, -inf
    %1304 = vmax.xlane.f32.xlu0 %v1303
    %v1305 = vpop.xlane.xlu0 %1304
    %v1306 = vsel %vm368, %v1298, -inf
    %1307 = vmax.xlane.f32.xlu0 %v1306
    %v1308 = vpop.xlane.xlu0 %1307
    %v1309 = vsel %vm368, %v1299, -inf
    %1310 = vmax.xlane.f32.xlu0 %v1309
    %v1311 = vpop.xlane.xlu0 %1310
    %v1312 = vsub.f32 %v1296, %v1302
    %v1313 = vsub.f32 %v1297, %v1305
    %v1314 = vsub.f32 %v1298, %v1308
    %v1315 = vsub.f32 %v1299, %v1311
    %v1316 = vmul.f32 %v1312, 1.442695
    %v1317 = vpow.pop %v1316
    %v1318 = vmul.f32 %v1313, 1.442695
    %v1319 = vpow.pop %v1318
    %v1320 = vmul.f32 %v1314, 1.442695
    %v1321 = vpow.pop %v1320
    %v1322 = vmul.f32 %v1315, 1.442695
    %v1323 = vpow.pop %v1322
    %v1324 = vsel %vm368, %v1317, 0.0
    %1325 = vadd.xlane.f32.xlu0 %v1324
    %v1326 = vpop.xlane.xlu0 %1325
    %v1327 = vsel %vm368, %v1319, 0.0
    %1328 = vadd.xlane.f32.xlu0 %v1327
    %v1329 = vpop.xlane.xlu0 %1328
    %v1330 = vsel %vm368, %v1321, 0.0
    %1331 = vadd.xlane.f32.xlu0 %v1330
    %v1332 = vpop.xlane.xlu0 %1331
    %v1333 = vsel %vm368, %v1323, 0.0
    %1334 = vadd.xlane.f32.xlu0 %v1333
    %v1335 = vpop.xlane.xlu0 %1334
    %v1336 = vrcp.pop %v1326
    %v1337 = vmul.f32 %v1317, %v1336
    %v1338 = vrcp.pop %v1329
    %v1339 = vmul.f32 %v1319, %v1338
    %v1340 = vrcp.pop %v1332
    %v1341 = vmul.f32 %v1321, %v1340
    %v1342 = vrcp.pop %v1335
    %v1343 = vmul.f32 %v1323, %v1342
    %v1344 = vpack.c.bf16 %v1339, %v1337
    %v1345 = vpack.c.bf16 %v1343, %v1341
    %v1346 = vmul.f32 %v1337, %v334
    %v1347 = vmul.f32 %v1339, %v335
    %v1348 = vmul.f32 %v1341, %v336
    %v1349 = vmul.f32 %v1343, %v337
    %v1350 = vsel %vm368, %v1346, 0.0
    %1351 = vadd.xlane.f32.xlu0 %v1350
    %v1352 = vpop.xlane.xlu0 %1351
    %v1353 = vsel %vm368, %v1347, 0.0
    %1354 = vadd.xlane.f32.xlu0 %v1353
    %v1355 = vpop.xlane.xlu0 %1354
    %v1356 = vsel %vm368, %v1348, 0.0
    %1357 = vadd.xlane.f32.xlu0 %v1356
    %v1358 = vpop.xlane.xlu0 %1357
    %v1359 = vsel %vm368, %v1349, 0.0
    %1360 = vadd.xlane.f32.xlu0 %v1359
    %v1361 = vpop.xlane.xlu0 %1360
    %v1362 = vmul.f32 %v1352, %v729
    %v1363 = vmul.f32 %v1355, %v729
    %v1364 = vmul.f32 %v1358, %v729
    %v1365 = vmul.f32 %v1361, %v729
    %1368 = vrot.lane.b32.xlu0 %v332, 96
    %v1369 = vpop.permute.xlu0 %1368
    %1370 = vrot.lane.b32.xlu0 %v333, 96
    %v1371 = vpop.permute.xlu0 %1370
    %v1375 = vsel %vm368, %v1344, 0
    %v1378 = vsel %vm368, %v1345, 0
    %1380 = vmatprep.subr.bf16.mxu0 0
    %1381 = vmatpush1.bf16.msra.mxu0 %v1369
    %1382 = vmatprep.subr.bf16.mxu0 0
    %1383 = vmatpush1.bf16.msra.mxu0 %v1371
    %1384 = vmatprep.subr.bf16.mxu0 0
    %1385 = vmatpush1.bf16.msra.mxu0 0
    %1386 = vmatprep.subr.bf16.mxu0 0
    %1387 = vmatpush1.bf16.msra.mxu0 0
    %1388 = vmatprep.subr.bf16.mxu0 0
    %1389 = vmatpush1.bf16.msra.mxu0 0
    %1390 = vmatprep.subr.bf16.mxu0 0
    %1391 = vmatpush1.bf16.msra.mxu0 0
    %1392 = vmatprep.subr.bf16.mxu0 0
    %1393 = vmatpush1.bf16.msra.mxu0 0
    %1394 = vmatprep.subr.bf16.mxu0 0
    %1395 = vmatpush1.bf16.msra.mxu0 0
    %1396 = vmatprep.subr.bf16.mxu0 0
    %1397 = vmatpush1.bf16.msra.mxu0 0
    %1398 = vmatprep.subr.bf16.mxu0 0
    %1399 = vmatpush1.bf16.msra.mxu0 0
    %1400 = vmatprep.subr.bf16.mxu0 0
    %1401 = vmatpush1.bf16.msra.mxu0 0
    %1402 = vmatprep.subr.bf16.mxu0 0
    %1403 = vmatpush1.bf16.msra.mxu0 0
    %1404 = vmatprep.subr.bf16.mxu0 0
    %1405 = vmatpush1.bf16.msra.mxu0 0
    %1406 = vmatprep.subr.bf16.mxu0 0
    %1407 = vmatpush1.bf16.msra.mxu0 0
    %1408 = vmatprep.subr.bf16.mxu0 0
    %1409 = vmatpush1.bf16.msra.mxu0 0
    %1410 = vmatprep.subr.bf16.mxu0 0
    %1411 = vmatpush1.bf16.msra.mxu0 0
    %1412 = vmatprep.mubr.bf16.mxu0 0
    %1413 = vmatmul.mubr.bf16.gmra.mrb[0].mxu0 %v1375
    %v1414 = vpop.f32.mrb[0].mxu0
    %v1415 = vadd.f32 %v1362, %v1414
    %v1416 = vpop.f32.mrb[0].mxu0
    %v1417 = vpop.f32.mrb[0].mxu0
    %v1418 = vadd.f32 %v1363, %v1417
    %v1419 = vpop.f32.mrb[0].mxu0
    %1420 = vmatprep.mubr.bf16.mxu0 0
    %1421 = vmatmul.mubr.bf16.gmra.mrb[0].mxu0 %v1378
    %v1422 = vpop.f32.mrb[0].mxu0
    %v1423 = vadd.f32 %v1364, %v1422
    %v1424 = vpop.f32.mrb[0].mxu0
    %v1425 = vpop.f32.mrb[0].mxu0
    %v1426 = vadd.f32 %v1365, %v1425
    %v1427 = vpop.f32.mrb[0].mxu0
    %1428 = vdwg.mxu0
    %v1429 = vmul.f32 %v1337, %v429
    %v1430 = vmul.f32 %v1339, %v430
    %v1431 = vmul.f32 %v1341, %v431
    %v1432 = vmul.f32 %v1343, %v432
    %v1433 = vsel %vm368, %v1429, 0.0
    %1434 = vadd.xlane.f32.xlu0 %v1433
    %v1435 = vpop.xlane.xlu0 %1434
    %v1436 = vsel %vm368, %v1430, 0.0
    %1437 = vadd.xlane.f32.xlu0 %v1436
    %v1438 = vpop.xlane.xlu0 %1437
    %v1439 = vsel %vm368, %v1431, 0.0
    %1440 = vadd.xlane.f32.xlu0 %v1439
    %v1441 = vpop.xlane.xlu0 %1440
    %v1442 = vsel %vm368, %v1432, 0.0
    %1443 = vadd.xlane.f32.xlu0 %v1442
    %v1444 = vpop.xlane.xlu0 %1443
    %v1445 = vmul.f32 %v1435, %v808
    %v1446 = vmul.f32 %v1438, %v808
    %v1447 = vmul.f32 %v1441, %v808
    %v1448 = vmul.f32 %v1444, %v808
    %v1449 = vadd.f32 %v1415, %v1445
    %v1450 = vadd.f32 %v1418, %v1446
    %v1451 = vadd.f32 %v1423, %v1447
    %v1452 = vadd.f32 %v1426, %v1448
    %v1453 = vmul.f32 %v1337, %v458
    %v1454 = vmul.f32 %v1339, %v459
    %v1455 = vmul.f32 %v1341, %v460
    %v1456 = vmul.f32 %v1343, %v461
    %v1457 = vsel %vm368, %v1453, 0.0
    %1458 = vadd.xlane.f32.xlu0 %v1457
    %v1459 = vpop.xlane.xlu0 %1458
    %v1460 = vsel %vm368, %v1454, 0.0
    %1461 = vadd.xlane.f32.xlu0 %v1460
    %v1462 = vpop.xlane.xlu0 %1461
    %v1463 = vsel %vm368, %v1455, 0.0
    %1464 = vadd.xlane.f32.xlu0 %v1463
    %v1465 = vpop.xlane.xlu0 %1464
    %v1466 = vsel %vm368, %v1456, 0.0
    %1467 = vadd.xlane.f32.xlu0 %v1466
    %v1468 = vpop.xlane.xlu0 %1467
    %v1469 = vmul.f32 %v1459, %v836
    %v1470 = vmul.f32 %v1462, %v836
    %v1471 = vmul.f32 %v1465, %v836
    %v1472 = vmul.f32 %v1468, %v836
    %v1473 = vadd.f32 %v1449, %v1469
    %v1474 = vadd.f32 %v1450, %v1470
    %v1475 = vadd.f32 %v1451, %v1471
    %v1476 = vadd.f32 %v1452, %v1472
    %v1477 = vmul.f32 %v1337, %v487
    %v1478 = vmul.f32 %v1339, %v488
    %v1479 = vmul.f32 %v1341, %v489
    %v1480 = vmul.f32 %v1343, %v490
    %v1481 = vsel %vm368, %v1477, 0.0
    %1482 = vadd.xlane.f32.xlu0 %v1481
    %v1483 = vpop.xlane.xlu0 %1482
    %v1484 = vsel %vm368, %v1478, 0.0
    %1485 = vadd.xlane.f32.xlu0 %v1484
    %v1486 = vpop.xlane.xlu0 %1485
    %v1487 = vsel %vm368, %v1479, 0.0
    %1488 = vadd.xlane.f32.xlu0 %v1487
    %v1489 = vpop.xlane.xlu0 %1488
    %v1490 = vsel %vm368, %v1480, 0.0
    %1491 = vadd.xlane.f32.xlu0 %v1490
    %v1492 = vpop.xlane.xlu0 %1491
    %v1493 = vmul.f32 %v1483, %v864
    %v1494 = vmul.f32 %v1486, %v864
    %v1495 = vmul.f32 %v1489, %v864
    %v1496 = vmul.f32 %v1492, %v864
    %v1497 = vadd.f32 %v1473, %v1493
    %v1498 = vadd.f32 %v1474, %v1494
    %v1499 = vadd.f32 %v1475, %v1495
    %v1500 = vadd.f32 %v1476, %v1496
    %v1501 = vmul.f32 %v1337, %v516
    %v1502 = vmul.f32 %v1339, %v517
    %v1503 = vmul.f32 %v1341, %v518
    %v1504 = vmul.f32 %v1343, %v519
    %v1505 = vsel %vm368, %v1501, 0.0
    %1506 = vadd.xlane.f32.xlu0 %v1505
    %v1507 = vpop.xlane.xlu0 %1506
    %v1508 = vsel %vm368, %v1502, 0.0
    %1509 = vadd.xlane.f32.xlu0 %v1508
    %v1510 = vpop.xlane.xlu0 %1509
    %v1511 = vsel %vm368, %v1503, 0.0
    %1512 = vadd.xlane.f32.xlu0 %v1511
    %v1513 = vpop.xlane.xlu0 %1512
    %v1514 = vsel %vm368, %v1504, 0.0
    %1515 = vadd.xlane.f32.xlu0 %v1514
    %v1516 = vpop.xlane.xlu0 %1515
    %v1517 = vmul.f32 %v1507, %v892
    %v1518 = vmul.f32 %v1510, %v892
    %v1519 = vmul.f32 %v1513, %v892
    %v1520 = vmul.f32 %v1516, %v892
    %v1521 = vadd.f32 %v1497, %v1517
    %v1522 = vadd.f32 %v1498, %v1518
    %v1523 = vadd.f32 %v1499, %v1519
    %v1524 = vadd.f32 %v1500, %v1520
    %v1525 = vmul.f32 %v1337, %v545
    %v1526 = vmul.f32 %v1339, %v546
    %v1527 = vmul.f32 %v1341, %v547
    %v1528 = vmul.f32 %v1343, %v548
    %v1529 = vsel %vm368, %v1525, 0.0
    %1530 = vadd.xlane.f32.xlu0 %v1529
    %v1531 = vpop.xlane.xlu0 %1530
    %v1532 = vsel %vm368, %v1526, 0.0
    %1533 = vadd.xlane.f32.xlu0 %v1532
    %v1534 = vpop.xlane.xlu0 %1533
    %v1535 = vsel %vm368, %v1527, 0.0
    %1536 = vadd.xlane.f32.xlu0 %v1535
    %v1537 = vpop.xlane.xlu0 %1536
    %v1538 = vsel %vm368, %v1528, 0.0
    %1539 = vadd.xlane.f32.xlu0 %v1538
    %v1540 = vpop.xlane.xlu0 %1539
    %v1541 = vmul.f32 %v1531, %v920
    %v1542 = vmul.f32 %v1534, %v920
    %v1543 = vmul.f32 %v1537, %v920
    %v1544 = vmul.f32 %v1540, %v920
    %v1545 = vadd.f32 %v1521, %v1541
    %v1546 = vadd.f32 %v1522, %v1542
    %v1547 = vadd.f32 %v1523, %v1543
    %v1548 = vadd.f32 %v1524, %v1544
    %v1549 = vmul.f32 %v1337, %v574
    %v1550 = vmul.f32 %v1339, %v575
    %v1551 = vmul.f32 %v1341, %v576
    %v1552 = vmul.f32 %v1343, %v577
    %v1553 = vsel %vm368, %v1549, 0.0
    %1554 = vadd.xlane.f32.xlu0 %v1553
    %v1555 = vpop.xlane.xlu0 %1554
    %v1556 = vsel %vm368, %v1550, 0.0
    %1557 = vadd.xlane.f32.xlu0 %v1556
    %v1558 = vpop.xlane.xlu0 %1557
    %v1559 = vsel %vm368, %v1551, 0.0
    %1560 = vadd.xlane.f32.xlu0 %v1559
    %v1561 = vpop.xlane.xlu0 %1560
    %v1562 = vsel %vm368, %v1552, 0.0
    %1563 = vadd.xlane.f32.xlu0 %v1562
    %v1564 = vpop.xlane.xlu0 %1563
    %v1565 = vmul.f32 %v1555, %v948
    %v1566 = vmul.f32 %v1558, %v948
    %v1567 = vmul.f32 %v1561, %v948
    %v1568 = vmul.f32 %v1564, %v948
    %v1569 = vadd.f32 %v1545, %v1565
    %v1570 = vadd.f32 %v1546, %v1566
    %v1571 = vadd.f32 %v1547, %v1567
    %v1572 = vadd.f32 %v1548, %v1568
    %v1573 = vmul.f32 %v1337, %v603
    %v1574 = vmul.f32 %v1339, %v604
    %v1575 = vmul.f32 %v1341, %v605
    %v1576 = vmul.f32 %v1343, %v606
    %v1577 = vsel %vm368, %v1573, 0.0
    %1578 = vadd.xlane.f32.xlu0 %v1577
    %v1579 = vpop.xlane.xlu0 %1578
    %v1580 = vsel %vm368, %v1574, 0.0
    %1581 = vadd.xlane.f32.xlu0 %v1580
    %v1582 = vpop.xlane.xlu0 %1581
    %v1583 = vsel %vm368, %v1575, 0.0
    %1584 = vadd.xlane.f32.xlu0 %v1583
    %v1585 = vpop.xlane.xlu0 %1584
    %v1586 = vsel %vm368, %v1576, 0.0
    %1587 = vadd.xlane.f32.xlu0 %v1586
    %v1588 = vpop.xlane.xlu0 %1587
    %v1589 = vmul.f32 %v1579, %v976
    %v1590 = vmul.f32 %v1582, %v976
    %v1591 = vmul.f32 %v1585, %v976
    %v1592 = vmul.f32 %v1588, %v976
    %v1593 = vadd.f32 %v1569, %v1589
    %v1594 = vadd.f32 %v1570, %v1590
    %v1595 = vadd.f32 %v1571, %v1591
    %v1596 = vadd.f32 %v1572, %v1592
    %v1597 = vmul.f32 %v1337, %v632
    %v1598 = vmul.f32 %v1339, %v633
    %v1599 = vmul.f32 %v1341, %v634
    %v1600 = vmul.f32 %v1343, %v635
    %v1601 = vsel %vm368, %v1597, 0.0
    %1602 = vadd.xlane.f32.xlu0 %v1601
    %v1603 = vpop.xlane.xlu0 %1602
    %v1604 = vsel %vm368, %v1598, 0.0
    %1605 = vadd.xlane.f32.xlu0 %v1604
    %v1606 = vpop.xlane.xlu0 %1605
    %v1607 = vsel %vm368, %v1599, 0.0
    %1608 = vadd.xlane.f32.xlu0 %v1607
    %v1609 = vpop.xlane.xlu0 %1608
    %v1610 = vsel %vm368, %v1600, 0.0
    %1611 = vadd.xlane.f32.xlu0 %v1610
    %v1612 = vpop.xlane.xlu0 %1611
    %v1613 = vmul.f32 %v1603, %v1004
    %v1614 = vmul.f32 %v1606, %v1004
    %v1615 = vmul.f32 %v1609, %v1004
    %v1616 = vmul.f32 %v1612, %v1004
    %v1617 = vadd.f32 %v1593, %v1613
    %v1618 = vadd.f32 %v1594, %v1614
    %v1619 = vadd.f32 %v1595, %v1615
    %v1620 = vadd.f32 %v1596, %v1616
    %1625 = vrot.lane.b32.xlu0 %v1617, 32
    %v1626 = vpop.permute.xlu0 %1625
    %1627 = vrot.lane.b32.xlu0 %v1618, 32
    %v1628 = vpop.permute.xlu0 %1627
    %1629 = vrot.lane.b32.xlu0 %v1619, 32
    %v1630 = vpop.permute.xlu0 %1629
    %1631 = vrot.lane.b32.xlu0 %v1620, 32
    %v1632 = vpop.permute.xlu0 %1631
    %v1637 = vsel %vm368, %v1009, %v1626
    %v1638 = vsel %vm368, %v1010, %v1628
    %v1639 = vsel %vm368, %v1011, %v1630
    %v1640 = vsel %vm368, %v1012, %v1632
    %v1641 = vpack.c.bf16 %v1638, %v1637
    %v1642 = vpack.c.bf16 %v1640, %v1639
    %v1643 = vld [vmem:[%s7] sm:$0xf]
    %v1644 = vld [vmem:[%s7 + $0x4] sm:$0xf]
    %v1645 = vld [vmem:[%s7 + $0x8] sm:$0xf]
    %v1646 = vld [vmem:[%s7 + $0xc] sm:$0xf]
    %v1647 = vld [vmem:[%s7 + $0x10] sm:$0xf]
    %v1648 = vld [vmem:[%s7 + $0x14] sm:$0xf]
    %v1649 = vld [vmem:[%s7 + $0x18] sm:$0xf]
    %v1650 = vld [vmem:[%s7 + $0x1c] sm:$0xf]
    %v1651 = vld [vmem:[%s8] sm:$0x1]
    %v1653 = vlaneseq
    %v1654 = vshrl.u32 %v1653, 7
    %v1655 = vsub.s32 0, %v1654
    %v1656 = vrot.slane %v1651, %v1655
    %v1666 = vunpack.c.l.b16 %v1643
    %v1667 = vunpack.c.l.b16 %v1644
    %v1668 = vunpack.c.l.b16 %v1645
    %v1669 = vunpack.c.l.b16 %v1646
    %v1670 = vunpack.c.l.b16 %v1647
    %v1671 = vunpack.c.l.b16 %v1648
    %v1672 = vunpack.c.l.b16 %v1649
    %v1673 = vunpack.c.l.b16 %v1650
    %v1674 = vpack.c.b16 %v1667, %v1666
    %v1675 = vpack.c.b16 %v1669, %v1668
    %v1676 = vpack.c.b16 %v1671, %v1670
    %v1677 = vpack.c.b16 %v1673, %v1672
    %v1683 = vsel %vm167, %v1641, 0
    %v1686 = vsel %vm167, %v1642, 0
    %1688 = vmatprep.subr.bf16.mxu0 0
    %1689 = vmatpush1.bf16.msra.mxu0 %v1674
    %1690 = vmatprep.subr.bf16.mxu0 0
    %1691 = vmatpush1.bf16.msra.mxu0 %v1675
    %1692 = vmatprep.subr.bf16.mxu0 0
    %1693 = vmatpush1.bf16.msra.mxu0 %v1676
    %1694 = vmatprep.subr.bf16.mxu0 0
    %1695 = vmatpush1.bf16.msra.mxu0 %v1677
    %1696 = vmatprep.subr.bf16.mxu0 0
    %1697 = vmatpush1.bf16.msra.mxu0 0
    %1698 = vmatprep.subr.bf16.mxu0 0
    %1699 = vmatpush1.bf16.msra.mxu0 0
    %1700 = vmatprep.subr.bf16.mxu0 0
    %1701 = vmatpush1.bf16.msra.mxu0 0
    %1702 = vmatprep.subr.bf16.mxu0 0
    %1703 = vmatpush1.bf16.msra.mxu0 0
    %1704 = vmatprep.subr.bf16.mxu0 0
    %1705 = vmatpush1.bf16.msra.mxu0 0
    %1706 = vmatprep.subr.bf16.mxu0 0
    %1707 = vmatpush1.bf16.msra.mxu0 0
    %1708 = vmatprep.subr.bf16.mxu0 0
    %1709 = vmatpush1.bf16.msra.mxu0 0
    %1710 = vmatprep.subr.bf16.mxu0 0
    %1711 = vmatpush1.bf16.msra.mxu0 0
    %1712 = vmatprep.subr.bf16.mxu0 0
    %1713 = vmatpush1.bf16.msra.mxu0 0
    %1714 = vmatprep.subr.bf16.mxu0 0
    %1715 = vmatpush1.bf16.msra.mxu0 0
    %1716 = vmatprep.subr.bf16.mxu0 0
    %1717 = vmatpush1.bf16.msra.mxu0 0
    %1718 = vmatprep.subr.bf16.mxu0 0
    %1719 = vmatpush1.bf16.msra.mxu0 0
    %1720 = vmatprep.mubr.bf16.mxu0 0
    %1721 = vmatmul.mubr.bf16.gmra.mrb[0].mxu0 %v1683
    %v1722 = vpop.f32.mrb[0].mxu0
    %v1723 = vadd.f32 %v1656, %v1722
    %v1724 = vpop.f32.mrb[0].mxu0
    %v1725 = vpop.f32.mrb[0].mxu0
    %v1726 = vadd.f32 %v1656, %v1725
    %v1727 = vpop.f32.mrb[0].mxu0
    %1728 = vmatprep.mubr.bf16.mxu0 0
    %1729 = vmatmul.mubr.bf16.gmra.mrb[0].mxu0 %v1686
    %v1730 = vpop.f32.mrb[0].mxu0
    %v1731 = vadd.f32 %v1656, %v1730
    %v1732 = vpop.f32.mrb[0].mxu0
    %v1733 = vpop.f32.mrb[0].mxu0
    %v1734 = vadd.f32 %v1656, %v1733
    %v1735 = vpop.f32.mrb[0].mxu0
    %1736 = vdwg.mxu0
    %v1737 = vadd.f32 %v101, %v1723
    %v1738 = vadd.f32 %v102, %v1726
    %v1739 = vadd.f32 %v103, %v1731
    %v1740 = vadd.f32 %v104, %v1734
    %v1741 = vld [vmem:[%s11] sm:$0x1]
    %v1742 = vld [vmem:[%s12] sm:$0x1]
    %v1743 = vsel %vm167, %v1737, 0.0
    %1744 = vadd.xlane.f32.xlu0 %v1743
    %v1745 = vpop.xlane.xlu0 %1744
    %v1746 = vsel %vm167, %v1738, 0.0
    %1747 = vadd.xlane.f32.xlu0 %v1746
    %v1748 = vpop.xlane.xlu0 %1747
    %v1749 = vsel %vm167, %v1739, 0.0
    %1750 = vadd.xlane.f32.xlu0 %v1749
    %v1751 = vpop.xlane.xlu0 %1750
    %v1752 = vsel %vm167, %v1740, 0.0
    %1753 = vadd.xlane.f32.xlu0 %v1752
    %v1754 = vpop.xlane.xlu0 %1753
    %v1755 = vrcp.pop 64.0
    %v1756 = vmul.f32 %v1745, %v1755
    %v1757 = vmul.f32 %v1748, %v1755
    %v1758 = vmul.f32 %v1751, %v1755
    %v1759 = vmul.f32 %v1754, %v1755
    %v1760 = vsub.f32 %v1737, %v1756
    %v1761 = vsub.f32 %v1738, %v1757
    %v1762 = vsub.f32 %v1739, %v1758
    %v1763 = vsub.f32 %v1740, %v1759
    %v1764 = vmul.f32 %v1760, %v1760
    %v1765 = vmul.f32 %v1761, %v1761
    %v1766 = vmul.f32 %v1762, %v1762
    %v1767 = vmul.f32 %v1763, %v1763
    %v1768 = vsel %vm167, %v1764, 0.0
    %1769 = vadd.xlane.f32.xlu0 %v1768
    %v1770 = vpop.xlane.xlu0 %1769
    %v1771 = vsel %vm167, %v1765, 0.0
    %1772 = vadd.xlane.f32.xlu0 %v1771
    %v1773 = vpop.xlane.xlu0 %1772
    %v1774 = vsel %vm167, %v1766, 0.0
    %1775 = vadd.xlane.f32.xlu0 %v1774
    %v1776 = vpop.xlane.xlu0 %1775
    %v1777 = vsel %vm167, %v1767, 0.0
    %1778 = vadd.xlane.f32.xlu0 %v1777
    %v1779 = vpop.xlane.xlu0 %1778
    %v1780 = vmul.f32 %v1770, %v1755
    %v1781 = vmul.f32 %v1773, %v1755
    %v1782 = vmul.f32 %v1776, %v1755
    %v1783 = vmul.f32 %v1779, %v1755
    %v1784 = vadd.f32 %v1780, 1e-05
    %v1785 = vadd.f32 %v1781, 1e-05
    %v1786 = vadd.f32 %v1782, 1e-05
    %v1787 = vadd.f32 %v1783, 1e-05
    %v1788 = vrsqrt.pop %v1784
    %v1789 = vrsqrt.pop %v1785
    %v1790 = vrsqrt.pop %v1786
    %v1791 = vrsqrt.pop %v1787
    %v1792 = vmul.f32 %v1760, %v1788
    %v1793 = vmul.f32 %v1761, %v1789
    %v1794 = vmul.f32 %v1762, %v1790
    %v1795 = vmul.f32 %v1763, %v1791
    %v1797 = vlaneseq
    %v1798 = vshrl.u32 %v1797, 7
    %v1799 = vsub.s32 0, %v1798
    %v1800 = vrot.slane %v1741, %v1799
    %v1802 = vmul.f32 %v1792, %v1800
    %v1803 = vmul.f32 %v1793, %v1800
    %v1804 = vmul.f32 %v1794, %v1800
    %v1805 = vmul.f32 %v1795, %v1800
    %v1807 = vlaneseq
    %v1808 = vshrl.u32 %v1807, 7
    %v1809 = vsub.s32 0, %v1808
    %v1810 = vrot.slane %v1742, %v1809
    %v1812 = vadd.f32 %v1802, %v1810
    %v1813 = vadd.f32 %v1803, %v1810
    %v1814 = vadd.f32 %v1804, %v1810
    %v1815 = vadd.f32 %v1805, %v1810
    %v1816 = vmul.f32 %v1812, %v84
    %v1817 = vmul.f32 %v1813, %v89
    %v1818 = vmul.f32 %v1814, %v94
    %v1819 = vmul.f32 %v1815, %v99
    %vm1824 = vcmask 1040384
    %v1825 = vrot.slane %v1816, 7
    %v1826 = vrot.slane %v1817, 7
    %v1827 = vsel %vm1824, %v1825, %v1826
    %v1828 = vrot.slane %v1818, 7
    %v1829 = vsel %vm1824, %v1826, %v1828
    %v1830 = vrot.slane %v1819, 7
    %v1831 = vsel %vm1824, %v1828, %v1830
    %v1837 = vsel %vm1824, 0.0, %v1825
    %v1838 = vsel %vm1824, %v1830, 0.0
    %1840 = vset.pattern.permute.xlu0 0
    %1841 = vperm.xlu0 %1840, %v72
    %v1842 = vpop.permute.xlu0 %1841
    %1845 = vset.pattern.permute.xlu0 0
    %1846 = vperm.xlu0 %1845, %v73
    %v1847 = vpop.permute.xlu0 %1846
    %1850 = vset.pattern.permute.xlu0 0
    %1851 = vperm.xlu0 %1850, %v74
    %v1852 = vpop.permute.xlu0 %1851
    %1855 = vset.pattern.permute.xlu0 0
    %1856 = vperm.xlu0 %1855, %v75
    %v1857 = vpop.permute.xlu0 %1856
    %v1859 = vmul.f32 %v1837, %v1842
    %v1860 = vmul.f32 %v1827, %v1847
    %v1861 = vmul.f32 %v1829, %v1852
    %v1862 = vmul.f32 %v1831, %v1857
    %1864 = vset.pattern.permute.xlu0 0
    %1865 = vperm.xlu0 %1864, %v77
    %v1866 = vpop.permute.xlu0 %1865
    %1868 = vset.pattern.permute.xlu0 0
    %1869 = vperm.xlu0 %1868, %v78
    %v1870 = vpop.permute.xlu0 %1869
    %1872 = vset.pattern.permute.xlu0 0
    %1873 = vperm.xlu0 %1872, %v79
    %v1874 = vpop.permute.xlu0 %1873
    %1876 = vset.pattern.permute.xlu0 0
    %1877 = vperm.xlu0 %1876, %v80
    %v1878 = vpop.permute.xlu0 %1877
    %vm1879 = vcmask 1041408
    %v1880 = vrot.slane %v1866, 6
    %v1881 = vrot.slane %v1870, 6
    %v1882 = vsel %vm1879, %v1880, %v1881
    %v1883 = vrot.slane %v1874, 6
    %v1884 = vsel %vm1879, %v1881, %v1883
    %v1885 = vrot.slane %v1878, 6
    %v1886 = vsel %vm1879, %v1883, %v1885
    %v1892 = vmul.f32 %v1837, %v1880
    %v1893 = vmul.f32 %v1827, %v1882
    %v1894 = vmul.f32 %v1829, %v1884
    %v1895 = vmul.f32 %v1831, %v1886
    %v1896 = vmul.f32 %v1838, %v1885
    %1897 = vrot.lane.b32.xlu0 %v1816, 64
    %v1898 = vpop.permute.xlu0 %1897
    %1899 = vrot.lane.b32.xlu0 %v1817, 64
    %v1900 = vpop.permute.xlu0 %1899
    %1901 = vrot.lane.b32.xlu0 %v1818, 64
    %v1902 = vpop.permute.xlu0 %1901
    %1903 = vrot.lane.b32.xlu0 %v1819, 64
    %v1904 = vpop.permute.xlu0 %1903
    %vm1914 = vcmask 1045504
    %v1915 = vrot.slane %v1892, 2
    %v1916 = vrot.slane %v1893, 2
    %v1917 = vsel %vm1914, %v1915, %v1916
    %v1918 = vrot.slane %v1894, 2
    %v1919 = vsel %vm1914, %v1916, %v1918
    %v1920 = vrot.slane %v1895, 2
    %v1921 = vsel %vm1914, %v1918, %v1920
    %v1922 = vrot.slane %v1896, 2
    %v1923 = vsel %vm1914, %v1920, %v1922
    %v1928 = vsel %vm167, %v1859, %v1898
    %v1929 = vsel %vm167, %v1860, %v1900
    %v1930 = vsel %vm167, %v1861, %v1902
    %v1931 = vsel %vm167, %v1862, %v1904
    %v1932 = vpack.c.bf16 %v1929, %v1928
    %v1933 = vpack.c.bf16 %v1919, %v1917
    %v1934 = vpack.c.bf16 %v1931, %v1930
    %v1935 = vpack.c.bf16 %v1923, %v1921
    %v1936 = vld [vmem:[%s13] sm:$0xf]
    %v1937 = vld [vmem:[%s13 + $0x4] sm:$0xf]
    %v1938 = vld [vmem:[%s13 + $0x8] sm:$0xf]
    %v1939 = vld [vmem:[%s13 + $0xc] sm:$0xf]
    %v1940 = vld [vmem:[%s13 + $0x10] sm:$0xf]
    %v1941 = vld [vmem:[%s13 + $0x14] sm:$0xf]
    %v1942 = vld [vmem:[%s13 + $0x18] sm:$0xf]
    %v1943 = vld [vmem:[%s13 + $0x1c] sm:$0xf]
    %v1944 = vld [vmem:[%s13 + $0x20] sm:$0xf]
    %v1945 = vld [vmem:[%s13 + $0x24] sm:$0xf]
    %v1946 = vld [vmem:[%s13 + $0x28] sm:$0xf]
    %v1947 = vld [vmem:[%s13 + $0x2c] sm:$0xf]
    %v1948 = vld [vmem:[%s13 + $0x30] sm:$0xf]
    %v1949 = vld [vmem:[%s13 + $0x34] sm:$0xf]
    %v1950 = vld [vmem:[%s13 + $0x38] sm:$0xf]
    %v1951 = vld [vmem:[%s13 + $0x3c] sm:$0xf]
    %v1952 = vld [vmem:[%s13 + $0x40] sm:$0xf]
    %v1953 = vld [vmem:[%s13 + $0x44] sm:$0xf]
    %v1954 = vld [vmem:[%s13 + $0x48] sm:$0xf]
    %v1955 = vld [vmem:[%s13 + $0x4c] sm:$0xf]
    %v1956 = vld [vmem:[%s13 + $0x50] sm:$0xf]
    %v1957 = vld [vmem:[%s13 + $0x54] sm:$0xf]
    %v1958 = vld [vmem:[%s13 + $0x58] sm:$0xf]
    %v1959 = vld [vmem:[%s13 + $0x5c] sm:$0xf]
    %v1960 = vld [vmem:[%s14] sm:$0x1]
    %v1962 = vlaneseq
    %v1963 = vshrl.u32 %v1962, 7
    %v1964 = vsub.s32 0, %v1963
    %v1965 = vrot.slane %v1960, %v1964
    %v1991 = vunpack.c.l.b16 %v1936
    %v1992 = vunpack.c.l.b16 %v1937
    %v1993 = vunpack.c.l.b16 %v1938
    %v1994 = vunpack.c.l.b16 %v1939
    %v1995 = vunpack.c.l.b16 %v1940
    %v1996 = vunpack.c.l.b16 %v1941
    %v1997 = vunpack.c.l.b16 %v1942
    %v1998 = vunpack.c.l.b16 %v1943
    %v1999 = vunpack.c.l.b16 %v1944
    %v2000 = vunpack.c.l.b16 %v1945
    %v2001 = vunpack.c.l.b16 %v1946
    %v2002 = vunpack.c.l.b16 %v1947
    %v2003 = vunpack.c.l.b16 %v1948
    %v2004 = vunpack.c.l.b16 %v1949
    %v2005 = vunpack.c.l.b16 %v1950
    %v2006 = vunpack.c.l.b16 %v1951
    %v2007 = vunpack.c.l.b16 %v1952
    %v2008 = vunpack.c.l.b16 %v1953
    %v2009 = vunpack.c.l.b16 %v1954
    %v2010 = vunpack.c.l.b16 %v1955
    %v2011 = vunpack.c.l.b16 %v1956
    %v2012 = vunpack.c.l.b16 %v1957
    %v2013 = vunpack.c.l.b16 %v1958
    %v2014 = vunpack.c.l.b16 %v1959
    %v2015 = vpack.c.b16 %v1992, %v1991
    %v2016 = vpack.c.b16 %v1994, %v1993
    %v2017 = vpack.c.b16 %v1996, %v1995
    %v2018 = vpack.c.b16 %v1998, %v1997
    %v2019 = vpack.c.b16 %v2000, %v1999
    %v2020 = vpack.c.b16 %v2002, %v2001
    %v2021 = vpack.c.b16 %v2004, %v2003
    %v2022 = vpack.c.b16 %v2006, %v2005
    %v2023 = vpack.c.b16 %v2008, %v2007
    %v2024 = vpack.c.b16 %v2010, %v2009
    %v2025 = vpack.c.b16 %v2012, %v2011
    %v2026 = vpack.c.b16 %v2014, %v2013
    %v2040 = vsel %vm167, %v1933, 0
    %v2043 = vsel %vm167, %v1935, 0
    %2045 = vmatprep.subr.bf16.mxu0 0
    %2046 = vmatpush1.bf16.msra.mxu0 %v2015
    %2047 = vmatprep.subr.bf16.mxu0 0
    %2048 = vmatpush1.bf16.msra.mxu0 %v2016
    %2049 = vmatprep.subr.bf16.mxu0 0
    %2050 = vmatpush1.bf16.msra.mxu0 %v2017
    %2051 = vmatprep.subr.bf16.mxu0 0
    %2052 = vmatpush1.bf16.msra.mxu0 %v2018
    %2053 = vmatprep.subr.bf16.mxu0 0
    %2054 = vmatpush1.bf16.msra.mxu0 %v2019
    %2055 = vmatprep.subr.bf16.mxu0 0
    %2056 = vmatpush1.bf16.msra.mxu0 %v2020
    %2057 = vmatprep.subr.bf16.mxu0 0
    %2058 = vmatpush1.bf16.msra.mxu0 %v2021
    %2059 = vmatprep.subr.bf16.mxu0 0
    %2060 = vmatpush1.bf16.msra.mxu0 %v2022
    %2061 = vmatprep.subr.bf16.mxu0 0
    %2062 = vmatpush1.bf16.msra.mxu0 %v2023
    %2063 = vmatprep.subr.bf16.mxu0 0
    %2064 = vmatpush1.bf16.msra.mxu0 %v2024
    %2065 = vmatprep.subr.bf16.mxu0 0
    %2066 = vmatpush1.bf16.msra.mxu0 %v2025
    %2067 = vmatprep.subr.bf16.mxu0 0
    %2068 = vmatpush1.bf16.msra.mxu0 %v2026
    %2069 = vmatprep.subr.bf16.mxu0 0
    %2070 = vmatpush1.bf16.msra.mxu0 0
    %2071 = vmatprep.subr.bf16.mxu0 0
    %2072 = vmatpush1.bf16.msra.mxu0 0
    %2073 = vmatprep.subr.bf16.mxu0 0
    %2074 = vmatpush1.bf16.msra.mxu0 0
    %2075 = vmatprep.subr.bf16.mxu0 0
    %2076 = vmatpush1.bf16.msra.mxu0 0
    %2077 = vmatprep.mubr.bf16.mxu0 %v2040
    %2078 = vmatmul.mubr.bf16.gmra.mrb[0].mxu0 %v1932
    %v2079 = vpop.f32.mrb[0].mxu0
    %v2080 = vadd.f32 %v1965, %v2079
    %v2081 = vpop.f32.mrb[0].mxu0
    %v2082 = vpop.f32.mrb[0].mxu0
    %v2083 = vadd.f32 %v1965, %v2082
    %v2084 = vpop.f32.mrb[0].mxu0
    %2085 = vmatprep.mubr.bf16.mxu0 %v2043
    %2086 = vmatmul.mubr.bf16.gmra.mrb[0].mxu0 %v1934
    %v2087 = vpop.f32.mrb[0].mxu0
    %v2088 = vadd.f32 %v1965, %v2087
    %v2089 = vpop.f32.mrb[0].mxu0
    %v2090 = vpop.f32.mrb[0].mxu0
    %v2091 = vadd.f32 %v1965, %v2090
    %v2092 = vpop.f32.mrb[0].mxu0
    %2093 = vdwg.mxu0
    %v2094 = vmax.f32 %v2080, 0.0
    %v2095 = vmax.f32 %v2083, 0.0
    %v2096 = vmax.f32 %v2088, 0.0
    %v2097 = vmax.f32 %v2091, 0.0
    %v2098 = vmul.f32 %v2094, %v84
    %v2099 = vmul.f32 %v2095, %v89
    %v2100 = vmul.f32 %v2096, %v94
    %v2101 = vmul.f32 %v2097, %v99
    %v2106 = vrot.slane %v2098, 7
    %v2107 = vrot.slane %v2099, 7
    %v2108 = vsel %vm1824, %v2106, %v2107
    %v2109 = vrot.slane %v2100, 7
    %v2110 = vsel %vm1824, %v2107, %v2109
    %v2111 = vrot.slane %v2101, 7
    %v2112 = vsel %vm1824, %v2109, %v2111
    %v2118 = vsel %vm1824, 0.0, %v2106
    %v2119 = vsel %vm1824, %v2111, 0.0
    %v2120 = vmul.f32 %v2118, %v1842
    %v2121 = vmul.f32 %v2108, %v1847
    %v2122 = vmul.f32 %v2110, %v1852
    %v2123 = vmul.f32 %v2112, %v1857
    %v2124 = vmul.f32 %v2118, %v1880
    %v2125 = vmul.f32 %v2108, %v1882
    %v2126 = vmul.f32 %v2110, %v1884
    %v2127 = vmul.f32 %v2112, %v1886
    %v2128 = vmul.f32 %v2119, %v1885
    %v2134 = vrot.slane %v2124, 2
    %v2135 = vrot.slane %v2125, 2
    %v2136 = vsel %vm1914, %v2134, %v2135
    %v2137 = vrot.slane %v2126, 2
    %v2138 = vsel %vm1914, %v2135, %v2137
    %v2139 = vrot.slane %v2127, 2
    %v2140 = vsel %vm1914, %v2137, %v2139
    %v2141 = vrot.slane %v2128, 2
    %v2142 = vsel %vm1914, %v2139, %v2141
    %v2147 = vpack.c.bf16 %v2121, %v2120
    %v2148 = vpack.c.bf16 %v2099, %v2098
    %v2149 = vpack.c.bf16 %v2138, %v2136
    %v2150 = vpack.c.bf16 %v2123, %v2122
    %v2151 = vpack.c.bf16 %v2101, %v2100
    %v2152 = vpack.c.bf16 %v2142, %v2140
    %v2153 = vld [vmem:[%s15] sm:$0xf]
    %v2154 = vld [vmem:[%s15 + $0x4] sm:$0xf]
    %v2155 = vld [vmem:[%s15 + $0x8] sm:$0xf]
    %v2156 = vld [vmem:[%s15 + $0xc] sm:$0xf]
    %v2157 = vld [vmem:[%s15 + $0x10] sm:$0xf]
    %v2158 = vld [vmem:[%s15 + $0x14] sm:$0xf]
    %v2159 = vld [vmem:[%s15 + $0x18] sm:$0xf]
    %v2160 = vld [vmem:[%s15 + $0x1c] sm:$0xf]
    %v2161 = vld [vmem:[%s15 + $0x20] sm:$0xf]
    %v2162 = vld [vmem:[%s15 + $0x24] sm:$0xf]
    %v2163 = vld [vmem:[%s15 + $0x28] sm:$0xf]
    %v2164 = vld [vmem:[%s15 + $0x2c] sm:$0xf]
    %v2165 = vld [vmem:[%s15 + $0x30] sm:$0xf]
    %v2166 = vld [vmem:[%s15 + $0x34] sm:$0xf]
    %v2167 = vld [vmem:[%s15 + $0x38] sm:$0xf]
    %v2168 = vld [vmem:[%s15 + $0x3c] sm:$0xf]
    %v2169 = vld [vmem:[%s15 + $0x40] sm:$0xf]
    %v2170 = vld [vmem:[%s15 + $0x44] sm:$0xf]
    %v2171 = vld [vmem:[%s15 + $0x48] sm:$0xf]
    %v2172 = vld [vmem:[%s15 + $0x4c] sm:$0xf]
    %v2173 = vld [vmem:[%s15 + $0x50] sm:$0xf]
    %v2174 = vld [vmem:[%s15 + $0x54] sm:$0xf]
    %v2175 = vld [vmem:[%s15 + $0x58] sm:$0xf]
    %v2176 = vld [vmem:[%s15 + $0x5c] sm:$0xf]
    %v2177 = vld [vmem:[%s15 + $0x60] sm:$0xf]
    %v2178 = vld [vmem:[%s15 + $0x64] sm:$0xf]
    %v2179 = vld [vmem:[%s15 + $0x68] sm:$0xf]
    %v2180 = vld [vmem:[%s15 + $0x6c] sm:$0xf]
    %v2181 = vld [vmem:[%s15 + $0x70] sm:$0xf]
    %v2182 = vld [vmem:[%s15 + $0x74] sm:$0xf]
    %v2183 = vld [vmem:[%s15 + $0x78] sm:$0xf]
    %v2184 = vld [vmem:[%s15 + $0x7c] sm:$0xf]
    %v2185 = vld [vmem:[%s15 + $0x80] sm:$0xf]
    %v2186 = vld [vmem:[%s15 + $0x84] sm:$0xf]
    %v2187 = vld [vmem:[%s15 + $0x88] sm:$0xf]
    %v2188 = vld [vmem:[%s15 + $0x8c] sm:$0xf]
    %v2189 = vld [vmem:[%s15 + $0x90] sm:$0xf]
    %v2190 = vld [vmem:[%s15 + $0x94] sm:$0xf]
    %v2191 = vld [vmem:[%s15 + $0x98] sm:$0xf]
    %v2192 = vld [vmem:[%s15 + $0x9c] sm:$0xf]
    %v2193 = vld [vmem:[%s15 + $0xa0] sm:$0xf]
    %v2194 = vld [vmem:[%s15 + $0xa4] sm:$0xf]
    %v2195 = vld [vmem:[%s15 + $0xa8] sm:$0xf]
    %v2196 = vld [vmem:[%s15 + $0xac] sm:$0xf]
    %v2197 = vld [vmem:[%s15 + $0xb0] sm:$0xf]
    %v2198 = vld [vmem:[%s15 + $0xb4] sm:$0xf]
    %v2199 = vld [vmem:[%s15 + $0xb8] sm:$0xf]
    %v2200 = vld [vmem:[%s15 + $0xbc] sm:$0xf]
    %v2201 = vld [vmem:[%s16] sm:$0x1]
    %v2203 = vlaneseq
    %v2204 = vshrl.u32 %v2203, 7
    %v2205 = vsub.s32 0, %v2204
    %v2206 = vrot.slane %v2201, %v2205
    %v2256 = vunpack.c.l.b16 %v2153
    %v2257 = vunpack.c.l.b16 %v2154
    %v2258 = vunpack.c.l.b16 %v2155
    %v2259 = vunpack.c.l.b16 %v2156
    %v2260 = vunpack.c.l.b16 %v2157
    %v2261 = vunpack.c.l.b16 %v2158
    %v2262 = vunpack.c.l.b16 %v2159
    %v2263 = vunpack.c.l.b16 %v2160
    %v2264 = vunpack.c.l.b16 %v2161
    %v2265 = vunpack.c.l.b16 %v2162
    %v2266 = vunpack.c.l.b16 %v2163
    %v2267 = vunpack.c.l.b16 %v2164
    %v2268 = vunpack.c.l.b16 %v2165
    %v2269 = vunpack.c.l.b16 %v2166
    %v2270 = vunpack.c.l.b16 %v2167
    %v2271 = vunpack.c.l.b16 %v2168
    %v2272 = vunpack.c.l.b16 %v2169
    %v2273 = vunpack.c.l.b16 %v2170
    %v2274 = vunpack.c.l.b16 %v2171
    %v2275 = vunpack.c.l.b16 %v2172
    %v2276 = vunpack.c.l.b16 %v2173
    %v2277 = vunpack.c.l.b16 %v2174
    %v2278 = vunpack.c.l.b16 %v2175
    %v2279 = vunpack.c.l.b16 %v2176
    %v2280 = vunpack.c.l.b16 %v2177
    %v2281 = vunpack.c.l.b16 %v2178
    %v2282 = vunpack.c.l.b16 %v2179
    %v2283 = vunpack.c.l.b16 %v2180
    %v2284 = vunpack.c.l.b16 %v2181
    %v2285 = vunpack.c.l.b16 %v2182
    %v2286 = vunpack.c.l.b16 %v2183
    %v2287 = vunpack.c.l.b16 %v2184
    %v2288 = vunpack.c.l.b16 %v2185
    %v2289 = vunpack.c.l.b16 %v2186
    %v2290 = vunpack.c.l.b16 %v2187
    %v2291 = vunpack.c.l.b16 %v2188
    %v2292 = vunpack.c.l.b16 %v2189
    %v2293 = vunpack.c.l.b16 %v2190
    %v2294 = vunpack.c.l.b16 %v2191
    %v2295 = vunpack.c.l.b16 %v2192
    %v2296 = vunpack.c.l.b16 %v2193
    %v2297 = vunpack.c.l.b16 %v2194
    %v2298 = vunpack.c.l.b16 %v2195
    %v2299 = vunpack.c.l.b16 %v2196
    %v2300 = vunpack.c.l.b16 %v2197
    %v2301 = vunpack.c.l.b16 %v2198
    %v2302 = vunpack.c.l.b16 %v2199
    %v2303 = vunpack.c.l.b16 %v2200
    %v2304 = vpack.c.b16 %v2257, %v2256
    %v2305 = vpack.c.b16 %v2259, %v2258
    %v2306 = vpack.c.b16 %v2261, %v2260
    %v2307 = vpack.c.b16 %v2263, %v2262
    %v2308 = vpack.c.b16 %v2265, %v2264
    %v2309 = vpack.c.b16 %v2267, %v2266
    %v2310 = vpack.c.b16 %v2269, %v2268
    %v2311 = vpack.c.b16 %v2271, %v2270
    %v2312 = vpack.c.b16 %v2273, %v2272
    %v2313 = vpack.c.b16 %v2275, %v2274
    %v2314 = vpack.c.b16 %v2277, %v2276
    %v2315 = vpack.c.b16 %v2279, %v2278
    %v2316 = vpack.c.b16 %v2281, %v2280
    %v2317 = vpack.c.b16 %v2283, %v2282
    %v2318 = vpack.c.b16 %v2285, %v2284
    %v2319 = vpack.c.b16 %v2287, %v2286
    %v2320 = vpack.c.b16 %v2289, %v2288
    %v2321 = vpack.c.b16 %v2291, %v2290
    %v2322 = vpack.c.b16 %v2293, %v2292
    %v2323 = vpack.c.b16 %v2295, %v2294
    %v2324 = vpack.c.b16 %v2297, %v2296
    %v2325 = vpack.c.b16 %v2299, %v2298
    %v2326 = vpack.c.b16 %v2301, %v2300
    %v2327 = vpack.c.b16 %v2303, %v2302
    %2352 = vmatprep.subr.bf16.mxu0 0
    %2353 = vmatpush1.bf16.msra.mxu0 %v2304
    %2354 = vmatprep.subr.bf16.mxu0 0
    %2355 = vmatpush1.bf16.msra.mxu0 %v2305
    %2356 = vmatprep.subr.bf16.mxu0 0
    %2357 = vmatpush1.bf16.msra.mxu0 %v2306
    %2358 = vmatprep.subr.bf16.mxu0 0
    %2359 = vmatpush1.bf16.msra.mxu0 %v2307
    %2360 = vmatprep.subr.bf16.mxu0 0
    %2361 = vmatpush1.bf16.msra.mxu0 %v2308
    %2362 = vmatprep.subr.bf16.mxu0 0
    %2363 = vmatpush1.bf16.msra.mxu0 %v2309
    %2364 = vmatprep.subr.bf16.mxu0 0
    %2365 = vmatpush1.bf16.msra.mxu0 %v2310
    %2366 = vmatprep.subr.bf16.mxu0 0
    %2367 = vmatpush1.bf16.msra.mxu0 %v2311
    %2368 = vmatprep.subr.bf16.mxu0 0
    %2369 = vmatpush1.bf16.msra.mxu0 %v2312
    %2370 = vmatprep.subr.bf16.mxu0 0
    %2371 = vmatpush1.bf16.msra.mxu0 %v2313
    %2372 = vmatprep.subr.bf16.mxu0 0
    %2373 = vmatpush1.bf16.msra.mxu0 %v2314
    %2374 = vmatprep.subr.bf16.mxu0 0
    %2375 = vmatpush1.bf16.msra.mxu0 %v2315
    %2376 = vmatprep.subr.bf16.mxu0 0
    %2377 = vmatpush1.bf16.msra.mxu0 %v2316
    %2378 = vmatprep.subr.bf16.mxu0 0
    %2379 = vmatpush1.bf16.msra.mxu0 %v2317
    %2380 = vmatprep.subr.bf16.mxu0 0
    %2381 = vmatpush1.bf16.msra.mxu0 %v2318
    %2382 = vmatprep.subr.bf16.mxu0 0
    %2383 = vmatpush1.bf16.msra.mxu0 %v2319
    %2384 = vmatprep.mubr.bf16.mxu0 %v2148
    %2385 = vmatmul.mubr.bf16.gmra.mrb[0].mxu0 %v2147
    %v2386 = vpop.f32.mrb[0].mxu0
    %v2387 = vadd.f32 %v2206, %v2386
    %v2388 = vpop.f32.mrb[0].mxu0
    %v2389 = vpop.f32.mrb[0].mxu0
    %v2390 = vadd.f32 %v2206, %v2389
    %v2391 = vpop.f32.mrb[0].mxu0
    %2392 = vmatprep.mubr.bf16.mxu0 %v2151
    %2393 = vmatmul.mubr.bf16.gmra.mrb[0].mxu0 %v2150
    %v2394 = vpop.f32.mrb[0].mxu0
    %v2395 = vadd.f32 %v2206, %v2394
    %v2396 = vpop.f32.mrb[0].mxu0
    %v2397 = vpop.f32.mrb[0].mxu0
    %v2398 = vadd.f32 %v2206, %v2397
    %v2399 = vpop.f32.mrb[0].mxu0
    %2400 = vdwg.mxu0
    %2401 = vmatprep.subr.bf16.mxu0 0
    %2402 = vmatpush1.bf16.msra.mxu0 %v2320
    %2403 = vmatprep.subr.bf16.mxu0 0
    %2404 = vmatpush1.bf16.msra.mxu0 %v2321
    %2405 = vmatprep.subr.bf16.mxu0 0
    %2406 = vmatpush1.bf16.msra.mxu0 %v2322
    %2407 = vmatprep.subr.bf16.mxu0 0
    %2408 = vmatpush1.bf16.msra.mxu0 %v2323
    %2409 = vmatprep.subr.bf16.mxu0 0
    %2410 = vmatpush1.bf16.msra.mxu0 %v2324
    %2411 = vmatprep.subr.bf16.mxu0 0
    %2412 = vmatpush1.bf16.msra.mxu0 %v2325
    %2413 = vmatprep.subr.bf16.mxu0 0
    %2414 = vmatpush1.bf16.msra.mxu0 %v2326
    %2415 = vmatprep.subr.bf16.mxu0 0
    %2416 = vmatpush1.bf16.msra.mxu0 %v2327
    %2417 = vmatprep.subr.bf16.mxu0 0
    %2418 = vmatpush1.bf16.msra.mxu0 0
    %2419 = vmatprep.subr.bf16.mxu0 0
    %2420 = vmatpush1.bf16.msra.mxu0 0
    %2421 = vmatprep.subr.bf16.mxu0 0
    %2422 = vmatpush1.bf16.msra.mxu0 0
    %2423 = vmatprep.subr.bf16.mxu0 0
    %2424 = vmatpush1.bf16.msra.mxu0 0
    %2425 = vmatprep.subr.bf16.mxu0 0
    %2426 = vmatpush1.bf16.msra.mxu0 0
    %2427 = vmatprep.subr.bf16.mxu0 0
    %2428 = vmatpush1.bf16.msra.mxu0 0
    %2429 = vmatprep.subr.bf16.mxu0 0
    %2430 = vmatpush1.bf16.msra.mxu0 0
    %2431 = vmatprep.subr.bf16.mxu0 0
    %2432 = vmatpush1.bf16.msra.mxu0 0
    %2433 = vmatprep.mubr.bf16.mxu0 0
    %2434 = vmatmul.mubr.bf16.gmra.mrb[0].mxu0 %v2149
    %v2435 = vpop.f32.mrb[0].mxu0
    %v2436 = vadd.f32 %v2387, %v2435
    %v2437 = vpop.f32.mrb[0].mxu0
    %v2438 = vpop.f32.mrb[0].mxu0
    %v2439 = vadd.f32 %v2390, %v2438
    %v2440 = vpop.f32.mrb[0].mxu0
    %2441 = vmatprep.mubr.bf16.mxu0 0
    %2442 = vmatmul.mubr.bf16.gmra.mrb[0].mxu0 %v2152
    %v2443 = vpop.f32.mrb[0].mxu0
    %v2444 = vadd.f32 %v2395, %v2443
    %v2445 = vpop.f32.mrb[0].mxu0
    %v2446 = vpop.f32.mrb[0].mxu0
    %v2447 = vadd.f32 %v2398, %v2446
    %v2448 = vpop.f32.mrb[0].mxu0
    %2449 = vdwg.mxu0
    %v2450 = vmul.f32 %v2436, %v84
    %v2451 = vmul.f32 %v2439, %v89
    %v2452 = vmul.f32 %v2444, %v94
    %v2453 = vmul.f32 %v2447, %v99
    %v2454 = vadd.f32 %v1812, %v2450
    %v2455 = vadd.f32 %v1813, %v2451
    %v2456 = vadd.f32 %v1814, %v2452
    %v2457 = vadd.f32 %v1815, %v2453
    %v2458 = vld [vmem:[%s17] sm:$0x1]
    %v2459 = vld [vmem:[%s18] sm:$0x1]
    %v2460 = vsel %vm167, %v2454, 0.0
    %2461 = vadd.xlane.f32.xlu0 %v2460
    %v2462 = vpop.xlane.xlu0 %2461
    %v2463 = vsel %vm167, %v2455, 0.0
    %2464 = vadd.xlane.f32.xlu0 %v2463
    %v2465 = vpop.xlane.xlu0 %2464
    %v2466 = vsel %vm167, %v2456, 0.0
    %2467 = vadd.xlane.f32.xlu0 %v2466
    %v2468 = vpop.xlane.xlu0 %2467
    %v2469 = vsel %vm167, %v2457, 0.0
    %2470 = vadd.xlane.f32.xlu0 %v2469
    %v2471 = vpop.xlane.xlu0 %2470
    %v2472 = vmul.f32 %v2462, %v1755
    %v2473 = vmul.f32 %v2465, %v1755
    %v2474 = vmul.f32 %v2468, %v1755
    %v2475 = vmul.f32 %v2471, %v1755
    %v2476 = vsub.f32 %v2454, %v2472
    %v2477 = vsub.f32 %v2455, %v2473
    %v2478 = vsub.f32 %v2456, %v2474
    %v2479 = vsub.f32 %v2457, %v2475
    %v2480 = vmul.f32 %v2476, %v2476
    %v2481 = vmul.f32 %v2477, %v2477
    %v2482 = vmul.f32 %v2478, %v2478
    %v2483 = vmul.f32 %v2479, %v2479
    %v2484 = vsel %vm167, %v2480, 0.0
    %2485 = vadd.xlane.f32.xlu0 %v2484
    %v2486 = vpop.xlane.xlu0 %2485
    %v2487 = vsel %vm167, %v2481, 0.0
    %2488 = vadd.xlane.f32.xlu0 %v2487
    %v2489 = vpop.xlane.xlu0 %2488
    %v2490 = vsel %vm167, %v2482, 0.0
    %2491 = vadd.xlane.f32.xlu0 %v2490
    %v2492 = vpop.xlane.xlu0 %2491
    %v2493 = vsel %vm167, %v2483, 0.0
    %2494 = vadd.xlane.f32.xlu0 %v2493
    %v2495 = vpop.xlane.xlu0 %2494
    %v2496 = vmul.f32 %v2486, %v1755
    %v2497 = vmul.f32 %v2489, %v1755
    %v2498 = vmul.f32 %v2492, %v1755
    %v2499 = vmul.f32 %v2495, %v1755
    %v2500 = vadd.f32 %v2496, 1e-05
    %v2501 = vadd.f32 %v2497, 1e-05
    %v2502 = vadd.f32 %v2498, 1e-05
    %v2503 = vadd.f32 %v2499, 1e-05
    %v2504 = vrsqrt.pop %v2500
    %v2505 = vrsqrt.pop %v2501
    %v2506 = vrsqrt.pop %v2502
    %v2507 = vrsqrt.pop %v2503
    %v2508 = vmul.f32 %v2476, %v2504
    %v2509 = vmul.f32 %v2477, %v2505
    %v2510 = vmul.f32 %v2478, %v2506
    %v2511 = vmul.f32 %v2479, %v2507
    %v2513 = vlaneseq
    %v2514 = vshrl.u32 %v2513, 7
    %v2515 = vsub.s32 0, %v2514
    %v2516 = vrot.slane %v2458, %v2515
    %v2518 = vmul.f32 %v2508, %v2516
    %v2519 = vmul.f32 %v2509, %v2516
    %v2520 = vmul.f32 %v2510, %v2516
    %v2521 = vmul.f32 %v2511, %v2516
    %v2523 = vlaneseq
    %v2524 = vshrl.u32 %v2523, 7
    %v2525 = vsub.s32 0, %v2524
    %v2526 = vrot.slane %v2459, %v2525
    %v2528 = vadd.f32 %v2518, %v2526
    %v2529 = vadd.f32 %v2519, %v2526
    %v2530 = vadd.f32 %v2520, %v2526
    %v2531 = vadd.f32 %v2521, %v2526
    %v2532 = vpack.c.bf16 %v2529, %v2528
    %v2533 = vpack.c.bf16 %v2531, %v2530
    %s2534 = scalar_lea.vmem %s5, 64
    %v2535 = vld [vmem:[%s2534] sm:$0xff]
    %v2536 = vld [vmem:[%s2534 + $0x8] sm:$0xff]
    %v2537 = vld [vmem:[%s2534 + $0x10] sm:$0xff]
    %v2538 = vld [vmem:[%s2534 + $0x18] sm:$0xff]
    %v2539 = vld [vmem:[%s2534 + $0x20] sm:$0xff]
    %v2540 = vld [vmem:[%s2534 + $0x28] sm:$0xff]
    %v2541 = vld [vmem:[%s2534 + $0x30] sm:$0xff]
    %v2542 = vld [vmem:[%s2534 + $0x38] sm:$0xff]
    %s2543 = scalar_lea.vmem %s6, 2
    %v2544 = vld [vmem:[%s2543] sm:$0x3]
    %v2546 = vlaneseq
    %v2547 = vshrl.u32 %v2546, 7
    %v2548 = vsub.s32 0, %v2547
    %v2549 = vrot.slane %v2544, %v2548
    %v2550 = vlaneseq
    %v2551 = vshrl.u32 %v2550, 7
    %v2552 = vsub.s32 1, %v2551
    %v2553 = vrot.slane %v2544, %v2552
    %v2564 = vunpack.c.l.b16 %v2535
    %v2565 = vunpack.c.h.b16 %v2535
    %v2566 = vunpack.c.l.b16 %v2536
    %v2567 = vunpack.c.h.b16 %v2536
    %v2568 = vunpack.c.l.b16 %v2537
    %v2569 = vunpack.c.h.b16 %v2537
    %v2570 = vunpack.c.l.b16 %v2538
    %v2571 = vunpack.c.h.b16 %v2538
    %v2572 = vunpack.c.l.b16 %v2539
    %v2573 = vunpack.c.h.b16 %v2539
    %v2574 = vunpack.c.l.b16 %v2540
    %v2575 = vunpack.c.h.b16 %v2540
    %v2576 = vunpack.c.l.b16 %v2541
    %v2577 = vunpack.c.h.b16 %v2541
    %v2578 = vunpack.c.l.b16 %v2542
    %v2579 = vunpack.c.h.b16 %v2542
    %v2580 = vpack.c.b16 %v2566, %v2564
    %v2581 = vpack.c.b16 %v2567, %v2565
    %v2582 = vpack.c.b16 %v2570, %v2568
    %v2583 = vpack.c.b16 %v2571, %v2569
    %v2584 = vpack.c.b16 %v2574, %v2572
    %v2585 = vpack.c.b16 %v2575, %v2573
    %v2586 = vpack.c.b16 %v2578, %v2576
    %v2587 = vpack.c.b16 %v2579, %v2577
    %v2597 = vsel %vm167, %v2532, 0
    %v2600 = vsel %vm167, %v2533, 0
    %2602 = vmatprep.subr.bf16.mxu0 %v2581
    %2603 = vmatpush1.bf16.msra.mxu0 %v2580
    %2604 = vmatprep.subr.bf16.mxu0 %v2583
    %2605 = vmatpush1.bf16.msra.mxu0 %v2582
    %2606 = vmatprep.subr.bf16.mxu0 %v2585
    %2607 = vmatpush1.bf16.msra.mxu0 %v2584
    %2608 = vmatprep.subr.bf16.mxu0 %v2587
    %2609 = vmatpush1.bf16.msra.mxu0 %v2586
    %2610 = vmatprep.subr.bf16.mxu0 0
    %2611 = vmatpush1.bf16.msra.mxu0 0
    %2612 = vmatprep.subr.bf16.mxu0 0
    %2613 = vmatpush1.bf16.msra.mxu0 0
    %2614 = vmatprep.subr.bf16.mxu0 0
    %2615 = vmatpush1.bf16.msra.mxu0 0
    %2616 = vmatprep.subr.bf16.mxu0 0
    %2617 = vmatpush1.bf16.msra.mxu0 0
    %2618 = vmatprep.subr.bf16.mxu0 0
    %2619 = vmatpush1.bf16.msra.mxu0 0
    %2620 = vmatprep.subr.bf16.mxu0 0
    %2621 = vmatpush1.bf16.msra.mxu0 0
    %2622 = vmatprep.subr.bf16.mxu0 0
    %2623 = vmatpush1.bf16.msra.mxu0 0
    %2624 = vmatprep.subr.bf16.mxu0 0
    %2625 = vmatpush1.bf16.msra.mxu0 0
    %2626 = vmatprep.subr.bf16.mxu0 0
    %2627 = vmatpush1.bf16.msra.mxu0 0
    %2628 = vmatprep.subr.bf16.mxu0 0
    %2629 = vmatpush1.bf16.msra.mxu0 0
    %2630 = vmatprep.subr.bf16.mxu0 0
    %2631 = vmatpush1.bf16.msra.mxu0 0
    %2632 = vmatprep.subr.bf16.mxu0 0
    %2633 = vmatpush1.bf16.msra.mxu0 0
    %2634 = vmatprep.mubr.bf16.mxu0 0
    %2635 = vmatmul.mubr.bf16.gmra.mrb[0].mxu0 %v2597
    %v2636 = vpop.f32.mrb[0].mxu0
    %v2637 = vadd.f32 %v2549, %v2636
    %v2638 = vpop.f32.mrb[0].mxu0
    %v2639 = vadd.f32 %v2553, %v2638
    %v2640 = vpop.f32.mrb[0].mxu0
    %v2641 = vadd.f32 %v2549, %v2640
    %v2642 = vpop.f32.mrb[0].mxu0
    %v2643 = vadd.f32 %v2553, %v2642
    %2644 = vmatprep.mubr.bf16.mxu0 0
    %2645 = vmatmul.mubr.bf16.gmra.mrb[0].mxu0 %v2600
    %v2646 = vpop.f32.mrb[0].mxu0
    %v2647 = vadd.f32 %v2549, %v2646
    %v2648 = vpop.f32.mrb[0].mxu0
    %v2649 = vadd.f32 %v2553, %v2648
    %v2650 = vpop.f32.mrb[0].mxu0
    %v2651 = vadd.f32 %v2549, %v2650
    %v2652 = vpop.f32.mrb[0].mxu0
    %v2653 = vadd.f32 %v2553, %v2652
    %2654 = vdwg.mxu0
    %v2655 = vmul.f32 %v2637, 0.17677669
    %v2656 = vmul.f32 %v2641, 0.17677669
    %v2657 = vmul.f32 %v2647, 0.17677669
    %v2658 = vmul.f32 %v2651, 0.17677669
    %v2659 = vpack.c.bf16 %v2656, %v2655
    %v2660 = vpack.c.bf16 %v2658, %v2657
    %s2661 = scalar_lea.vmem %s9, 32
    %v2662 = vld [vmem:[%s2661] sm:$0xf]
    %v2663 = vld [vmem:[%s2661 + $0x4] sm:$0xf]
    %v2664 = vld [vmem:[%s2661 + $0x8] sm:$0xf]
    %v2665 = vld [vmem:[%s2661 + $0xc] sm:$0xf]
    %v2666 = vld [vmem:[%s2661 + $0x10] sm:$0xf]
    %v2667 = vld [vmem:[%s2661 + $0x14] sm:$0xf]
    %v2668 = vld [vmem:[%s2661 + $0x18] sm:$0xf]
    %v2669 = vld [vmem:[%s2661 + $0x1c] sm:$0xf]
    %v2678 = vunpack.c.l.b16 %v2662
    %v2679 = vunpack.c.l.b16 %v2663
    %v2680 = vunpack.c.l.b16 %v2664
    %v2681 = vunpack.c.l.b16 %v2665
    %v2682 = vunpack.c.l.b16 %v2666
    %v2683 = vunpack.c.l.b16 %v2667
    %v2684 = vunpack.c.l.b16 %v2668
    %v2685 = vunpack.c.l.b16 %v2669
    %v2686 = vpack.c.b16 %v2679, %v2678
    %v2687 = vpack.c.b16 %v2681, %v2680
    %v2688 = vpack.c.b16 %v2683, %v2682
    %v2689 = vpack.c.b16 %v2685, %v2684
    %v2695 = vsel %vm167, %v2659, 0
    %v2698 = vsel %vm167, %v2660, 0
    %2700 = vmatprep.subr.bf16.mxu0 0
    %2701 = vmatpush1.bf16.msra.mxu0 %v2686
    %2702 = vmatprep.subr.bf16.mxu0 0
    %2703 = vmatpush1.bf16.msra.mxu0 %v2687
    %2704 = vmatprep.subr.bf16.mxu0 0
    %2705 = vmatpush1.bf16.msra.mxu0 %v2688
    %2706 = vmatprep.subr.bf16.mxu0 0
    %2707 = vmatpush1.bf16.msra.mxu0 %v2689
    %2708 = vmatprep.subr.bf16.mxu0 0
    %2709 = vmatpush1.bf16.msra.mxu0 0
    %2710 = vmatprep.subr.bf16.mxu0 0
    %2711 = vmatpush1.bf16.msra.mxu0 0
    %2712 = vmatprep.subr.bf16.mxu0 0
    %2713 = vmatpush1.bf16.msra.mxu0 0
    %2714 = vmatprep.subr.bf16.mxu0 0
    %2715 = vmatpush1.bf16.msra.mxu0 0
    %2716 = vmatprep.subr.bf16.mxu0 0
    %2717 = vmatpush1.bf16.msra.mxu0 0
    %2718 = vmatprep.subr.bf16.mxu0 0
    %2719 = vmatpush1.bf16.msra.mxu0 0
    %2720 = vmatprep.subr.bf16.mxu0 0
    %2721 = vmatpush1.bf16.msra.mxu0 0
    %2722 = vmatprep.subr.bf16.mxu0 0
    %2723 = vmatpush1.bf16.msra.mxu0 0
    %2724 = vmatprep.subr.bf16.mxu0 0
    %2725 = vmatpush1.bf16.msra.mxu0 0
    %2726 = vmatprep.subr.bf16.mxu0 0
    %2727 = vmatpush1.bf16.msra.mxu0 0
    %2728 = vmatprep.subr.bf16.mxu0 0
    %2729 = vmatpush1.bf16.msra.mxu0 0
    %2730 = vmatprep.subr.bf16.mxu0 0
    %2731 = vmatpush1.bf16.msra.mxu0 0
    %2732 = vmatprep.mubr.bf16.mxu0 0
    %2733 = vmatmul.mubr.bf16.gmra.mrb[0].mxu0 %v2695
    %v2734 = vpop.f32.mrb[0].mxu0
    %v2735 = vadd.f32 0.0, %v2734
    %v2736 = vpop.f32.mrb[0].mxu0
    %v2737 = vpop.f32.mrb[0].mxu0
    %v2738 = vadd.f32 0.0, %v2737
    %v2739 = vpop.f32.mrb[0].mxu0
    %2740 = vmatprep.mubr.bf16.mxu0 0
    %2741 = vmatmul.mubr.bf16.gmra.mrb[0].mxu0 %v2698
    %v2742 = vpop.f32.mrb[0].mxu0
    %v2743 = vadd.f32 0.0, %v2742
    %v2744 = vpop.f32.mrb[0].mxu0
    %v2745 = vpop.f32.mrb[0].mxu0
    %v2746 = vadd.f32 0.0, %v2745
    %v2747 = vpop.f32.mrb[0].mxu0
    %2748 = vdwg.mxu0
    %s2749 = scalar_lea.vmem %s10, 16
    %v2750 = vld [vmem:[%s2749] sm:$0xff]
    %v2751 = vld [vmem:[%s2749 + $0x8] sm:$0x1]
    %v2752 = vpack.c.bf16 %v2641, %v2637
    %v2753 = vpack.c.bf16 %v2651, %v2647
    %v2754 = vpack.c.bf16 %v2643, %v2639
    %v2755 = vpack.c.bf16 %v2653, %v2649
    %2757 = vset.pattern.permute.xlu0 0
    %2758 = vperm.xlu0 %2757, %v2735
    %v2759 = vpop.permute.xlu0 %2758
    %2762 = vset.pattern.permute.xlu0 0
    %2763 = vperm.xlu0 %2762, %v2738
    %v2764 = vpop.permute.xlu0 %2763
    %2767 = vset.pattern.permute.xlu0 0
    %2768 = vperm.xlu0 %2767, %v2743
    %v2769 = vpop.permute.xlu0 %2768
    %2772 = vset.pattern.permute.xlu0 0
    %2773 = vperm.xlu0 %2772, %v2746
    %v2774 = vpop.permute.xlu0 %2773
    %v2776 = vmul.f32 %v2759, %v334
    %v2777 = vmul.f32 %v2764, %v335
    %v2778 = vmul.f32 %v2769, %v336
    %v2779 = vmul.f32 %v2774, %v337
    %2782 = vrot.lane.b32.xlu0 %v2752, 64
    %v2783 = vpop.permute.xlu0 %2782
    %2784 = vrot.lane.b32.xlu0 %v2753, 64
    %v2785 = vpop.permute.xlu0 %2784
    %v2786 = vsel %vm368, %v2659, 0
    %v2788 = vsel %vm368, %v2660, 0
    %v2791 = vsel %vm368, %v2783, 0
    %v2794 = vsel %vm368, %v2785, 0
    %2796 = vmatprep.subr.bf16.mxu0 0
    %2797 = vmatpush1.bf16.xpose.msra.mxu0 %v2791
    %2798 = vmatprep.subr.bf16.mxu0 0
    %2799 = vmatpush1.bf16.xpose.msra.mxu0 %v2794
    %2800 = vmatprep.subr.bf16.mxu0 0
    %2801 = vmatpush1.bf16.xpose.msra.mxu0 0
    %2802 = vmatprep.subr.bf16.mxu0 0
    %2803 = vmatpush1.bf16.xpose.msra.mxu0 0
    %2804 = vmatprep.subr.bf16.mxu0 0
    %2805 = vmatpush1.bf16.xpose.msra.mxu0 0
    %2806 = vmatprep.subr.bf16.mxu0 0
    %2807 = vmatpush1.bf16.xpose.msra.mxu0 0
    %2808 = vmatprep.subr.bf16.mxu0 0
    %2809 = vmatpush1.bf16.xpose.msra.mxu0 0
    %2810 = vmatprep.subr.bf16.mxu0 0
    %2811 = vmatpush1.bf16.xpose.msra.mxu0 0
    %2812 = vmatprep.subr.bf16.mxu0 0
    %2813 = vmatpush1.bf16.xpose.msra.mxu0 0
    %2814 = vmatprep.subr.bf16.mxu0 0
    %2815 = vmatpush1.bf16.xpose.msra.mxu0 0
    %2816 = vmatprep.subr.bf16.mxu0 0
    %2817 = vmatpush1.bf16.xpose.msra.mxu0 0
    %2818 = vmatprep.subr.bf16.mxu0 0
    %2819 = vmatpush1.bf16.xpose.msra.mxu0 0
    %2820 = vmatprep.subr.bf16.mxu0 0
    %2821 = vmatpush1.bf16.xpose.msra.mxu0 0
    %2822 = vmatprep.subr.bf16.mxu0 0
    %2823 = vmatpush1.bf16.xpose.msra.mxu0 0
    %2824 = vmatprep.subr.bf16.mxu0 0
    %2825 = vmatpush1.bf16.xpose.msra.mxu0 0
    %2826 = vmatprep.subr.bf16.mxu0 0
    %2827 = vmatpush1.bf16.xpose.msra.mxu0 0
    %2828 = vmatprep.mubr.bf16.mxu0 0
    %2829 = vmatmul.mubr.bf16.gmra.mrb[0].mxu0 %v2786
    %v2830 = vpop.f32.mrb[0].mxu0
    %v2831 = vadd.f32 %v2776, %v2830
    %v2832 = vpop.f32.mrb[0].mxu0
    %v2833 = vpop.f32.mrb[0].mxu0
    %v2834 = vadd.f32 %v2777, %v2833
    %v2835 = vpop.f32.mrb[0].mxu0
    %2836 = vmatprep.mubr.bf16.mxu0 0
    %2837 = vmatmul.mubr.bf16.gmra.mrb[0].mxu0 %v2788
    %v2838 = vpop.f32.mrb[0].mxu0
    %v2839 = vadd.f32 %v2778, %v2838
    %v2840 = vpop.f32.mrb[0].mxu0
    %v2841 = vpop.f32.mrb[0].mxu0
    %v2842 = vadd.f32 %v2779, %v2841
    %v2843 = vpop.f32.mrb[0].mxu0
    %2844 = vdwg.mxu0
    %2845 = vset.pattern.permute.xlu0 1
    %2846 = vperm.xlu0 %2845, %v2735
    %v2847 = vpop.permute.xlu0 %2846
    %2849 = vset.pattern.permute.xlu0 1
    %2850 = vperm.xlu0 %2849, %v2738
    %v2851 = vpop.permute.xlu0 %2850
    %2853 = vset.pattern.permute.xlu0 1
    %2854 = vperm.xlu0 %2853, %v2743
    %v2855 = vpop.permute.xlu0 %2854
    %2857 = vset.pattern.permute.xlu0 1
    %2858 = vperm.xlu0 %2857, %v2746
    %v2859 = vpop.permute.xlu0 %2858
    %v2861 = vmul.f32 %v2847, %v429
    %v2862 = vmul.f32 %v2851, %v430
    %v2863 = vmul.f32 %v2855, %v431
    %v2864 = vmul.f32 %v2859, %v432
    %v2865 = vadd.f32 %v2831, %v2861
    %v2866 = vadd.f32 %v2834, %v2862
    %v2867 = vadd.f32 %v2839, %v2863
    %v2868 = vadd.f32 %v2842, %v2864
    %2869 = vset.pattern.permute.xlu0 2
    %2870 = vperm.xlu0 %2869, %v2735
    %v2871 = vpop.permute.xlu0 %2870
    %2873 = vset.pattern.permute.xlu0 2
    %2874 = vperm.xlu0 %2873, %v2738
    %v2875 = vpop.permute.xlu0 %2874
    %2877 = vset.pattern.permute.xlu0 2
    %2878 = vperm.xlu0 %2877, %v2743
    %v2879 = vpop.permute.xlu0 %2878
    %2881 = vset.pattern.permute.xlu0 2
    %2882 = vperm.xlu0 %2881, %v2746
    %v2883 = vpop.permute.xlu0 %2882
    %v2885 = vmul.f32 %v2871, %v458
    %v2886 = vmul.f32 %v2875, %v459
    %v2887 = vmul.f32 %v2879, %v460
    %v2888 = vmul.f32 %v2883, %v461
    %v2889 = vadd.f32 %v2865, %v2885
    %v2890 = vadd.f32 %v2866, %v2886
    %v2891 = vadd.f32 %v2867, %v2887
    %v2892 = vadd.f32 %v2868, %v2888
    %2893 = vset.pattern.permute.xlu0 3
    %2894 = vperm.xlu0 %2893, %v2735
    %v2895 = vpop.permute.xlu0 %2894
    %2897 = vset.pattern.permute.xlu0 3
    %2898 = vperm.xlu0 %2897, %v2738
    %v2899 = vpop.permute.xlu0 %2898
    %2901 = vset.pattern.permute.xlu0 3
    %2902 = vperm.xlu0 %2901, %v2743
    %v2903 = vpop.permute.xlu0 %2902
    %2905 = vset.pattern.permute.xlu0 3
    %2906 = vperm.xlu0 %2905, %v2746
    %v2907 = vpop.permute.xlu0 %2906
    %v2909 = vmul.f32 %v2895, %v487
    %v2910 = vmul.f32 %v2899, %v488
    %v2911 = vmul.f32 %v2903, %v489
    %v2912 = vmul.f32 %v2907, %v490
    %v2913 = vadd.f32 %v2889, %v2909
    %v2914 = vadd.f32 %v2890, %v2910
    %v2915 = vadd.f32 %v2891, %v2911
    %v2916 = vadd.f32 %v2892, %v2912
    %2917 = vset.pattern.permute.xlu0 4
    %2918 = vperm.xlu0 %2917, %v2735
    %v2919 = vpop.permute.xlu0 %2918
    %2921 = vset.pattern.permute.xlu0 4
    %2922 = vperm.xlu0 %2921, %v2738
    %v2923 = vpop.permute.xlu0 %2922
    %2925 = vset.pattern.permute.xlu0 4
    %2926 = vperm.xlu0 %2925, %v2743
    %v2927 = vpop.permute.xlu0 %2926
    %2929 = vset.pattern.permute.xlu0 4
    %2930 = vperm.xlu0 %2929, %v2746
    %v2931 = vpop.permute.xlu0 %2930
    %v2933 = vmul.f32 %v2919, %v516
    %v2934 = vmul.f32 %v2923, %v517
    %v2935 = vmul.f32 %v2927, %v518
    %v2936 = vmul.f32 %v2931, %v519
    %v2937 = vadd.f32 %v2913, %v2933
    %v2938 = vadd.f32 %v2914, %v2934
    %v2939 = vadd.f32 %v2915, %v2935
    %v2940 = vadd.f32 %v2916, %v2936
    %2941 = vset.pattern.permute.xlu0 5
    %2942 = vperm.xlu0 %2941, %v2735
    %v2943 = vpop.permute.xlu0 %2942
    %2945 = vset.pattern.permute.xlu0 5
    %2946 = vperm.xlu0 %2945, %v2738
    %v2947 = vpop.permute.xlu0 %2946
    %2949 = vset.pattern.permute.xlu0 5
    %2950 = vperm.xlu0 %2949, %v2743
    %v2951 = vpop.permute.xlu0 %2950
    %2953 = vset.pattern.permute.xlu0 5
    %2954 = vperm.xlu0 %2953, %v2746
    %v2955 = vpop.permute.xlu0 %2954
    %v2957 = vmul.f32 %v2943, %v545
    %v2958 = vmul.f32 %v2947, %v546
    %v2959 = vmul.f32 %v2951, %v547
    %v2960 = vmul.f32 %v2955, %v548
    %v2961 = vadd.f32 %v2937, %v2957
    %v2962 = vadd.f32 %v2938, %v2958
    %v2963 = vadd.f32 %v2939, %v2959
    %v2964 = vadd.f32 %v2940, %v2960
    %2965 = vset.pattern.permute.xlu0 6
    %2966 = vperm.xlu0 %2965, %v2735
    %v2967 = vpop.permute.xlu0 %2966
    %2969 = vset.pattern.permute.xlu0 6
    %2970 = vperm.xlu0 %2969, %v2738
    %v2971 = vpop.permute.xlu0 %2970
    %2973 = vset.pattern.permute.xlu0 6
    %2974 = vperm.xlu0 %2973, %v2743
    %v2975 = vpop.permute.xlu0 %2974
    %2977 = vset.pattern.permute.xlu0 6
    %2978 = vperm.xlu0 %2977, %v2746
    %v2979 = vpop.permute.xlu0 %2978
    %v2981 = vmul.f32 %v2967, %v574
    %v2982 = vmul.f32 %v2971, %v575
    %v2983 = vmul.f32 %v2975, %v576
    %v2984 = vmul.f32 %v2979, %v577
    %v2985 = vadd.f32 %v2961, %v2981
    %v2986 = vadd.f32 %v2962, %v2982
    %v2987 = vadd.f32 %v2963, %v2983
    %v2988 = vadd.f32 %v2964, %v2984
    %2989 = vset.pattern.permute.xlu0 7
    %2990 = vperm.xlu0 %2989, %v2735
    %v2991 = vpop.permute.xlu0 %2990
    %2993 = vset.pattern.permute.xlu0 7
    %2994 = vperm.xlu0 %2993, %v2738
    %v2995 = vpop.permute.xlu0 %2994
    %2997 = vset.pattern.permute.xlu0 7
    %2998 = vperm.xlu0 %2997, %v2743
    %v2999 = vpop.permute.xlu0 %2998
    %3001 = vset.pattern.permute.xlu0 7
    %3002 = vperm.xlu0 %3001, %v2746
    %v3003 = vpop.permute.xlu0 %3002
    %v3005 = vmul.f32 %v2991, %v603
    %v3006 = vmul.f32 %v2995, %v604
    %v3007 = vmul.f32 %v2999, %v605
    %v3008 = vmul.f32 %v3003, %v606
    %v3009 = vadd.f32 %v2985, %v3005
    %v3010 = vadd.f32 %v2986, %v3006
    %v3011 = vadd.f32 %v2987, %v3007
    %v3012 = vadd.f32 %v2988, %v3008
    %3013 = vset.pattern.permute.xlu0 8
    %3014 = vperm.xlu0 %3013, %v2735
    %v3015 = vpop.permute.xlu0 %3014
    %3017 = vset.pattern.permute.xlu0 8
    %3018 = vperm.xlu0 %3017, %v2738
    %v3019 = vpop.permute.xlu0 %3018
    %3021 = vset.pattern.permute.xlu0 8
    %3022 = vperm.xlu0 %3021, %v2743
    %v3023 = vpop.permute.xlu0 %3022
    %3025 = vset.pattern.permute.xlu0 8
    %3026 = vperm.xlu0 %3025, %v2746
    %v3027 = vpop.permute.xlu0 %3026
    %v3029 = vmul.f32 %v3015, %v632
    %v3030 = vmul.f32 %v3019, %v633
    %v3031 = vmul.f32 %v3023, %v634
    %v3032 = vmul.f32 %v3027, %v635
    %v3033 = vadd.f32 %v3009, %v3029
    %v3034 = vadd.f32 %v3010, %v3030
    %v3035 = vadd.f32 %v3011, %v3031
    %v3036 = vadd.f32 %v3012, %v3032
    %v3037 = vsel %vm326, %v3033, -10000.0
    %v3038 = vsel %vm327, %v3034, -10000.0
    %v3039 = vsel %vm328, %v3035, -10000.0
    %v3040 = vsel %vm329, %v3036, -10000.0
    %v3041 = vsel %vm368, %v3037, -inf
    %3042 = vmax.xlane.f32.xlu0 %v3041
    %v3043 = vpop.xlane.xlu0 %3042
    %v3044 = vsel %vm368, %v3038, -inf
    %3045 = vmax.xlane.f32.xlu0 %v3044
    %v3046 = vpop.xlane.xlu0 %3045
    %v3047 = vsel %vm368, %v3039, -inf
    %3048 = vmax.xlane.f32.xlu0 %v3047
    %v3049 = vpop.xlane.xlu0 %3048
    %v3050 = vsel %vm368, %v3040, -inf
    %3051 = vmax.xlane.f32.xlu0 %v3050
    %v3052 = vpop.xlane.xlu0 %3051
    %v3053 = vsub.f32 %v3037, %v3043
    %v3054 = vsub.f32 %v3038, %v3046
    %v3055 = vsub.f32 %v3039, %v3049
    %v3056 = vsub.f32 %v3040, %v3052
    %v3057 = vmul.f32 %v3053, 1.442695
    %v3058 = vpow.pop %v3057
    %v3059 = vmul.f32 %v3054, 1.442695
    %v3060 = vpow.pop %v3059
    %v3061 = vmul.f32 %v3055, 1.442695
    %v3062 = vpow.pop %v3061
    %v3063 = vmul.f32 %v3056, 1.442695
    %v3064 = vpow.pop %v3063
    %v3065 = vsel %vm368, %v3058, 0.0
    %3066 = vadd.xlane.f32.xlu0 %v3065
    %v3067 = vpop.xlane.xlu0 %3066
    %v3068 = vsel %vm368, %v3060, 0.0
    %3069 = vadd.xlane.f32.xlu0 %v3068
    %v3070 = vpop.xlane.xlu0 %3069
    %v3071 = vsel %vm368, %v3062, 0.0
    %3072 = vadd.xlane.f32.xlu0 %v3071
    %v3073 = vpop.xlane.xlu0 %3072
    %v3074 = vsel %vm368, %v3064, 0.0
    %3075 = vadd.xlane.f32.xlu0 %v3074
    %v3076 = vpop.xlane.xlu0 %3075
    %v3077 = vrcp.pop %v3067
    %v3078 = vmul.f32 %v3058, %v3077
    %v3079 = vrcp.pop %v3070
    %v3080 = vmul.f32 %v3060, %v3079
    %v3081 = vrcp.pop %v3073
    %v3082 = vmul.f32 %v3062, %v3081
    %v3083 = vrcp.pop %v3076
    %v3084 = vmul.f32 %v3064, %v3083
    %v3085 = vpack.c.bf16 %v3080, %v3078
    %v3086 = vpack.c.bf16 %v3084, %v3082
    %v3087 = vmul.f32 %v3078, %v334
    %v3088 = vmul.f32 %v3080, %v335
    %v3089 = vmul.f32 %v3082, %v336
    %v3090 = vmul.f32 %v3084, %v337
    %v3091 = vsel %vm368, %v3087, 0.0
    %3092 = vadd.xlane.f32.xlu0 %v3091
    %v3093 = vpop.xlane.xlu0 %3092
    %v3094 = vsel %vm368, %v3088, 0.0
    %3095 = vadd.xlane.f32.xlu0 %v3094
    %v3096 = vpop.xlane.xlu0 %3095
    %v3097 = vsel %vm368, %v3089, 0.0
    %3098 = vadd.xlane.f32.xlu0 %v3097
    %v3099 = vpop.xlane.xlu0 %3098
    %v3100 = vsel %vm368, %v3090, 0.0
    %3101 = vadd.xlane.f32.xlu0 %v3100
    %v3102 = vpop.xlane.xlu0 %3101
    %v3103 = vlaneseq
    %v3104 = vshrl.u32 %v3103, 7
    %v3105 = vsub.s32 0, %v3104
    %v3106 = vrot.slane %v2750, %v3105
    %v3107 = vmul.f32 %v3093, %v3106
    %v3108 = vmul.f32 %v3096, %v3106
    %v3109 = vmul.f32 %v3099, %v3106
    %v3110 = vmul.f32 %v3102, %v3106
    %v3112 = vsel %vm368, %v3085, 0
    %v3115 = vsel %vm368, %v3086, 0
    %3117 = vmatprep.subr.bf16.mxu0 0
    %3118 = vmatpush1.bf16.msra.mxu0 %v2754
    %3119 = vmatprep.subr.bf16.mxu0 0
    %3120 = vmatpush1.bf16.msra.mxu0 %v2755
    %3121 = vmatprep.subr.bf16.mxu0 0
    %3122 = vmatpush1.bf16.msra.mxu0 0
    %3123 = vmatprep.subr.bf16.mxu0 0
    %3124 = vmatpush1.bf16.msra.mxu0 0
    %3125 = vmatprep.subr.bf16.mxu0 0
    %3126 = vmatpush1.bf16.msra.mxu0 0
    %3127 = vmatprep.subr.bf16.mxu0 0
    %3128 = vmatpush1.bf16.msra.mxu0 0
    %3129 = vmatprep.subr.bf16.mxu0 0
    %3130 = vmatpush1.bf16.msra.mxu0 0
    %3131 = vmatprep.subr.bf16.mxu0 0
    %3132 = vmatpush1.bf16.msra.mxu0 0
    %3133 = vmatprep.subr.bf16.mxu0 0
    %3134 = vmatpush1.bf16.msra.mxu0 0
    %3135 = vmatprep.subr.bf16.mxu0 0
    %3136 = vmatpush1.bf16.msra.mxu0 0
    %3137 = vmatprep.subr.bf16.mxu0 0
    %3138 = vmatpush1.bf16.msra.mxu0 0
    %3139 = vmatprep.subr.bf16.mxu0 0
    %3140 = vmatpush1.bf16.msra.mxu0 0
    %3141 = vmatprep.subr.bf16.mxu0 0
    %3142 = vmatpush1.bf16.msra.mxu0 0
    %3143 = vmatprep.subr.bf16.mxu0 0
    %3144 = vmatpush1.bf16.msra.mxu0 0
    %3145 = vmatprep.subr.bf16.mxu0 0
    %3146 = vmatpush1.bf16.msra.mxu0 0
    %3147 = vmatprep.subr.bf16.mxu0 0
    %3148 = vmatpush1.bf16.msra.mxu0 0
    %3149 = vmatprep.mubr.bf16.mxu0 0
    %3150 = vmatmul.mubr.bf16.gmra.mrb[0].mxu0 %v3112
    %v3151 = vpop.f32.mrb[0].mxu0
    %v3152 = vadd.f32 %v3107, %v3151
    %v3153 = vpop.f32.mrb[0].mxu0
    %v3154 = vpop.f32.mrb[0].mxu0
    %v3155 = vadd.f32 %v3108, %v3154
    %v3156 = vpop.f32.mrb[0].mxu0
    %3157 = vmatprep.mubr.bf16.mxu0 0
    %3158 = vmatmul.mubr.bf16.gmra.mrb[0].mxu0 %v3115
    %v3159 = vpop.f32.mrb[0].mxu0
    %v3160 = vadd.f32 %v3109, %v3159
    %v3161 = vpop.f32.mrb[0].mxu0
    %v3162 = vpop.f32.mrb[0].mxu0
    %v3163 = vadd.f32 %v3110, %v3162
    %v3164 = vpop.f32.mrb[0].mxu0
    %3165 = vdwg.mxu0
    %v3166 = vmul.f32 %v3078, %v429
    %v3167 = vmul.f32 %v3080, %v430
    %v3168 = vmul.f32 %v3082, %v431
    %v3169 = vmul.f32 %v3084, %v432
    %v3170 = vsel %vm368, %v3166, 0.0
    %3171 = vadd.xlane.f32.xlu0 %v3170
    %v3172 = vpop.xlane.xlu0 %3171
    %v3173 = vsel %vm368, %v3167, 0.0
    %3174 = vadd.xlane.f32.xlu0 %v3173
    %v3175 = vpop.xlane.xlu0 %3174
    %v3176 = vsel %vm368, %v3168, 0.0
    %3177 = vadd.xlane.f32.xlu0 %v3176
    %v3178 = vpop.xlane.xlu0 %3177
    %v3179 = vsel %vm368, %v3169, 0.0
    %3180 = vadd.xlane.f32.xlu0 %v3179
    %v3181 = vpop.xlane.xlu0 %3180
    %v3182 = vlaneseq
    %v3183 = vshrl.u32 %v3182, 7
    %v3184 = vsub.s32 1, %v3183
    %v3185 = vrot.slane %v2750, %v3184
    %v3186 = vmul.f32 %v3172, %v3185
    %v3187 = vmul.f32 %v3175, %v3185
    %v3188 = vmul.f32 %v3178, %v3185
    %v3189 = vmul.f32 %v3181, %v3185
    %v3190 = vadd.f32 %v3152, %v3186
    %v3191 = vadd.f32 %v3155, %v3187
    %v3192 = vadd.f32 %v3160, %v3188
    %v3193 = vadd.f32 %v3163, %v3189
    %v3194 = vmul.f32 %v3078, %v458
    %v3195 = vmul.f32 %v3080, %v459
    %v3196 = vmul.f32 %v3082, %v460
    %v3197 = vmul.f32 %v3084, %v461
    %v3198 = vsel %vm368, %v3194, 0.0
    %3199 = vadd.xlane.f32.xlu0 %v3198
    %v3200 = vpop.xlane.xlu0 %3199
    %v3201 = vsel %vm368, %v3195, 0.0
    %3202 = vadd.xlane.f32.xlu0 %v3201
    %v3203 = vpop.xlane.xlu0 %3202
    %v3204 = vsel %vm368, %v3196, 0.0
    %3205 = vadd.xlane.f32.xlu0 %v3204
    %v3206 = vpop.xlane.xlu0 %3205
    %v3207 = vsel %vm368, %v3197, 0.0
    %3208 = vadd.xlane.f32.xlu0 %v3207
    %v3209 = vpop.xlane.xlu0 %3208
    %v3210 = vlaneseq
    %v3211 = vshrl.u32 %v3210, 7
    %v3212 = vsub.s32 2, %v3211
    %v3213 = vrot.slane %v2750, %v3212
    %v3214 = vmul.f32 %v3200, %v3213
    %v3215 = vmul.f32 %v3203, %v3213
    %v3216 = vmul.f32 %v3206, %v3213
    %v3217 = vmul.f32 %v3209, %v3213
    %v3218 = vadd.f32 %v3190, %v3214
    %v3219 = vadd.f32 %v3191, %v3215
    %v3220 = vadd.f32 %v3192, %v3216
    %v3221 = vadd.f32 %v3193, %v3217
    %v3222 = vmul.f32 %v3078, %v487
    %v3223 = vmul.f32 %v3080, %v488
    %v3224 = vmul.f32 %v3082, %v489
    %v3225 = vmul.f32 %v3084, %v490
    %v3226 = vsel %vm368, %v3222, 0.0
    %3227 = vadd.xlane.f32.xlu0 %v3226
    %v3228 = vpop.xlane.xlu0 %3227
    %v3229 = vsel %vm368, %v3223, 0.0
    %3230 = vadd.xlane.f32.xlu0 %v3229
    %v3231 = vpop.xlane.xlu0 %3230
    %v3232 = vsel %vm368, %v3224, 0.0
    %3233 = vadd.xlane.f32.xlu0 %v3232
    %v3234 = vpop.xlane.xlu0 %3233
    %v3235 = vsel %vm368, %v3225, 0.0
    %3236 = vadd.xlane.f32.xlu0 %v3235
    %v3237 = vpop.xlane.xlu0 %3236
    %v3238 = vlaneseq
    %v3239 = vshrl.u32 %v3238, 7
    %v3240 = vsub.s32 3, %v3239
    %v3241 = vrot.slane %v2750, %v3240
    %v3242 = vmul.f32 %v3228, %v3241
    %v3243 = vmul.f32 %v3231, %v3241
    %v3244 = vmul.f32 %v3234, %v3241
    %v3245 = vmul.f32 %v3237, %v3241
    %v3246 = vadd.f32 %v3218, %v3242
    %v3247 = vadd.f32 %v3219, %v3243
    %v3248 = vadd.f32 %v3220, %v3244
    %v3249 = vadd.f32 %v3221, %v3245
    %v3250 = vmul.f32 %v3078, %v516
    %v3251 = vmul.f32 %v3080, %v517
    %v3252 = vmul.f32 %v3082, %v518
    %v3253 = vmul.f32 %v3084, %v519
    %v3254 = vsel %vm368, %v3250, 0.0
    %3255 = vadd.xlane.f32.xlu0 %v3254
    %v3256 = vpop.xlane.xlu0 %3255
    %v3257 = vsel %vm368, %v3251, 0.0
    %3258 = vadd.xlane.f32.xlu0 %v3257
    %v3259 = vpop.xlane.xlu0 %3258
    %v3260 = vsel %vm368, %v3252, 0.0
    %3261 = vadd.xlane.f32.xlu0 %v3260
    %v3262 = vpop.xlane.xlu0 %3261
    %v3263 = vsel %vm368, %v3253, 0.0
    %3264 = vadd.xlane.f32.xlu0 %v3263
    %v3265 = vpop.xlane.xlu0 %3264
    %v3266 = vlaneseq
    %v3267 = vshrl.u32 %v3266, 7
    %v3268 = vsub.s32 4, %v3267
    %v3269 = vrot.slane %v2750, %v3268
    %v3270 = vmul.f32 %v3256, %v3269
    %v3271 = vmul.f32 %v3259, %v3269
    %v3272 = vmul.f32 %v3262, %v3269
    %v3273 = vmul.f32 %v3265, %v3269
    %v3274 = vadd.f32 %v3246, %v3270
    %v3275 = vadd.f32 %v3247, %v3271
    %v3276 = vadd.f32 %v3248, %v3272
    %v3277 = vadd.f32 %v3249, %v3273
    %v3278 = vmul.f32 %v3078, %v545
    %v3279 = vmul.f32 %v3080, %v546
    %v3280 = vmul.f32 %v3082, %v547
    %v3281 = vmul.f32 %v3084, %v548
    %v3282 = vsel %vm368, %v3278, 0.0
    %3283 = vadd.xlane.f32.xlu0 %v3282
    %v3284 = vpop.xlane.xlu0 %3283
    %v3285 = vsel %vm368, %v3279, 0.0
    %3286 = vadd.xlane.f32.xlu0 %v3285
    %v3287 = vpop.xlane.xlu0 %3286
    %v3288 = vsel %vm368, %v3280, 0.0
    %3289 = vadd.xlane.f32.xlu0 %v3288
    %v3290 = vpop.xlane.xlu0 %3289
    %v3291 = vsel %vm368, %v3281, 0.0
    %3292 = vadd.xlane.f32.xlu0 %v3291
    %v3293 = vpop.xlane.xlu0 %3292
    %v3294 = vlaneseq
    %v3295 = vshrl.u32 %v3294, 7
    %v3296 = vsub.s32 5, %v3295
    %v3297 = vrot.slane %v2750, %v3296
    %v3298 = vmul.f32 %v3284, %v3297
    %v3299 = vmul.f32 %v3287, %v3297
    %v3300 = vmul.f32 %v3290, %v3297
    %v3301 = vmul.f32 %v3293, %v3297
    %v3302 = vadd.f32 %v3274, %v3298
    %v3303 = vadd.f32 %v3275, %v3299
    %v3304 = vadd.f32 %v3276, %v3300
    %v3305 = vadd.f32 %v3277, %v3301
    %v3306 = vmul.f32 %v3078, %v574
    %v3307 = vmul.f32 %v3080, %v575
    %v3308 = vmul.f32 %v3082, %v576
    %v3309 = vmul.f32 %v3084, %v577
    %v3310 = vsel %vm368, %v3306, 0.0
    %3311 = vadd.xlane.f32.xlu0 %v3310
    %v3312 = vpop.xlane.xlu0 %3311
    %v3313 = vsel %vm368, %v3307, 0.0
    %3314 = vadd.xlane.f32.xlu0 %v3313
    %v3315 = vpop.xlane.xlu0 %3314
    %v3316 = vsel %vm368, %v3308, 0.0
    %3317 = vadd.xlane.f32.xlu0 %v3316
    %v3318 = vpop.xlane.xlu0 %3317
    %v3319 = vsel %vm368, %v3309, 0.0
    %3320 = vadd.xlane.f32.xlu0 %v3319
    %v3321 = vpop.xlane.xlu0 %3320
    %v3322 = vlaneseq
    %v3323 = vshrl.u32 %v3322, 7
    %v3324 = vsub.s32 6, %v3323
    %v3325 = vrot.slane %v2750, %v3324
    %v3326 = vmul.f32 %v3312, %v3325
    %v3327 = vmul.f32 %v3315, %v3325
    %v3328 = vmul.f32 %v3318, %v3325
    %v3329 = vmul.f32 %v3321, %v3325
    %v3330 = vadd.f32 %v3302, %v3326
    %v3331 = vadd.f32 %v3303, %v3327
    %v3332 = vadd.f32 %v3304, %v3328
    %v3333 = vadd.f32 %v3305, %v3329
    %v3334 = vmul.f32 %v3078, %v603
    %v3335 = vmul.f32 %v3080, %v604
    %v3336 = vmul.f32 %v3082, %v605
    %v3337 = vmul.f32 %v3084, %v606
    %v3338 = vsel %vm368, %v3334, 0.0
    %3339 = vadd.xlane.f32.xlu0 %v3338
    %v3340 = vpop.xlane.xlu0 %3339
    %v3341 = vsel %vm368, %v3335, 0.0
    %3342 = vadd.xlane.f32.xlu0 %v3341
    %v3343 = vpop.xlane.xlu0 %3342
    %v3344 = vsel %vm368, %v3336, 0.0
    %3345 = vadd.xlane.f32.xlu0 %v3344
    %v3346 = vpop.xlane.xlu0 %3345
    %v3347 = vsel %vm368, %v3337, 0.0
    %3348 = vadd.xlane.f32.xlu0 %v3347
    %v3349 = vpop.xlane.xlu0 %3348
    %v3350 = vlaneseq
    %v3351 = vshrl.u32 %v3350, 7
    %v3352 = vsub.s32 7, %v3351
    %v3353 = vrot.slane %v2750, %v3352
    %v3354 = vmul.f32 %v3340, %v3353
    %v3355 = vmul.f32 %v3343, %v3353
    %v3356 = vmul.f32 %v3346, %v3353
    %v3357 = vmul.f32 %v3349, %v3353
    %v3358 = vadd.f32 %v3330, %v3354
    %v3359 = vadd.f32 %v3331, %v3355
    %v3360 = vadd.f32 %v3332, %v3356
    %v3361 = vadd.f32 %v3333, %v3357
    %v3362 = vmul.f32 %v3078, %v632
    %v3363 = vmul.f32 %v3080, %v633
    %v3364 = vmul.f32 %v3082, %v634
    %v3365 = vmul.f32 %v3084, %v635
    %v3366 = vsel %vm368, %v3362, 0.0
    %3367 = vadd.xlane.f32.xlu0 %v3366
    %v3368 = vpop.xlane.xlu0 %3367
    %v3369 = vsel %vm368, %v3363, 0.0
    %3370 = vadd.xlane.f32.xlu0 %v3369
    %v3371 = vpop.xlane.xlu0 %3370
    %v3372 = vsel %vm368, %v3364, 0.0
    %3373 = vadd.xlane.f32.xlu0 %v3372
    %v3374 = vpop.xlane.xlu0 %3373
    %v3375 = vsel %vm368, %v3365, 0.0
    %3376 = vadd.xlane.f32.xlu0 %v3375
    %v3377 = vpop.xlane.xlu0 %3376
    %v3378 = vlaneseq
    %v3379 = vshrl.u32 %v3378, 7
    %v3380 = vsub.s32 0, %v3379
    %v3381 = vrot.slane %v2751, %v3380
    %v3382 = vmul.f32 %v3368, %v3381
    %v3383 = vmul.f32 %v3371, %v3381
    %v3384 = vmul.f32 %v3374, %v3381
    %v3385 = vmul.f32 %v3377, %v3381
    %v3386 = vadd.f32 %v3358, %v3382
    %v3387 = vadd.f32 %v3359, %v3383
    %v3388 = vadd.f32 %v3360, %v3384
    %v3389 = vadd.f32 %v3361, %v3385
    %3390 = vset.pattern.permute.xlu0 9
    %3391 = vperm.xlu0 %3390, %v2735
    %v3392 = vpop.permute.xlu0 %3391
    %3394 = vset.pattern.permute.xlu0 9
    %3395 = vperm.xlu0 %3394, %v2738
    %v3396 = vpop.permute.xlu0 %3395
    %3398 = vset.pattern.permute.xlu0 9
    %3399 = vperm.xlu0 %3398, %v2743
    %v3400 = vpop.permute.xlu0 %3399
    %3402 = vset.pattern.permute.xlu0 9
    %3403 = vperm.xlu0 %3402, %v2746
    %v3404 = vpop.permute.xlu0 %3403
    %v3406 = vmul.f32 %v3392, %v334
    %v3407 = vmul.f32 %v3396, %v335
    %v3408 = vmul.f32 %v3400, %v336
    %v3409 = vmul.f32 %v3404, %v337
    %3412 = vrot.lane.b32.xlu0 %v2659, 96
    %v3413 = vpop.permute.xlu0 %3412
    %3414 = vrot.lane.b32.xlu0 %v2660, 96
    %v3415 = vpop.permute.xlu0 %3414
    %3416 = vrot.lane.b32.xlu0 %v2752, 32
    %v3417 = vpop.permute.xlu0 %3416
    %3418 = vrot.lane.b32.xlu0 %v2753, 32
    %v3419 = vpop.permute.xlu0 %3418
    %v3421 = vsel %vm368, %v3413, 0
    %v3424 = vsel %vm368, %v3415, 0
    %v3427 = vsel %vm368, %v3417, 0
    %v3430 = vsel %vm368, %v3419, 0
    %3432 = vmatprep.subr.bf16.mxu0 0
    %3433 = vmatpush1.bf16.xpose.msra.mxu0 %v3427
    %3434 = vmatprep.subr.bf16.mxu0 0
    %3435 = vmatpush1.bf16.xpose.msra.mxu0 %v3430
    %3436 = vmatprep.subr.bf16.mxu0 0
    %3437 = vmatpush1.bf16.xpose.msra.mxu0 0
    %3438 = vmatprep.subr.bf16.mxu0 0
    %3439 = vmatpush1.bf16.xpose.msra.mxu0 0
    %3440 = vmatprep.subr.bf16.mxu0 0
    %3441 = vmatpush1.bf16.xpose.msra.mxu0 0
    %3442 = vmatprep.subr.bf16.mxu0 0
    %3443 = vmatpush1.bf16.xpose.msra.mxu0 0
    %3444 = vmatprep.subr.bf16.mxu0 0
    %3445 = vmatpush1.bf16.xpose.msra.mxu0 0
    %3446 = vmatprep.subr.bf16.mxu0 0
    %3447 = vmatpush1.bf16.xpose.msra.mxu0 0
    %3448 = vmatprep.subr.bf16.mxu0 0
    %3449 = vmatpush1.bf16.xpose.msra.mxu0 0
    %3450 = vmatprep.subr.bf16.mxu0 0
    %3451 = vmatpush1.bf16.xpose.msra.mxu0 0
    %3452 = vmatprep.subr.bf16.mxu0 0
    %3453 = vmatpush1.bf16.xpose.msra.mxu0 0
    %3454 = vmatprep.subr.bf16.mxu0 0
    %3455 = vmatpush1.bf16.xpose.msra.mxu0 0
    %3456 = vmatprep.subr.bf16.mxu0 0
    %3457 = vmatpush1.bf16.xpose.msra.mxu0 0
    %3458 = vmatprep.subr.bf16.mxu0 0
    %3459 = vmatpush1.bf16.xpose.msra.mxu0 0
    %3460 = vmatprep.subr.bf16.mxu0 0
    %3461 = vmatpush1.bf16.xpose.msra.mxu0 0
    %3462 = vmatprep.subr.bf16.mxu0 0
    %3463 = vmatpush1.bf16.xpose.msra.mxu0 0
    %3464 = vmatprep.mubr.bf16.mxu0 0
    %3465 = vmatmul.mubr.bf16.gmra.mrb[0].mxu0 %v3421
    %v3466 = vpop.f32.mrb[0].mxu0
    %v3467 = vadd.f32 %v3406, %v3466
    %v3468 = vpop.f32.mrb[0].mxu0
    %v3469 = vpop.f32.mrb[0].mxu0
    %v3470 = vadd.f32 %v3407, %v3469
    %v3471 = vpop.f32.mrb[0].mxu0
    %3472 = vmatprep.mubr.bf16.mxu0 0
    %3473 = vmatmul.mubr.bf16.gmra.mrb[0].mxu0 %v3424
    %v3474 = vpop.f32.mrb[0].mxu0
    %v3475 = vadd.f32 %v3408, %v3474
    %v3476 = vpop.f32.mrb[0].mxu0
    %v3477 = vpop.f32.mrb[0].mxu0
    %v3478 = vadd.f32 %v3409, %v3477
    %v3479 = vpop.f32.mrb[0].mxu0
    %3480 = vdwg.mxu0
    %3481 = vset.pattern.permute.xlu0 10
    %3482 = vperm.xlu0 %3481, %v2735
    %v3483 = vpop.permute.xlu0 %3482
    %3485 = vset.pattern.permute.xlu0 10
    %3486 = vperm.xlu0 %3485, %v2738
    %v3487 = vpop.permute.xlu0 %3486
    %3489 = vset.pattern.permute.xlu0 10
    %3490 = vperm.xlu0 %3489, %v2743
    %v3491 = vpop.permute.xlu0 %3490
    %3493 = vset.pattern.permute.xlu0 10
    %3494 = vperm.xlu0 %3493, %v2746
    %v3495 = vpop.permute.xlu0 %3494
    %v3497 = vmul.f32 %v3483, %v429
    %v3498 = vmul.f32 %v3487, %v430
    %v3499 = vmul.f32 %v3491, %v431
    %v3500 = vmul.f32 %v3495, %v432
    %v3501 = vadd.f32 %v3467, %v3497
    %v3502 = vadd.f32 %v3470, %v3498
    %v3503 = vadd.f32 %v3475, %v3499
    %v3504 = vadd.f32 %v3478, %v3500
    %3505 = vset.pattern.permute.xlu0 11
    %3506 = vperm.xlu0 %3505, %v2735
    %v3507 = vpop.permute.xlu0 %3506
    %3509 = vset.pattern.permute.xlu0 11
    %3510 = vperm.xlu0 %3509, %v2738
    %v3511 = vpop.permute.xlu0 %3510
    %3513 = vset.pattern.permute.xlu0 11
    %3514 = vperm.xlu0 %3513, %v2743
    %v3515 = vpop.permute.xlu0 %3514
    %3517 = vset.pattern.permute.xlu0 11
    %3518 = vperm.xlu0 %3517, %v2746
    %v3519 = vpop.permute.xlu0 %3518
    %v3521 = vmul.f32 %v3507, %v458
    %v3522 = vmul.f32 %v3511, %v459
    %v3523 = vmul.f32 %v3515, %v460
    %v3524 = vmul.f32 %v3519, %v461
    %v3525 = vadd.f32 %v3501, %v3521
    %v3526 = vadd.f32 %v3502, %v3522
    %v3527 = vadd.f32 %v3503, %v3523
    %v3528 = vadd.f32 %v3504, %v3524
    %3529 = vset.pattern.permute.xlu0 12
    %3530 = vperm.xlu0 %3529, %v2735
    %v3531 = vpop.permute.xlu0 %3530
    %3533 = vset.pattern.permute.xlu0 12
    %3534 = vperm.xlu0 %3533, %v2738
    %v3535 = vpop.permute.xlu0 %3534
    %3537 = vset.pattern.permute.xlu0 12
    %3538 = vperm.xlu0 %3537, %v2743
    %v3539 = vpop.permute.xlu0 %3538
    %3541 = vset.pattern.permute.xlu0 12
    %3542 = vperm.xlu0 %3541, %v2746
    %v3543 = vpop.permute.xlu0 %3542
    %v3545 = vmul.f32 %v3531, %v487
    %v3546 = vmul.f32 %v3535, %v488
    %v3547 = vmul.f32 %v3539, %v489
    %v3548 = vmul.f32 %v3543, %v490
    %v3549 = vadd.f32 %v3525, %v3545
    %v3550 = vadd.f32 %v3526, %v3546
    %v3551 = vadd.f32 %v3527, %v3547
    %v3552 = vadd.f32 %v3528, %v3548
    %3553 = vset.pattern.permute.xlu0 13
    %3554 = vperm.xlu0 %3553, %v2735
    %v3555 = vpop.permute.xlu0 %3554
    %3557 = vset.pattern.permute.xlu0 13
    %3558 = vperm.xlu0 %3557, %v2738
    %v3559 = vpop.permute.xlu0 %3558
    %3561 = vset.pattern.permute.xlu0 13
    %3562 = vperm.xlu0 %3561, %v2743
    %v3563 = vpop.permute.xlu0 %3562
    %3565 = vset.pattern.permute.xlu0 13
    %3566 = vperm.xlu0 %3565, %v2746
    %v3567 = vpop.permute.xlu0 %3566
    %v3569 = vmul.f32 %v3555, %v516
    %v3570 = vmul.f32 %v3559, %v517
    %v3571 = vmul.f32 %v3563, %v518
    %v3572 = vmul.f32 %v3567, %v519
    %v3573 = vadd.f32 %v3549, %v3569
    %v3574 = vadd.f32 %v3550, %v3570
    %v3575 = vadd.f32 %v3551, %v3571
    %v3576 = vadd.f32 %v3552, %v3572
    %3577 = vset.pattern.permute.xlu0 14
    %3578 = vperm.xlu0 %3577, %v2735
    %v3579 = vpop.permute.xlu0 %3578
    %3581 = vset.pattern.permute.xlu0 14
    %3582 = vperm.xlu0 %3581, %v2738
    %v3583 = vpop.permute.xlu0 %3582
    %3585 = vset.pattern.permute.xlu0 14
    %3586 = vperm.xlu0 %3585, %v2743
    %v3587 = vpop.permute.xlu0 %3586
    %3589 = vset.pattern.permute.xlu0 14
    %3590 = vperm.xlu0 %3589, %v2746
    %v3591 = vpop.permute.xlu0 %3590
    %v3593 = vmul.f32 %v3579, %v545
    %v3594 = vmul.f32 %v3583, %v546
    %v3595 = vmul.f32 %v3587, %v547
    %v3596 = vmul.f32 %v3591, %v548
    %v3597 = vadd.f32 %v3573, %v3593
    %v3598 = vadd.f32 %v3574, %v3594
    %v3599 = vadd.f32 %v3575, %v3595
    %v3600 = vadd.f32 %v3576, %v3596
    %3601 = vset.pattern.permute.xlu0 15
    %3602 = vperm.xlu0 %3601, %v2735
    %v3603 = vpop.permute.xlu0 %3602
    %3605 = vset.pattern.permute.xlu0 15
    %3606 = vperm.xlu0 %3605, %v2738
    %v3607 = vpop.permute.xlu0 %3606
    %3609 = vset.pattern.permute.xlu0 15
    %3610 = vperm.xlu0 %3609, %v2743
    %v3611 = vpop.permute.xlu0 %3610
    %3613 = vset.pattern.permute.xlu0 15
    %3614 = vperm.xlu0 %3613, %v2746
    %v3615 = vpop.permute.xlu0 %3614
    %v3617 = vmul.f32 %v3603, %v574
    %v3618 = vmul.f32 %v3607, %v575
    %v3619 = vmul.f32 %v3611, %v576
    %v3620 = vmul.f32 %v3615, %v577
    %v3621 = vadd.f32 %v3597, %v3617
    %v3622 = vadd.f32 %v3598, %v3618
    %v3623 = vadd.f32 %v3599, %v3619
    %v3624 = vadd.f32 %v3600, %v3620
    %3625 = vset.pattern.permute.xlu0 16
    %3626 = vperm.xlu0 %3625, %v2735
    %v3627 = vpop.permute.xlu0 %3626
    %3629 = vset.pattern.permute.xlu0 16
    %3630 = vperm.xlu0 %3629, %v2738
    %v3631 = vpop.permute.xlu0 %3630
    %3633 = vset.pattern.permute.xlu0 16
    %3634 = vperm.xlu0 %3633, %v2743
    %v3635 = vpop.permute.xlu0 %3634
    %3637 = vset.pattern.permute.xlu0 16
    %3638 = vperm.xlu0 %3637, %v2746
    %v3639 = vpop.permute.xlu0 %3638
    %v3641 = vmul.f32 %v3627, %v603
    %v3642 = vmul.f32 %v3631, %v604
    %v3643 = vmul.f32 %v3635, %v605
    %v3644 = vmul.f32 %v3639, %v606
    %v3645 = vadd.f32 %v3621, %v3641
    %v3646 = vadd.f32 %v3622, %v3642
    %v3647 = vadd.f32 %v3623, %v3643
    %v3648 = vadd.f32 %v3624, %v3644
    %3649 = vset.pattern.permute.xlu0 17
    %3650 = vperm.xlu0 %3649, %v2735
    %v3651 = vpop.permute.xlu0 %3650
    %3653 = vset.pattern.permute.xlu0 17
    %3654 = vperm.xlu0 %3653, %v2738
    %v3655 = vpop.permute.xlu0 %3654
    %3657 = vset.pattern.permute.xlu0 17
    %3658 = vperm.xlu0 %3657, %v2743
    %v3659 = vpop.permute.xlu0 %3658
    %3661 = vset.pattern.permute.xlu0 17
    %3662 = vperm.xlu0 %3661, %v2746
    %v3663 = vpop.permute.xlu0 %3662
    %v3665 = vmul.f32 %v3651, %v632
    %v3666 = vmul.f32 %v3655, %v633
    %v3667 = vmul.f32 %v3659, %v634
    %v3668 = vmul.f32 %v3663, %v635
    %v3669 = vadd.f32 %v3645, %v3665
    %v3670 = vadd.f32 %v3646, %v3666
    %v3671 = vadd.f32 %v3647, %v3667
    %v3672 = vadd.f32 %v3648, %v3668
    %v3673 = vsel %vm326, %v3669, -10000.0
    %v3674 = vsel %vm327, %v3670, -10000.0
    %v3675 = vsel %vm328, %v3671, -10000.0
    %v3676 = vsel %vm329, %v3672, -10000.0
    %v3677 = vsel %vm368, %v3673, -inf
    %3678 = vmax.xlane.f32.xlu0 %v3677
    %v3679 = vpop.xlane.xlu0 %3678
    %v3680 = vsel %vm368, %v3674, -inf
    %3681 = vmax.xlane.f32.xlu0 %v3680
    %v3682 = vpop.xlane.xlu0 %3681
    %v3683 = vsel %vm368, %v3675, -inf
    %3684 = vmax.xlane.f32.xlu0 %v3683
    %v3685 = vpop.xlane.xlu0 %3684
    %v3686 = vsel %vm368, %v3676, -inf
    %3687 = vmax.xlane.f32.xlu0 %v3686
    %v3688 = vpop.xlane.xlu0 %3687
    %v3689 = vsub.f32 %v3673, %v3679
    %v3690 = vsub.f32 %v3674, %v3682
    %v3691 = vsub.f32 %v3675, %v3685
    %v3692 = vsub.f32 %v3676, %v3688
    %v3693 = vmul.f32 %v3689, 1.442695
    %v3694 = vpow.pop %v3693
    %v3695 = vmul.f32 %v3690, 1.442695
    %v3696 = vpow.pop %v3695
    %v3697 = vmul.f32 %v3691, 1.442695
    %v3698 = vpow.pop %v3697
    %v3699 = vmul.f32 %v3692, 1.442695
    %v3700 = vpow.pop %v3699
    %v3701 = vsel %vm368, %v3694, 0.0
    %3702 = vadd.xlane.f32.xlu0 %v3701
    %v3703 = vpop.xlane.xlu0 %3702
    %v3704 = vsel %vm368, %v3696, 0.0
    %3705 = vadd.xlane.f32.xlu0 %v3704
    %v3706 = vpop.xlane.xlu0 %3705
    %v3707 = vsel %vm368, %v3698, 0.0
    %3708 = vadd.xlane.f32.xlu0 %v3707
    %v3709 = vpop.xlane.xlu0 %3708
    %v3710 = vsel %vm368, %v3700, 0.0
    %3711 = vadd.xlane.f32.xlu0 %v3710
    %v3712 = vpop.xlane.xlu0 %3711
    %v3713 = vrcp.pop %v3703
    %v3714 = vmul.f32 %v3694, %v3713
    %v3715 = vrcp.pop %v3706
    %v3716 = vmul.f32 %v3696, %v3715
    %v3717 = vrcp.pop %v3709
    %v3718 = vmul.f32 %v3698, %v3717
    %v3719 = vrcp.pop %v3712
    %v3720 = vmul.f32 %v3700, %v3719
    %v3721 = vpack.c.bf16 %v3716, %v3714
    %v3722 = vpack.c.bf16 %v3720, %v3718
    %v3723 = vmul.f32 %v3714, %v334
    %v3724 = vmul.f32 %v3716, %v335
    %v3725 = vmul.f32 %v3718, %v336
    %v3726 = vmul.f32 %v3720, %v337
    %v3727 = vsel %vm368, %v3723, 0.0
    %3728 = vadd.xlane.f32.xlu0 %v3727
    %v3729 = vpop.xlane.xlu0 %3728
    %v3730 = vsel %vm368, %v3724, 0.0
    %3731 = vadd.xlane.f32.xlu0 %v3730
    %v3732 = vpop.xlane.xlu0 %3731
    %v3733 = vsel %vm368, %v3725, 0.0
    %3734 = vadd.xlane.f32.xlu0 %v3733
    %v3735 = vpop.xlane.xlu0 %3734
    %v3736 = vsel %vm368, %v3726, 0.0
    %3737 = vadd.xlane.f32.xlu0 %v3736
    %v3738 = vpop.xlane.xlu0 %3737
    %v3739 = vmul.f32 %v3729, %v3106
    %v3740 = vmul.f32 %v3732, %v3106
    %v3741 = vmul.f32 %v3735, %v3106
    %v3742 = vmul.f32 %v3738, %v3106
    %3745 = vrot.lane.b32.xlu0 %v2754, 96
    %v3746 = vpop.permute.xlu0 %3745
    %3747 = vrot.lane.b32.xlu0 %v2755, 96
    %v3748 = vpop.permute.xlu0 %3747
    %v3752 = vsel %vm368, %v3721, 0
    %v3755 = vsel %vm368, %v3722, 0
    %3757 = vmatprep.subr.bf16.mxu0 0
    %3758 = vmatpush1.bf16.msra.mxu0 %v3746
    %3759 = vmatprep.subr.bf16.mxu0 0
    %3760 = vmatpush1.bf16.msra.mxu0 %v3748
    %3761 = vmatprep.subr.bf16.mxu0 0
    %3762 = vmatpush1.bf16.msra.mxu0 0
    %3763 = vmatprep.subr.bf16.mxu0 0
    %3764 = vmatpush1.bf16.msra.mxu0 0
    %3765 = vmatprep.subr.bf16.mxu0 0
    %3766 = vmatpush1.bf16.msra.mxu0 0
    %3767 = vmatprep.subr.bf16.mxu0 0
    %3768 = vmatpush1.bf16.msra.mxu0 0
    %3769 = vmatprep.subr.bf16.mxu0 0
    %3770 = vmatpush1.bf16.msra.mxu0 0
    %3771 = vmatprep.subr.bf16.mxu0 0
    %3772 = vmatpush1.bf16.msra.mxu0 0
    %3773 = vmatprep.subr.bf16.mxu0 0
    %3774 = vmatpush1.bf16.msra.mxu0 0
    %3775 = vmatprep.subr.bf16.mxu0 0
    %3776 = vmatpush1.bf16.msra.mxu0 0
    %3777 = vmatprep.subr.bf16.mxu0 0
    %3778 = vmatpush1.bf16.msra.mxu0 0
    %3779 = vmatprep.subr.bf16.mxu0 0
    %3780 = vmatpush1.bf16.msra.mxu0 0
    %3781 = vmatprep.subr.bf16.mxu0 0
    %3782 = vmatpush1.bf16.msra.mxu0 0
    %3783 = vmatprep.subr.bf16.mxu0 0
    %3784 = vmatpush1.bf16.msra.mxu0 0
    %3785 = vmatprep.subr.bf16.mxu0 0
    %3786 = vmatpush1.bf16.msra.mxu0 0
    %3787 = vmatprep.subr.bf16.mxu0 0
    %3788 = vmatpush1.bf16.msra.mxu0 0
    %3789 = vmatprep.mubr.bf16.mxu0 0
    %3790 = vmatmul.mubr.bf16.gmra.mrb[0].mxu0 %v3752
    %v3791 = vpop.f32.mrb[0].mxu0
    %v3792 = vadd.f32 %v3739, %v3791
    %v3793 = vpop.f32.mrb[0].mxu0
    %v3794 = vpop.f32.mrb[0].mxu0
    %v3795 = vadd.f32 %v3740, %v3794
    %v3796 = vpop.f32.mrb[0].mxu0
    %3797 = vmatprep.mubr.bf16.mxu0 0
    %3798 = vmatmul.mubr.bf16.gmra.mrb[0].mxu0 %v3755
    %v3799 = vpop.f32.mrb[0].mxu0
    %v3800 = vadd.f32 %v3741, %v3799
    %v3801 = vpop.f32.mrb[0].mxu0
    %v3802 = vpop.f32.mrb[0].mxu0
    %v3803 = vadd.f32 %v3742, %v3802
    %v3804 = vpop.f32.mrb[0].mxu0
    %3805 = vdwg.mxu0
    %v3806 = vmul.f32 %v3714, %v429
    %v3807 = vmul.f32 %v3716, %v430
    %v3808 = vmul.f32 %v3718, %v431
    %v3809 = vmul.f32 %v3720, %v432
    %v3810 = vsel %vm368, %v3806, 0.0
    %3811 = vadd.xlane.f32.xlu0 %v3810
    %v3812 = vpop.xlane.xlu0 %3811
    %v3813 = vsel %vm368, %v3807, 0.0
    %3814 = vadd.xlane.f32.xlu0 %v3813
    %v3815 = vpop.xlane.xlu0 %3814
    %v3816 = vsel %vm368, %v3808, 0.0
    %3817 = vadd.xlane.f32.xlu0 %v3816
    %v3818 = vpop.xlane.xlu0 %3817
    %v3819 = vsel %vm368, %v3809, 0.0
    %3820 = vadd.xlane.f32.xlu0 %v3819
    %v3821 = vpop.xlane.xlu0 %3820
    %v3822 = vmul.f32 %v3812, %v3185
    %v3823 = vmul.f32 %v3815, %v3185
    %v3824 = vmul.f32 %v3818, %v3185
    %v3825 = vmul.f32 %v3821, %v3185
    %v3826 = vadd.f32 %v3792, %v3822
    %v3827 = vadd.f32 %v3795, %v3823
    %v3828 = vadd.f32 %v3800, %v3824
    %v3829 = vadd.f32 %v3803, %v3825
    %v3830 = vmul.f32 %v3714, %v458
    %v3831 = vmul.f32 %v3716, %v459
    %v3832 = vmul.f32 %v3718, %v460
    %v3833 = vmul.f32 %v3720, %v461
    %v3834 = vsel %vm368, %v3830, 0.0
    %3835 = vadd.xlane.f32.xlu0 %v3834
    %v3836 = vpop.xlane.xlu0 %3835
    %v3837 = vsel %vm368, %v3831, 0.0
    %3838 = vadd.xlane.f32.xlu0 %v3837
    %v3839 = vpop.xlane.xlu0 %3838
    %v3840 = vsel %vm368, %v3832, 0.0
    %3841 = vadd.xlane.f32.xlu0 %v3840
    %v3842 = vpop.xlane.xlu0 %3841
    %v3843 = vsel %vm368, %v3833, 0.0
    %3844 = vadd.xlane.f32.xlu0 %v3843
    %v3845 = vpop.xlane.xlu0 %3844
    %v3846 = vmul.f32 %v3836, %v3213
    %v3847 = vmul.f32 %v3839, %v3213
    %v3848 = vmul.f32 %v3842, %v3213
    %v3849 = vmul.f32 %v3845, %v3213
    %v3850 = vadd.f32 %v3826, %v3846
    %v3851 = vadd.f32 %v3827, %v3847
    %v3852 = vadd.f32 %v3828, %v3848
    %v3853 = vadd.f32 %v3829, %v3849
    %v3854 = vmul.f32 %v3714, %v487
    %v3855 = vmul.f32 %v3716, %v488
    %v3856 = vmul.f32 %v3718, %v489
    %v3857 = vmul.f32 %v3720, %v490
    %v3858 = vsel %vm368, %v3854, 0.0
    %3859 = vadd.xlane.f32.xlu0 %v3858
    %v3860 = vpop.xlane.xlu0 %3859
    %v3861 = vsel %vm368, %v3855, 0.0
    %3862 = vadd.xlane.f32.xlu0 %v3861
    %v3863 = vpop.xlane.xlu0 %3862
    %v3864 = vsel %vm368, %v3856, 0.0
    %3865 = vadd.xlane.f32.xlu0 %v3864
    %v3866 = vpop.xlane.xlu0 %3865
    %v3867 = vsel %vm368, %v3857, 0.0
    %3868 = vadd.xlane.f32.xlu0 %v3867
    %v3869 = vpop.xlane.xlu0 %3868
    %v3870 = vmul.f32 %v3860, %v3241
    %v3871 = vmul.f32 %v3863, %v3241
    %v3872 = vmul.f32 %v3866, %v3241
    %v3873 = vmul.f32 %v3869, %v3241
    %v3874 = vadd.f32 %v3850, %v3870
    %v3875 = vadd.f32 %v3851, %v3871
    %v3876 = vadd.f32 %v3852, %v3872
    %v3877 = vadd.f32 %v3853, %v3873
    %v3878 = vmul.f32 %v3714, %v516
    %v3879 = vmul.f32 %v3716, %v517
    %v3880 = vmul.f32 %v3718, %v518
    %v3881 = vmul.f32 %v3720, %v519
    %v3882 = vsel %vm368, %v3878, 0.0
    %3883 = vadd.xlane.f32.xlu0 %v3882
    %v3884 = vpop.xlane.xlu0 %3883
    %v3885 = vsel %vm368, %v3879, 0.0
    %3886 = vadd.xlane.f32.xlu0 %v3885
    %v3887 = vpop.xlane.xlu0 %3886
    %v3888 = vsel %vm368, %v3880, 0.0
    %3889 = vadd.xlane.f32.xlu0 %v3888
    %v3890 = vpop.xlane.xlu0 %3889
    %v3891 = vsel %vm368, %v3881, 0.0
    %3892 = vadd.xlane.f32.xlu0 %v3891
    %v3893 = vpop.xlane.xlu0 %3892
    %v3894 = vmul.f32 %v3884, %v3269
    %v3895 = vmul.f32 %v3887, %v3269
    %v3896 = vmul.f32 %v3890, %v3269
    %v3897 = vmul.f32 %v3893, %v3269
    %v3898 = vadd.f32 %v3874, %v3894
    %v3899 = vadd.f32 %v3875, %v3895
    %v3900 = vadd.f32 %v3876, %v3896
    %v3901 = vadd.f32 %v3877, %v3897
    %v3902 = vmul.f32 %v3714, %v545
    %v3903 = vmul.f32 %v3716, %v546
    %v3904 = vmul.f32 %v3718, %v547
    %v3905 = vmul.f32 %v3720, %v548
    %v3906 = vsel %vm368, %v3902, 0.0
    %3907 = vadd.xlane.f32.xlu0 %v3906
    %v3908 = vpop.xlane.xlu0 %3907
    %v3909 = vsel %vm368, %v3903, 0.0
    %3910 = vadd.xlane.f32.xlu0 %v3909
    %v3911 = vpop.xlane.xlu0 %3910
    %v3912 = vsel %vm368, %v3904, 0.0
    %3913 = vadd.xlane.f32.xlu0 %v3912
    %v3914 = vpop.xlane.xlu0 %3913
    %v3915 = vsel %vm368, %v3905, 0.0
    %3916 = vadd.xlane.f32.xlu0 %v3915
    %v3917 = vpop.xlane.xlu0 %3916
    %v3918 = vmul.f32 %v3908, %v3297
    %v3919 = vmul.f32 %v3911, %v3297
    %v3920 = vmul.f32 %v3914, %v3297
    %v3921 = vmul.f32 %v3917, %v3297
    %v3922 = vadd.f32 %v3898, %v3918
    %v3923 = vadd.f32 %v3899, %v3919
    %v3924 = vadd.f32 %v3900, %v3920
    %v3925 = vadd.f32 %v3901, %v3921
    %v3926 = vmul.f32 %v3714, %v574
    %v3927 = vmul.f32 %v3716, %v575
    %v3928 = vmul.f32 %v3718, %v576
    %v3929 = vmul.f32 %v3720, %v577
    %v3930 = vsel %vm368, %v3926, 0.0
    %3931 = vadd.xlane.f32.xlu0 %v3930
    %v3932 = vpop.xlane.xlu0 %3931
    %v3933 = vsel %vm368, %v3927, 0.0
    %3934 = vadd.xlane.f32.xlu0 %v3933
    %v3935 = vpop.xlane.xlu0 %3934
    %v3936 = vsel %vm368, %v3928, 0.0
    %3937 = vadd.xlane.f32.xlu0 %v3936
    %v3938 = vpop.xlane.xlu0 %3937
    %v3939 = vsel %vm368, %v3929, 0.0
    %3940 = vadd.xlane.f32.xlu0 %v3939
    %v3941 = vpop.xlane.xlu0 %3940
    %v3942 = vmul.f32 %v3932, %v3325
    %v3943 = vmul.f32 %v3935, %v3325
    %v3944 = vmul.f32 %v3938, %v3325
    %v3945 = vmul.f32 %v3941, %v3325
    %v3946 = vadd.f32 %v3922, %v3942
    %v3947 = vadd.f32 %v3923, %v3943
    %v3948 = vadd.f32 %v3924, %v3944
    %v3949 = vadd.f32 %v3925, %v3945
    %v3950 = vmul.f32 %v3714, %v603
    %v3951 = vmul.f32 %v3716, %v604
    %v3952 = vmul.f32 %v3718, %v605
    %v3953 = vmul.f32 %v3720, %v606
    %v3954 = vsel %vm368, %v3950, 0.0
    %3955 = vadd.xlane.f32.xlu0 %v3954
    %v3956 = vpop.xlane.xlu0 %3955
    %v3957 = vsel %vm368, %v3951, 0.0
    %3958 = vadd.xlane.f32.xlu0 %v3957
    %v3959 = vpop.xlane.xlu0 %3958
    %v3960 = vsel %vm368, %v3952, 0.0
    %3961 = vadd.xlane.f32.xlu0 %v3960
    %v3962 = vpop.xlane.xlu0 %3961
    %v3963 = vsel %vm368, %v3953, 0.0
    %3964 = vadd.xlane.f32.xlu0 %v3963
    %v3965 = vpop.xlane.xlu0 %3964
    %v3966 = vmul.f32 %v3956, %v3353
    %v3967 = vmul.f32 %v3959, %v3353
    %v3968 = vmul.f32 %v3962, %v3353
    %v3969 = vmul.f32 %v3965, %v3353
    %v3970 = vadd.f32 %v3946, %v3966
    %v3971 = vadd.f32 %v3947, %v3967
    %v3972 = vadd.f32 %v3948, %v3968
    %v3973 = vadd.f32 %v3949, %v3969
    %v3974 = vmul.f32 %v3714, %v632
    %v3975 = vmul.f32 %v3716, %v633
    %v3976 = vmul.f32 %v3718, %v634
    %v3977 = vmul.f32 %v3720, %v635
    %v3978 = vsel %vm368, %v3974, 0.0
    %3979 = vadd.xlane.f32.xlu0 %v3978
    %v3980 = vpop.xlane.xlu0 %3979
    %v3981 = vsel %vm368, %v3975, 0.0
    %3982 = vadd.xlane.f32.xlu0 %v3981
    %v3983 = vpop.xlane.xlu0 %3982
    %v3984 = vsel %vm368, %v3976, 0.0
    %3985 = vadd.xlane.f32.xlu0 %v3984
    %v3986 = vpop.xlane.xlu0 %3985
    %v3987 = vsel %vm368, %v3977, 0.0
    %3988 = vadd.xlane.f32.xlu0 %v3987
    %v3989 = vpop.xlane.xlu0 %3988
    %v3990 = vmul.f32 %v3980, %v3381
    %v3991 = vmul.f32 %v3983, %v3381
    %v3992 = vmul.f32 %v3986, %v3381
    %v3993 = vmul.f32 %v3989, %v3381
    %v3994 = vadd.f32 %v3970, %v3990
    %v3995 = vadd.f32 %v3971, %v3991
    %v3996 = vadd.f32 %v3972, %v3992
    %v3997 = vadd.f32 %v3973, %v3993
    %4002 = vrot.lane.b32.xlu0 %v3994, 32
    %v4003 = vpop.permute.xlu0 %4002
    %4004 = vrot.lane.b32.xlu0 %v3995, 32
    %v4005 = vpop.permute.xlu0 %4004
    %4006 = vrot.lane.b32.xlu0 %v3996, 32
    %v4007 = vpop.permute.xlu0 %4006
    %4008 = vrot.lane.b32.xlu0 %v3997, 32
    %v4009 = vpop.permute.xlu0 %4008
    %v4014 = vsel %vm368, %v3386, %v4003
    %v4015 = vsel %vm368, %v3387, %v4005
    %v4016 = vsel %vm368, %v3388, %v4007
    %v4017 = vsel %vm368, %v3389, %v4009
    %v4018 = vpack.c.bf16 %v4015, %v4014
    %v4019 = vpack.c.bf16 %v4017, %v4016
    %s4020 = scalar_lea.vmem %s7, 32
    %v4021 = vld [vmem:[%s4020] sm:$0xf]
    %v4022 = vld [vmem:[%s4020 + $0x4] sm:$0xf]
    %v4023 = vld [vmem:[%s4020 + $0x8] sm:$0xf]
    %v4024 = vld [vmem:[%s4020 + $0xc] sm:$0xf]
    %v4025 = vld [vmem:[%s4020 + $0x10] sm:$0xf]
    %v4026 = vld [vmem:[%s4020 + $0x14] sm:$0xf]
    %v4027 = vld [vmem:[%s4020 + $0x18] sm:$0xf]
    %v4028 = vld [vmem:[%s4020 + $0x1c] sm:$0xf]
    %s4029 = scalar_lea.vmem %s8, 1
    %v4030 = vld [vmem:[%s4029] sm:$0x1]
    %v4032 = vlaneseq
    %v4033 = vshrl.u32 %v4032, 7
    %v4034 = vsub.s32 0, %v4033
    %v4035 = vrot.slane %v4030, %v4034
    %v4045 = vunpack.c.l.b16 %v4021
    %v4046 = vunpack.c.l.b16 %v4022
    %v4047 = vunpack.c.l.b16 %v4023
    %v4048 = vunpack.c.l.b16 %v4024
    %v4049 = vunpack.c.l.b16 %v4025
    %v4050 = vunpack.c.l.b16 %v4026
    %v4051 = vunpack.c.l.b16 %v4027
    %v4052 = vunpack.c.l.b16 %v4028
    %v4053 = vpack.c.b16 %v4046, %v4045
    %v4054 = vpack.c.b16 %v4048, %v4047
    %v4055 = vpack.c.b16 %v4050, %v4049
    %v4056 = vpack.c.b16 %v4052, %v4051
    %v4062 = vsel %vm167, %v4018, 0
    %v4065 = vsel %vm167, %v4019, 0
    %4067 = vmatprep.subr.bf16.mxu0 0
    %4068 = vmatpush1.bf16.msra.mxu0 %v4053
    %4069 = vmatprep.subr.bf16.mxu0 0
    %4070 = vmatpush1.bf16.msra.mxu0 %v4054
    %4071 = vmatprep.subr.bf16.mxu0 0
    %4072 = vmatpush1.bf16.msra.mxu0 %v4055
    %4073 = vmatprep.subr.bf16.mxu0 0
    %4074 = vmatpush1.bf16.msra.mxu0 %v4056
    %4075 = vmatprep.subr.bf16.mxu0 0
    %4076 = vmatpush1.bf16.msra.mxu0 0
    %4077 = vmatprep.subr.bf16.mxu0 0
    %4078 = vmatpush1.bf16.msra.mxu0 0
    %4079 = vmatprep.subr.bf16.mxu0 0
    %4080 = vmatpush1.bf16.msra.mxu0 0
    %4081 = vmatprep.subr.bf16.mxu0 0
    %4082 = vmatpush1.bf16.msra.mxu0 0
    %4083 = vmatprep.subr.bf16.mxu0 0
    %4084 = vmatpush1.bf16.msra.mxu0 0
    %4085 = vmatprep.subr.bf16.mxu0 0
    %4086 = vmatpush1.bf16.msra.mxu0 0
    %4087 = vmatprep.subr.bf16.mxu0 0
    %4088 = vmatpush1.bf16.msra.mxu0 0
    %4089 = vmatprep.subr.bf16.mxu0 0
    %4090 = vmatpush1.bf16.msra.mxu0 0
    %4091 = vmatprep.subr.bf16.mxu0 0
    %4092 = vmatpush1.bf16.msra.mxu0 0
    %4093 = vmatprep.subr.bf16.mxu0 0
    %4094 = vmatpush1.bf16.msra.mxu0 0
    %4095 = vmatprep.subr.bf16.mxu0 0
    %4096 = vmatpush1.bf16.msra.mxu0 0
    %4097 = vmatprep.subr.bf16.mxu0 0
    %4098 = vmatpush1.bf16.msra.mxu0 0
    %4099 = vmatprep.mubr.bf16.mxu0 0
    %4100 = vmatmul.mubr.bf16.gmra.mrb[0].mxu0 %v4062
    %v4101 = vpop.f32.mrb[0].mxu0
    %v4102 = vadd.f32 %v4035, %v4101
    %v4103 = vpop.f32.mrb[0].mxu0
    %v4104 = vpop.f32.mrb[0].mxu0
    %v4105 = vadd.f32 %v4035, %v4104
    %v4106 = vpop.f32.mrb[0].mxu0
    %4107 = vmatprep.mubr.bf16.mxu0 0
    %4108 = vmatmul.mubr.bf16.gmra.mrb[0].mxu0 %v4065
    %v4109 = vpop.f32.mrb[0].mxu0
    %v4110 = vadd.f32 %v4035, %v4109
    %v4111 = vpop.f32.mrb[0].mxu0
    %v4112 = vpop.f32.mrb[0].mxu0
    %v4113 = vadd.f32 %v4035, %v4112
    %v4114 = vpop.f32.mrb[0].mxu0
    %4115 = vdwg.mxu0
    %v4116 = vadd.f32 %v2528, %v4102
    %v4117 = vadd.f32 %v2529, %v4105
    %v4118 = vadd.f32 %v2530, %v4110
    %v4119 = vadd.f32 %v2531, %v4113
    %s4120 = scalar_lea.vmem %s11, 1
    %v4121 = vld [vmem:[%s4120] sm:$0x1]
    %s4122 = scalar_lea.vmem %s12, 1
    %v4123 = vld [vmem:[%s4122] sm:$0x1]
    %v4124 = vsel %vm167, %v4116, 0.0
    %4125 = vadd.xlane.f32.xlu0 %v4124
    %v4126 = vpop.xlane.xlu0 %4125
    %v4127 = vsel %vm167, %v4117, 0.0
    %4128 = vadd.xlane.f32.xlu0 %v4127
    %v4129 = vpop.xlane.xlu0 %4128
    %v4130 = vsel %vm167, %v4118, 0.0
    %4131 = vadd.xlane.f32.xlu0 %v4130
    %v4132 = vpop.xlane.xlu0 %4131
    %v4133 = vsel %vm167, %v4119, 0.0
    %4134 = vadd.xlane.f32.xlu0 %v4133
    %v4135 = vpop.xlane.xlu0 %4134
    %v4136 = vmul.f32 %v4126, %v1755
    %v4137 = vmul.f32 %v4129, %v1755
    %v4138 = vmul.f32 %v4132, %v1755
    %v4139 = vmul.f32 %v4135, %v1755
    %v4140 = vsub.f32 %v4116, %v4136
    %v4141 = vsub.f32 %v4117, %v4137
    %v4142 = vsub.f32 %v4118, %v4138
    %v4143 = vsub.f32 %v4119, %v4139
    %v4144 = vmul.f32 %v4140, %v4140
    %v4145 = vmul.f32 %v4141, %v4141
    %v4146 = vmul.f32 %v4142, %v4142
    %v4147 = vmul.f32 %v4143, %v4143
    %v4148 = vsel %vm167, %v4144, 0.0
    %4149 = vadd.xlane.f32.xlu0 %v4148
    %v4150 = vpop.xlane.xlu0 %4149
    %v4151 = vsel %vm167, %v4145, 0.0
    %4152 = vadd.xlane.f32.xlu0 %v4151
    %v4153 = vpop.xlane.xlu0 %4152
    %v4154 = vsel %vm167, %v4146, 0.0
    %4155 = vadd.xlane.f32.xlu0 %v4154
    %v4156 = vpop.xlane.xlu0 %4155
    %v4157 = vsel %vm167, %v4147, 0.0
    %4158 = vadd.xlane.f32.xlu0 %v4157
    %v4159 = vpop.xlane.xlu0 %4158
    %v4160 = vmul.f32 %v4150, %v1755
    %v4161 = vmul.f32 %v4153, %v1755
    %v4162 = vmul.f32 %v4156, %v1755
    %v4163 = vmul.f32 %v4159, %v1755
    %v4164 = vadd.f32 %v4160, 1e-05
    %v4165 = vadd.f32 %v4161, 1e-05
    %v4166 = vadd.f32 %v4162, 1e-05
    %v4167 = vadd.f32 %v4163, 1e-05
    %v4168 = vrsqrt.pop %v4164
    %v4169 = vrsqrt.pop %v4165
    %v4170 = vrsqrt.pop %v4166
    %v4171 = vrsqrt.pop %v4167
    %v4172 = vmul.f32 %v4140, %v4168
    %v4173 = vmul.f32 %v4141, %v4169
    %v4174 = vmul.f32 %v4142, %v4170
    %v4175 = vmul.f32 %v4143, %v4171
    %v4177 = vlaneseq
    %v4178 = vshrl.u32 %v4177, 7
    %v4179 = vsub.s32 0, %v4178
    %v4180 = vrot.slane %v4121, %v4179
    %v4182 = vmul.f32 %v4172, %v4180
    %v4183 = vmul.f32 %v4173, %v4180
    %v4184 = vmul.f32 %v4174, %v4180
    %v4185 = vmul.f32 %v4175, %v4180
    %v4187 = vlaneseq
    %v4188 = vshrl.u32 %v4187, 7
    %v4189 = vsub.s32 0, %v4188
    %v4190 = vrot.slane %v4123, %v4189
    %v4192 = vadd.f32 %v4182, %v4190
    %v4193 = vadd.f32 %v4183, %v4190
    %v4194 = vadd.f32 %v4184, %v4190
    %v4195 = vadd.f32 %v4185, %v4190
    %v4196 = vmul.f32 %v4192, %v84
    %v4197 = vmul.f32 %v4193, %v89
    %v4198 = vmul.f32 %v4194, %v94
    %v4199 = vmul.f32 %v4195, %v99
    %v4204 = vrot.slane %v4196, 7
    %v4205 = vrot.slane %v4197, 7
    %v4206 = vsel %vm1824, %v4204, %v4205
    %v4207 = vrot.slane %v4198, 7
    %v4208 = vsel %vm1824, %v4205, %v4207
    %v4209 = vrot.slane %v4199, 7
    %v4210 = vsel %vm1824, %v4207, %v4209
    %v4216 = vsel %vm1824, 0.0, %v4204
    %v4217 = vsel %vm1824, %v4209, 0.0
    %v4218 = vmul.f32 %v4216, %v1842
    %v4219 = vmul.f32 %v4206, %v1847
    %v4220 = vmul.f32 %v4208, %v1852
    %v4221 = vmul.f32 %v4210, %v1857
    %v4222 = vmul.f32 %v4216, %v1880
    %v4223 = vmul.f32 %v4206, %v1882
    %v4224 = vmul.f32 %v4208, %v1884
    %v4225 = vmul.f32 %v4210, %v1886
    %v4226 = vmul.f32 %v4217, %v1885
    %4227 = vrot.lane.b32.xlu0 %v4196, 64
    %v4228 = vpop.permute.xlu0 %4227
    %4229 = vrot.lane.b32.xlu0 %v4197, 64
    %v4230 = vpop.permute.xlu0 %4229
    %4231 = vrot.lane.b32.xlu0 %v4198, 64
    %v4232 = vpop.permute.xlu0 %4231
    %4233 = vrot.lane.b32.xlu0 %v4199, 64
    %v4234 = vpop.permute.xlu0 %4233
    %v4244 = vrot.slane %v4222, 2
    %v4245 = vrot.slane %v4223, 2
    %v4246 = vsel %vm1914, %v4244, %v4245
    %v4247 = vrot.slane %v4224, 2
    %v4248 = vsel %vm1914, %v4245, %v4247
    %v4249 = vrot.slane %v4225, 2
    %v4250 = vsel %vm1914, %v4247, %v4249
    %v4251 = vrot.slane %v4226, 2
    %v4252 = vsel %vm1914, %v4249, %v4251
    %v4257 = vsel %vm167, %v4218, %v4228
    %v4258 = vsel %vm167, %v4219, %v4230
    %v4259 = vsel %vm167, %v4220, %v4232
    %v4260 = vsel %vm167, %v4221, %v4234
    %v4261 = vpack.c.bf16 %v4258, %v4257
    %v4262 = vpack.c.bf16 %v4248, %v4246
    %v4263 = vpack.c.bf16 %v4260, %v4259
    %v4264 = vpack.c.bf16 %v4252, %v4250
    %s4265 = scalar_lea.vmem %s13, 96
    %v4266 = vld [vmem:[%s4265] sm:$0xf]
    %v4267 = vld [vmem:[%s4265 + $0x4] sm:$0xf]
    %v4268 = vld [vmem:[%s4265 + $0x8] sm:$0xf]
    %v4269 = vld [vmem:[%s4265 + $0xc] sm:$0xf]
    %v4270 = vld [vmem:[%s4265 + $0x10] sm:$0xf]
    %v4271 = vld [vmem:[%s4265 + $0x14] sm:$0xf]
    %v4272 = vld [vmem:[%s4265 + $0x18] sm:$0xf]
    %v4273 = vld [vmem:[%s4265 + $0x1c] sm:$0xf]
    %v4274 = vld [vmem:[%s4265 + $0x20] sm:$0xf]
    %v4275 = vld [vmem:[%s4265 + $0x24] sm:$0xf]
    %v4276 = vld [vmem:[%s4265 + $0x28] sm:$0xf]
    %v4277 = vld [vmem:[%s4265 + $0x2c] sm:$0xf]
    %v4278 = vld [vmem:[%s4265 + $0x30] sm:$0xf]
    %v4279 = vld [vmem:[%s4265 + $0x34] sm:$0xf]
    %v4280 = vld [vmem:[%s4265 + $0x38] sm:$0xf]
    %v4281 = vld [vmem:[%s4265 + $0x3c] sm:$0xf]
    %v4282 = vld [vmem:[%s4265 + $0x40] sm:$0xf]
    %v4283 = vld [vmem:[%s4265 + $0x44] sm:$0xf]
    %v4284 = vld [vmem:[%s4265 + $0x48] sm:$0xf]
    %v4285 = vld [vmem:[%s4265 + $0x4c] sm:$0xf]
    %v4286 = vld [vmem:[%s4265 + $0x50] sm:$0xf]
    %v4287 = vld [vmem:[%s4265 + $0x54] sm:$0xf]
    %v4288 = vld [vmem:[%s4265 + $0x58] sm:$0xf]
    %v4289 = vld [vmem:[%s4265 + $0x5c] sm:$0xf]
    %s4290 = scalar_lea.vmem %s14, 1
    %v4291 = vld [vmem:[%s4290] sm:$0x1]
    %v4293 = vlaneseq
    %v4294 = vshrl.u32 %v4293, 7
    %v4295 = vsub.s32 0, %v4294
    %v4296 = vrot.slane %v4291, %v4295
    %v4322 = vunpack.c.l.b16 %v4266
    %v4323 = vunpack.c.l.b16 %v4267
    %v4324 = vunpack.c.l.b16 %v4268
    %v4325 = vunpack.c.l.b16 %v4269
    %v4326 = vunpack.c.l.b16 %v4270
    %v4327 = vunpack.c.l.b16 %v4271
    %v4328 = vunpack.c.l.b16 %v4272
    %v4329 = vunpack.c.l.b16 %v4273
    %v4330 = vunpack.c.l.b16 %v4274
    %v4331 = vunpack.c.l.b16 %v4275
    %v4332 = vunpack.c.l.b16 %v4276
    %v4333 = vunpack.c.l.b16 %v4277
    %v4334 = vunpack.c.l.b16 %v4278
    %v4335 = vunpack.c.l.b16 %v4279
    %v4336 = vunpack.c.l.b16 %v4280
    %v4337 = vunpack.c.l.b16 %v4281
    %v4338 = vunpack.c.l.b16 %v4282
    %v4339 = vunpack.c.l.b16 %v4283
    %v4340 = vunpack.c.l.b16 %v4284
    %v4341 = vunpack.c.l.b16 %v4285
    %v4342 = vunpack.c.l.b16 %v4286
    %v4343 = vunpack.c.l.b16 %v4287
    %v4344 = vunpack.c.l.b16 %v4288
    %v4345 = vunpack.c.l.b16 %v4289
    %v4346 = vpack.c.b16 %v4323, %v4322
    %v4347 = vpack.c.b16 %v4325, %v4324
    %v4348 = vpack.c.b16 %v4327, %v4326
    %v4349 = vpack.c.b16 %v4329, %v4328
    %v4350 = vpack.c.b16 %v4331, %v4330
    %v4351 = vpack.c.b16 %v4333, %v4332
    %v4352 = vpack.c.b16 %v4335, %v4334
    %v4353 = vpack.c.b16 %v4337, %v4336
    %v4354 = vpack.c.b16 %v4339, %v4338
    %v4355 = vpack.c.b16 %v4341, %v4340
    %v4356 = vpack.c.b16 %v4343, %v4342
    %v4357 = vpack.c.b16 %v4345, %v4344
    %v4371 = vsel %vm167, %v4262, 0
    %v4374 = vsel %vm167, %v4264, 0
    %4376 = vmatprep.subr.bf16.mxu0 0
    %4377 = vmatpush1.bf16.msra.mxu0 %v4346
    %4378 = vmatprep.subr.bf16.mxu0 0
    %4379 = vmatpush1.bf16.msra.mxu0 %v4347
    %4380 = vmatprep.subr.bf16.mxu0 0
    %4381 = vmatpush1.bf16.msra.mxu0 %v4348
    %4382 = vmatprep.subr.bf16.mxu0 0
    %4383 = vmatpush1.bf16.msra.mxu0 %v4349
    %4384 = vmatprep.subr.bf16.mxu0 0
    %4385 = vmatpush1.bf16.msra.mxu0 %v4350
    %4386 = vmatprep.subr.bf16.mxu0 0
    %4387 = vmatpush1.bf16.msra.mxu0 %v4351
    %4388 = vmatprep.subr.bf16.mxu0 0
    %4389 = vmatpush1.bf16.msra.mxu0 %v4352
    %4390 = vmatprep.subr.bf16.mxu0 0
    %4391 = vmatpush1.bf16.msra.mxu0 %v4353
    %4392 = vmatprep.subr.bf16.mxu0 0
    %4393 = vmatpush1.bf16.msra.mxu0 %v4354
    %4394 = vmatprep.subr.bf16.mxu0 0
    %4395 = vmatpush1.bf16.msra.mxu0 %v4355
    %4396 = vmatprep.subr.bf16.mxu0 0
    %4397 = vmatpush1.bf16.msra.mxu0 %v4356
    %4398 = vmatprep.subr.bf16.mxu0 0
    %4399 = vmatpush1.bf16.msra.mxu0 %v4357
    %4400 = vmatprep.subr.bf16.mxu0 0
    %4401 = vmatpush1.bf16.msra.mxu0 0
    %4402 = vmatprep.subr.bf16.mxu0 0
    %4403 = vmatpush1.bf16.msra.mxu0 0
    %4404 = vmatprep.subr.bf16.mxu0 0
    %4405 = vmatpush1.bf16.msra.mxu0 0
    %4406 = vmatprep.subr.bf16.mxu0 0
    %4407 = vmatpush1.bf16.msra.mxu0 0
    %4408 = vmatprep.mubr.bf16.mxu0 %v4371
    %4409 = vmatmul.mubr.bf16.gmra.mrb[0].mxu0 %v4261
    %v4410 = vpop.f32.mrb[0].mxu0
    %v4411 = vadd.f32 %v4296, %v4410
    %v4412 = vpop.f32.mrb[0].mxu0
    %v4413 = vpop.f32.mrb[0].mxu0
    %v4414 = vadd.f32 %v4296, %v4413
    %v4415 = vpop.f32.mrb[0].mxu0
    %4416 = vmatprep.mubr.bf16.mxu0 %v4374
    %4417 = vmatmul.mubr.bf16.gmra.mrb[0].mxu0 %v4263
    %v4418 = vpop.f32.mrb[0].mxu0
    %v4419 = vadd.f32 %v4296, %v4418
    %v4420 = vpop.f32.mrb[0].mxu0
    %v4421 = vpop.f32.mrb[0].mxu0
    %v4422 = vadd.f32 %v4296, %v4421
    %v4423 = vpop.f32.mrb[0].mxu0
    %4424 = vdwg.mxu0
    %v4425 = vmax.f32 %v4411, 0.0
    %v4426 = vmax.f32 %v4414, 0.0
    %v4427 = vmax.f32 %v4419, 0.0
    %v4428 = vmax.f32 %v4422, 0.0
    %v4429 = vmul.f32 %v4425, %v84
    %v4430 = vmul.f32 %v4426, %v89
    %v4431 = vmul.f32 %v4427, %v94
    %v4432 = vmul.f32 %v4428, %v99
    %v4437 = vrot.slane %v4429, 7
    %v4438 = vrot.slane %v4430, 7
    %v4439 = vsel %vm1824, %v4437, %v4438
    %v4440 = vrot.slane %v4431, 7
    %v4441 = vsel %vm1824, %v4438, %v4440
    %v4442 = vrot.slane %v4432, 7
    %v4443 = vsel %vm1824, %v4440, %v4442
    %v4449 = vsel %vm1824, 0.0, %v4437
    %v4450 = vsel %vm1824, %v4442, 0.0
    %v4451 = vmul.f32 %v4449, %v1842
    %v4452 = vmul.f32 %v4439, %v1847
    %v4453 = vmul.f32 %v4441, %v1852
    %v4454 = vmul.f32 %v4443, %v1857
    %v4455 = vmul.f32 %v4449, %v1880
    %v4456 = vmul.f32 %v4439, %v1882
    %v4457 = vmul.f32 %v4441, %v1884
    %v4458 = vmul.f32 %v4443, %v1886
    %v4459 = vmul.f32 %v4450, %v1885
    %v4465 = vrot.slane %v4455, 2
    %v4466 = vrot.slane %v4456, 2
    %v4467 = vsel %vm1914, %v4465, %v4466
    %v4468 = vrot.slane %v4457, 2
    %v4469 = vsel %vm1914, %v4466, %v4468
    %v4470 = vrot.slane %v4458, 2
    %v4471 = vsel %vm1914, %v4468, %v4470
    %v4472 = vrot.slane %v4459, 2
    %v4473 = vsel %vm1914, %v4470, %v4472
    %v4478 = vpack.c.bf16 %v4452, %v4451
    %v4479 = vpack.c.bf16 %v4430, %v4429
    %v4480 = vpack.c.bf16 %v4469, %v4467
    %v4481 = vpack.c.bf16 %v4454, %v4453
    %v4482 = vpack.c.bf16 %v4432, %v4431
    %v4483 = vpack.c.bf16 %v4473, %v4471
    %s4484 = scalar_lea.vmem %s15, 192
    %v4485 = vld [vmem:[%s4484] sm:$0xf]
    %v4486 = vld [vmem:[%s4484 + $0x4] sm:$0xf]
    %v4487 = vld [vmem:[%s4484 + $0x8] sm:$0xf]
    %v4488 = vld [vmem:[%s4484 + $0xc] sm:$0xf]
    %v4489 = vld [vmem:[%s4484 + $0x10] sm:$0xf]
    %v4490 = vld [vmem:[%s4484 + $0x14] sm:$0xf]
    %v4491 = vld [vmem:[%s4484 + $0x18] sm:$0xf]
    %v4492 = vld [vmem:[%s4484 + $0x1c] sm:$0xf]
    %v4493 = vld [vmem:[%s4484 + $0x20] sm:$0xf]
    %v4494 = vld [vmem:[%s4484 + $0x24] sm:$0xf]
    %v4495 = vld [vmem:[%s4484 + $0x28] sm:$0xf]
    %v4496 = vld [vmem:[%s4484 + $0x2c] sm:$0xf]
    %v4497 = vld [vmem:[%s4484 + $0x30] sm:$0xf]
    %v4498 = vld [vmem:[%s4484 + $0x34] sm:$0xf]
    %v4499 = vld [vmem:[%s4484 + $0x38] sm:$0xf]
    %v4500 = vld [vmem:[%s4484 + $0x3c] sm:$0xf]
    %v4501 = vld [vmem:[%s4484 + $0x40] sm:$0xf]
    %v4502 = vld [vmem:[%s4484 + $0x44] sm:$0xf]
    %v4503 = vld [vmem:[%s4484 + $0x48] sm:$0xf]
    %v4504 = vld [vmem:[%s4484 + $0x4c] sm:$0xf]
    %v4505 = vld [vmem:[%s4484 + $0x50] sm:$0xf]
    %v4506 = vld [vmem:[%s4484 + $0x54] sm:$0xf]
    %v4507 = vld [vmem:[%s4484 + $0x58] sm:$0xf]
    %v4508 = vld [vmem:[%s4484 + $0x5c] sm:$0xf]
    %v4509 = vld [vmem:[%s4484 + $0x60] sm:$0xf]
    %v4510 = vld [vmem:[%s4484 + $0x64] sm:$0xf]
    %v4511 = vld [vmem:[%s4484 + $0x68] sm:$0xf]
    %v4512 = vld [vmem:[%s4484 + $0x6c] sm:$0xf]
    %v4513 = vld [vmem:[%s4484 + $0x70] sm:$0xf]
    %v4514 = vld [vmem:[%s4484 + $0x74] sm:$0xf]
    %v4515 = vld [vmem:[%s4484 + $0x78] sm:$0xf]
    %v4516 = vld [vmem:[%s4484 + $0x7c] sm:$0xf]
    %v4517 = vld [vmem:[%s4484 + $0x80] sm:$0xf]
    %v4518 = vld [vmem:[%s4484 + $0x84] sm:$0xf]
    %v4519 = vld [vmem:[%s4484 + $0x88] sm:$0xf]
    %v4520 = vld [vmem:[%s4484 + $0x8c] sm:$0xf]
    %v4521 = vld [vmem:[%s4484 + $0x90] sm:$0xf]
    %v4522 = vld [vmem:[%s4484 + $0x94] sm:$0xf]
    %v4523 = vld [vmem:[%s4484 + $0x98] sm:$0xf]
    %v4524 = vld [vmem:[%s4484 + $0x9c] sm:$0xf]
    %v4525 = vld [vmem:[%s4484 + $0xa0] sm:$0xf]
    %v4526 = vld [vmem:[%s4484 + $0xa4] sm:$0xf]
    %v4527 = vld [vmem:[%s4484 + $0xa8] sm:$0xf]
    %v4528 = vld [vmem:[%s4484 + $0xac] sm:$0xf]
    %v4529 = vld [vmem:[%s4484 + $0xb0] sm:$0xf]
    %v4530 = vld [vmem:[%s4484 + $0xb4] sm:$0xf]
    %v4531 = vld [vmem:[%s4484 + $0xb8] sm:$0xf]
    %v4532 = vld [vmem:[%s4484 + $0xbc] sm:$0xf]
    %s4533 = scalar_lea.vmem %s16, 1
    %v4534 = vld [vmem:[%s4533] sm:$0x1]
    %v4536 = vlaneseq
    %v4537 = vshrl.u32 %v4536, 7
    %v4538 = vsub.s32 0, %v4537
    %v4539 = vrot.slane %v4534, %v4538
    %v4589 = vunpack.c.l.b16 %v4485
    %v4590 = vunpack.c.l.b16 %v4486
    %v4591 = vunpack.c.l.b16 %v4487
    %v4592 = vunpack.c.l.b16 %v4488
    %v4593 = vunpack.c.l.b16 %v4489
    %v4594 = vunpack.c.l.b16 %v4490
    %v4595 = vunpack.c.l.b16 %v4491
    %v4596 = vunpack.c.l.b16 %v4492
    %v4597 = vunpack.c.l.b16 %v4493
    %v4598 = vunpack.c.l.b16 %v4494
    %v4599 = vunpack.c.l.b16 %v4495
    %v4600 = vunpack.c.l.b16 %v4496
    %v4601 = vunpack.c.l.b16 %v4497
    %v4602 = vunpack.c.l.b16 %v4498
    %v4603 = vunpack.c.l.b16 %v4499
    %v4604 = vunpack.c.l.b16 %v4500
    %v4605 = vunpack.c.l.b16 %v4501
    %v4606 = vunpack.c.l.b16 %v4502
    %v4607 = vunpack.c.l.b16 %v4503
    %v4608 = vunpack.c.l.b16 %v4504
    %v4609 = vunpack.c.l.b16 %v4505
    %v4610 = vunpack.c.l.b16 %v4506
    %v4611 = vunpack.c.l.b16 %v4507
    %v4612 = vunpack.c.l.b16 %v4508
    %v4613 = vunpack.c.l.b16 %v4509
    %v4614 = vunpack.c.l.b16 %v4510
    %v4615 = vunpack.c.l.b16 %v4511
    %v4616 = vunpack.c.l.b16 %v4512
    %v4617 = vunpack.c.l.b16 %v4513
    %v4618 = vunpack.c.l.b16 %v4514
    %v4619 = vunpack.c.l.b16 %v4515
    %v4620 = vunpack.c.l.b16 %v4516
    %v4621 = vunpack.c.l.b16 %v4517
    %v4622 = vunpack.c.l.b16 %v4518
    %v4623 = vunpack.c.l.b16 %v4519
    %v4624 = vunpack.c.l.b16 %v4520
    %v4625 = vunpack.c.l.b16 %v4521
    %v4626 = vunpack.c.l.b16 %v4522
    %v4627 = vunpack.c.l.b16 %v4523
    %v4628 = vunpack.c.l.b16 %v4524
    %v4629 = vunpack.c.l.b16 %v4525
    %v4630 = vunpack.c.l.b16 %v4526
    %v4631 = vunpack.c.l.b16 %v4527
    %v4632 = vunpack.c.l.b16 %v4528
    %v4633 = vunpack.c.l.b16 %v4529
    %v4634 = vunpack.c.l.b16 %v4530
    %v4635 = vunpack.c.l.b16 %v4531
    %v4636 = vunpack.c.l.b16 %v4532
    %v4637 = vpack.c.b16 %v4590, %v4589
    %v4638 = vpack.c.b16 %v4592, %v4591
    %v4639 = vpack.c.b16 %v4594, %v4593
    %v4640 = vpack.c.b16 %v4596, %v4595
    %v4641 = vpack.c.b16 %v4598, %v4597
    %v4642 = vpack.c.b16 %v4600, %v4599
    %v4643 = vpack.c.b16 %v4602, %v4601
    %v4644 = vpack.c.b16 %v4604, %v4603
    %v4645 = vpack.c.b16 %v4606, %v4605
    %v4646 = vpack.c.b16 %v4608, %v4607
    %v4647 = vpack.c.b16 %v4610, %v4609
    %v4648 = vpack.c.b16 %v4612, %v4611
    %v4649 = vpack.c.b16 %v4614, %v4613
    %v4650 = vpack.c.b16 %v4616, %v4615
    %v4651 = vpack.c.b16 %v4618, %v4617
    %v4652 = vpack.c.b16 %v4620, %v4619
    %v4653 = vpack.c.b16 %v4622, %v4621
    %v4654 = vpack.c.b16 %v4624, %v4623
    %v4655 = vpack.c.b16 %v4626, %v4625
    %v4656 = vpack.c.b16 %v4628, %v4627
    %v4657 = vpack.c.b16 %v4630, %v4629
    %v4658 = vpack.c.b16 %v4632, %v4631
    %v4659 = vpack.c.b16 %v4634, %v4633
    %v4660 = vpack.c.b16 %v4636, %v4635
    %4685 = vmatprep.subr.bf16.mxu0 0
    %4686 = vmatpush1.bf16.msra.mxu0 %v4637
    %4687 = vmatprep.subr.bf16.mxu0 0
    %4688 = vmatpush1.bf16.msra.mxu0 %v4638
    %4689 = vmatprep.subr.bf16.mxu0 0
    %4690 = vmatpush1.bf16.msra.mxu0 %v4639
    %4691 = vmatprep.subr.bf16.mxu0 0
    %4692 = vmatpush1.bf16.msra.mxu0 %v4640
    %4693 = vmatprep.subr.bf16.mxu0 0
    %4694 = vmatpush1.bf16.msra.mxu0 %v4641
    %4695 = vmatprep.subr.bf16.mxu0 0
    %4696 = vmatpush1.bf16.msra.mxu0 %v4642
    %4697 = vmatprep.subr.bf16.mxu0 0
    %4698 = vmatpush1.bf16.msra.mxu0 %v4643
    %4699 = vmatprep.subr.bf16.mxu0 0
    %4700 = vmatpush1.bf16.msra.mxu0 %v4644
    %4701 = vmatprep.subr.bf16.mxu0 0
    %4702 = vmatpush1.bf16.msra.mxu0 %v4645
    %4703 = vmatprep.subr.bf16.mxu0 0
    %4704 = vmatpush1.bf16.msra.mxu0 %v4646
    %4705 = vmatprep.subr.bf16.mxu0 0
    %4706 = vmatpush1.bf16.msra.mxu0 %v4647
    %4707 = vmatprep.subr.bf16.mxu0 0
    %4708 = vmatpush1.bf16.msra.mxu0 %v4648
    %4709 = vmatprep.subr.bf16.mxu0 0
    %4710 = vmatpush1.bf16.msra.mxu0 %v4649
    %4711 = vmatprep.subr.bf16.mxu0 0
    %4712 = vmatpush1.bf16.msra.mxu0 %v4650
    %4713 = vmatprep.subr.bf16.mxu0 0
    %4714 = vmatpush1.bf16.msra.mxu0 %v4651
    %4715 = vmatprep.subr.bf16.mxu0 0
    %4716 = vmatpush1.bf16.msra.mxu0 %v4652
    %4717 = vmatprep.mubr.bf16.mxu0 %v4479
    %4718 = vmatmul.mubr.bf16.gmra.mrb[0].mxu0 %v4478
    %v4719 = vpop.f32.mrb[0].mxu0
    %v4720 = vadd.f32 %v4539, %v4719
    %v4721 = vpop.f32.mrb[0].mxu0
    %v4722 = vpop.f32.mrb[0].mxu0
    %v4723 = vadd.f32 %v4539, %v4722
    %v4724 = vpop.f32.mrb[0].mxu0
    %4725 = vmatprep.mubr.bf16.mxu0 %v4482
    %4726 = vmatmul.mubr.bf16.gmra.mrb[0].mxu0 %v4481
    %v4727 = vpop.f32.mrb[0].mxu0
    %v4728 = vadd.f32 %v4539, %v4727
    %v4729 = vpop.f32.mrb[0].mxu0
    %v4730 = vpop.f32.mrb[0].mxu0
    %v4731 = vadd.f32 %v4539, %v4730
    %v4732 = vpop.f32.mrb[0].mxu0
    %4733 = vdwg.mxu0
    %4734 = vmatprep.subr.bf16.mxu0 0
    %4735 = vmatpush1.bf16.msra.mxu0 %v4653
    %4736 = vmatprep.subr.bf16.mxu0 0
    %4737 = vmatpush1.bf16.msra.mxu0 %v4654
    %4738 = vmatprep.subr.bf16.mxu0 0
    %4739 = vmatpush1.bf16.msra.mxu0 %v4655
    %4740 = vmatprep.subr.bf16.mxu0 0
    %4741 = vmatpush1.bf16.msra.mxu0 %v4656
    %4742 = vmatprep.subr.bf16.mxu0 0
    %4743 = vmatpush1.bf16.msra.mxu0 %v4657
    %4744 = vmatprep.subr.bf16.mxu0 0
    %4745 = vmatpush1.bf16.msra.mxu0 %v4658
    %4746 = vmatprep.subr.bf16.mxu0 0
    %4747 = vmatpush1.bf16.msra.mxu0 %v4659
    %4748 = vmatprep.subr.bf16.mxu0 0
    %4749 = vmatpush1.bf16.msra.mxu0 %v4660
    %4750 = vmatprep.subr.bf16.mxu0 0
    %4751 = vmatpush1.bf16.msra.mxu0 0
    %4752 = vmatprep.subr.bf16.mxu0 0
    %4753 = vmatpush1.bf16.msra.mxu0 0
    %4754 = vmatprep.subr.bf16.mxu0 0
    %4755 = vmatpush1.bf16.msra.mxu0 0
    %4756 = vmatprep.subr.bf16.mxu0 0
    %4757 = vmatpush1.bf16.msra.mxu0 0
    %4758 = vmatprep.subr.bf16.mxu0 0
    %4759 = vmatpush1.bf16.msra.mxu0 0
    %4760 = vmatprep.subr.bf16.mxu0 0
    %4761 = vmatpush1.bf16.msra.mxu0 0
    %4762 = vmatprep.subr.bf16.mxu0 0
    %4763 = vmatpush1.bf16.msra.mxu0 0
    %4764 = vmatprep.subr.bf16.mxu0 0
    %4765 = vmatpush1.bf16.msra.mxu0 0
    %4766 = vmatprep.mubr.bf16.mxu0 0
    %4767 = vmatmul.mubr.bf16.gmra.mrb[0].mxu0 %v4480
    %v4768 = vpop.f32.mrb[0].mxu0
    %v4769 = vadd.f32 %v4720, %v4768
    %v4770 = vpop.f32.mrb[0].mxu0
    %v4771 = vpop.f32.mrb[0].mxu0
    %v4772 = vadd.f32 %v4723, %v4771
    %v4773 = vpop.f32.mrb[0].mxu0
    %4774 = vmatprep.mubr.bf16.mxu0 0
    %4775 = vmatmul.mubr.bf16.gmra.mrb[0].mxu0 %v4483
    %v4776 = vpop.f32.mrb[0].mxu0
    %v4777 = vadd.f32 %v4728, %v4776
    %v4778 = vpop.f32.mrb[0].mxu0
    %v4779 = vpop.f32.mrb[0].mxu0
    %v4780 = vadd.f32 %v4731, %v4779
    %v4781 = vpop.f32.mrb[0].mxu0
    %4782 = vdwg.mxu0
    %v4783 = vmul.f32 %v4769, %v84
    %v4784 = vmul.f32 %v4772, %v89
    %v4785 = vmul.f32 %v4777, %v94
    %v4786 = vmul.f32 %v4780, %v99
    %v4787 = vadd.f32 %v4192, %v4783
    %v4788 = vadd.f32 %v4193, %v4784
    %v4789 = vadd.f32 %v4194, %v4785
    %v4790 = vadd.f32 %v4195, %v4786
    %s4791 = scalar_lea.vmem %s17, 1
    %v4792 = vld [vmem:[%s4791] sm:$0x1]
    %s4793 = scalar_lea.vmem %s18, 1
    %v4794 = vld [vmem:[%s4793] sm:$0x1]
    %v4795 = vsel %vm167, %v4787, 0.0
    %4796 = vadd.xlane.f32.xlu0 %v4795
    %v4797 = vpop.xlane.xlu0 %4796
    %v4798 = vsel %vm167, %v4788, 0.0
    %4799 = vadd.xlane.f32.xlu0 %v4798
    %v4800 = vpop.xlane.xlu0 %4799
    %v4801 = vsel %vm167, %v4789, 0.0
    %4802 = vadd.xlane.f32.xlu0 %v4801
    %v4803 = vpop.xlane.xlu0 %4802
    %v4804 = vsel %vm167, %v4790, 0.0
    %4805 = vadd.xlane.f32.xlu0 %v4804
    %v4806 = vpop.xlane.xlu0 %4805
    %v4807 = vmul.f32 %v4797, %v1755
    %v4808 = vmul.f32 %v4800, %v1755
    %v4809 = vmul.f32 %v4803, %v1755
    %v4810 = vmul.f32 %v4806, %v1755
    %v4811 = vsub.f32 %v4787, %v4807
    %v4812 = vsub.f32 %v4788, %v4808
    %v4813 = vsub.f32 %v4789, %v4809
    %v4814 = vsub.f32 %v4790, %v4810
    %v4815 = vmul.f32 %v4811, %v4811
    %v4816 = vmul.f32 %v4812, %v4812
    %v4817 = vmul.f32 %v4813, %v4813
    %v4818 = vmul.f32 %v4814, %v4814
    %v4819 = vsel %vm167, %v4815, 0.0
    %4820 = vadd.xlane.f32.xlu0 %v4819
    %v4821 = vpop.xlane.xlu0 %4820
    %v4822 = vsel %vm167, %v4816, 0.0
    %4823 = vadd.xlane.f32.xlu0 %v4822
    %v4824 = vpop.xlane.xlu0 %4823
    %v4825 = vsel %vm167, %v4817, 0.0
    %4826 = vadd.xlane.f32.xlu0 %v4825
    %v4827 = vpop.xlane.xlu0 %4826
    %v4828 = vsel %vm167, %v4818, 0.0
    %4829 = vadd.xlane.f32.xlu0 %v4828
    %v4830 = vpop.xlane.xlu0 %4829
    %v4831 = vmul.f32 %v4821, %v1755
    %v4832 = vmul.f32 %v4824, %v1755
    %v4833 = vmul.f32 %v4827, %v1755
    %v4834 = vmul.f32 %v4830, %v1755
    %v4835 = vadd.f32 %v4831, 1e-05
    %v4836 = vadd.f32 %v4832, 1e-05
    %v4837 = vadd.f32 %v4833, 1e-05
    %v4838 = vadd.f32 %v4834, 1e-05
    %v4839 = vrsqrt.pop %v4835
    %v4840 = vrsqrt.pop %v4836
    %v4841 = vrsqrt.pop %v4837
    %v4842 = vrsqrt.pop %v4838
    %v4843 = vmul.f32 %v4811, %v4839
    %v4844 = vmul.f32 %v4812, %v4840
    %v4845 = vmul.f32 %v4813, %v4841
    %v4846 = vmul.f32 %v4814, %v4842
    %v4848 = vlaneseq
    %v4849 = vshrl.u32 %v4848, 7
    %v4850 = vsub.s32 0, %v4849
    %v4851 = vrot.slane %v4792, %v4850
    %v4853 = vmul.f32 %v4843, %v4851
    %v4854 = vmul.f32 %v4844, %v4851
    %v4855 = vmul.f32 %v4845, %v4851
    %v4856 = vmul.f32 %v4846, %v4851
    %v4858 = vlaneseq
    %v4859 = vshrl.u32 %v4858, 7
    %v4860 = vsub.s32 0, %v4859
    %v4861 = vrot.slane %v4794, %v4860
    %v4863 = vadd.f32 %v4853, %v4861
    %v4864 = vadd.f32 %v4854, %v4861
    %v4865 = vadd.f32 %v4855, %v4861
    %v4866 = vadd.f32 %v4856, %v4861
    %v4867 = vmul.f32 %v4863, %v84
    %v4868 = vmul.f32 %v4864, %v89
    %v4869 = vmul.f32 %v4865, %v94
    %v4870 = vmul.f32 %v4866, %v99
    %v4871 = vpack.c.bf16 %v4868, %v4867
    %v4872 = vpack.c.bf16 %v4870, %v4869
    %s4873 = scalar_lea.vmem %s5, 128
    %v4874 = vld [vmem:[%s4873] sm:$0xff]
    %v4875 = vld [vmem:[%s4873 + $0x8] sm:$0xff]
    %v4876 = vld [vmem:[%s4873 + $0x10] sm:$0xff]
    %v4877 = vld [vmem:[%s4873 + $0x18] sm:$0xff]
    %v4878 = vld [vmem:[%s4873 + $0x20] sm:$0xff]
    %v4879 = vld [vmem:[%s4873 + $0x28] sm:$0xff]
    %v4880 = vld [vmem:[%s4873 + $0x30] sm:$0xff]
    %v4881 = vld [vmem:[%s4873 + $0x38] sm:$0xff]
    %s4882 = scalar_lea.vmem %s6, 4
    %v4883 = vld [vmem:[%s4882] sm:$0x3]
    %v4885 = vlaneseq
    %v4886 = vshrl.u32 %v4885, 7
    %v4887 = vsub.s32 0, %v4886
    %v4888 = vrot.slane %v4883, %v4887
    %v4889 = vlaneseq
    %v4890 = vshrl.u32 %v4889, 7
    %v4891 = vsub.s32 1, %v4890
    %v4892 = vrot.slane %v4883, %v4891
    %v4903 = vunpack.c.l.b16 %v4874
    %v4904 = vunpack.c.h.b16 %v4874
    %v4905 = vunpack.c.l.b16 %v4875
    %v4906 = vunpack.c.h.b16 %v4875
    %v4907 = vunpack.c.l.b16 %v4876
    %v4908 = vunpack.c.h.b16 %v4876
    %v4909 = vunpack.c.l.b16 %v4877
    %v4910 = vunpack.c.h.b16 %v4877
    %v4911 = vunpack.c.l.b16 %v4878
    %v4912 = vunpack.c.h.b16 %v4878
    %v4913 = vunpack.c.l.b16 %v4879
    %v4914 = vunpack.c.h.b16 %v4879
    %v4915 = vunpack.c.l.b16 %v4880
    %v4916 = vunpack.c.h.b16 %v4880
    %v4917 = vunpack.c.l.b16 %v4881
    %v4918 = vunpack.c.h.b16 %v4881
    %v4919 = vpack.c.b16 %v4905, %v4903
    %v4920 = vpack.c.b16 %v4906, %v4904
    %v4921 = vpack.c.b16 %v4909, %v4907
    %v4922 = vpack.c.b16 %v4910, %v4908
    %v4923 = vpack.c.b16 %v4913, %v4911
    %v4924 = vpack.c.b16 %v4914, %v4912
    %v4925 = vpack.c.b16 %v4917, %v4915
    %v4926 = vpack.c.b16 %v4918, %v4916
    %v4936 = vsel %vm167, %v4871, 0
    %v4939 = vsel %vm167, %v4872, 0
    %4941 = vmatprep.subr.bf16.mxu0 %v4920
    %4942 = vmatpush1.bf16.msra.mxu0 %v4919
    %4943 = vmatprep.subr.bf16.mxu0 %v4922
    %4944 = vmatpush1.bf16.msra.mxu0 %v4921
    %4945 = vmatprep.subr.bf16.mxu0 %v4924
    %4946 = vmatpush1.bf16.msra.mxu0 %v4923
    %4947 = vmatprep.subr.bf16.mxu0 %v4926
    %4948 = vmatpush1.bf16.msra.mxu0 %v4925
    %4949 = vmatprep.subr.bf16.mxu0 0
    %4950 = vmatpush1.bf16.msra.mxu0 0
    %4951 = vmatprep.subr.bf16.mxu0 0
    %4952 = vmatpush1.bf16.msra.mxu0 0
    %4953 = vmatprep.subr.bf16.mxu0 0
    %4954 = vmatpush1.bf16.msra.mxu0 0
    %4955 = vmatprep.subr.bf16.mxu0 0
    %4956 = vmatpush1.bf16.msra.mxu0 0
    %4957 = vmatprep.subr.bf16.mxu0 0
    %4958 = vmatpush1.bf16.msra.mxu0 0
    %4959 = vmatprep.subr.bf16.mxu0 0
    %4960 = vmatpush1.bf16.msra.mxu0 0
    %4961 = vmatprep.subr.bf16.mxu0 0
    %4962 = vmatpush1.bf16.msra.mxu0 0
    %4963 = vmatprep.subr.bf16.mxu0 0
    %4964 = vmatpush1.bf16.msra.mxu0 0
    %4965 = vmatprep.subr.bf16.mxu0 0
    %4966 = vmatpush1.bf16.msra.mxu0 0
    %4967 = vmatprep.subr.bf16.mxu0 0
    %4968 = vmatpush1.bf16.msra.mxu0 0
    %4969 = vmatprep.subr.bf16.mxu0 0
    %4970 = vmatpush1.bf16.msra.mxu0 0
    %4971 = vmatprep.subr.bf16.mxu0 0
    %4972 = vmatpush1.bf16.msra.mxu0 0
    %4973 = vmatprep.mubr.bf16.mxu0 0
    %4974 = vmatmul.mubr.bf16.gmra.mrb[0].mxu0 %v4936
    %v4975 = vpop.f32.mrb[0].mxu0
    %v4976 = vadd.f32 %v4888, %v4975
    %v4977 = vpop.f32.mrb[0].mxu0
    %v4978 = vadd.f32 %v4892, %v4977
    %v4979 = vpop.f32.mrb[0].mxu0
    %v4980 = vadd.f32 %v4888, %v4979
    %v4981 = vpop.f32.mrb[0].mxu0
    %v4982 = vadd.f32 %v4892, %v4981
    %4983 = vmatprep.mubr.bf16.mxu0 0
    %4984 = vmatmul.mubr.bf16.gmra.mrb[0].mxu0 %v4939
    %v4985 = vpop.f32.mrb[0].mxu0
    %v4986 = vadd.f32 %v4888, %v4985
    %v4987 = vpop.f32.mrb[0].mxu0
    %v4988 = vadd.f32 %v4892, %v4987
    %v4989 = vpop.f32.mrb[0].mxu0
    %v4990 = vadd.f32 %v4888, %v4989
    %v4991 = vpop.f32.mrb[0].mxu0
    %v4992 = vadd.f32 %v4892, %v4991
    %4993 = vdwg.mxu0
    %v4994 = vmul.f32 %v4976, 0.17677669
    %v4995 = vmul.f32 %v4980, 0.17677669
    %v4996 = vmul.f32 %v4986, 0.17677669
    %v4997 = vmul.f32 %v4990, 0.17677669
    %v4998 = vpack.c.bf16 %v4995, %v4994
    %v4999 = vpack.c.bf16 %v4997, %v4996
    %s5000 = scalar_lea.vmem %s9, 64
    %v5001 = vld [vmem:[%s5000] sm:$0xf]
    %v5002 = vld [vmem:[%s5000 + $0x4] sm:$0xf]
    %v5003 = vld [vmem:[%s5000 + $0x8] sm:$0xf]
    %v5004 = vld [vmem:[%s5000 + $0xc] sm:$0xf]
    %v5005 = vld [vmem:[%s5000 + $0x10] sm:$0xf]
    %v5006 = vld [vmem:[%s5000 + $0x14] sm:$0xf]
    %v5007 = vld [vmem:[%s5000 + $0x18] sm:$0xf]
    %v5008 = vld [vmem:[%s5000 + $0x1c] sm:$0xf]
    %v5017 = vunpack.c.l.b16 %v5001
    %v5018 = vunpack.c.l.b16 %v5002
    %v5019 = vunpack.c.l.b16 %v5003
    %v5020 = vunpack.c.l.b16 %v5004
    %v5021 = vunpack.c.l.b16 %v5005
    %v5022 = vunpack.c.l.b16 %v5006
    %v5023 = vunpack.c.l.b16 %v5007
    %v5024 = vunpack.c.l.b16 %v5008
    %v5025 = vpack.c.b16 %v5018, %v5017
    %v5026 = vpack.c.b16 %v5020, %v5019
    %v5027 = vpack.c.b16 %v5022, %v5021
    %v5028 = vpack.c.b16 %v5024, %v5023
    %v5034 = vsel %vm167, %v4998, 0
    %v5037 = vsel %vm167, %v4999, 0
    %5039 = vmatprep.subr.bf16.mxu0 0
    %5040 = vmatpush1.bf16.msra.mxu0 %v5025
    %5041 = vmatprep.subr.bf16.mxu0 0
    %5042 = vmatpush1.bf16.msra.mxu0 %v5026
    %5043 = vmatprep.subr.bf16.mxu0 0
    %5044 = vmatpush1.bf16.msra.mxu0 %v5027
    %5045 = vmatprep.subr.bf16.mxu0 0
    %5046 = vmatpush1.bf16.msra.mxu0 %v5028
    %5047 = vmatprep.subr.bf16.mxu0 0
    %5048 = vmatpush1.bf16.msra.mxu0 0
    %5049 = vmatprep.subr.bf16.mxu0 0
    %5050 = vmatpush1.bf16.msra.mxu0 0
    %5051 = vmatprep.subr.bf16.mxu0 0
    %5052 = vmatpush1.bf16.msra.mxu0 0
    %5053 = vmatprep.subr.bf16.mxu0 0
    %5054 = vmatpush1.bf16.msra.mxu0 0
    %5055 = vmatprep.subr.bf16.mxu0 0
    %5056 = vmatpush1.bf16.msra.mxu0 0
    %5057 = vmatprep.subr.bf16.mxu0 0
    %5058 = vmatpush1.bf16.msra.mxu0 0
    %5059 = vmatprep.subr.bf16.mxu0 0
    %5060 = vmatpush1.bf16.msra.mxu0 0
    %5061 = vmatprep.subr.bf16.mxu0 0
    %5062 = vmatpush1.bf16.msra.mxu0 0
    %5063 = vmatprep.subr.bf16.mxu0 0
    %5064 = vmatpush1.bf16.msra.mxu0 0
    %5065 = vmatprep.subr.bf16.mxu0 0
    %5066 = vmatpush1.bf16.msra.mxu0 0
    %5067 = vmatprep.subr.bf16.mxu0 0
    %5068 = vmatpush1.bf16.msra.mxu0 0
    %5069 = vmatprep.subr.bf16.mxu0 0
    %5070 = vmatpush1.bf16.msra.mxu0 0
    %5071 = vmatprep.mubr.bf16.mxu0 0
    %5072 = vmatmul.mubr.bf16.gmra.mrb[0].mxu0 %v5034
    %v5073 = vpop.f32.mrb[0].mxu0
    %v5074 = vadd.f32 0.0, %v5073
    %v5075 = vpop.f32.mrb[0].mxu0
    %v5076 = vpop.f32.mrb[0].mxu0
    %v5077 = vadd.f32 0.0, %v5076
    %v5078 = vpop.f32.mrb[0].mxu0
    %5079 = vmatprep.mubr.bf16.mxu0 0
    %5080 = vmatmul.mubr.bf16.gmra.mrb[0].mxu0 %v5037
    %v5081 = vpop.f32.mrb[0].mxu0
    %v5082 = vadd.f32 0.0, %v5081
    %v5083 = vpop.f32.mrb[0].mxu0
    %v5084 = vpop.f32.mrb[0].mxu0
    %v5085 = vadd.f32 0.0, %v5084
    %v5086 = vpop.f32.mrb[0].mxu0
    %5087 = vdwg.mxu0
    %s5088 = scalar_lea.vmem %s10, 32
    %v5089 = vld [vmem:[%s5088] sm:$0xff]
    %v5090 = vld [vmem:[%s5088 + $0x8] sm:$0x1]
    %v5091 = vpack.c.bf16 %v4980, %v4976
    %v5092 = vpack.c.bf16 %v4990, %v4986
    %v5093 = vpack.c.bf16 %v4982, %v4978
    %v5094 = vpack.c.bf16 %v4992, %v4988
    %5096 = vset.pattern.permute.xlu0 0
    %5097 = vperm.xlu0 %5096, %v5074
    %v5098 = vpop.permute.xlu0 %5097
    %5101 = vset.pattern.permute.xlu0 0
    %5102 = vperm.xlu0 %5101, %v5077
    %v5103 = vpop.permute.xlu0 %5102
    %5106 = vset.pattern.permute.xlu0 0
    %5107 = vperm.xlu0 %5106, %v5082
    %v5108 = vpop.permute.xlu0 %5107
    %5111 = vset.pattern.permute.xlu0 0
    %5112 = vperm.xlu0 %5111, %v5085
    %v5113 = vpop.permute.xlu0 %5112
    %v5115 = vmul.f32 %v5098, %v334
    %v5116 = vmul.f32 %v5103, %v335
    %v5117 = vmul.f32 %v5108, %v336
    %v5118 = vmul.f32 %v5113, %v337
    %5121 = vrot.lane.b32.xlu0 %v5091, 64
    %v5122 = vpop.permute.xlu0 %5121
    %5123 = vrot.lane.b32.xlu0 %v5092, 64
    %v5124 = vpop.permute.xlu0 %5123
    %v5125 = vsel %vm368, %v4998, 0
    %v5127 = vsel %vm368, %v4999, 0
    %v5130 = vsel %vm368, %v5122, 0
    %v5133 = vsel %vm368, %v5124, 0
    %5135 = vmatprep.subr.bf16.mxu0 0
    %5136 = vmatpush1.bf16.xpose.msra.mxu0 %v5130
    %5137 = vmatprep.subr.bf16.mxu0 0
    %5138 = vmatpush1.bf16.xpose.msra.mxu0 %v5133
    %5139 = vmatprep.subr.bf16.mxu0 0
    %5140 = vmatpush1.bf16.xpose.msra.mxu0 0
    %5141 = vmatprep.subr.bf16.mxu0 0
    %5142 = vmatpush1.bf16.xpose.msra.mxu0 0
    %5143 = vmatprep.subr.bf16.mxu0 0
    %5144 = vmatpush1.bf16.xpose.msra.mxu0 0
    %5145 = vmatprep.subr.bf16.mxu0 0
    %5146 = vmatpush1.bf16.xpose.msra.mxu0 0
    %5147 = vmatprep.subr.bf16.mxu0 0
    %5148 = vmatpush1.bf16.xpose.msra.mxu0 0
    %5149 = vmatprep.subr.bf16.mxu0 0
    %5150 = vmatpush1.bf16.xpose.msra.mxu0 0
    %5151 = vmatprep.subr.bf16.mxu0 0
    %5152 = vmatpush1.bf16.xpose.msra.mxu0 0
    %5153 = vmatprep.subr.bf16.mxu0 0
    %5154 = vmatpush1.bf16.xpose.msra.mxu0 0
    %5155 = vmatprep.subr.bf16.mxu0 0
    %5156 = vmatpush1.bf16.xpose.msra.mxu0 0
    %5157 = vmatprep.subr.bf16.mxu0 0
    %5158 = vmatpush1.bf16.xpose.msra.mxu0 0
    %5159 = vmatprep.subr.bf16.mxu0 0
    %5160 = vmatpush1.bf16.xpose.msra.mxu0 0
    %5161 = vmatprep.subr.bf16.mxu0 0
    %5162 = vmatpush1.bf16.xpose.msra.mxu0 0
    %5163 = vmatprep.subr.bf16.mxu0 0
    %5164 = vmatpush1.bf16.xpose.msra.mxu0 0
    %5165 = vmatprep.subr.bf16.mxu0 0
    %5166 = vmatpush1.bf16.xpose.msra.mxu0 0
    %5167 = vmatprep.mubr.bf16.mxu0 0
    %5168 = vmatmul.mubr.bf16.gmra.mrb[0].mxu0 %v5125
    %v5169 = vpop.f32.mrb[0].mxu0
    %v5170 = vadd.f32 %v5115, %v5169
    %v5171 = vpop.f32.mrb[0].mxu0
    %v5172 = vpop.f32.mrb[0].mxu0
    %v5173 = vadd.f32 %v5116, %v5172
    %v5174 = vpop.f32.mrb[0].mxu0
    %5175 = vmatprep.mubr.bf16.mxu0 0
    %5176 = vmatmul.mubr.bf16.gmra.mrb[0].mxu0 %v5127
    %v5177 = vpop.f32.mrb[0].mxu0
    %v5178 = vadd.f32 %v5117, %v5177
    %v5179 = vpop.f32.mrb[0].mxu0
    %v5180 = vpop.f32.mrb[0].mxu0
    %v5181 = vadd.f32 %v5118, %v5180
    %v5182 = vpop.f32.mrb[0].mxu0
    %5183 = vdwg.mxu0
    %5184 = vset.pattern.permute.xlu0 1
    %5185 = vperm.xlu0 %5184, %v5074
    %v5186 = vpop.permute.xlu0 %5185
    %5188 = vset.pattern.permute.xlu0 1
    %5189 = vperm.xlu0 %5188, %v5077
    %v5190 = vpop.permute.xlu0 %5189
    %5192 = vset.pattern.permute.xlu0 1
    %5193 = vperm.xlu0 %5192, %v5082
    %v5194 = vpop.permute.xlu0 %5193
    %5196 = vset.pattern.permute.xlu0 1
    %5197 = vperm.xlu0 %5196, %v5085
    %v5198 = vpop.permute.xlu0 %5197
    %v5200 = vmul.f32 %v5186, %v429
    %v5201 = vmul.f32 %v5190, %v430
    %v5202 = vmul.f32 %v5194, %v431
    %v5203 = vmul.f32 %v5198, %v432
    %v5204 = vadd.f32 %v5170, %v5200
    %v5205 = vadd.f32 %v5173, %v5201
    %v5206 = vadd.f32 %v5178, %v5202
    %v5207 = vadd.f32 %v5181, %v5203
    %5208 = vset.pattern.permute.xlu0 2
    %5209 = vperm.xlu0 %5208, %v5074
    %v5210 = vpop.permute.xlu0 %5209
    %5212 = vset.pattern.permute.xlu0 2
    %5213 = vperm.xlu0 %5212, %v5077
    %v5214 = vpop.permute.xlu0 %5213
    %5216 = vset.pattern.permute.xlu0 2
    %5217 = vperm.xlu0 %5216, %v5082
    %v5218 = vpop.permute.xlu0 %5217
    %5220 = vset.pattern.permute.xlu0 2
    %5221 = vperm.xlu0 %5220, %v5085
    %v5222 = vpop.permute.xlu0 %5221
    %v5224 = vmul.f32 %v5210, %v458
    %v5225 = vmul.f32 %v5214, %v459
    %v5226 = vmul.f32 %v5218, %v460
    %v5227 = vmul.f32 %v5222, %v461
    %v5228 = vadd.f32 %v5204, %v5224
    %v5229 = vadd.f32 %v5205, %v5225
    %v5230 = vadd.f32 %v5206, %v5226
    %v5231 = vadd.f32 %v5207, %v5227
    %5232 = vset.pattern.permute.xlu0 3
    %5233 = vperm.xlu0 %5232, %v5074
    %v5234 = vpop.permute.xlu0 %5233
    %5236 = vset.pattern.permute.xlu0 3
    %5237 = vperm.xlu0 %5236, %v5077
    %v5238 = vpop.permute.xlu0 %5237
    %5240 = vset.pattern.permute.xlu0 3
    %5241 = vperm.xlu0 %5240, %v5082
    %v5242 = vpop.permute.xlu0 %5241
    %5244 = vset.pattern.permute.xlu0 3
    %5245 = vperm.xlu0 %5244, %v5085
    %v5246 = vpop.permute.xlu0 %5245
    %v5248 = vmul.f32 %v5234, %v487
    %v5249 = vmul.f32 %v5238, %v488
    %v5250 = vmul.f32 %v5242, %v489
    %v5251 = vmul.f32 %v5246, %v490
    %v5252 = vadd.f32 %v5228, %v5248
    %v5253 = vadd.f32 %v5229, %v5249
    %v5254 = vadd.f32 %v5230, %v5250
    %v5255 = vadd.f32 %v5231, %v5251
    %5256 = vset.pattern.permute.xlu0 4
    %5257 = vperm.xlu0 %5256, %v5074
    %v5258 = vpop.permute.xlu0 %5257
    %5260 = vset.pattern.permute.xlu0 4
    %5261 = vperm.xlu0 %5260, %v5077
    %v5262 = vpop.permute.xlu0 %5261
    %5264 = vset.pattern.permute.xlu0 4
    %5265 = vperm.xlu0 %5264, %v5082
    %v5266 = vpop.permute.xlu0 %5265
    %5268 = vset.pattern.permute.xlu0 4
    %5269 = vperm.xlu0 %5268, %v5085
    %v5270 = vpop.permute.xlu0 %5269
    %v5272 = vmul.f32 %v5258, %v516
    %v5273 = vmul.f32 %v5262, %v517
    %v5274 = vmul.f32 %v5266, %v518
    %v5275 = vmul.f32 %v5270, %v519
    %v5276 = vadd.f32 %v5252, %v5272
    %v5277 = vadd.f32 %v5253, %v5273
    %v5278 = vadd.f32 %v5254, %v5274
    %v5279 = vadd.f32 %v5255, %v5275
    %5280 = vset.pattern.permute.xlu0 5
    %5281 = vperm.xlu0 %5280, %v5074
    %v5282 = vpop.permute.xlu0 %5281
    %5284 = vset.pattern.permute.xlu0 5
    %5285 = vperm.xlu0 %5284, %v5077
    %v5286 = vpop.permute.xlu0 %5285
    %5288 = vset.pattern.permute.xlu0 5
    %5289 = vperm.xlu0 %5288, %v5082
    %v5290 = vpop.permute.xlu0 %5289
    %5292 = vset.pattern.permute.xlu0 5
    %5293 = vperm.xlu0 %5292, %v5085
    %v5294 = vpop.permute.xlu0 %5293
    %v5296 = vmul.f32 %v5282, %v545
    %v5297 = vmul.f32 %v5286, %v546
    %v5298 = vmul.f32 %v5290, %v547
    %v5299 = vmul.f32 %v5294, %v548
    %v5300 = vadd.f32 %v5276, %v5296
    %v5301 = vadd.f32 %v5277, %v5297
    %v5302 = vadd.f32 %v5278, %v5298
    %v5303 = vadd.f32 %v5279, %v5299
    %5304 = vset.pattern.permute.xlu0 6
    %5305 = vperm.xlu0 %5304, %v5074
    %v5306 = vpop.permute.xlu0 %5305
    %5308 = vset.pattern.permute.xlu0 6
    %5309 = vperm.xlu0 %5308, %v5077
    %v5310 = vpop.permute.xlu0 %5309
    %5312 = vset.pattern.permute.xlu0 6
    %5313 = vperm.xlu0 %5312, %v5082
    %v5314 = vpop.permute.xlu0 %5313
    %5316 = vset.pattern.permute.xlu0 6
    %5317 = vperm.xlu0 %5316, %v5085
    %v5318 = vpop.permute.xlu0 %5317
    %v5320 = vmul.f32 %v5306, %v574
    %v5321 = vmul.f32 %v5310, %v575
    %v5322 = vmul.f32 %v5314, %v576
    %v5323 = vmul.f32 %v5318, %v577
    %v5324 = vadd.f32 %v5300, %v5320
    %v5325 = vadd.f32 %v5301, %v5321
    %v5326 = vadd.f32 %v5302, %v5322
    %v5327 = vadd.f32 %v5303, %v5323
    %5328 = vset.pattern.permute.xlu0 7
    %5329 = vperm.xlu0 %5328, %v5074
    %v5330 = vpop.permute.xlu0 %5329
    %5332 = vset.pattern.permute.xlu0 7
    %5333 = vperm.xlu0 %5332, %v5077
    %v5334 = vpop.permute.xlu0 %5333
    %5336 = vset.pattern.permute.xlu0 7
    %5337 = vperm.xlu0 %5336, %v5082
    %v5338 = vpop.permute.xlu0 %5337
    %5340 = vset.pattern.permute.xlu0 7
    %5341 = vperm.xlu0 %5340, %v5085
    %v5342 = vpop.permute.xlu0 %5341
    %v5344 = vmul.f32 %v5330, %v603
    %v5345 = vmul.f32 %v5334, %v604
    %v5346 = vmul.f32 %v5338, %v605
    %v5347 = vmul.f32 %v5342, %v606
    %v5348 = vadd.f32 %v5324, %v5344
    %v5349 = vadd.f32 %v5325, %v5345
    %v5350 = vadd.f32 %v5326, %v5346
    %v5351 = vadd.f32 %v5327, %v5347
    %5352 = vset.pattern.permute.xlu0 8
    %5353 = vperm.xlu0 %5352, %v5074
    %v5354 = vpop.permute.xlu0 %5353
    %5356 = vset.pattern.permute.xlu0 8
    %5357 = vperm.xlu0 %5356, %v5077
    %v5358 = vpop.permute.xlu0 %5357
    %5360 = vset.pattern.permute.xlu0 8
    %5361 = vperm.xlu0 %5360, %v5082
    %v5362 = vpop.permute.xlu0 %5361
    %5364 = vset.pattern.permute.xlu0 8
    %5365 = vperm.xlu0 %5364, %v5085
    %v5366 = vpop.permute.xlu0 %5365
    %v5368 = vmul.f32 %v5354, %v632
    %v5369 = vmul.f32 %v5358, %v633
    %v5370 = vmul.f32 %v5362, %v634
    %v5371 = vmul.f32 %v5366, %v635
    %v5372 = vadd.f32 %v5348, %v5368
    %v5373 = vadd.f32 %v5349, %v5369
    %v5374 = vadd.f32 %v5350, %v5370
    %v5375 = vadd.f32 %v5351, %v5371
    %v5376 = vsel %vm326, %v5372, -10000.0
    %v5377 = vsel %vm327, %v5373, -10000.0
    %v5378 = vsel %vm328, %v5374, -10000.0
    %v5379 = vsel %vm329, %v5375, -10000.0
    %v5380 = vsel %vm368, %v5376, -inf
    %5381 = vmax.xlane.f32.xlu0 %v5380
    %v5382 = vpop.xlane.xlu0 %5381
    %v5383 = vsel %vm368, %v5377, -inf
    %5384 = vmax.xlane.f32.xlu0 %v5383
    %v5385 = vpop.xlane.xlu0 %5384
    %v5386 = vsel %vm368, %v5378, -inf
    %5387 = vmax.xlane.f32.xlu0 %v5386
    %v5388 = vpop.xlane.xlu0 %5387
    %v5389 = vsel %vm368, %v5379, -inf
    %5390 = vmax.xlane.f32.xlu0 %v5389
    %v5391 = vpop.xlane.xlu0 %5390
    %v5392 = vsub.f32 %v5376, %v5382
    %v5393 = vsub.f32 %v5377, %v5385
    %v5394 = vsub.f32 %v5378, %v5388
    %v5395 = vsub.f32 %v5379, %v5391
    %v5396 = vmul.f32 %v5392, 1.442695
    %v5397 = vpow.pop %v5396
    %v5398 = vmul.f32 %v5393, 1.442695
    %v5399 = vpow.pop %v5398
    %v5400 = vmul.f32 %v5394, 1.442695
    %v5401 = vpow.pop %v5400
    %v5402 = vmul.f32 %v5395, 1.442695
    %v5403 = vpow.pop %v5402
    %v5404 = vsel %vm368, %v5397, 0.0
    %5405 = vadd.xlane.f32.xlu0 %v5404
    %v5406 = vpop.xlane.xlu0 %5405
    %v5407 = vsel %vm368, %v5399, 0.0
    %5408 = vadd.xlane.f32.xlu0 %v5407
    %v5409 = vpop.xlane.xlu0 %5408
    %v5410 = vsel %vm368, %v5401, 0.0
    %5411 = vadd.xlane.f32.xlu0 %v5410
    %v5412 = vpop.xlane.xlu0 %5411
    %v5413 = vsel %vm368, %v5403, 0.0
    %5414 = vadd.xlane.f32.xlu0 %v5413
    %v5415 = vpop.xlane.xlu0 %5414
    %v5416 = vrcp.pop %v5406
    %v5417 = vmul.f32 %v5397, %v5416
    %v5418 = vrcp.pop %v5409
    %v5419 = vmul.f32 %v5399, %v5418
    %v5420 = vrcp.pop %v5412
    %v5421 = vmul.f32 %v5401, %v5420
    %v5422 = vrcp.pop %v5415
    %v5423 = vmul.f32 %v5403, %v5422
    %v5424 = vpack.c.bf16 %v5419, %v5417
    %v5425 = vpack.c.bf16 %v5423, %v5421
    %v5426 = vmul.f32 %v5417, %v334
    %v5427 = vmul.f32 %v5419, %v335
    %v5428 = vmul.f32 %v5421, %v336
    %v5429 = vmul.f32 %v5423, %v337
    %v5430 = vsel %vm368, %v5426, 0.0
    %5431 = vadd.xlane.f32.xlu0 %v5430
    %v5432 = vpop.xlane.xlu0 %5431
    %v5433 = vsel %vm368, %v5427, 0.0
    %5434 = vadd.xlane.f32.xlu0 %v5433
    %v5435 = vpop.xlane.xlu0 %5434
    %v5436 = vsel %vm368, %v5428, 0.0
    %5437 = vadd.xlane.f32.xlu0 %v5436
    %v5438 = vpop.xlane.xlu0 %5437
    %v5439 = vsel %vm368, %v5429, 0.0
    %5440 = vadd.xlane.f32.xlu0 %v5439
    %v5441 = vpop.xlane.xlu0 %5440
    %v5442 = vlaneseq
    %v5443 = vshrl.u32 %v5442, 7
    %v5444 = vsub.s32 0, %v5443
    %v5445 = vrot.slane %v5089, %v5444
    %v5446 = vmul.f32 %v5432, %v5445
    %v5447 = vmul.f32 %v5435, %v5445
    %v5448 = vmul.f32 %v5438, %v5445
    %v5449 = vmul.f32 %v5441, %v5445
    %v5451 = vsel %vm368, %v5424, 0
    %v5454 = vsel %vm368, %v5425, 0
    %5456 = vmatprep.subr.bf16.mxu0 0
    %5457 = vmatpush1.bf16.msra.mxu0 %v5093
    %5458 = vmatprep.subr.bf16.mxu0 0
    %5459 = vmatpush1.bf16.msra.mxu0 %v5094
    %5460 = vmatprep.subr.bf16.mxu0 0
    %5461 = vmatpush1.bf16.msra.mxu0 0
    %5462 = vmatprep.subr.bf16.mxu0 0
    %5463 = vmatpush1.bf16.msra.mxu0 0
    %5464 = vmatprep.subr.bf16.mxu0 0
    %5465 = vmatpush1.bf16.msra.mxu0 0
    %5466 = vmatprep.subr.bf16.mxu0 0
    %5467 = vmatpush1.bf16.msra.mxu0 0
    %5468 = vmatprep.subr.bf16.mxu0 0
    %5469 = vmatpush1.bf16.msra.mxu0 0
    %5470 = vmatprep.subr.bf16.mxu0 0
    %5471 = vmatpush1.bf16.msra.mxu0 0
    %5472 = vmatprep.subr.bf16.mxu0 0
    %5473 = vmatpush1.bf16.msra.mxu0 0
    %5474 = vmatprep.subr.bf16.mxu0 0
    %5475 = vmatpush1.bf16.msra.mxu0 0
    %5476 = vmatprep.subr.bf16.mxu0 0
    %5477 = vmatpush1.bf16.msra.mxu0 0
    %5478 = vmatprep.subr.bf16.mxu0 0
    %5479 = vmatpush1.bf16.msra.mxu0 0
    %5480 = vmatprep.subr.bf16.mxu0 0
    %5481 = vmatpush1.bf16.msra.mxu0 0
    %5482 = vmatprep.subr.bf16.mxu0 0
    %5483 = vmatpush1.bf16.msra.mxu0 0
    %5484 = vmatprep.subr.bf16.mxu0 0
    %5485 = vmatpush1.bf16.msra.mxu0 0
    %5486 = vmatprep.subr.bf16.mxu0 0
    %5487 = vmatpush1.bf16.msra.mxu0 0
    %5488 = vmatprep.mubr.bf16.mxu0 0
    %5489 = vmatmul.mubr.bf16.gmra.mrb[0].mxu0 %v5451
    %v5490 = vpop.f32.mrb[0].mxu0
    %v5491 = vadd.f32 %v5446, %v5490
    %v5492 = vpop.f32.mrb[0].mxu0
    %v5493 = vpop.f32.mrb[0].mxu0
    %v5494 = vadd.f32 %v5447, %v5493
    %v5495 = vpop.f32.mrb[0].mxu0
    %5496 = vmatprep.mubr.bf16.mxu0 0
    %5497 = vmatmul.mubr.bf16.gmra.mrb[0].mxu0 %v5454
    %v5498 = vpop.f32.mrb[0].mxu0
    %v5499 = vadd.f32 %v5448, %v5498
    %v5500 = vpop.f32.mrb[0].mxu0
    %v5501 = vpop.f32.mrb[0].mxu0
    %v5502 = vadd.f32 %v5449, %v5501
    %v5503 = vpop.f32.mrb[0].mxu0
    %5504 = vdwg.mxu0
    %v5505 = vmul.f32 %v5417, %v429
    %v5506 = vmul.f32 %v5419, %v430
    %v5507 = vmul.f32 %v5421, %v431
    %v5508 = vmul.f32 %v5423, %v432
    %v5509 = vsel %vm368, %v5505, 0.0
    %5510 = vadd.xlane.f32.xlu0 %v5509
    %v5511 = vpop.xlane.xlu0 %5510
    %v5512 = vsel %vm368, %v5506, 0.0
    %5513 = vadd.xlane.f32.xlu0 %v5512
    %v5514 = vpop.xlane.xlu0 %5513
    %v5515 = vsel %vm368, %v5507, 0.0
    %5516 = vadd.xlane.f32.xlu0 %v5515
    %v5517 = vpop.xlane.xlu0 %5516
    %v5518 = vsel %vm368, %v5508, 0.0
    %5519 = vadd.xlane.f32.xlu0 %v5518
    %v5520 = vpop.xlane.xlu0 %5519
    %v5521 = vlaneseq
    %v5522 = vshrl.u32 %v5521, 7
    %v5523 = vsub.s32 1, %v5522
    %v5524 = vrot.slane %v5089, %v5523
    %v5525 = vmul.f32 %v5511, %v5524
    %v5526 = vmul.f32 %v5514, %v5524
    %v5527 = vmul.f32 %v5517, %v5524
    %v5528 = vmul.f32 %v5520, %v5524
    %v5529 = vadd.f32 %v5491, %v5525
    %v5530 = vadd.f32 %v5494, %v5526
    %v5531 = vadd.f32 %v5499, %v5527
    %v5532 = vadd.f32 %v5502, %v5528
    %v5533 = vmul.f32 %v5417, %v458
    %v5534 = vmul.f32 %v5419, %v459
    %v5535 = vmul.f32 %v5421, %v460
    %v5536 = vmul.f32 %v5423, %v461
    %v5537 = vsel %vm368, %v5533, 0.0
    %5538 = vadd.xlane.f32.xlu0 %v5537
    %v5539 = vpop.xlane.xlu0 %5538
    %v5540 = vsel %vm368, %v5534, 0.0
    %5541 = vadd.xlane.f32.xlu0 %v5540
    %v5542 = vpop.xlane.xlu0 %5541
    %v5543 = vsel %vm368, %v5535, 0.0
    %5544 = vadd.xlane.f32.xlu0 %v5543
    %v5545 = vpop.xlane.xlu0 %5544
    %v5546 = vsel %vm368, %v5536, 0.0
    %5547 = vadd.xlane.f32.xlu0 %v5546
    %v5548 = vpop.xlane.xlu0 %5547
    %v5549 = vlaneseq
    %v5550 = vshrl.u32 %v5549, 7
    %v5551 = vsub.s32 2, %v5550
    %v5552 = vrot.slane %v5089, %v5551
    %v5553 = vmul.f32 %v5539, %v5552
    %v5554 = vmul.f32 %v5542, %v5552
    %v5555 = vmul.f32 %v5545, %v5552
    %v5556 = vmul.f32 %v5548, %v5552
    %v5557 = vadd.f32 %v5529, %v5553
    %v5558 = vadd.f32 %v5530, %v5554
    %v5559 = vadd.f32 %v5531, %v5555
    %v5560 = vadd.f32 %v5532, %v5556
    %v5561 = vmul.f32 %v5417, %v487
    %v5562 = vmul.f32 %v5419, %v488
    %v5563 = vmul.f32 %v5421, %v489
    %v5564 = vmul.f32 %v5423, %v490
    %v5565 = vsel %vm368, %v5561, 0.0
    %5566 = vadd.xlane.f32.xlu0 %v5565
    %v5567 = vpop.xlane.xlu0 %5566
    %v5568 = vsel %vm368, %v5562, 0.0
    %5569 = vadd.xlane.f32.xlu0 %v5568
    %v5570 = vpop.xlane.xlu0 %5569
    %v5571 = vsel %vm368, %v5563, 0.0
    %5572 = vadd.xlane.f32.xlu0 %v5571
    %v5573 = vpop.xlane.xlu0 %5572
    %v5574 = vsel %vm368, %v5564, 0.0
    %5575 = vadd.xlane.f32.xlu0 %v5574
    %v5576 = vpop.xlane.xlu0 %5575
    %v5577 = vlaneseq
    %v5578 = vshrl.u32 %v5577, 7
    %v5579 = vsub.s32 3, %v5578
    %v5580 = vrot.slane %v5089, %v5579
    %v5581 = vmul.f32 %v5567, %v5580
    %v5582 = vmul.f32 %v5570, %v5580
    %v5583 = vmul.f32 %v5573, %v5580
    %v5584 = vmul.f32 %v5576, %v5580
    %v5585 = vadd.f32 %v5557, %v5581
    %v5586 = vadd.f32 %v5558, %v5582
    %v5587 = vadd.f32 %v5559, %v5583
    %v5588 = vadd.f32 %v5560, %v5584
    %v5589 = vmul.f32 %v5417, %v516
    %v5590 = vmul.f32 %v5419, %v517
    %v5591 = vmul.f32 %v5421, %v518
    %v5592 = vmul.f32 %v5423, %v519
    %v5593 = vsel %vm368, %v5589, 0.0
    %5594 = vadd.xlane.f32.xlu0 %v5593
    %v5595 = vpop.xlane.xlu0 %5594
    %v5596 = vsel %vm368, %v5590, 0.0
    %5597 = vadd.xlane.f32.xlu0 %v5596
    %v5598 = vpop.xlane.xlu0 %5597
    %v5599 = vsel %vm368, %v5591, 0.0
    %5600 = vadd.xlane.f32.xlu0 %v5599
    %v5601 = vpop.xlane.xlu0 %5600
    %v5602 = vsel %vm368, %v5592, 0.0
    %5603 = vadd.xlane.f32.xlu0 %v5602
    %v5604 = vpop.xlane.xlu0 %5603
    %v5605 = vlaneseq
    %v5606 = vshrl.u32 %v5605, 7
    %v5607 = vsub.s32 4, %v5606
    %v5608 = vrot.slane %v5089, %v5607
    %v5609 = vmul.f32 %v5595, %v5608
    %v5610 = vmul.f32 %v5598, %v5608
    %v5611 = vmul.f32 %v5601, %v5608
    %v5612 = vmul.f32 %v5604, %v5608
    %v5613 = vadd.f32 %v5585, %v5609
    %v5614 = vadd.f32 %v5586, %v5610
    %v5615 = vadd.f32 %v5587, %v5611
    %v5616 = vadd.f32 %v5588, %v5612
    %v5617 = vmul.f32 %v5417, %v545
    %v5618 = vmul.f32 %v5419, %v546
    %v5619 = vmul.f32 %v5421, %v547
    %v5620 = vmul.f32 %v5423, %v548
    %v5621 = vsel %vm368, %v5617, 0.0
    %5622 = vadd.xlane.f32.xlu0 %v5621
    %v5623 = vpop.xlane.xlu0 %5622
    %v5624 = vsel %vm368, %v5618, 0.0
    %5625 = vadd.xlane.f32.xlu0 %v5624
    %v5626 = vpop.xlane.xlu0 %5625
    %v5627 = vsel %vm368, %v5619, 0.0
    %5628 = vadd.xlane.f32.xlu0 %v5627
    %v5629 = vpop.xlane.xlu0 %5628
    %v5630 = vsel %vm368, %v5620, 0.0
    %5631 = vadd.xlane.f32.xlu0 %v5630
    %v5632 = vpop.xlane.xlu0 %5631
    %v5633 = vlaneseq
    %v5634 = vshrl.u32 %v5633, 7
    %v5635 = vsub.s32 5, %v5634
    %v5636 = vrot.slane %v5089, %v5635
    %v5637 = vmul.f32 %v5623, %v5636
    %v5638 = vmul.f32 %v5626, %v5636
    %v5639 = vmul.f32 %v5629, %v5636
    %v5640 = vmul.f32 %v5632, %v5636
    %v5641 = vadd.f32 %v5613, %v5637
    %v5642 = vadd.f32 %v5614, %v5638
    %v5643 = vadd.f32 %v5615, %v5639
    %v5644 = vadd.f32 %v5616, %v5640
    %v5645 = vmul.f32 %v5417, %v574
    %v5646 = vmul.f32 %v5419, %v575
    %v5647 = vmul.f32 %v5421, %v576
    %v5648 = vmul.f32 %v5423, %v577
    %v5649 = vsel %vm368, %v5645, 0.0
    %5650 = vadd.xlane.f32.xlu0 %v5649
    %v5651 = vpop.xlane.xlu0 %5650
    %v5652 = vsel %vm368, %v5646, 0.0
    %5653 = vadd.xlane.f32.xlu0 %v5652
    %v5654 = vpop.xlane.xlu0 %5653
    %v5655 = vsel %vm368, %v5647, 0.0
    %5656 = vadd.xlane.f32.xlu0 %v5655
    %v5657 = vpop.xlane.xlu0 %5656
    %v5658 = vsel %vm368, %v5648, 0.0
    %5659 = vadd.xlane.f32.xlu0 %v5658
    %v5660 = vpop.xlane.xlu0 %5659
    %v5661 = vlaneseq
    %v5662 = vshrl.u32 %v5661, 7
    %v5663 = vsub.s32 6, %v5662
    %v5664 = vrot.slane %v5089, %v5663
    %v5665 = vmul.f32 %v5651, %v5664
    %v5666 = vmul.f32 %v5654, %v5664
    %v5667 = vmul.f32 %v5657, %v5664
    %v5668 = vmul.f32 %v5660, %v5664
    %v5669 = vadd.f32 %v5641, %v5665
    %v5670 = vadd.f32 %v5642, %v5666
    %v5671 = vadd.f32 %v5643, %v5667
    %v5672 = vadd.f32 %v5644, %v5668
    %v5673 = vmul.f32 %v5417, %v603
    %v5674 = vmul.f32 %v5419, %v604
    %v5675 = vmul.f32 %v5421, %v605
    %v5676 = vmul.f32 %v5423, %v606
    %v5677 = vsel %vm368, %v5673, 0.0
    %5678 = vadd.xlane.f32.xlu0 %v5677
    %v5679 = vpop.xlane.xlu0 %5678
    %v5680 = vsel %vm368, %v5674, 0.0
    %5681 = vadd.xlane.f32.xlu0 %v5680
    %v5682 = vpop.xlane.xlu0 %5681
    %v5683 = vsel %vm368, %v5675, 0.0
    %5684 = vadd.xlane.f32.xlu0 %v5683
    %v5685 = vpop.xlane.xlu0 %5684
    %v5686 = vsel %vm368, %v5676, 0.0
    %5687 = vadd.xlane.f32.xlu0 %v5686
    %v5688 = vpop.xlane.xlu0 %5687
    %v5689 = vlaneseq
    %v5690 = vshrl.u32 %v5689, 7
    %v5691 = vsub.s32 7, %v5690
    %v5692 = vrot.slane %v5089, %v5691
    %v5693 = vmul.f32 %v5679, %v5692
    %v5694 = vmul.f32 %v5682, %v5692
    %v5695 = vmul.f32 %v5685, %v5692
    %v5696 = vmul.f32 %v5688, %v5692
    %v5697 = vadd.f32 %v5669, %v5693
    %v5698 = vadd.f32 %v5670, %v5694
    %v5699 = vadd.f32 %v5671, %v5695
    %v5700 = vadd.f32 %v5672, %v5696
    %v5701 = vmul.f32 %v5417, %v632
    %v5702 = vmul.f32 %v5419, %v633
    %v5703 = vmul.f32 %v5421, %v634
    %v5704 = vmul.f32 %v5423, %v635
    %v5705 = vsel %vm368, %v5701, 0.0
    %5706 = vadd.xlane.f32.xlu0 %v5705
    %v5707 = vpop.xlane.xlu0 %5706
    %v5708 = vsel %vm368, %v5702, 0.0
    %5709 = vadd.xlane.f32.xlu0 %v5708
    %v5710 = vpop.xlane.xlu0 %5709
    %v5711 = vsel %vm368, %v5703, 0.0
    %5712 = vadd.xlane.f32.xlu0 %v5711
    %v5713 = vpop.xlane.xlu0 %5712
    %v5714 = vsel %vm368, %v5704, 0.0
    %5715 = vadd.xlane.f32.xlu0 %v5714
    %v5716 = vpop.xlane.xlu0 %5715
    %v5717 = vlaneseq
    %v5718 = vshrl.u32 %v5717, 7
    %v5719 = vsub.s32 0, %v5718
    %v5720 = vrot.slane %v5090, %v5719
    %v5721 = vmul.f32 %v5707, %v5720
    %v5722 = vmul.f32 %v5710, %v5720
    %v5723 = vmul.f32 %v5713, %v5720
    %v5724 = vmul.f32 %v5716, %v5720
    %v5725 = vadd.f32 %v5697, %v5721
    %v5726 = vadd.f32 %v5698, %v5722
    %v5727 = vadd.f32 %v5699, %v5723
    %v5728 = vadd.f32 %v5700, %v5724
    %5729 = vset.pattern.permute.xlu0 9
    %5730 = vperm.xlu0 %5729, %v5074
    %v5731 = vpop.permute.xlu0 %5730
    %5733 = vset.pattern.permute.xlu0 9
    %5734 = vperm.xlu0 %5733, %v5077
    %v5735 = vpop.permute.xlu0 %5734
    %5737 = vset.pattern.permute.xlu0 9
    %5738 = vperm.xlu0 %5737, %v5082
    %v5739 = vpop.permute.xlu0 %5738
    %5741 = vset.pattern.permute.xlu0 9
    %5742 = vperm.xlu0 %5741, %v5085
    %v5743 = vpop.permute.xlu0 %5742
    %v5745 = vmul.f32 %v5731, %v334
    %v5746 = vmul.f32 %v5735, %v335
    %v5747 = vmul.f32 %v5739, %v336
    %v5748 = vmul.f32 %v5743, %v337
    %5751 = vrot.lane.b32.xlu0 %v4998, 96
    %v5752 = vpop.permute.xlu0 %5751
    %5753 = vrot.lane.b32.xlu0 %v4999, 96
    %v5754 = vpop.permute.xlu0 %5753
    %5755 = vrot.lane.b32.xlu0 %v5091, 32
    %v5756 = vpop.permute.xlu0 %5755
    %5757 = vrot.lane.b32.xlu0 %v5092, 32
    %v5758 = vpop.permute.xlu0 %5757
    %v5760 = vsel %vm368, %v5752, 0
    %v5763 = vsel %vm368, %v5754, 0
    %v5766 = vsel %vm368, %v5756, 0
    %v5769 = vsel %vm368, %v5758, 0
    %5771 = vmatprep.subr.bf16.mxu0 0
    %5772 = vmatpush1.bf16.xpose.msra.mxu0 %v5766
    %5773 = vmatprep.subr.bf16.mxu0 0
    %5774 = vmatpush1.bf16.xpose.msra.mxu0 %v5769
    %5775 = vmatprep.subr.bf16.mxu0 0
    %5776 = vmatpush1.bf16.xpose.msra.mxu0 0
    %5777 = vmatprep.subr.bf16.mxu0 0
    %5778 = vmatpush1.bf16.xpose.msra.mxu0 0
    %5779 = vmatprep.subr.bf16.mxu0 0
    %5780 = vmatpush1.bf16.xpose.msra.mxu0 0
    %5781 = vmatprep.subr.bf16.mxu0 0
    %5782 = vmatpush1.bf16.xpose.msra.mxu0 0
    %5783 = vmatprep.subr.bf16.mxu0 0
    %5784 = vmatpush1.bf16.xpose.msra.mxu0 0
    %5785 = vmatprep.subr.bf16.mxu0 0
    %5786 = vmatpush1.bf16.xpose.msra.mxu0 0
    %5787 = vmatprep.subr.bf16.mxu0 0
    %5788 = vmatpush1.bf16.xpose.msra.mxu0 0
    %5789 = vmatprep.subr.bf16.mxu0 0
    %5790 = vmatpush1.bf16.xpose.msra.mxu0 0
    %5791 = vmatprep.subr.bf16.mxu0 0
    %5792 = vmatpush1.bf16.xpose.msra.mxu0 0
    %5793 = vmatprep.subr.bf16.mxu0 0
    %5794 = vmatpush1.bf16.xpose.msra.mxu0 0
    %5795 = vmatprep.subr.bf16.mxu0 0
    %5796 = vmatpush1.bf16.xpose.msra.mxu0 0
    %5797 = vmatprep.subr.bf16.mxu0 0
    %5798 = vmatpush1.bf16.xpose.msra.mxu0 0
    %5799 = vmatprep.subr.bf16.mxu0 0
    %5800 = vmatpush1.bf16.xpose.msra.mxu0 0
    %5801 = vmatprep.subr.bf16.mxu0 0
    %5802 = vmatpush1.bf16.xpose.msra.mxu0 0
    %5803 = vmatprep.mubr.bf16.mxu0 0
    %5804 = vmatmul.mubr.bf16.gmra.mrb[0].mxu0 %v5760
    %v5805 = vpop.f32.mrb[0].mxu0
    %v5806 = vadd.f32 %v5745, %v5805
    %v5807 = vpop.f32.mrb[0].mxu0
    %v5808 = vpop.f32.mrb[0].mxu0
    %v5809 = vadd.f32 %v5746, %v5808
    %v5810 = vpop.f32.mrb[0].mxu0
    %5811 = vmatprep.mubr.bf16.mxu0 0
    %5812 = vmatmul.mubr.bf16.gmra.mrb[0].mxu0 %v5763
    %v5813 = vpop.f32.mrb[0].mxu0
    %v5814 = vadd.f32 %v5747, %v5813
    %v5815 = vpop.f32.mrb[0].mxu0
    %v5816 = vpop.f32.mrb[0].mxu0
    %v5817 = vadd.f32 %v5748, %v5816
    %v5818 = vpop.f32.mrb[0].mxu0
    %5819 = vdwg.mxu0
    %5820 = vset.pattern.permute.xlu0 10
    %5821 = vperm.xlu0 %5820, %v5074
    %v5822 = vpop.permute.xlu0 %5821
    %5824 = vset.pattern.permute.xlu0 10
    %5825 = vperm.xlu0 %5824, %v5077
    %v5826 = vpop.permute.xlu0 %5825
    %5828 = vset.pattern.permute.xlu0 10
    %5829 = vperm.xlu0 %5828, %v5082
    %v5830 = vpop.permute.xlu0 %5829
    %5832 = vset.pattern.permute.xlu0 10
    %5833 = vperm.xlu0 %5832, %v5085
    %v5834 = vpop.permute.xlu0 %5833
    %v5836 = vmul.f32 %v5822, %v429
    %v5837 = vmul.f32 %v5826, %v430
    %v5838 = vmul.f32 %v5830, %v431
    %v5839 = vmul.f32 %v5834, %v432
    %v5840 = vadd.f32 %v5806, %v5836
    %v5841 = vadd.f32 %v5809, %v5837
    %v5842 = vadd.f32 %v5814, %v5838
    %v5843 = vadd.f32 %v5817, %v5839
    %5844 = vset.pattern.permute.xlu0 11
    %5845 = vperm.xlu0 %5844, %v5074
    %v5846 = vpop.permute.xlu0 %5845
    %5848 = vset.pattern.permute.xlu0 11
    %5849 = vperm.xlu0 %5848, %v5077
    %v5850 = vpop.permute.xlu0 %5849
    %5852 = vset.pattern.permute.xlu0 11
    %5853 = vperm.xlu0 %5852, %v5082
    %v5854 = vpop.permute.xlu0 %5853
    %5856 = vset.pattern.permute.xlu0 11
    %5857 = vperm.xlu0 %5856, %v5085
    %v5858 = vpop.permute.xlu0 %5857
    %v5860 = vmul.f32 %v5846, %v458
    %v5861 = vmul.f32 %v5850, %v459
    %v5862 = vmul.f32 %v5854, %v460
    %v5863 = vmul.f32 %v5858, %v461
    %v5864 = vadd.f32 %v5840, %v5860
    %v5865 = vadd.f32 %v5841, %v5861
    %v5866 = vadd.f32 %v5842, %v5862
    %v5867 = vadd.f32 %v5843, %v5863
    %5868 = vset.pattern.permute.xlu0 12
    %5869 = vperm.xlu0 %5868, %v5074
    %v5870 = vpop.permute.xlu0 %5869
    %5872 = vset.pattern.permute.xlu0 12
    %5873 = vperm.xlu0 %5872, %v5077
    %v5874 = vpop.permute.xlu0 %5873
    %5876 = vset.pattern.permute.xlu0 12
    %5877 = vperm.xlu0 %5876, %v5082
    %v5878 = vpop.permute.xlu0 %5877
    %5880 = vset.pattern.permute.xlu0 12
    %5881 = vperm.xlu0 %5880, %v5085
    %v5882 = vpop.permute.xlu0 %5881
    %v5884 = vmul.f32 %v5870, %v487
    %v5885 = vmul.f32 %v5874, %v488
    %v5886 = vmul.f32 %v5878, %v489
    %v5887 = vmul.f32 %v5882, %v490
    %v5888 = vadd.f32 %v5864, %v5884
    %v5889 = vadd.f32 %v5865, %v5885
    %v5890 = vadd.f32 %v5866, %v5886
    %v5891 = vadd.f32 %v5867, %v5887
    %5892 = vset.pattern.permute.xlu0 13
    %5893 = vperm.xlu0 %5892, %v5074
    %v5894 = vpop.permute.xlu0 %5893
    %5896 = vset.pattern.permute.xlu0 13
    %5897 = vperm.xlu0 %5896, %v5077
    %v5898 = vpop.permute.xlu0 %5897
    %5900 = vset.pattern.permute.xlu0 13
    %5901 = vperm.xlu0 %5900, %v5082
    %v5902 = vpop.permute.xlu0 %5901
    %5904 = vset.pattern.permute.xlu0 13
    %5905 = vperm.xlu0 %5904, %v5085
    %v5906 = vpop.permute.xlu0 %5905
    %v5908 = vmul.f32 %v5894, %v516
    %v5909 = vmul.f32 %v5898, %v517
    %v5910 = vmul.f32 %v5902, %v518
    %v5911 = vmul.f32 %v5906, %v519
    %v5912 = vadd.f32 %v5888, %v5908
    %v5913 = vadd.f32 %v5889, %v5909
    %v5914 = vadd.f32 %v5890, %v5910
    %v5915 = vadd.f32 %v5891, %v5911
    %5916 = vset.pattern.permute.xlu0 14
    %5917 = vperm.xlu0 %5916, %v5074
    %v5918 = vpop.permute.xlu0 %5917
    %5920 = vset.pattern.permute.xlu0 14
    %5921 = vperm.xlu0 %5920, %v5077
    %v5922 = vpop.permute.xlu0 %5921
    %5924 = vset.pattern.permute.xlu0 14
    %5925 = vperm.xlu0 %5924, %v5082
    %v5926 = vpop.permute.xlu0 %5925
    %5928 = vset.pattern.permute.xlu0 14
    %5929 = vperm.xlu0 %5928, %v5085
    %v5930 = vpop.permute.xlu0 %5929
    %v5932 = vmul.f32 %v5918, %v545
    %v5933 = vmul.f32 %v5922, %v546
    %v5934 = vmul.f32 %v5926, %v547
    %v5935 = vmul.f32 %v5930, %v548
    %v5936 = vadd.f32 %v5912, %v5932
    %v5937 = vadd.f32 %v5913, %v5933
    %v5938 = vadd.f32 %v5914, %v5934
    %v5939 = vadd.f32 %v5915, %v5935
    %5940 = vset.pattern.permute.xlu0 15
    %5941 = vperm.xlu0 %5940, %v5074
    %v5942 = vpop.permute.xlu0 %5941
    %5944 = vset.pattern.permute.xlu0 15
    %5945 = vperm.xlu0 %5944, %v5077
    %v5946 = vpop.permute.xlu0 %5945
    %5948 = vset.pattern.permute.xlu0 15
    %5949 = vperm.xlu0 %5948, %v5082
    %v5950 = vpop.permute.xlu0 %5949
    %5952 = vset.pattern.permute.xlu0 15
    %5953 = vperm.xlu0 %5952, %v5085
    %v5954 = vpop.permute.xlu0 %5953
    %v5956 = vmul.f32 %v5942, %v574
    %v5957 = vmul.f32 %v5946, %v575
    %v5958 = vmul.f32 %v5950, %v576
    %v5959 = vmul.f32 %v5954, %v577
    %v5960 = vadd.f32 %v5936, %v5956
    %v5961 = vadd.f32 %v5937, %v5957
    %v5962 = vadd.f32 %v5938, %v5958
    %v5963 = vadd.f32 %v5939, %v5959
    %5964 = vset.pattern.permute.xlu0 16
    %5965 = vperm.xlu0 %5964, %v5074
    %v5966 = vpop.permute.xlu0 %5965
    %5968 = vset.pattern.permute.xlu0 16
    %5969 = vperm.xlu0 %5968, %v5077
    %v5970 = vpop.permute.xlu0 %5969
    %5972 = vset.pattern.permute.xlu0 16
    %5973 = vperm.xlu0 %5972, %v5082
    %v5974 = vpop.permute.xlu0 %5973
    %5976 = vset.pattern.permute.xlu0 16
    %5977 = vperm.xlu0 %5976, %v5085
    %v5978 = vpop.permute.xlu0 %5977
    %v5980 = vmul.f32 %v5966, %v603
    %v5981 = vmul.f32 %v5970, %v604
    %v5982 = vmul.f32 %v5974, %v605
    %v5983 = vmul.f32 %v5978, %v606
    %v5984 = vadd.f32 %v5960, %v5980
    %v5985 = vadd.f32 %v5961, %v5981
    %v5986 = vadd.f32 %v5962, %v5982
    %v5987 = vadd.f32 %v5963, %v5983
    %5988 = vset.pattern.permute.xlu0 17
    %5989 = vperm.xlu0 %5988, %v5074
    %v5990 = vpop.permute.xlu0 %5989
    %5992 = vset.pattern.permute.xlu0 17
    %5993 = vperm.xlu0 %5992, %v5077
    %v5994 = vpop.permute.xlu0 %5993
    %5996 = vset.pattern.permute.xlu0 17
    %5997 = vperm.xlu0 %5996, %v5082
    %v5998 = vpop.permute.xlu0 %5997
    %6000 = vset.pattern.permute.xlu0 17
    %6001 = vperm.xlu0 %6000, %v5085
    %v6002 = vpop.permute.xlu0 %6001
    %v6004 = vmul.f32 %v5990, %v632
    %v6005 = vmul.f32 %v5994, %v633
    %v6006 = vmul.f32 %v5998, %v634
    %v6007 = vmul.f32 %v6002, %v635
    %v6008 = vadd.f32 %v5984, %v6004
    %v6009 = vadd.f32 %v5985, %v6005
    %v6010 = vadd.f32 %v5986, %v6006
    %v6011 = vadd.f32 %v5987, %v6007
    %v6012 = vsel %vm326, %v6008, -10000.0
    %v6013 = vsel %vm327, %v6009, -10000.0
    %v6014 = vsel %vm328, %v6010, -10000.0
    %v6015 = vsel %vm329, %v6011, -10000.0
    %v6016 = vsel %vm368, %v6012, -inf
    %6017 = vmax.xlane.f32.xlu0 %v6016
    %v6018 = vpop.xlane.xlu0 %6017
    %v6019 = vsel %vm368, %v6013, -inf
    %6020 = vmax.xlane.f32.xlu0 %v6019
    %v6021 = vpop.xlane.xlu0 %6020
    %v6022 = vsel %vm368, %v6014, -inf
    %6023 = vmax.xlane.f32.xlu0 %v6022
    %v6024 = vpop.xlane.xlu0 %6023
    %v6025 = vsel %vm368, %v6015, -inf
    %6026 = vmax.xlane.f32.xlu0 %v6025
    %v6027 = vpop.xlane.xlu0 %6026
    %v6028 = vsub.f32 %v6012, %v6018
    %v6029 = vsub.f32 %v6013, %v6021
    %v6030 = vsub.f32 %v6014, %v6024
    %v6031 = vsub.f32 %v6015, %v6027
    %v6032 = vmul.f32 %v6028, 1.442695
    %v6033 = vpow.pop %v6032
    %v6034 = vmul.f32 %v6029, 1.442695
    %v6035 = vpow.pop %v6034
    %v6036 = vmul.f32 %v6030, 1.442695
    %v6037 = vpow.pop %v6036
    %v6038 = vmul.f32 %v6031, 1.442695
    %v6039 = vpow.pop %v6038
    %v6040 = vsel %vm368, %v6033, 0.0
    %6041 = vadd.xlane.f32.xlu0 %v6040
    %v6042 = vpop.xlane.xlu0 %6041
    %v6043 = vsel %vm368, %v6035, 0.0
    %6044 = vadd.xlane.f32.xlu0 %v6043
    %v6045 = vpop.xlane.xlu0 %6044
    %v6046 = vsel %vm368, %v6037, 0.0
    %6047 = vadd.xlane.f32.xlu0 %v6046
    %v6048 = vpop.xlane.xlu0 %6047
    %v6049 = vsel %vm368, %v6039, 0.0
    %6050 = vadd.xlane.f32.xlu0 %v6049
    %v6051 = vpop.xlane.xlu0 %6050
    %v6052 = vrcp.pop %v6042
    %v6053 = vmul.f32 %v6033, %v6052
    %v6054 = vrcp.pop %v6045
    %v6055 = vmul.f32 %v6035, %v6054
    %v6056 = vrcp.pop %v6048
    %v6057 = vmul.f32 %v6037, %v6056
    %v6058 = vrcp.pop %v6051
    %v6059 = vmul.f32 %v6039, %v6058
    %v6060 = vpack.c.bf16 %v6055, %v6053
    %v6061 = vpack.c.bf16 %v6059, %v6057
    %v6062 = vmul.f32 %v6053, %v334
    %v6063 = vmul.f32 %v6055, %v335
    %v6064 = vmul.f32 %v6057, %v336
    %v6065 = vmul.f32 %v6059, %v337
    %v6066 = vsel %vm368, %v6062, 0.0
    %6067 = vadd.xlane.f32.xlu0 %v6066
    %v6068 = vpop.xlane.xlu0 %6067
    %v6069 = vsel %vm368, %v6063, 0.0
    %6070 = vadd.xlane.f32.xlu0 %v6069
    %v6071 = vpop.xlane.xlu0 %6070
    %v6072 = vsel %vm368, %v6064, 0.0
    %6073 = vadd.xlane.f32.xlu0 %v6072
    %v6074 = vpop.xlane.xlu0 %6073
    %v6075 = vsel %vm368, %v6065, 0.0
    %6076 = vadd.xlane.f32.xlu0 %v6075
    %v6077 = vpop.xlane.xlu0 %6076
    %v6078 = vmul.f32 %v6068, %v5445
    %v6079 = vmul.f32 %v6071, %v5445
    %v6080 = vmul.f32 %v6074, %v5445
    %v6081 = vmul.f32 %v6077, %v5445
    %6084 = vrot.lane.b32.xlu0 %v5093, 96
    %v6085 = vpop.permute.xlu0 %6084
    %6086 = vrot.lane.b32.xlu0 %v5094, 96
    %v6087 = vpop.permute.xlu0 %6086
    %v6091 = vsel %vm368, %v6060, 0
    %v6094 = vsel %vm368, %v6061, 0
    %6096 = vmatprep.subr.bf16.mxu0 0
    %6097 = vmatpush1.bf16.msra.mxu0 %v6085
    %6098 = vmatprep.subr.bf16.mxu0 0
    %6099 = vmatpush1.bf16.msra.mxu0 %v6087
    %6100 = vmatprep.subr.bf16.mxu0 0
    %6101 = vmatpush1.bf16.msra.mxu0 0
    %6102 = vmatprep.subr.bf16.mxu0 0
    %6103 = vmatpush1.bf16.msra.mxu0 0
    %6104 = vmatprep.subr.bf16.mxu0 0
    %6105 = vmatpush1.bf16.msra.mxu0 0
    %6106 = vmatprep.subr.bf16.mxu0 0
    %6107 = vmatpush1.bf16.msra.mxu0 0
    %6108 = vmatprep.subr.bf16.mxu0 0
    %6109 = vmatpush1.bf16.msra.mxu0 0
    %6110 = vmatprep.subr.bf16.mxu0 0
    %6111 = vmatpush1.bf16.msra.mxu0 0
    %6112 = vmatprep.subr.bf16.mxu0 0
    %6113 = vmatpush1.bf16.msra.mxu0 0
    %6114 = vmatprep.subr.bf16.mxu0 0
    %6115 = vmatpush1.bf16.msra.mxu0 0
    %6116 = vmatprep.subr.bf16.mxu0 0
    %6117 = vmatpush1.bf16.msra.mxu0 0
    %6118 = vmatprep.subr.bf16.mxu0 0
    %6119 = vmatpush1.bf16.msra.mxu0 0
    %6120 = vmatprep.subr.bf16.mxu0 0
    %6121 = vmatpush1.bf16.msra.mxu0 0
    %6122 = vmatprep.subr.bf16.mxu0 0
    %6123 = vmatpush1.bf16.msra.mxu0 0
    %6124 = vmatprep.subr.bf16.mxu0 0
    %6125 = vmatpush1.bf16.msra.mxu0 0
    %6126 = vmatprep.subr.bf16.mxu0 0
    %6127 = vmatpush1.bf16.msra.mxu0 0
    %6128 = vmatprep.mubr.bf16.mxu0 0
    %6129 = vmatmul.mubr.bf16.gmra.mrb[0].mxu0 %v6091
    %v6130 = vpop.f32.mrb[0].mxu0
    %v6131 = vadd.f32 %v6078, %v6130
    %v6132 = vpop.f32.mrb[0].mxu0
    %v6133 = vpop.f32.mrb[0].mxu0
    %v6134 = vadd.f32 %v6079, %v6133
    %v6135 = vpop.f32.mrb[0].mxu0
    %6136 = vmatprep.mubr.bf16.mxu0 0
    %6137 = vmatmul.mubr.bf16.gmra.mrb[0].mxu0 %v6094
    %v6138 = vpop.f32.mrb[0].mxu0
    %v6139 = vadd.f32 %v6080, %v6138
    %v6140 = vpop.f32.mrb[0].mxu0
    %v6141 = vpop.f32.mrb[0].mxu0
    %v6142 = vadd.f32 %v6081, %v6141
    %v6143 = vpop.f32.mrb[0].mxu0
    %6144 = vdwg.mxu0
    %v6145 = vmul.f32 %v6053, %v429
    %v6146 = vmul.f32 %v6055, %v430
    %v6147 = vmul.f32 %v6057, %v431
    %v6148 = vmul.f32 %v6059, %v432
    %v6149 = vsel %vm368, %v6145, 0.0
    %6150 = vadd.xlane.f32.xlu0 %v6149
    %v6151 = vpop.xlane.xlu0 %6150
    %v6152 = vsel %vm368, %v6146, 0.0
    %6153 = vadd.xlane.f32.xlu0 %v6152
    %v6154 = vpop.xlane.xlu0 %6153
    %v6155 = vsel %vm368, %v6147, 0.0
    %6156 = vadd.xlane.f32.xlu0 %v6155
    %v6157 = vpop.xlane.xlu0 %6156
    %v6158 = vsel %vm368, %v6148, 0.0
    %6159 = vadd.xlane.f32.xlu0 %v6158
    %v6160 = vpop.xlane.xlu0 %6159
    %v6161 = vmul.f32 %v6151, %v5524
    %v6162 = vmul.f32 %v6154, %v5524
    %v6163 = vmul.f32 %v6157, %v5524
    %v6164 = vmul.f32 %v6160, %v5524
    %v6165 = vadd.f32 %v6131, %v6161
    %v6166 = vadd.f32 %v6134, %v6162
    %v6167 = vadd.f32 %v6139, %v6163
    %v6168 = vadd.f32 %v6142, %v6164
    %v6169 = vmul.f32 %v6053, %v458
    %v6170 = vmul.f32 %v6055, %v459
    %v6171 = vmul.f32 %v6057, %v460
    %v6172 = vmul.f32 %v6059, %v461
    %v6173 = vsel %vm368, %v6169, 0.0
    %6174 = vadd.xlane.f32.xlu0 %v6173
    %v6175 = vpop.xlane.xlu0 %6174
    %v6176 = vsel %vm368, %v6170, 0.0
    %6177 = vadd.xlane.f32.xlu0 %v6176
    %v6178 = vpop.xlane.xlu0 %6177
    %v6179 = vsel %vm368, %v6171, 0.0
    %6180 = vadd.xlane.f32.xlu0 %v6179
    %v6181 = vpop.xlane.xlu0 %6180
    %v6182 = vsel %vm368, %v6172, 0.0
    %6183 = vadd.xlane.f32.xlu0 %v6182
    %v6184 = vpop.xlane.xlu0 %6183
    %v6185 = vmul.f32 %v6175, %v5552
    %v6186 = vmul.f32 %v6178, %v5552
    %v6187 = vmul.f32 %v6181, %v5552
    %v6188 = vmul.f32 %v6184, %v5552
    %v6189 = vadd.f32 %v6165, %v6185
    %v6190 = vadd.f32 %v6166, %v6186
    %v6191 = vadd.f32 %v6167, %v6187
    %v6192 = vadd.f32 %v6168, %v6188
    %v6193 = vmul.f32 %v6053, %v487
    %v6194 = vmul.f32 %v6055, %v488
    %v6195 = vmul.f32 %v6057, %v489
    %v6196 = vmul.f32 %v6059, %v490
    %v6197 = vsel %vm368, %v6193, 0.0
    %6198 = vadd.xlane.f32.xlu0 %v6197
    %v6199 = vpop.xlane.xlu0 %6198
    %v6200 = vsel %vm368, %v6194, 0.0
    %6201 = vadd.xlane.f32.xlu0 %v6200
    %v6202 = vpop.xlane.xlu0 %6201
    %v6203 = vsel %vm368, %v6195, 0.0
    %6204 = vadd.xlane.f32.xlu0 %v6203
    %v6205 = vpop.xlane.xlu0 %6204
    %v6206 = vsel %vm368, %v6196, 0.0
    %6207 = vadd.xlane.f32.xlu0 %v6206
    %v6208 = vpop.xlane.xlu0 %6207
    %v6209 = vmul.f32 %v6199, %v5580
    %v6210 = vmul.f32 %v6202, %v5580
    %v6211 = vmul.f32 %v6205, %v5580
    %v6212 = vmul.f32 %v6208, %v5580
    %v6213 = vadd.f32 %v6189, %v6209
    %v6214 = vadd.f32 %v6190, %v6210
    %v6215 = vadd.f32 %v6191, %v6211
    %v6216 = vadd.f32 %v6192, %v6212
    %v6217 = vmul.f32 %v6053, %v516
    %v6218 = vmul.f32 %v6055, %v517
    %v6219 = vmul.f32 %v6057, %v518
    %v6220 = vmul.f32 %v6059, %v519
    %v6221 = vsel %vm368, %v6217, 0.0
    %6222 = vadd.xlane.f32.xlu0 %v6221
    %v6223 = vpop.xlane.xlu0 %6222
    %v6224 = vsel %vm368, %v6218, 0.0
    %6225 = vadd.xlane.f32.xlu0 %v6224
    %v6226 = vpop.xlane.xlu0 %6225
    %v6227 = vsel %vm368, %v6219, 0.0
    %6228 = vadd.xlane.f32.xlu0 %v6227
    %v6229 = vpop.xlane.xlu0 %6228
    %v6230 = vsel %vm368, %v6220, 0.0
    %6231 = vadd.xlane.f32.xlu0 %v6230
    %v6232 = vpop.xlane.xlu0 %6231
    %v6233 = vmul.f32 %v6223, %v5608
    %v6234 = vmul.f32 %v6226, %v5608
    %v6235 = vmul.f32 %v6229, %v5608
    %v6236 = vmul.f32 %v6232, %v5608
    %v6237 = vadd.f32 %v6213, %v6233
    %v6238 = vadd.f32 %v6214, %v6234
    %v6239 = vadd.f32 %v6215, %v6235
    %v6240 = vadd.f32 %v6216, %v6236
    %v6241 = vmul.f32 %v6053, %v545
    %v6242 = vmul.f32 %v6055, %v546
    %v6243 = vmul.f32 %v6057, %v547
    %v6244 = vmul.f32 %v6059, %v548
    %v6245 = vsel %vm368, %v6241, 0.0
    %6246 = vadd.xlane.f32.xlu0 %v6245
    %v6247 = vpop.xlane.xlu0 %6246
    %v6248 = vsel %vm368, %v6242, 0.0
    %6249 = vadd.xlane.f32.xlu0 %v6248
    %v6250 = vpop.xlane.xlu0 %6249
    %v6251 = vsel %vm368, %v6243, 0.0
    %6252 = vadd.xlane.f32.xlu0 %v6251
    %v6253 = vpop.xlane.xlu0 %6252
    %v6254 = vsel %vm368, %v6244, 0.0
    %6255 = vadd.xlane.f32.xlu0 %v6254
    %v6256 = vpop.xlane.xlu0 %6255
    %v6257 = vmul.f32 %v6247, %v5636
    %v6258 = vmul.f32 %v6250, %v5636
    %v6259 = vmul.f32 %v6253, %v5636
    %v6260 = vmul.f32 %v6256, %v5636
    %v6261 = vadd.f32 %v6237, %v6257
    %v6262 = vadd.f32 %v6238, %v6258
    %v6263 = vadd.f32 %v6239, %v6259
    %v6264 = vadd.f32 %v6240, %v6260
    %v6265 = vmul.f32 %v6053, %v574
    %v6266 = vmul.f32 %v6055, %v575
    %v6267 = vmul.f32 %v6057, %v576
    %v6268 = vmul.f32 %v6059, %v577
    %v6269 = vsel %vm368, %v6265, 0.0
    %6270 = vadd.xlane.f32.xlu0 %v6269
    %v6271 = vpop.xlane.xlu0 %6270
    %v6272 = vsel %vm368, %v6266, 0.0
    %6273 = vadd.xlane.f32.xlu0 %v6272
    %v6274 = vpop.xlane.xlu0 %6273
    %v6275 = vsel %vm368, %v6267, 0.0
    %6276 = vadd.xlane.f32.xlu0 %v6275
    %v6277 = vpop.xlane.xlu0 %6276
    %v6278 = vsel %vm368, %v6268, 0.0
    %6279 = vadd.xlane.f32.xlu0 %v6278
    %v6280 = vpop.xlane.xlu0 %6279
    %v6281 = vmul.f32 %v6271, %v5664
    %v6282 = vmul.f32 %v6274, %v5664
    %v6283 = vmul.f32 %v6277, %v5664
    %v6284 = vmul.f32 %v6280, %v5664
    %v6285 = vadd.f32 %v6261, %v6281
    %v6286 = vadd.f32 %v6262, %v6282
    %v6287 = vadd.f32 %v6263, %v6283
    %v6288 = vadd.f32 %v6264, %v6284
    %v6289 = vmul.f32 %v6053, %v603
    %v6290 = vmul.f32 %v6055, %v604
    %v6291 = vmul.f32 %v6057, %v605
    %v6292 = vmul.f32 %v6059, %v606
    %v6293 = vsel %vm368, %v6289, 0.0
    %6294 = vadd.xlane.f32.xlu0 %v6293
    %v6295 = vpop.xlane.xlu0 %6294
    %v6296 = vsel %vm368, %v6290, 0.0
    %6297 = vadd.xlane.f32.xlu0 %v6296
    %v6298 = vpop.xlane.xlu0 %6297
    %v6299 = vsel %vm368, %v6291, 0.0
    %6300 = vadd.xlane.f32.xlu0 %v6299
    %v6301 = vpop.xlane.xlu0 %6300
    %v6302 = vsel %vm368, %v6292, 0.0
    %6303 = vadd.xlane.f32.xlu0 %v6302
    %v6304 = vpop.xlane.xlu0 %6303
    %v6305 = vmul.f32 %v6295, %v5692
    %v6306 = vmul.f32 %v6298, %v5692
    %v6307 = vmul.f32 %v6301, %v5692
    %v6308 = vmul.f32 %v6304, %v5692
    %v6309 = vadd.f32 %v6285, %v6305
    %v6310 = vadd.f32 %v6286, %v6306
    %v6311 = vadd.f32 %v6287, %v6307
    %v6312 = vadd.f32 %v6288, %v6308
    %v6313 = vmul.f32 %v6053, %v632
    %v6314 = vmul.f32 %v6055, %v633
    %v6315 = vmul.f32 %v6057, %v634
    %v6316 = vmul.f32 %v6059, %v635
    %v6317 = vsel %vm368, %v6313, 0.0
    %6318 = vadd.xlane.f32.xlu0 %v6317
    %v6319 = vpop.xlane.xlu0 %6318
    %v6320 = vsel %vm368, %v6314, 0.0
    %6321 = vadd.xlane.f32.xlu0 %v6320
    %v6322 = vpop.xlane.xlu0 %6321
    %v6323 = vsel %vm368, %v6315, 0.0
    %6324 = vadd.xlane.f32.xlu0 %v6323
    %v6325 = vpop.xlane.xlu0 %6324
    %v6326 = vsel %vm368, %v6316, 0.0
    %6327 = vadd.xlane.f32.xlu0 %v6326
    %v6328 = vpop.xlane.xlu0 %6327
    %v6329 = vmul.f32 %v6319, %v5720
    %v6330 = vmul.f32 %v6322, %v5720
    %v6331 = vmul.f32 %v6325, %v5720
    %v6332 = vmul.f32 %v6328, %v5720
    %v6333 = vadd.f32 %v6309, %v6329
    %v6334 = vadd.f32 %v6310, %v6330
    %v6335 = vadd.f32 %v6311, %v6331
    %v6336 = vadd.f32 %v6312, %v6332
    %6341 = vrot.lane.b32.xlu0 %v6333, 32
    %v6342 = vpop.permute.xlu0 %6341
    %6343 = vrot.lane.b32.xlu0 %v6334, 32
    %v6344 = vpop.permute.xlu0 %6343
    %6345 = vrot.lane.b32.xlu0 %v6335, 32
    %v6346 = vpop.permute.xlu0 %6345
    %6347 = vrot.lane.b32.xlu0 %v6336, 32
    %v6348 = vpop.permute.xlu0 %6347
    %v6353 = vsel %vm368, %v5725, %v6342
    %v6354 = vsel %vm368, %v5726, %v6344
    %v6355 = vsel %vm368, %v5727, %v6346
    %v6356 = vsel %vm368, %v5728, %v6348
    %v6357 = vpack.c.bf16 %v6354, %v6353
    %v6358 = vpack.c.bf16 %v6356, %v6355
    %s6359 = scalar_lea.vmem %s7, 64
    %v6360 = vld [vmem:[%s6359] sm:$0xf]
    %v6361 = vld [vmem:[%s6359 + $0x4] sm:$0xf]
    %v6362 = vld [vmem:[%s6359 + $0x8] sm:$0xf]
    %v6363 = vld [vmem:[%s6359 + $0xc] sm:$0xf]
    %v6364 = vld [vmem:[%s6359 + $0x10] sm:$0xf]
    %v6365 = vld [vmem:[%s6359 + $0x14] sm:$0xf]
    %v6366 = vld [vmem:[%s6359 + $0x18] sm:$0xf]
    %v6367 = vld [vmem:[%s6359 + $0x1c] sm:$0xf]
    %s6368 = scalar_lea.vmem %s8, 2
    %v6369 = vld [vmem:[%s6368] sm:$0x1]
    %v6371 = vlaneseq
    %v6372 = vshrl.u32 %v6371, 7
    %v6373 = vsub.s32 0, %v6372
    %v6374 = vrot.slane %v6369, %v6373
    %v6384 = vunpack.c.l.b16 %v6360
    %v6385 = vunpack.c.l.b16 %v6361
    %v6386 = vunpack.c.l.b16 %v6362
    %v6387 = vunpack.c.l.b16 %v6363
    %v6388 = vunpack.c.l.b16 %v6364
    %v6389 = vunpack.c.l.b16 %v6365
    %v6390 = vunpack.c.l.b16 %v6366
    %v6391 = vunpack.c.l.b16 %v6367
    %v6392 = vpack.c.b16 %v6385, %v6384
    %v6393 = vpack.c.b16 %v6387, %v6386
    %v6394 = vpack.c.b16 %v6389, %v6388
    %v6395 = vpack.c.b16 %v6391, %v6390
    %v6401 = vsel %vm167, %v6357, 0
    %v6404 = vsel %vm167, %v6358, 0
    %6406 = vmatprep.subr.bf16.mxu0 0
    %6407 = vmatpush1.bf16.msra.mxu0 %v6392
    %6408 = vmatprep.subr.bf16.mxu0 0
    %6409 = vmatpush1.bf16.msra.mxu0 %v6393
    %6410 = vmatprep.subr.bf16.mxu0 0
    %6411 = vmatpush1.bf16.msra.mxu0 %v6394
    %6412 = vmatprep.subr.bf16.mxu0 0
    %6413 = vmatpush1.bf16.msra.mxu0 %v6395
    %6414 = vmatprep.subr.bf16.mxu0 0
    %6415 = vmatpush1.bf16.msra.mxu0 0
    %6416 = vmatprep.subr.bf16.mxu0 0
    %6417 = vmatpush1.bf16.msra.mxu0 0
    %6418 = vmatprep.subr.bf16.mxu0 0
    %6419 = vmatpush1.bf16.msra.mxu0 0
    %6420 = vmatprep.subr.bf16.mxu0 0
    %6421 = vmatpush1.bf16.msra.mxu0 0
    %6422 = vmatprep.subr.bf16.mxu0 0
    %6423 = vmatpush1.bf16.msra.mxu0 0
    %6424 = vmatprep.subr.bf16.mxu0 0
    %6425 = vmatpush1.bf16.msra.mxu0 0
    %6426 = vmatprep.subr.bf16.mxu0 0
    %6427 = vmatpush1.bf16.msra.mxu0 0
    %6428 = vmatprep.subr.bf16.mxu0 0
    %6429 = vmatpush1.bf16.msra.mxu0 0
    %6430 = vmatprep.subr.bf16.mxu0 0
    %6431 = vmatpush1.bf16.msra.mxu0 0
    %6432 = vmatprep.subr.bf16.mxu0 0
    %6433 = vmatpush1.bf16.msra.mxu0 0
    %6434 = vmatprep.subr.bf16.mxu0 0
    %6435 = vmatpush1.bf16.msra.mxu0 0
    %6436 = vmatprep.subr.bf16.mxu0 0
    %6437 = vmatpush1.bf16.msra.mxu0 0
    %6438 = vmatprep.mubr.bf16.mxu0 0
    %6439 = vmatmul.mubr.bf16.gmra.mrb[0].mxu0 %v6401
    %v6440 = vpop.f32.mrb[0].mxu0
    %v6441 = vadd.f32 %v6374, %v6440
    %v6442 = vpop.f32.mrb[0].mxu0
    %v6443 = vpop.f32.mrb[0].mxu0
    %v6444 = vadd.f32 %v6374, %v6443
    %v6445 = vpop.f32.mrb[0].mxu0
    %6446 = vmatprep.mubr.bf16.mxu0 0
    %6447 = vmatmul.mubr.bf16.gmra.mrb[0].mxu0 %v6404
    %v6448 = vpop.f32.mrb[0].mxu0
    %v6449 = vadd.f32 %v6374, %v6448
    %v6450 = vpop.f32.mrb[0].mxu0
    %v6451 = vpop.f32.mrb[0].mxu0
    %v6452 = vadd.f32 %v6374, %v6451
    %v6453 = vpop.f32.mrb[0].mxu0
    %6454 = vdwg.mxu0
    %v6455 = vadd.f32 %v4867, %v6441
    %v6456 = vadd.f32 %v4868, %v6444
    %v6457 = vadd.f32 %v4869, %v6449
    %v6458 = vadd.f32 %v4870, %v6452
    %s6459 = scalar_lea.vmem %s11, 2
    %v6460 = vld [vmem:[%s6459] sm:$0x1]
    %s6461 = scalar_lea.vmem %s12, 2
    %v6462 = vld [vmem:[%s6461] sm:$0x1]
    %v6463 = vsel %vm167, %v6455, 0.0
    %6464 = vadd.xlane.f32.xlu0 %v6463
    %v6465 = vpop.xlane.xlu0 %6464
    %v6466 = vsel %vm167, %v6456, 0.0
    %6467 = vadd.xlane.f32.xlu0 %v6466
    %v6468 = vpop.xlane.xlu0 %6467
    %v6469 = vsel %vm167, %v6457, 0.0
    %6470 = vadd.xlane.f32.xlu0 %v6469
    %v6471 = vpop.xlane.xlu0 %6470
    %v6472 = vsel %vm167, %v6458, 0.0
    %6473 = vadd.xlane.f32.xlu0 %v6472
    %v6474 = vpop.xlane.xlu0 %6473
    %v6475 = vmul.f32 %v6465, %v1755
    %v6476 = vmul.f32 %v6468, %v1755
    %v6477 = vmul.f32 %v6471, %v1755
    %v6478 = vmul.f32 %v6474, %v1755
    %v6479 = vsub.f32 %v6455, %v6475
    %v6480 = vsub.f32 %v6456, %v6476
    %v6481 = vsub.f32 %v6457, %v6477
    %v6482 = vsub.f32 %v6458, %v6478
    %v6483 = vmul.f32 %v6479, %v6479
    %v6484 = vmul.f32 %v6480, %v6480
    %v6485 = vmul.f32 %v6481, %v6481
    %v6486 = vmul.f32 %v6482, %v6482
    %v6487 = vsel %vm167, %v6483, 0.0
    %6488 = vadd.xlane.f32.xlu0 %v6487
    %v6489 = vpop.xlane.xlu0 %6488
    %v6490 = vsel %vm167, %v6484, 0.0
    %6491 = vadd.xlane.f32.xlu0 %v6490
    %v6492 = vpop.xlane.xlu0 %6491
    %v6493 = vsel %vm167, %v6485, 0.0
    %6494 = vadd.xlane.f32.xlu0 %v6493
    %v6495 = vpop.xlane.xlu0 %6494
    %v6496 = vsel %vm167, %v6486, 0.0
    %6497 = vadd.xlane.f32.xlu0 %v6496
    %v6498 = vpop.xlane.xlu0 %6497
    %v6499 = vmul.f32 %v6489, %v1755
    %v6500 = vmul.f32 %v6492, %v1755
    %v6501 = vmul.f32 %v6495, %v1755
    %v6502 = vmul.f32 %v6498, %v1755
    %v6503 = vadd.f32 %v6499, 1e-05
    %v6504 = vadd.f32 %v6500, 1e-05
    %v6505 = vadd.f32 %v6501, 1e-05
    %v6506 = vadd.f32 %v6502, 1e-05
    %v6507 = vrsqrt.pop %v6503
    %v6508 = vrsqrt.pop %v6504
    %v6509 = vrsqrt.pop %v6505
    %v6510 = vrsqrt.pop %v6506
    %v6511 = vmul.f32 %v6479, %v6507
    %v6512 = vmul.f32 %v6480, %v6508
    %v6513 = vmul.f32 %v6481, %v6509
    %v6514 = vmul.f32 %v6482, %v6510
    %v6516 = vlaneseq
    %v6517 = vshrl.u32 %v6516, 7
    %v6518 = vsub.s32 0, %v6517
    %v6519 = vrot.slane %v6460, %v6518
    %v6521 = vmul.f32 %v6511, %v6519
    %v6522 = vmul.f32 %v6512, %v6519
    %v6523 = vmul.f32 %v6513, %v6519
    %v6524 = vmul.f32 %v6514, %v6519
    %v6526 = vlaneseq
    %v6527 = vshrl.u32 %v6526, 7
    %v6528 = vsub.s32 0, %v6527
    %v6529 = vrot.slane %v6462, %v6528
    %v6531 = vadd.f32 %v6521, %v6529
    %v6532 = vadd.f32 %v6522, %v6529
    %v6533 = vadd.f32 %v6523, %v6529
    %v6534 = vadd.f32 %v6524, %v6529
    %v6535 = vmul.f32 %v6531, %v84
    %v6536 = vmul.f32 %v6532, %v89
    %v6537 = vmul.f32 %v6533, %v94
    %v6538 = vmul.f32 %v6534, %v99
    %v6543 = vrot.slane %v6535, 7
    %v6544 = vrot.slane %v6536, 7
    %v6545 = vsel %vm1824, %v6543, %v6544
    %v6546 = vrot.slane %v6537, 7
    %v6547 = vsel %vm1824, %v6544, %v6546
    %v6548 = vrot.slane %v6538, 7
    %v6549 = vsel %vm1824, %v6546, %v6548
    %v6555 = vsel %vm1824, 0.0, %v6543
    %v6556 = vsel %vm1824, %v6548, 0.0
    %v6557 = vmul.f32 %v6555, %v1842
    %v6558 = vmul.f32 %v6545, %v1847
    %v6559 = vmul.f32 %v6547, %v1852
    %v6560 = vmul.f32 %v6549, %v1857
    %v6561 = vmul.f32 %v6555, %v1880
    %v6562 = vmul.f32 %v6545, %v1882
    %v6563 = vmul.f32 %v6547, %v1884
    %v6564 = vmul.f32 %v6549, %v1886
    %v6565 = vmul.f32 %v6556, %v1885
    %6566 = vrot.lane.b32.xlu0 %v6535, 64
    %v6567 = vpop.permute.xlu0 %6566
    %6568 = vrot.lane.b32.xlu0 %v6536, 64
    %v6569 = vpop.permute.xlu0 %6568
    %6570 = vrot.lane.b32.xlu0 %v6537, 64
    %v6571 = vpop.permute.xlu0 %6570
    %6572 = vrot.lane.b32.xlu0 %v6538, 64
    %v6573 = vpop.permute.xlu0 %6572
    %v6583 = vrot.slane %v6561, 2
    %v6584 = vrot.slane %v6562, 2
    %v6585 = vsel %vm1914, %v6583, %v6584
    %v6586 = vrot.slane %v6563, 2
    %v6587 = vsel %vm1914, %v6584, %v6586
    %v6588 = vrot.slane %v6564, 2
    %v6589 = vsel %vm1914, %v6586, %v6588
    %v6590 = vrot.slane %v6565, 2
    %v6591 = vsel %vm1914, %v6588, %v6590
    %v6596 = vsel %vm167, %v6557, %v6567
    %v6597 = vsel %vm167, %v6558, %v6569
    %v6598 = vsel %vm167, %v6559, %v6571
    %v6599 = vsel %vm167, %v6560, %v6573
    %v6600 = vpack.c.bf16 %v6597, %v6596
    %v6601 = vpack.c.bf16 %v6587, %v6585
    %v6602 = vpack.c.bf16 %v6599, %v6598
    %v6603 = vpack.c.bf16 %v6591, %v6589
    %s6604 = scalar_lea.vmem %s13, 192
    %v6605 = vld [vmem:[%s6604] sm:$0xf]
    %v6606 = vld [vmem:[%s6604 + $0x4] sm:$0xf]
    %v6607 = vld [vmem:[%s6604 + $0x8] sm:$0xf]
    %v6608 = vld [vmem:[%s6604 + $0xc] sm:$0xf]
    %v6609 = vld [vmem:[%s6604 + $0x10] sm:$0xf]
    %v6610 = vld [vmem:[%s6604 + $0x14] sm:$0xf]
    %v6611 = vld [vmem:[%s6604 + $0x18] sm:$0xf]
    %v6612 = vld [vmem:[%s6604 + $0x1c] sm:$0xf]
    %v6613 = vld [vmem:[%s6604 + $0x20] sm:$0xf]
    %v6614 = vld [vmem:[%s6604 + $0x24] sm:$0xf]
    %v6615 = vld [vmem:[%s6604 + $0x28] sm:$0xf]
    %v6616 = vld [vmem:[%s6604 + $0x2c] sm:$0xf]
    %v6617 = vld [vmem:[%s6604 + $0x30] sm:$0xf]
    %v6618 = vld [vmem:[%s6604 + $0x34] sm:$0xf]
    %v6619 = vld [vmem:[%s6604 + $0x38] sm:$0xf]
    %v6620 = vld [vmem:[%s6604 + $0x3c] sm:$0xf]
    %v6621 = vld [vmem:[%s6604 + $0x40] sm:$0xf]
    %v6622 = vld [vmem:[%s6604 + $0x44] sm:$0xf]
    %v6623 = vld [vmem:[%s6604 + $0x48] sm:$0xf]
    %v6624 = vld [vmem:[%s6604 + $0x4c] sm:$0xf]
    %v6625 = vld [vmem:[%s6604 + $0x50] sm:$0xf]
    %v6626 = vld [vmem:[%s6604 + $0x54] sm:$0xf]
    %v6627 = vld [vmem:[%s6604 + $0x58] sm:$0xf]
    %v6628 = vld [vmem:[%s6604 + $0x5c] sm:$0xf]
    %s6629 = scalar_lea.vmem %s14, 2
    %v6630 = vld [vmem:[%s6629] sm:$0x1]
    %v6632 = vlaneseq
    %v6633 = vshrl.u32 %v6632, 7
    %v6634 = vsub.s32 0, %v6633
    %v6635 = vrot.slane %v6630, %v6634
    %v6661 = vunpack.c.l.b16 %v6605
    %v6662 = vunpack.c.l.b16 %v6606
    %v6663 = vunpack.c.l.b16 %v6607
    %v6664 = vunpack.c.l.b16 %v6608
    %v6665 = vunpack.c.l.b16 %v6609
    %v6666 = vunpack.c.l.b16 %v6610
    %v6667 = vunpack.c.l.b16 %v6611
    %v6668 = vunpack.c.l.b16 %v6612
    %v6669 = vunpack.c.l.b16 %v6613
    %v6670 = vunpack.c.l.b16 %v6614
    %v6671 = vunpack.c.l.b16 %v6615
    %v6672 = vunpack.c.l.b16 %v6616
    %v6673 = vunpack.c.l.b16 %v6617
    %v6674 = vunpack.c.l.b16 %v6618
    %v6675 = vunpack.c.l.b16 %v6619
    %v6676 = vunpack.c.l.b16 %v6620
    %v6677 = vunpack.c.l.b16 %v6621
    %v6678 = vunpack.c.l.b16 %v6622
    %v6679 = vunpack.c.l.b16 %v6623
    %v6680 = vunpack.c.l.b16 %v6624
    %v6681 = vunpack.c.l.b16 %v6625
    %v6682 = vunpack.c.l.b16 %v6626
    %v6683 = vunpack.c.l.b16 %v6627
    %v6684 = vunpack.c.l.b16 %v6628
    %v6685 = vpack.c.b16 %v6662, %v6661
    %v6686 = vpack.c.b16 %v6664, %v6663
    %v6687 = vpack.c.b16 %v6666, %v6665
    %v6688 = vpack.c.b16 %v6668, %v6667
    %v6689 = vpack.c.b16 %v6670, %v6669
    %v6690 = vpack.c.b16 %v6672, %v6671
    %v6691 = vpack.c.b16 %v6674, %v6673
    %v6692 = vpack.c.b16 %v6676, %v6675
    %v6693 = vpack.c.b16 %v6678, %v6677
    %v6694 = vpack.c.b16 %v6680, %v6679
    %v6695 = vpack.c.b16 %v6682, %v6681
    %v6696 = vpack.c.b16 %v6684, %v6683
    %v6710 = vsel %vm167, %v6601, 0
    %v6713 = vsel %vm167, %v6603, 0
    %6715 = vmatprep.subr.bf16.mxu0 0
    %6716 = vmatpush1.bf16.msra.mxu0 %v6685
    %6717 = vmatprep.subr.bf16.mxu0 0
    %6718 = vmatpush1.bf16.msra.mxu0 %v6686
    %6719 = vmatprep.subr.bf16.mxu0 0
    %6720 = vmatpush1.bf16.msra.mxu0 %v6687
    %6721 = vmatprep.subr.bf16.mxu0 0
    %6722 = vmatpush1.bf16.msra.mxu0 %v6688
    %6723 = vmatprep.subr.bf16.mxu0 0
    %6724 = vmatpush1.bf16.msra.mxu0 %v6689
    %6725 = vmatprep.subr.bf16.mxu0 0
    %6726 = vmatpush1.bf16.msra.mxu0 %v6690
    %6727 = vmatprep.subr.bf16.mxu0 0
    %6728 = vmatpush1.bf16.msra.mxu0 %v6691
    %6729 = vmatprep.subr.bf16.mxu0 0
    %6730 = vmatpush1.bf16.msra.mxu0 %v6692
    %6731 = vmatprep.subr.bf16.mxu0 0
    %6732 = vmatpush1.bf16.msra.mxu0 %v6693
    %6733 = vmatprep.subr.bf16.mxu0 0
    %6734 = vmatpush1.bf16.msra.mxu0 %v6694
    %6735 = vmatprep.subr.bf16.mxu0 0
    %6736 = vmatpush1.bf16.msra.mxu0 %v6695
    %6737 = vmatprep.subr.bf16.mxu0 0
    %6738 = vmatpush1.bf16.msra.mxu0 %v6696
    %6739 = vmatprep.subr.bf16.mxu0 0
    %6740 = vmatpush1.bf16.msra.mxu0 0
    %6741 = vmatprep.subr.bf16.mxu0 0
    %6742 = vmatpush1.bf16.msra.mxu0 0
    %6743 = vmatprep.subr.bf16.mxu0 0
    %6744 = vmatpush1.bf16.msra.mxu0 0
    %6745 = vmatprep.subr.bf16.mxu0 0
    %6746 = vmatpush1.bf16.msra.mxu0 0
    %6747 = vmatprep.mubr.bf16.mxu0 %v6710
    %6748 = vmatmul.mubr.bf16.gmra.mrb[0].mxu0 %v6600
    %v6749 = vpop.f32.mrb[0].mxu0
    %v6750 = vadd.f32 %v6635, %v6749
    %v6751 = vpop.f32.mrb[0].mxu0
    %v6752 = vpop.f32.mrb[0].mxu0
    %v6753 = vadd.f32 %v6635, %v6752
    %v6754 = vpop.f32.mrb[0].mxu0
    %6755 = vmatprep.mubr.bf16.mxu0 %v6713
    %6756 = vmatmul.mubr.bf16.gmra.mrb[0].mxu0 %v6602
    %v6757 = vpop.f32.mrb[0].mxu0
    %v6758 = vadd.f32 %v6635, %v6757
    %v6759 = vpop.f32.mrb[0].mxu0
    %v6760 = vpop.f32.mrb[0].mxu0
    %v6761 = vadd.f32 %v6635, %v6760
    %v6762 = vpop.f32.mrb[0].mxu0
    %6763 = vdwg.mxu0
    %v6764 = vmax.f32 %v6750, 0.0
    %v6765 = vmax.f32 %v6753, 0.0
    %v6766 = vmax.f32 %v6758, 0.0
    %v6767 = vmax.f32 %v6761, 0.0
    %v6768 = vmul.f32 %v6764, %v84
    %v6769 = vmul.f32 %v6765, %v89
    %v6770 = vmul.f32 %v6766, %v94
    %v6771 = vmul.f32 %v6767, %v99
    %v6776 = vrot.slane %v6768, 7
    %v6777 = vrot.slane %v6769, 7
    %v6778 = vsel %vm1824, %v6776, %v6777
    %v6779 = vrot.slane %v6770, 7
    %v6780 = vsel %vm1824, %v6777, %v6779
    %v6781 = vrot.slane %v6771, 7
    %v6782 = vsel %vm1824, %v6779, %v6781
    %v6788 = vsel %vm1824, 0.0, %v6776
    %v6789 = vsel %vm1824, %v6781, 0.0
    %v6790 = vmul.f32 %v6788, %v1842
    %v6791 = vmul.f32 %v6778, %v1847
    %v6792 = vmul.f32 %v6780, %v1852
    %v6793 = vmul.f32 %v6782, %v1857
    %v6794 = vmul.f32 %v6788, %v1880
    %v6795 = vmul.f32 %v6778, %v1882
    %v6796 = vmul.f32 %v6780, %v1884
    %v6797 = vmul.f32 %v6782, %v1886
    %v6798 = vmul.f32 %v6789, %v1885
    %v6804 = vrot.slane %v6794, 2
    %v6805 = vrot.slane %v6795, 2
    %v6806 = vsel %vm1914, %v6804, %v6805
    %v6807 = vrot.slane %v6796, 2
    %v6808 = vsel %vm1914, %v6805, %v6807
    %v6809 = vrot.slane %v6797, 2
    %v6810 = vsel %vm1914, %v6807, %v6809
    %v6811 = vrot.slane %v6798, 2
    %v6812 = vsel %vm1914, %v6809, %v6811
    %v6817 = vpack.c.bf16 %v6791, %v6790
    %v6818 = vpack.c.bf16 %v6769, %v6768
    %v6819 = vpack.c.bf16 %v6808, %v6806
    %v6820 = vpack.c.bf16 %v6793, %v6792
    %v6821 = vpack.c.bf16 %v6771, %v6770
    %v6822 = vpack.c.bf16 %v6812, %v6810
    %s6823 = scalar_lea.vmem %s15, 384
    %v6824 = vld [vmem:[%s6823] sm:$0xf]
    %v6825 = vld [vmem:[%s6823 + $0x4] sm:$0xf]
    %v6826 = vld [vmem:[%s6823 + $0x8] sm:$0xf]
    %v6827 = vld [vmem:[%s6823 + $0xc] sm:$0xf]
    %v6828 = vld [vmem:[%s6823 + $0x10] sm:$0xf]
    %v6829 = vld [vmem:[%s6823 + $0x14] sm:$0xf]
    %v6830 = vld [vmem:[%s6823 + $0x18] sm:$0xf]
    %v6831 = vld [vmem:[%s6823 + $0x1c] sm:$0xf]
    %v6832 = vld [vmem:[%s6823 + $0x20] sm:$0xf]
    %v6833 = vld [vmem:[%s6823 + $0x24] sm:$0xf]
    %v6834 = vld [vmem:[%s6823 + $0x28] sm:$0xf]
    %v6835 = vld [vmem:[%s6823 + $0x2c] sm:$0xf]
    %v6836 = vld [vmem:[%s6823 + $0x30] sm:$0xf]
    %v6837 = vld [vmem:[%s6823 + $0x34] sm:$0xf]
    %v6838 = vld [vmem:[%s6823 + $0x38] sm:$0xf]
    %v6839 = vld [vmem:[%s6823 + $0x3c] sm:$0xf]
    %v6840 = vld [vmem:[%s6823 + $0x40] sm:$0xf]
    %v6841 = vld [vmem:[%s6823 + $0x44] sm:$0xf]
    %v6842 = vld [vmem:[%s6823 + $0x48] sm:$0xf]
    %v6843 = vld [vmem:[%s6823 + $0x4c] sm:$0xf]
    %v6844 = vld [vmem:[%s6823 + $0x50] sm:$0xf]
    %v6845 = vld [vmem:[%s6823 + $0x54] sm:$0xf]
    %v6846 = vld [vmem:[%s6823 + $0x58] sm:$0xf]
    %v6847 = vld [vmem:[%s6823 + $0x5c] sm:$0xf]
    %v6848 = vld [vmem:[%s6823 + $0x60] sm:$0xf]
    %v6849 = vld [vmem:[%s6823 + $0x64] sm:$0xf]
    %v6850 = vld [vmem:[%s6823 + $0x68] sm:$0xf]
    %v6851 = vld [vmem:[%s6823 + $0x6c] sm:$0xf]
    %v6852 = vld [vmem:[%s6823 + $0x70] sm:$0xf]
    %v6853 = vld [vmem:[%s6823 + $0x74] sm:$0xf]
    %v6854 = vld [vmem:[%s6823 + $0x78] sm:$0xf]
    %v6855 = vld [vmem:[%s6823 + $0x7c] sm:$0xf]
    %v6856 = vld [vmem:[%s6823 + $0x80] sm:$0xf]
    %v6857 = vld [vmem:[%s6823 + $0x84] sm:$0xf]
    %v6858 = vld [vmem:[%s6823 + $0x88] sm:$0xf]
    %v6859 = vld [vmem:[%s6823 + $0x8c] sm:$0xf]
    %v6860 = vld [vmem:[%s6823 + $0x90] sm:$0xf]
    %v6861 = vld [vmem:[%s6823 + $0x94] sm:$0xf]
    %v6862 = vld [vmem:[%s6823 + $0x98] sm:$0xf]
    %v6863 = vld [vmem:[%s6823 + $0x9c] sm:$0xf]
    %v6864 = vld [vmem:[%s6823 + $0xa0] sm:$0xf]
    %v6865 = vld [vmem:[%s6823 + $0xa4] sm:$0xf]
    %v6866 = vld [vmem:[%s6823 + $0xa8] sm:$0xf]
    %v6867 = vld [vmem:[%s6823 + $0xac] sm:$0xf]
    %v6868 = vld [vmem:[%s6823 + $0xb0] sm:$0xf]
    %v6869 = vld [vmem:[%s6823 + $0xb4] sm:$0xf]
    %v6870 = vld [vmem:[%s6823 + $0xb8] sm:$0xf]
    %v6871 = vld [vmem:[%s6823 + $0xbc] sm:$0xf]
    %s6872 = scalar_lea.vmem %s16, 2
    %v6873 = vld [vmem:[%s6872] sm:$0x1]
    %v6875 = vlaneseq
    %v6876 = vshrl.u32 %v6875, 7
    %v6877 = vsub.s32 0, %v6876
    %v6878 = vrot.slane %v6873, %v6877
    %v6928 = vunpack.c.l.b16 %v6824
    %v6929 = vunpack.c.l.b16 %v6825
    %v6930 = vunpack.c.l.b16 %v6826
    %v6931 = vunpack.c.l.b16 %v6827
    %v6932 = vunpack.c.l.b16 %v6828
    %v6933 = vunpack.c.l.b16 %v6829
    %v6934 = vunpack.c.l.b16 %v6830
    %v6935 = vunpack.c.l.b16 %v6831
    %v6936 = vunpack.c.l.b16 %v6832
    %v6937 = vunpack.c.l.b16 %v6833
    %v6938 = vunpack.c.l.b16 %v6834
    %v6939 = vunpack.c.l.b16 %v6835
    %v6940 = vunpack.c.l.b16 %v6836
    %v6941 = vunpack.c.l.b16 %v6837
    %v6942 = vunpack.c.l.b16 %v6838
    %v6943 = vunpack.c.l.b16 %v6839
    %v6944 = vunpack.c.l.b16 %v6840
    %v6945 = vunpack.c.l.b16 %v6841
    %v6946 = vunpack.c.l.b16 %v6842
    %v6947 = vunpack.c.l.b16 %v6843
    %v6948 = vunpack.c.l.b16 %v6844
    %v6949 = vunpack.c.l.b16 %v6845
    %v6950 = vunpack.c.l.b16 %v6846
    %v6951 = vunpack.c.l.b16 %v6847
    %v6952 = vunpack.c.l.b16 %v6848
    %v6953 = vunpack.c.l.b16 %v6849
    %v6954 = vunpack.c.l.b16 %v6850
    %v6955 = vunpack.c.l.b16 %v6851
    %v6956 = vunpack.c.l.b16 %v6852
    %v6957 = vunpack.c.l.b16 %v6853
    %v6958 = vunpack.c.l.b16 %v6854
    %v6959 = vunpack.c.l.b16 %v6855
    %v6960 = vunpack.c.l.b16 %v6856
    %v6961 = vunpack.c.l.b16 %v6857
    %v6962 = vunpack.c.l.b16 %v6858
    %v6963 = vunpack.c.l.b16 %v6859
    %v6964 = vunpack.c.l.b16 %v6860
    %v6965 = vunpack.c.l.b16 %v6861
    %v6966 = vunpack.c.l.b16 %v6862
    %v6967 = vunpack.c.l.b16 %v6863
    %v6968 = vunpack.c.l.b16 %v6864
    %v6969 = vunpack.c.l.b16 %v6865
    %v6970 = vunpack.c.l.b16 %v6866
    %v6971 = vunpack.c.l.b16 %v6867
    %v6972 = vunpack.c.l.b16 %v6868
    %v6973 = vunpack.c.l.b16 %v6869
    %v6974 = vunpack.c.l.b16 %v6870
    %v6975 = vunpack.c.l.b16 %v6871
    %v6976 = vpack.c.b16 %v6929, %v6928
    %v6977 = vpack.c.b16 %v6931, %v6930
    %v6978 = vpack.c.b16 %v6933, %v6932
    %v6979 = vpack.c.b16 %v6935, %v6934
    %v6980 = vpack.c.b16 %v6937, %v6936
    %v6981 = vpack.c.b16 %v6939, %v6938
    %v6982 = vpack.c.b16 %v6941, %v6940
    %v6983 = vpack.c.b16 %v6943, %v6942
    %v6984 = vpack.c.b16 %v6945, %v6944
    %v6985 = vpack.c.b16 %v6947, %v6946
    %v6986 = vpack.c.b16 %v6949, %v6948
    %v6987 = vpack.c.b16 %v6951, %v6950
    %v6988 = vpack.c.b16 %v6953, %v6952
    %v6989 = vpack.c.b16 %v6955, %v6954
    %v6990 = vpack.c.b16 %v6957, %v6956
    %v6991 = vpack.c.b16 %v6959, %v6958
    %v6992 = vpack.c.b16 %v6961, %v6960
    %v6993 = vpack.c.b16 %v6963, %v6962
    %v6994 = vpack.c.b16 %v6965, %v6964
    %v6995 = vpack.c.b16 %v6967, %v6966
    %v6996 = vpack.c.b16 %v6969, %v6968
    %v6997 = vpack.c.b16 %v6971, %v6970
    %v6998 = vpack.c.b16 %v6973, %v6972
    %v6999 = vpack.c.b16 %v6975, %v6974
    %7024 = vmatprep.subr.bf16.mxu0 0
    %7025 = vmatpush1.bf16.msra.mxu0 %v6976
    %7026 = vmatprep.subr.bf16.mxu0 0
    %7027 = vmatpush1.bf16.msra.mxu0 %v6977
    %7028 = vmatprep.subr.bf16.mxu0 0
    %7029 = vmatpush1.bf16.msra.mxu0 %v6978
    %7030 = vmatprep.subr.bf16.mxu0 0
    %7031 = vmatpush1.bf16.msra.mxu0 %v6979
    %7032 = vmatprep.subr.bf16.mxu0 0
    %7033 = vmatpush1.bf16.msra.mxu0 %v6980
    %7034 = vmatprep.subr.bf16.mxu0 0
    %7035 = vmatpush1.bf16.msra.mxu0 %v6981
    %7036 = vmatprep.subr.bf16.mxu0 0
    %7037 = vmatpush1.bf16.msra.mxu0 %v6982
    %7038 = vmatprep.subr.bf16.mxu0 0
    %7039 = vmatpush1.bf16.msra.mxu0 %v6983
    %7040 = vmatprep.subr.bf16.mxu0 0
    %7041 = vmatpush1.bf16.msra.mxu0 %v6984
    %7042 = vmatprep.subr.bf16.mxu0 0
    %7043 = vmatpush1.bf16.msra.mxu0 %v6985
    %7044 = vmatprep.subr.bf16.mxu0 0
    %7045 = vmatpush1.bf16.msra.mxu0 %v6986
    %7046 = vmatprep.subr.bf16.mxu0 0
    %7047 = vmatpush1.bf16.msra.mxu0 %v6987
    %7048 = vmatprep.subr.bf16.mxu0 0
    %7049 = vmatpush1.bf16.msra.mxu0 %v6988
    %7050 = vmatprep.subr.bf16.mxu0 0
    %7051 = vmatpush1.bf16.msra.mxu0 %v6989
    %7052 = vmatprep.subr.bf16.mxu0 0
    %7053 = vmatpush1.bf16.msra.mxu0 %v6990
    %7054 = vmatprep.subr.bf16.mxu0 0
    %7055 = vmatpush1.bf16.msra.mxu0 %v6991
    %7056 = vmatprep.mubr.bf16.mxu0 %v6818
    %7057 = vmatmul.mubr.bf16.gmra.mrb[0].mxu0 %v6817
    %v7058 = vpop.f32.mrb[0].mxu0
    %v7059 = vadd.f32 %v6878, %v7058
    %v7060 = vpop.f32.mrb[0].mxu0
    %v7061 = vpop.f32.mrb[0].mxu0
    %v7062 = vadd.f32 %v6878, %v7061
    %v7063 = vpop.f32.mrb[0].mxu0
    %7064 = vmatprep.mubr.bf16.mxu0 %v6821
    %7065 = vmatmul.mubr.bf16.gmra.mrb[0].mxu0 %v6820
    %v7066 = vpop.f32.mrb[0].mxu0
    %v7067 = vadd.f32 %v6878, %v7066
    %v7068 = vpop.f32.mrb[0].mxu0
    %v7069 = vpop.f32.mrb[0].mxu0
    %v7070 = vadd.f32 %v6878, %v7069
    %v7071 = vpop.f32.mrb[0].mxu0
    %7072 = vdwg.mxu0
    %7073 = vmatprep.subr.bf16.mxu0 0
    %7074 = vmatpush1.bf16.msra.mxu0 %v6992
    %7075 = vmatprep.subr.bf16.mxu0 0
    %7076 = vmatpush1.bf16.msra.mxu0 %v6993
    %7077 = vmatprep.subr.bf16.mxu0 0
    %7078 = vmatpush1.bf16.msra.mxu0 %v6994
    %7079 = vmatprep.subr.bf16.mxu0 0
    %7080 = vmatpush1.bf16.msra.mxu0 %v6995
    %7081 = vmatprep.subr.bf16.mxu0 0
    %7082 = vmatpush1.bf16.msra.mxu0 %v6996
    %7083 = vmatprep.subr.bf16.mxu0 0
    %7084 = vmatpush1.bf16.msra.mxu0 %v6997
    %7085 = vmatprep.subr.bf16.mxu0 0
    %7086 = vmatpush1.bf16.msra.mxu0 %v6998
    %7087 = vmatprep.subr.bf16.mxu0 0
    %7088 = vmatpush1.bf16.msra.mxu0 %v6999
    %7089 = vmatprep.subr.bf16.mxu0 0
    %7090 = vmatpush1.bf16.msra.mxu0 0
    %7091 = vmatprep.subr.bf16.mxu0 0
    %7092 = vmatpush1.bf16.msra.mxu0 0
    %7093 = vmatprep.subr.bf16.mxu0 0
    %7094 = vmatpush1.bf16.msra.mxu0 0
    %7095 = vmatprep.subr.bf16.mxu0 0
    %7096 = vmatpush1.bf16.msra.mxu0 0
    %7097 = vmatprep.subr.bf16.mxu0 0
    %7098 = vmatpush1.bf16.msra.mxu0 0
    %7099 = vmatprep.subr.bf16.mxu0 0
    %7100 = vmatpush1.bf16.msra.mxu0 0
    %7101 = vmatprep.subr.bf16.mxu0 0
    %7102 = vmatpush1.bf16.msra.mxu0 0
    %7103 = vmatprep.subr.bf16.mxu0 0
    %7104 = vmatpush1.bf16.msra.mxu0 0
    %7105 = vmatprep.mubr.bf16.mxu0 0
    %7106 = vmatmul.mubr.bf16.gmra.mrb[0].mxu0 %v6819
    %v7107 = vpop.f32.mrb[0].mxu0
    %v7108 = vadd.f32 %v7059, %v7107
    %v7109 = vpop.f32.mrb[0].mxu0
    %v7110 = vpop.f32.mrb[0].mxu0
    %v7111 = vadd.f32 %v7062, %v7110
    %v7112 = vpop.f32.mrb[0].mxu0
    %7113 = vmatprep.mubr.bf16.mxu0 0
    %7114 = vmatmul.mubr.bf16.gmra.mrb[0].mxu0 %v6822
    %v7115 = vpop.f32.mrb[0].mxu0
    %v7116 = vadd.f32 %v7067, %v7115
    %v7117 = vpop.f32.mrb[0].mxu0
    %v7118 = vpop.f32.mrb[0].mxu0
    %v7119 = vadd.f32 %v7070, %v7118
    %v7120 = vpop.f32.mrb[0].mxu0
    %7121 = vdwg.mxu0
    %v7122 = vmul.f32 %v7108, %v84
    %v7123 = vmul.f32 %v7111, %v89
    %v7124 = vmul.f32 %v7116, %v94
    %v7125 = vmul.f32 %v7119, %v99
    %v7126 = vadd.f32 %v6531, %v7122
    %v7127 = vadd.f32 %v6532, %v7123
    %v7128 = vadd.f32 %v6533, %v7124
    %v7129 = vadd.f32 %v6534, %v7125
    %s7130 = scalar_lea.vmem %s17, 2
    %v7131 = vld [vmem:[%s7130] sm:$0x1]
    %s7132 = scalar_lea.vmem %s18, 2
    %v7133 = vld [vmem:[%s7132] sm:$0x1]
    %v7134 = vsel %vm167, %v7126, 0.0
    %7135 = vadd.xlane.f32.xlu0 %v7134
    %v7136 = vpop.xlane.xlu0 %7135
    %v7137 = vsel %vm167, %v7127, 0.0
    %7138 = vadd.xlane.f32.xlu0 %v7137
    %v7139 = vpop.xlane.xlu0 %7138
    %v7140 = vsel %vm167, %v7128, 0.0
    %7141 = vadd.xlane.f32.xlu0 %v7140
    %v7142 = vpop.xlane.xlu0 %7141
    %v7143 = vsel %vm167, %v7129, 0.0
    %7144 = vadd.xlane.f32.xlu0 %v7143
    %v7145 = vpop.xlane.xlu0 %7144
    %v7146 = vmul.f32 %v7136, %v1755
    %v7147 = vmul.f32 %v7139, %v1755
    %v7148 = vmul.f32 %v7142, %v1755
    %v7149 = vmul.f32 %v7145, %v1755
    %v7150 = vsub.f32 %v7126, %v7146
    %v7151 = vsub.f32 %v7127, %v7147
    %v7152 = vsub.f32 %v7128, %v7148
    %v7153 = vsub.f32 %v7129, %v7149
    %v7154 = vmul.f32 %v7150, %v7150
    %v7155 = vmul.f32 %v7151, %v7151
    %v7156 = vmul.f32 %v7152, %v7152
    %v7157 = vmul.f32 %v7153, %v7153
    %v7158 = vsel %vm167, %v7154, 0.0
    %7159 = vadd.xlane.f32.xlu0 %v7158
    %v7160 = vpop.xlane.xlu0 %7159
    %v7161 = vsel %vm167, %v7155, 0.0
    %7162 = vadd.xlane.f32.xlu0 %v7161
    %v7163 = vpop.xlane.xlu0 %7162
    %v7164 = vsel %vm167, %v7156, 0.0
    %7165 = vadd.xlane.f32.xlu0 %v7164
    %v7166 = vpop.xlane.xlu0 %7165
    %v7167 = vsel %vm167, %v7157, 0.0
    %7168 = vadd.xlane.f32.xlu0 %v7167
    %v7169 = vpop.xlane.xlu0 %7168
    %v7170 = vmul.f32 %v7160, %v1755
    %v7171 = vmul.f32 %v7163, %v1755
    %v7172 = vmul.f32 %v7166, %v1755
    %v7173 = vmul.f32 %v7169, %v1755
    %v7174 = vadd.f32 %v7170, 1e-05
    %v7175 = vadd.f32 %v7171, 1e-05
    %v7176 = vadd.f32 %v7172, 1e-05
    %v7177 = vadd.f32 %v7173, 1e-05
    %v7178 = vrsqrt.pop %v7174
    %v7179 = vrsqrt.pop %v7175
    %v7180 = vrsqrt.pop %v7176
    %v7181 = vrsqrt.pop %v7177
    %v7182 = vmul.f32 %v7150, %v7178
    %v7183 = vmul.f32 %v7151, %v7179
    %v7184 = vmul.f32 %v7152, %v7180
    %v7185 = vmul.f32 %v7153, %v7181
    %v7187 = vlaneseq
    %v7188 = vshrl.u32 %v7187, 7
    %v7189 = vsub.s32 0, %v7188
    %v7190 = vrot.slane %v7131, %v7189
    %v7192 = vmul.f32 %v7182, %v7190
    %v7193 = vmul.f32 %v7183, %v7190
    %v7194 = vmul.f32 %v7184, %v7190
    %v7195 = vmul.f32 %v7185, %v7190
    %v7197 = vlaneseq
    %v7198 = vshrl.u32 %v7197, 7
    %v7199 = vsub.s32 0, %v7198
    %v7200 = vrot.slane %v7133, %v7199
    %v7202 = vadd.f32 %v7192, %v7200
    %v7203 = vadd.f32 %v7193, %v7200
    %v7204 = vadd.f32 %v7194, %v7200
    %v7205 = vadd.f32 %v7195, %v7200
    %v7206 = vmul.f32 %v7202, %v84
    %v7207 = vmul.f32 %v7203, %v89
    %v7208 = vmul.f32 %v7204, %v94
    %v7209 = vmul.f32 %v7205, %v99
    %7210 = vst.msk [vmem:[#allocation2] sm:$0xff] %vm167, %v7206
    %7211 = vst.msk [vmem:[#allocation2 + $0x8] sm:$0xff] %vm167, %v7207
    %7212 = vst.msk [vmem:[#allocation2 + $0x10] sm:$0xff] %vm167, %v7208
    %7213 = vst.msk [vmem:[#allocation2 + $0x18] sm:$0xff] %vm167, %v7209
    // Predicated region
    $region78: #{text_encoder_forward.1} parent=1 // pred_check
      _
    $region79: #{text_encoder_forward.1} parent=1 // pred_check_branch
      %7215 = sbr.rel (0) target = $region81
    $region80: #{text_encoder_forward.1} parent=1 // pred_region
      %s7217 = ssub.s32 512, 512
      %7218 = vsyncadd [#allocation3], %s7217
      %s7219 = sshll.u32 [#allocation2], 4
      %s7220 = int_to_ptr.vmem [resolvable:$true] %s7219
      %7225 = dma.vmem_to_hbm [thread:$0]  %s7220, 512, %s19, [#allocation3], 128, 128, 8
    $region81: #{text_encoder_forward.1} parent=1 // pred_fallthru
      _
    // Predicated region
    $region82: #{text_encoder_forward.1} parent=1 // pred_check
      _
    $region83: #{text_encoder_forward.1} parent=1 // pred_check_branch
      %7227 = sbr.rel (0) target = $region85
    $region84: #{text_encoder_forward.1} parent=1 // pred_region
      %7228 = dma.done [#allocation3], 512
    $region85: #{text_encoder_forward.1} parent=1 // pred_fallthru
      _
    %7229 = vsyncpa [#allocation3], 1

</llo_original>
